<compile_context>
chip_gen: v5e
topology: v5e:2x2
jax: 0.10.0
libtpu: 0.0.40
codegen_flags: <defaults>
</compile_context>

<pallas_src>
import math

import jax
import jax.numpy as jnp
from jax import lax
from jax.experimental import pallas as pl
from jax.experimental.pallas import tpu as pltpu

NUM_FEA = 8          # num_fea (free parameter of Model)
SEQ_LEN = 30         # fixed by the module (Linear(30,30), 30*50 = 1500)
HIDDEN = 50          # LSTM hidden size
N_MID1 = 50          # Linear(1500, 50)
N_MID2 = 10          # Linear(50, 10) / handcrafted Linear(2F, 10)
BATCH = 2

GATE_TILE = 128      # one 128-lane tile per LSTM gate
GP = 4 * GATE_TILE   # gate-padded lane width (512)

# --- attention pack lane offsets (input 5) ---
AP_SUM = 128         # kron(1_{TxT}, I_B) starts on its own 128-lane tile

# --- head pack row offsets (input 7); matmul operands start on 8-row rows ---
HP_W2 = 0            # rows [0,50)    lanes [0,10) : Linear(50,10) weight (in,out)
HP_WHC = 56          # rows [56,..)   lanes [0,10) : handcrafted weight + bias row
HP_WO1 = 80          # rows [80,90)   lane 0       : output weight, z2 half
HP_WO2 = 96          # rows [96,106)  lane 0       : output weight, y  half
HP_B1 = 112          # row 112        lanes [0,50) : Linear(1500,50) bias
HP_B2 = 113          # row 113        lanes [0,10) : Linear(50,10) bias
HP_BO = 114          # row 114        lane 0       : output bias
HP_ROWS = 120

_VMEM = pl.BlockSpec(memory_space=pltpu.MemorySpace.VMEM)


# --------------------------- single fused kernel ----------------------------
def fused_kernel(x_ref, hc_ref, wih_ref, whh_ref, ap_ref, w1r_ref, hp_ref,
                 out_ref, xp_ref, seq_ref, gat_ref):
    f32 = jnp.float32
    B = out_ref.shape[0]
    T, H, N1 = w1r_ref.shape
    TB = T * B
    N2 = N_MID2

    # -- 0. constant ones-row that folds the attention bias into its matmul.
    seq_ref[pl.ds(TB, 1), :] = jnp.ones((1, H), f32)

    # -- 1. Hoisted input projection: one (T*B, F+1) @ (F+1, 512) matmul; the
    #       ones-column of x carries the combined LSTM bias (b_ih + b_hh).
    #       Gate k lives on lanes [128k, 128k + H).
    xp_ref[...] = jnp.dot(x_ref[...], wih_ref[...], preferred_element_type=f32)

    # -- 2. LSTM recurrence (fully unrolled).  Time-major xp: step t's (B,512)
    #       slab is rows [t*B, t*B+B) -- no concatenates.  Gate slices start on
    #       128-lane tile boundaries -> no lane rolls on the serial chain.
    #       One slab store of the hidden state per step.
    h = jnp.zeros((B, H), f32)
    c = jnp.zeros((B, H), f32)
    for t in range(T):
        gates = (jnp.dot(h, whh_ref[...], preferred_element_type=f32)
                 + xp_ref[pl.ds(t * B, B), :])                        # (B, 512)
        i_g = jax.nn.sigmoid(gates[:, 0 * GATE_TILE:0 * GATE_TILE + H])
        f_g = jax.nn.sigmoid(gates[:, 1 * GATE_TILE:1 * GATE_TILE + H])
        g_g = jnp.tanh(gates[:, 2 * GATE_TILE:2 * GATE_TILE + H])
        o_g = jax.nn.sigmoid(gates[:, 3 * GATE_TILE:3 * GATE_TILE + H])
        c = f_g * c + i_g * g_g
        h = o_g * jnp.tanh(c)
        seq_ref[pl.ds(t * B, B), :] = h                               # (B, H)

    # -- 3. Attention3dBlock, both batches at once in the interleaved layout:
    #       logits = kron(Wa, I_B) @ S (+ bias via the ones row); softmax over
    #       time per (batch, lane) with the denominator produced by one
    #       kron(1, I_B) matmul; gate the LSTM output.  No per-batch loop,
    #       no strided access, no relayouts.
    ap = ap_ref[...]
    s_aug = seq_ref[...]                                              # (TB+1, H)
    logits = jnp.dot(ap[:, 0:TB + 1], s_aug, preferred_element_type=f32)
    m = jnp.max(logits, axis=0, keepdims=True)   # per-lane constant: cancels
    e = jnp.exp(logits - m)
    denom = jnp.dot(ap[:, AP_SUM:AP_SUM + TB], e, preferred_element_type=f32)
    probs = e * pl.reciprocal(denom, approx=True)
    gat_ref[...] = probs * s_aug[0:TB, :]                             # (TB, H)

    # -- 4. MLP head.  Linear(1500, 50) as a sum over time of (B,H)@(H,50)
    #       dots reading aligned slabs from the time-major gated scratch; two
    #       accumulators halve the serial add chain.  Dropout = identity.
    hp = hp_ref[...]
    acc0 = jnp.zeros((B, N1), f32)
    acc1 = jnp.zeros((B, N1), f32)
    for t in range(0, T, 2):
        acc0 = acc0 + jnp.dot(gat_ref[pl.ds(t * B, B), :], w1r_ref[t],
                              preferred_element_type=f32)
        acc1 = acc1 + jnp.dot(gat_ref[pl.ds((t + 1) * B, B), :], w1r_ref[t + 1],
                              preferred_element_type=f32)
    z1 = jnp.maximum(acc0 + acc1 + hp[HP_B1:HP_B1 + 1, 0:N1], 0.0)
    z2 = jnp.maximum(jnp.dot(z1, hp[HP_W2:HP_W2 + N1, 0:N2],
                             preferred_element_type=f32)
                     + hp[HP_B2:HP_B2 + 1, 0:N2], 0.0)
    nhc = hc_ref.shape[1]
    y = jnp.maximum(jnp.dot(hc_ref[...], hp[HP_WHC:HP_WHC + nhc, 0:N2],
                            preferred_element_type=f32), 0.0)
    out_ref[...] = (jnp.dot(z2, hp[HP_WO1:HP_WO1 + N2, 0:1],
                            preferred_element_type=f32)
                    + jnp.dot(y, hp[HP_WO2:HP_WO2 + N2, 0:1],
                              preferred_element_type=f32)
                    + hp[HP_BO:HP_BO + 1, 0:1])


# ------------------------------ full forward --------------------------------
def model_forward(params, inputs, handcrafted):
    B, T, F = inputs.shape
    H, N1, N2 = HIDDEN, N_MID1, N_MID2
    f32 = jnp.float32
    assert 2 * F + 1 <= HP_WO1 - HP_WHC, "head pack layout assumes num_fea <= 11"

    # ---- host-side packing (tiny XLA ops; could be hoisted to load time) ----
    def pad_gates(w):   # (r, 4H) -> (r, 512): gate k on lanes [128k, 128k+H)
        out = jnp.zeros((w.shape[0], GP), f32)
        for k in range(4):
            out = out.at[:, k * GATE_TILE:k * GATE_TILE + H].set(
                w[:, k * H:(k + 1) * H])
        return out

    # Time-major data + ones column (folds the LSTM bias into the projection).
    x_tm = jnp.transpose(inputs, (1, 0, 2)).reshape(T * B, F)
    x_aug = jnp.concatenate([x_tm, jnp.ones((T * B, 1), f32)], axis=1)
    wih_aug = jnp.concatenate(
        [pad_gates(params["wih"]), pad_gates(params["bl"])], axis=0)
    whh_pad = pad_gates(params["whh"])

    # Attention pack: kron-expanded Linear(30,30) (+ bias column hitting the
    # ones row of the hidden-state scratch) and the per-batch time-sum matrix
    # on its own 128-lane tile.
    eye_b = jnp.eye(B, dtype=f32)
    wa_big = jnp.kron(params["wa"], eye_b)                       # (T*B, T*B)
    ba_big = jnp.kron(params["ba"], jnp.ones((B, 1), f32))       # (T*B, 1)
    summat = jnp.kron(jnp.ones((T, T), f32), eye_b)              # (T*B, T*B)
    ap = jnp.zeros((T * B, AP_SUM + T * B), f32)
    ap = ap.at[:, 0:T * B + 1].set(jnp.concatenate([wa_big, ba_big], axis=1))
    ap = ap.at[:, AP_SUM:AP_SUM + T * B].set(summat)

    # Handcrafted branch: fold its bias via a ones column.
    hc_aug = jnp.concatenate([handcrafted, jnp.ones((B, 1), f32)], axis=1)
    whc_aug = jnp.concatenate([params["whc"], params["bhc"]], axis=0)

    # Head pack: remaining small weights / biases in one (120, 50) slab.
    hp = jnp.zeros((HP_ROWS, N1), f32)
    hp = hp.at[HP_W2:HP_W2 + N1, 0:N2].set(params["w2"])
    hp = hp.at[HP_WHC:HP_WHC + 2 * F + 1, 0:N2].set(whc_aug)
    hp = hp.at[HP_WO1:HP_WO1 + N2, 0:1].set(params["wo1"])
    hp = hp.at[HP_WO2:HP_WO2 + N2, 0:1].set(params["wo2"])
    hp = hp.at[HP_B1, 0:N1].set(params["b1"][0])
    hp = hp.at[HP_B2, 0:N2].set(params["b2"][0])
    hp = hp.at[HP_BO, 0:1].set(params["bo"][0])

    w1r = params["w1"].reshape(T, H, N1)        # contiguous reshape (no copy)

    return pl.pallas_call(
        fused_kernel,
        out_shape=jax.ShapeDtypeStruct((B, 1), f32),
        in_specs=[_VMEM] * 7,
        out_specs=_VMEM,
        scratch_shapes=[
            pltpu.VMEM((T * B, GP), f32),       # xp : hoisted input projection
            pltpu.VMEM((T * B + 1, H), f32),    # seq: hidden states (+ ones row)
            pltpu.VMEM((T * B, H), f32),        # gat: attention-gated states
        ],
    )(x_aug, hc_aug, wih_aug, whh_pad, ap, w1r, hp)


# --------------------------- parameter init / ref ---------------------------
def init_params(key, num_fea):
    ks = jax.random.split(key, 13)
    H, T = HIDDEN, SEQ_LEN

    def u(k, shape, fan_in):
        bound = 1.0 / math.sqrt(fan_in)
        return jax.random.uniform(k, shape, jnp.float32, -bound, bound)

    return {
        # LSTM, gates concatenated (i, f, g, o) along the output dim.
        "wih": u(ks[0], (num_fea, 4 * H), H),
        "whh": u(ks[1], (H, 4 * H), H),
        "bl":  u(ks[2], (1, 4 * H), H),               # b_ih + b_hh folded together
        # Attention Linear(30, 30), torch layout W[out, in].
        "wa":  u(ks[3], (T, T), T),
        "ba":  u(ks[4], (T, 1), T),
        # Head.
        "w1":  u(ks[5], (T * H, N_MID1), T * H),      # Linear(1500, 50), stored W^T
        "b1":  u(ks[6], (1, N_MID1), T * H),
        "w2":  u(ks[7], (N_MID1, N_MID2), N_MID1),    # Linear(50, 10)
        "b2":  u(ks[8], (1, N_MID2), N_MID1),
        "whc": u(ks[9], (2 * num_fea, N_MID2), 2 * num_fea),   # handcrafted Linear
        "bhc": u(ks[10], (1, N_MID2), 2 * num_fea),
        "wo1": u(ks[11], (N_MID2, 1), 2 * N_MID2),    # output Linear(20,1) split
        "wo2": u(ks[12], (N_MID2, 1), 2 * N_MID2),
        "bo":  jnp.zeros((1, 1), jnp.float32),
    }


def reference_forward(params, inputs, hc):
    """Pure-JAX reference matching the PyTorch forward (eval mode)."""
    B, T, F = inputs.shape
    H = HIDDEN
    hi = lax.Precision.HIGHEST
    wih, whh, bl = params["wih"], params["whh"], params["bl"]

    def cell(carry, xt):
        h, c = carry
        gates = (jnp.dot(xt, wih, precision=hi)
                 + jnp.dot(h, whh, precision=hi) + bl)
        i = jax.nn.sigmoid(gates[:, 0:H])
        f = jax.nn.sigmoid(gates[:, H:2 * H])
        g = jnp.tanh(gates[:, 2 * H:3 * H])
        o = jax.nn.sigmoid(gates[:, 3 * H:4 * H])
        c = f * c + i * g
        h = o * jnp.tanh(c)
        return (h, c), h

    x_tbf = jnp.transpose(inputs, (1, 0, 2))
    _, seq = lax.scan(cell, (jnp.zeros((B, H)), jnp.zeros((B, H))), x_tbf)
    x_bth = jnp.transpose(seq, (1, 0, 2))                     # LSTM output (B, T, H)
    x_bht = jnp.transpose(x_bth, (0, 2, 1))                   # (B, H, T)
    logits = jnp.einsum("bht,st->bhs", x_bht, params["wa"],
                        precision=hi) + params["ba"][:, 0]
    probs = jax.nn.softmax(logits, axis=2)
    attn = jnp.transpose(probs, (0, 2, 1)) * x_bth            # (B, T, H)
    flat = attn.reshape(B, T * H)                             # (B, 1500)
    z1 = jax.nn.relu(jnp.dot(flat, params["w1"], precision=hi) + params["b1"])
    z2 = jax.nn.relu(jnp.dot(z1, params["w2"], precision=hi) + params["b2"])
    y = jax.nn.relu(jnp.dot(hc, params["whc"], precision=hi) + params["bhc"])
    return (jnp.dot(z2, params["wo1"], precision=hi)
            + jnp.dot(y, params["wo2"], precision=hi) + params["bo"])


if __name__ == "__main__":
    key = jax.random.PRNGKey(0)
    kp, kx, kh = jax.random.split(key, 3)
    params = init_params(kp, NUM_FEA)
    inputs = jax.random.normal(kx, (BATCH, SEQ_LEN, NUM_FEA), jnp.float32)
    handcrafted = jax.random.normal(kh, (BATCH, 2 * NUM_FEA), jnp.float32)

    out = jax.block_until_ready(jax.jit(model_forward)(params, inputs, handcrafted))
    assert out.shape == (BATCH, 1), out.shape

    ref = reference_forward(params, inputs, handcrafted)
    err = float(jnp.max(jnp.abs(out - ref)))
    assert err < 2e-3, f"max abs error vs reference: {err}"

    print("KERNEL_OK")
</pallas_src>

<mosaic_0001>
module attributes {stable_mosaic.version = 11 : i64} {
  func.func @fused_kernel(%arg0: memref<60x9xf32, #tpu.memory_space<vmem>>, %arg1: memref<2x17xf32, #tpu.memory_space<vmem>>, %arg2: memref<9x512xf32, #tpu.memory_space<vmem>>, %arg3: memref<50x512xf32, #tpu.memory_space<vmem>>, %arg4: memref<60x188xf32, #tpu.memory_space<vmem>>, %arg5: memref<30x50x50xf32, #tpu.memory_space<vmem>>, %arg6: memref<120x50xf32, #tpu.memory_space<vmem>>, %arg7: memref<2x1xf32, #tpu.memory_space<vmem>>, %arg8: memref<60x512xf32, #tpu.memory_space<vmem>>, %arg9: memref<61x50xf32, #tpu.memory_space<vmem>>, %arg10: memref<60x50xf32, #tpu.memory_space<vmem>>) attributes {dimension_semantics = [], scalar_prefetch = 0 : i64, scratch_operands = 3 : i64, tpu.core_type = #tpu.core_type<tc>} {
    %cst = arith.constant 1.000000e+00 : f32
    %0 = vector.broadcast %cst : f32 to vector<1x50xf32>
    %c60 = arith.constant 60 : index
    %c0 = arith.constant 0 : index
    %1 = vector.load %arg9[%c60, %c0] : memref<61x50xf32, #tpu.memory_space<vmem>>, vector<1x50xf32>
    tpu.vector_store %arg9[%c60, %c0], %0 {strides = array<i32>} : memref<61x50xf32, #tpu.memory_space<vmem>>, vector<1x50xf32>,
    %c0_0 = arith.constant 0 : index
    %c0_1 = arith.constant 0 : index
    %2 = vector.load %arg0[%c0_0, %c0_1] : memref<60x9xf32, #tpu.memory_space<vmem>>, vector<60x9xf32>
    %c0_2 = arith.constant 0 : index
    %c0_3 = arith.constant 0 : index
    %3 = vector.load %arg2[%c0_2, %c0_3] : memref<9x512xf32, #tpu.memory_space<vmem>>, vector<9x512xf32>
    %cst_4 = arith.constant dense<0.000000e+00> : vector<60x512xf32>
    %4 = tpu.matmul %2, %3, %cst_4 {dimension_numbers = #tpu.dot_dimension_numbers<[1], [0], [0], [1], [0, 0, 1, 1], [], []>} : vector<60x9xf32>, vector<9x512xf32>, vector<60x512xf32> -> vector<60x512xf32>
    %c0_5 = arith.constant 0 : index
    %c0_6 = arith.constant 0 : index
    %5 = vector.load %arg8[%c0_5, %c0_6] : memref<60x512xf32, #tpu.memory_space<vmem>>, vector<60x512xf32>
    tpu.vector_store %arg8[%c0_5, %c0_6], %4 {strides = array<i32>} : memref<60x512xf32, #tpu.memory_space<vmem>>, vector<60x512xf32>,
    %cst_7 = arith.constant 0.000000e+00 : f32
    %6 = vector.broadcast %cst_7 : f32 to vector<2x50xf32>
    %cst_8 = arith.constant 0.000000e+00 : f32
    %7 = vector.broadcast %cst_8 : f32 to vector<2x50xf32>
    %c0_9 = arith.constant 0 : index
    %c0_10 = arith.constant 0 : index
    %8 = vector.load %arg3[%c0_9, %c0_10] : memref<50x512xf32, #tpu.memory_space<vmem>>, vector<50x512xf32>
    %cst_11 = arith.constant dense<0.000000e+00> : vector<2x512xf32>
    %9 = tpu.matmul %6, %8, %cst_11 {dimension_numbers = #tpu.dot_dimension_numbers<[1], [0], [0], [1], [0, 0, 1, 1], [], []>} : vector<2x50xf32>, vector<50x512xf32>, vector<2x512xf32> -> vector<2x512xf32>
    %c0_12 = arith.constant 0 : index
    %c0_13 = arith.constant 0 : index
    %10 = vector.load %arg8[%c0_12, %c0_13] : memref<60x512xf32, #tpu.memory_space<vmem>>, vector<2x512xf32>
    %11 = arith.addf %9, %10 : vector<2x512xf32>
    %12 = vector.extract_strided_slice %11 {offsets = [0, 0], sizes = [2, 50], strides = [1, 1]} : vector<2x512xf32> to vector<2x50xf32>
    %13 = arith.negf %12 : vector<2x50xf32>
    %14 = math.exp %13 : vector<2x50xf32>
    %cst_14 = arith.constant 1.000000e+00 : f32
    %15 = vector.broadcast %cst_14 : f32 to vector<2x50xf32>
    %16 = arith.addf %15, %14 : vector<2x50xf32>
    %17 = arith.divf %15, %16 : vector<2x50xf32>
    %18 = vector.extract_strided_slice %11 {offsets = [0, 128], sizes = [2, 50], strides = [1, 1]} : vector<2x512xf32> to vector<2x50xf32>
    %19 = arith.negf %18 : vector<2x50xf32>
    %20 = math.exp %19 : vector<2x50xf32>
    %cst_15 = arith.constant 1.000000e+00 : f32
    %21 = vector.broadcast %cst_15 : f32 to vector<2x50xf32>
    %22 = arith.addf %21, %20 : vector<2x50xf32>
    %23 = arith.divf %21, %22 : vector<2x50xf32>
    %24 = vector.extract_strided_slice %11 {offsets = [0, 256], sizes = [2, 50], strides = [1, 1]} : vector<2x512xf32> to vector<2x50xf32>
    %25 = math.tanh %24 : vector<2x50xf32>
    %26 = vector.extract_strided_slice %11 {offsets = [0, 384], sizes = [2, 50], strides = [1, 1]} : vector<2x512xf32> to vector<2x50xf32>
    %27 = arith.negf %26 : vector<2x50xf32>
    %28 = math.exp %27 : vector<2x50xf32>
    %cst_16 = arith.constant 1.000000e+00 : f32
    %29 = vector.broadcast %cst_16 : f32 to vector<2x50xf32>
    %30 = arith.addf %29, %28 : vector<2x50xf32>
    %31 = arith.divf %29, %30 : vector<2x50xf32>
    %32 = arith.mulf %23, %7 : vector<2x50xf32>
    %33 = arith.mulf %17, %25 : vector<2x50xf32>
    %34 = arith.addf %32, %33 : vector<2x50xf32>
    %35 = math.tanh %34 : vector<2x50xf32>
    %36 = arith.mulf %31, %35 : vector<2x50xf32>
    %c0_17 = arith.constant 0 : index
    %c0_18 = arith.constant 0 : index
    %37 = vector.load %arg9[%c0_17, %c0_18] : memref<61x50xf32, #tpu.memory_space<vmem>>, vector<2x50xf32>
    tpu.vector_store %arg9[%c0_17, %c0_18], %36 {strides = array<i32>} : memref<61x50xf32, #tpu.memory_space<vmem>>, vector<2x50xf32>,
    %c0_19 = arith.constant 0 : index
    %c0_20 = arith.constant 0 : index
    %38 = vector.load %arg3[%c0_19, %c0_20] : memref<50x512xf32, #tpu.memory_space<vmem>>, vector<50x512xf32>
    %cst_21 = arith.constant dense<0.000000e+00> : vector<2x512xf32>
    %39 = tpu.matmul %36, %38, %cst_21 {dimension_numbers = #tpu.dot_dimension_numbers<[1], [0], [0], [1], [0, 0, 1, 1], [], []>} : vector<2x50xf32>, vector<50x512xf32>, vector<2x512xf32> -> vector<2x512xf32>
    %c2 = arith.constant 2 : index
    %c0_22 = arith.constant 0 : index
    %40 = vector.load %arg8[%c2, %c0_22] : memref<60x512xf32, #tpu.memory_space<vmem>>, vector<2x512xf32>
    %41 = arith.addf %39, %40 : vector<2x512xf32>
    %42 = vector.extract_strided_slice %41 {offsets = [0, 0], sizes = [2, 50], strides = [1, 1]} : vector<2x512xf32> to vector<2x50xf32>
    %43 = arith.negf %42 : vector<2x50xf32>
    %44 = math.exp %43 : vector<2x50xf32>
    %cst_23 = arith.constant 1.000000e+00 : f32
    %45 = vector.broadcast %cst_23 : f32 to vector<2x50xf32>
    %46 = arith.addf %45, %44 : vector<2x50xf32>
    %47 = arith.divf %45, %46 : vector<2x50xf32>
    %48 = vector.extract_strided_slice %41 {offsets = [0, 128], sizes = [2, 50], strides = [1, 1]} : vector<2x512xf32> to vector<2x50xf32>
    %49 = arith.negf %48 : vector<2x50xf32>
    %50 = math.exp %49 : vector<2x50xf32>
    %cst_24 = arith.constant 1.000000e+00 : f32
    %51 = vector.broadcast %cst_24 : f32 to vector<2x50xf32>
    %52 = arith.addf %51, %50 : vector<2x50xf32>
    %53 = arith.divf %51, %52 : vector<2x50xf32>
    %54 = vector.extract_strided_slice %41 {offsets = [0, 256], sizes = [2, 50], strides = [1, 1]} : vector<2x512xf32> to vector<2x50xf32>
    %55 = math.tanh %54 : vector<2x50xf32>
    %56 = vector.extract_strided_slice %41 {offsets = [0, 384], sizes = [2, 50], strides = [1, 1]} : vector<2x512xf32> to vector<2x50xf32>
    %57 = arith.negf %56 : vector<2x50xf32>
    %58 = math.exp %57 : vector<2x50xf32>
    %cst_25 = arith.constant 1.000000e+00 : f32
    %59 = vector.broadcast %cst_25 : f32 to vector<2x50xf32>
    %60 = arith.addf %59, %58 : vector<2x50xf32>
    %61 = arith.divf %59, %60 : vector<2x50xf32>
    %62 = arith.mulf %53, %34 : vector<2x50xf32>
    %63 = arith.mulf %47, %55 : vector<2x50xf32>
    %64 = arith.addf %62, %63 : vector<2x50xf32>
    %65 = math.tanh %64 : vector<2x50xf32>
    %66 = arith.mulf %61, %65 : vector<2x50xf32>
    %c2_26 = arith.constant 2 : index
    %c0_27 = arith.constant 0 : index
    %67 = vector.load %arg9[%c2_26, %c0_27] : memref<61x50xf32, #tpu.memory_space<vmem>>, vector<2x50xf32>
    tpu.vector_store %arg9[%c2_26, %c0_27], %66 {strides = array<i32>} : memref<61x50xf32, #tpu.memory_space<vmem>>, vector<2x50xf32>,
    %c0_28 = arith.constant 0 : index
    %c0_29 = arith.constant 0 : index
    %68 = vector.load %arg3[%c0_28, %c0_29] : memref<50x512xf32, #tpu.memory_space<vmem>>, vector<50x512xf32>
    %cst_30 = arith.constant dense<0.000000e+00> : vector<2x512xf32>
    %69 = tpu.matmul %66, %68, %cst_30 {dimension_numbers = #tpu.dot_dimension_numbers<[1], [0], [0], [1], [0, 0, 1, 1], [], []>} : vector<2x50xf32>, vector<50x512xf32>, vector<2x512xf32> -> vector<2x512xf32>
    %c4 = arith.constant 4 : index
    %c0_31 = arith.constant 0 : index
    %70 = vector.load %arg8[%c4, %c0_31] : memref<60x512xf32, #tpu.memory_space<vmem>>, vector<2x512xf32>
    %71 = arith.addf %69, %70 : vector<2x512xf32>
    %72 = vector.extract_strided_slice %71 {offsets = [0, 0], sizes = [2, 50], strides = [1, 1]} : vector<2x512xf32> to vector<2x50xf32>
    %73 = arith.negf %72 : vector<2x50xf32>
    %74 = math.exp %73 : vector<2x50xf32>
    %cst_32 = arith.constant 1.000000e+00 : f32
    %75 = vector.broadcast %cst_32 : f32 to vector<2x50xf32>
    %76 = arith.addf %75, %74 : vector<2x50xf32>
    %77 = arith.divf %75, %76 : vector<2x50xf32>
    %78 = vector.extract_strided_slice %71 {offsets = [0, 128], sizes = [2, 50], strides = [1, 1]} : vector<2x512xf32> to vector<2x50xf32>
    %79 = arith.negf %78 : vector<2x50xf32>
    %80 = math.exp %79 : vector<2x50xf32>
    %cst_33 = arith.constant 1.000000e+00 : f32
    %81 = vector.broadcast %cst_33 : f32 to vector<2x50xf32>
    %82 = arith.addf %81, %80 : vector<2x50xf32>
    %83 = arith.divf %81, %82 : vector<2x50xf32>
    %84 = vector.extract_strided_slice %71 {offsets = [0, 256], sizes = [2, 50], strides = [1, 1]} : vector<2x512xf32> to vector<2x50xf32>
    %85 = math.tanh %84 : vector<2x50xf32>
    %86 = vector.extract_strided_slice %71 {offsets = [0, 384], sizes = [2, 50], strides = [1, 1]} : vector<2x512xf32> to vector<2x50xf32>
    %87 = arith.negf %86 : vector<2x50xf32>
    %88 = math.exp %87 : vector<2x50xf32>
    %cst_34 = arith.constant 1.000000e+00 : f32
    %89 = vector.broadcast %cst_34 : f32 to vector<2x50xf32>
    %90 = arith.addf %89, %88 : vector<2x50xf32>
    %91 = arith.divf %89, %90 : vector<2x50xf32>
    %92 = arith.mulf %83, %64 : vector<2x50xf32>
    %93 = arith.mulf %77, %85 : vector<2x50xf32>
    %94 = arith.addf %92, %93 : vector<2x50xf32>
    %95 = math.tanh %94 : vector<2x50xf32>
    %96 = arith.mulf %91, %95 : vector<2x50xf32>
    %c4_35 = arith.constant 4 : index
    %c0_36 = arith.constant 0 : index
    %97 = vector.load %arg9[%c4_35, %c0_36] : memref<61x50xf32, #tpu.memory_space<vmem>>, vector<2x50xf32>
    tpu.vector_store %arg9[%c4_35, %c0_36], %96 {strides = array<i32>} : memref<61x50xf32, #tpu.memory_space<vmem>>, vector<2x50xf32>,
    %c0_37 = arith.constant 0 : index
    %c0_38 = arith.constant 0 : index
    %98 = vector.load %arg3[%c0_37, %c0_38] : memref<50x512xf32, #tpu.memory_space<vmem>>, vector<50x512xf32>
    %cst_39 = arith.constant dense<0.000000e+00> : vector<2x512xf32>
    %99 = tpu.matmul %96, %98, %cst_39 {dimension_numbers = #tpu.dot_dimension_numbers<[1], [0], [0], [1], [0, 0, 1, 1], [], []>} : vector<2x50xf32>, vector<50x512xf32>, vector<2x512xf32> -> vector<2x512xf32>
    %c6 = arith.constant 6 : index
    %c0_40 = arith.constant 0 : index
    %100 = vector.load %arg8[%c6, %c0_40] : memref<60x512xf32, #tpu.memory_space<vmem>>, vector<2x512xf32>
    %101 = arith.addf %99, %100 : vector<2x512xf32>
    %102 = vector.extract_strided_slice %101 {offsets = [0, 0], sizes = [2, 50], strides = [1, 1]} : vector<2x512xf32> to vector<2x50xf32>
    %103 = arith.negf %102 : vector<2x50xf32>
    %104 = math.exp %103 : vector<2x50xf32>
    %cst_41 = arith.constant 1.000000e+00 : f32
    %105 = vector.broadcast %cst_41 : f32 to vector<2x50xf32>
    %106 = arith.addf %105, %104 : vector<2x50xf32>
    %107 = arith.divf %105, %106 : vector<2x50xf32>
    %108 = vector.extract_strided_slice %101 {offsets = [0, 128], sizes = [2, 50], strides = [1, 1]} : vector<2x512xf32> to vector<2x50xf32>
    %109 = arith.negf %108 : vector<2x50xf32>
    %110 = math.exp %109 : vector<2x50xf32>
    %cst_42 = arith.constant 1.000000e+00 : f32
    %111 = vector.broadcast %cst_42 : f32 to vector<2x50xf32>
    %112 = arith.addf %111, %110 : vector<2x50xf32>
    %113 = arith.divf %111, %112 : vector<2x50xf32>
    %114 = vector.extract_strided_slice %101 {offsets = [0, 256], sizes = [2, 50], strides = [1, 1]} : vector<2x512xf32> to vector<2x50xf32>
    %115 = math.tanh %114 : vector<2x50xf32>
    %116 = vector.extract_strided_slice %101 {offsets = [0, 384], sizes = [2, 50], strides = [1, 1]} : vector<2x512xf32> to vector<2x50xf32>
    %117 = arith.negf %116 : vector<2x50xf32>
    %118 = math.exp %117 : vector<2x50xf32>
    %cst_43 = arith.constant 1.000000e+00 : f32
    %119 = vector.broadcast %cst_43 : f32 to vector<2x50xf32>
    %120 = arith.addf %119, %118 : vector<2x50xf32>
    %121 = arith.divf %119, %120 : vector<2x50xf32>
    %122 = arith.mulf %113, %94 : vector<2x50xf32>
    %123 = arith.mulf %107, %115 : vector<2x50xf32>
    %124 = arith.addf %122, %123 : vector<2x50xf32>
    %125 = math.tanh %124 : vector<2x50xf32>
    %126 = arith.mulf %121, %125 : vector<2x50xf32>
    %c6_44 = arith.constant 6 : index
    %c0_45 = arith.constant 0 : index
    %127 = vector.load %arg9[%c6_44, %c0_45] : memref<61x50xf32, #tpu.memory_space<vmem>>, vector<2x50xf32>
    tpu.vector_store %arg9[%c6_44, %c0_45], %126 {strides = array<i32>} : memref<61x50xf32, #tpu.memory_space<vmem>>, vector<2x50xf32>,
    %c0_46 = arith.constant 0 : index
    %c0_47 = arith.constant 0 : index
    %128 = vector.load %arg3[%c0_46, %c0_47] : memref<50x512xf32, #tpu.memory_space<vmem>>, vector<50x512xf32>
    %cst_48 = arith.constant dense<0.000000e+00> : vector<2x512xf32>
    %129 = tpu.matmul %126, %128, %cst_48 {dimension_numbers = #tpu.dot_dimension_numbers<[1], [0], [0], [1], [0, 0, 1, 1], [], []>} : vector<2x50xf32>, vector<50x512xf32>, vector<2x512xf32> -> vector<2x512xf32>
    %c8 = arith.constant 8 : index
    %c0_49 = arith.constant 0 : index
    %130 = vector.load %arg8[%c8, %c0_49] : memref<60x512xf32, #tpu.memory_space<vmem>>, vector<2x512xf32>
    %131 = arith.addf %129, %130 : vector<2x512xf32>
    %132 = vector.extract_strided_slice %131 {offsets = [0, 0], sizes = [2, 50], strides = [1, 1]} : vector<2x512xf32> to vector<2x50xf32>
    %133 = arith.negf %132 : vector<2x50xf32>
    %134 = math.exp %133 : vector<2x50xf32>
    %cst_50 = arith.constant 1.000000e+00 : f32
    %135 = vector.broadcast %cst_50 : f32 to vector<2x50xf32>
    %136 = arith.addf %135, %134 : vector<2x50xf32>
    %137 = arith.divf %135, %136 : vector<2x50xf32>
    %138 = vector.extract_strided_slice %131 {offsets = [0, 128], sizes = [2, 50], strides = [1, 1]} : vector<2x512xf32> to vector<2x50xf32>
    %139 = arith.negf %138 : vector<2x50xf32>
    %140 = math.exp %139 : vector<2x50xf32>
    %cst_51 = arith.constant 1.000000e+00 : f32
    %141 = vector.broadcast %cst_51 : f32 to vector<2x50xf32>
    %142 = arith.addf %141, %140 : vector<2x50xf32>
    %143 = arith.divf %141, %142 : vector<2x50xf32>
    %144 = vector.extract_strided_slice %131 {offsets = [0, 256], sizes = [2, 50], strides = [1, 1]} : vector<2x512xf32> to vector<2x50xf32>
    %145 = math.tanh %144 : vector<2x50xf32>
    %146 = vector.extract_strided_slice %131 {offsets = [0, 384], sizes = [2, 50], strides = [1, 1]} : vector<2x512xf32> to vector<2x50xf32>
    %147 = arith.negf %146 : vector<2x50xf32>
    %148 = math.exp %147 : vector<2x50xf32>
    %cst_52 = arith.constant 1.000000e+00 : f32
    %149 = vector.broadcast %cst_52 : f32 to vector<2x50xf32>
    %150 = arith.addf %149, %148 : vector<2x50xf32>
    %151 = arith.divf %149, %150 : vector<2x50xf32>
    %152 = arith.mulf %143, %124 : vector<2x50xf32>
    %153 = arith.mulf %137, %145 : vector<2x50xf32>
    %154 = arith.addf %152, %153 : vector<2x50xf32>
    %155 = math.tanh %154 : vector<2x50xf32>
    %156 = arith.mulf %151, %155 : vector<2x50xf32>
    %c8_53 = arith.constant 8 : index
    %c0_54 = arith.constant 0 : index
    %157 = vector.load %arg9[%c8_53, %c0_54] : memref<61x50xf32, #tpu.memory_space<vmem>>, vector<2x50xf32>
    tpu.vector_store %arg9[%c8_53, %c0_54], %156 {strides = array<i32>} : memref<61x50xf32, #tpu.memory_space<vmem>>, vector<2x50xf32>,
    %c0_55 = arith.constant 0 : index
    %c0_56 = arith.constant 0 : index
    %158 = vector.load %arg3[%c0_55, %c0_56] : memref<50x512xf32, #tpu.memory_space<vmem>>, vector<50x512xf32>
    %cst_57 = arith.constant dense<0.000000e+00> : vector<2x512xf32>
    %159 = tpu.matmul %156, %158, %cst_57 {dimension_numbers = #tpu.dot_dimension_numbers<[1], [0], [0], [1], [0, 0, 1, 1], [], []>} : vector<2x50xf32>, vector<50x512xf32>, vector<2x512xf32> -> vector<2x512xf32>
    %c10 = arith.constant 10 : index
    %c0_58 = arith.constant 0 : index
    %160 = vector.load %arg8[%c10, %c0_58] : memref<60x512xf32, #tpu.memory_space<vmem>>, vector<2x512xf32>
    %161 = arith.addf %159, %160 : vector<2x512xf32>
    %162 = vector.extract_strided_slice %161 {offsets = [0, 0], sizes = [2, 50], strides = [1, 1]} : vector<2x512xf32> to vector<2x50xf32>
    %163 = arith.negf %162 : vector<2x50xf32>
    %164 = math.exp %163 : vector<2x50xf32>
    %cst_59 = arith.constant 1.000000e+00 : f32
    %165 = vector.broadcast %cst_59 : f32 to vector<2x50xf32>
    %166 = arith.addf %165, %164 : vector<2x50xf32>
    %167 = arith.divf %165, %166 : vector<2x50xf32>
    %168 = vector.extract_strided_slice %161 {offsets = [0, 128], sizes = [2, 50], strides = [1, 1]} : vector<2x512xf32> to vector<2x50xf32>
    %169 = arith.negf %168 : vector<2x50xf32>
    %170 = math.exp %169 : vector<2x50xf32>
    %cst_60 = arith.constant 1.000000e+00 : f32
    %171 = vector.broadcast %cst_60 : f32 to vector<2x50xf32>
    %172 = arith.addf %171, %170 : vector<2x50xf32>
    %173 = arith.divf %171, %172 : vector<2x50xf32>
    %174 = vector.extract_strided_slice %161 {offsets = [0, 256], sizes = [2, 50], strides = [1, 1]} : vector<2x512xf32> to vector<2x50xf32>
    %175 = math.tanh %174 : vector<2x50xf32>
    %176 = vector.extract_strided_slice %161 {offsets = [0, 384], sizes = [2, 50], strides = [1, 1]} : vector<2x512xf32> to vector<2x50xf32>
    %177 = arith.negf %176 : vector<2x50xf32>
    %178 = math.exp %177 : vector<2x50xf32>
    %cst_61 = arith.constant 1.000000e+00 : f32
    %179 = vector.broadcast %cst_61 : f32 to vector<2x50xf32>
    %180 = arith.addf %179, %178 : vector<2x50xf32>
    %181 = arith.divf %179, %180 : vector<2x50xf32>
    %182 = arith.mulf %173, %154 : vector<2x50xf32>
    %183 = arith.mulf %167, %175 : vector<2x50xf32>
    %184 = arith.addf %182, %183 : vector<2x50xf32>
    %185 = math.tanh %184 : vector<2x50xf32>
    %186 = arith.mulf %181, %185 : vector<2x50xf32>
    %c10_62 = arith.constant 10 : index
    %c0_63 = arith.constant 0 : index
    %187 = vector.load %arg9[%c10_62, %c0_63] : memref<61x50xf32, #tpu.memory_space<vmem>>, vector<2x50xf32>
    tpu.vector_store %arg9[%c10_62, %c0_63], %186 {strides = array<i32>} : memref<61x50xf32, #tpu.memory_space<vmem>>, vector<2x50xf32>,
    %c0_64 = arith.constant 0 : index
    %c0_65 = arith.constant 0 : index
    %188 = vector.load %arg3[%c0_64, %c0_65] : memref<50x512xf32, #tpu.memory_space<vmem>>, vector<50x512xf32>
    %cst_66 = arith.constant dense<0.000000e+00> : vector<2x512xf32>
    %189 = tpu.matmul %186, %188, %cst_66 {dimension_numbers = #tpu.dot_dimension_numbers<[1], [0], [0], [1], [0, 0, 1, 1], [], []>} : vector<2x50xf32>, vector<50x512xf32>, vector<2x512xf32> -> vector<2x512xf32>
    %c12 = arith.constant 12 : index
    %c0_67 = arith.constant 0 : index
    %190 = vector.load %arg8[%c12, %c0_67] : memref<60x512xf32, #tpu.memory_space<vmem>>, vector<2x512xf32>
    %191 = arith.addf %189, %190 : vector<2x512xf32>
    %192 = vector.extract_strided_slice %191 {offsets = [0, 0], sizes = [2, 50], strides = [1, 1]} : vector<2x512xf32> to vector<2x50xf32>
    %193 = arith.negf %192 : vector<2x50xf32>
    %194 = math.exp %193 : vector<2x50xf32>
    %cst_68 = arith.constant 1.000000e+00 : f32
    %195 = vector.broadcast %cst_68 : f32 to vector<2x50xf32>
    %196 = arith.addf %195, %194 : vector<2x50xf32>
    %197 = arith.divf %195, %196 : vector<2x50xf32>
    %198 = vector.extract_strided_slice %191 {offsets = [0, 128], sizes = [2, 50], strides = [1, 1]} : vector<2x512xf32> to vector<2x50xf32>
    %199 = arith.negf %198 : vector<2x50xf32>
    %200 = math.exp %199 : vector<2x50xf32>
    %cst_69 = arith.constant 1.000000e+00 : f32
    %201 = vector.broadcast %cst_69 : f32 to vector<2x50xf32>
    %202 = arith.addf %201, %200 : vector<2x50xf32>
    %203 = arith.divf %201, %202 : vector<2x50xf32>
    %204 = vector.extract_strided_slice %191 {offsets = [0, 256], sizes = [2, 50], strides = [1, 1]} : vector<2x512xf32> to vector<2x50xf32>
    %205 = math.tanh %204 : vector<2x50xf32>
    %206 = vector.extract_strided_slice %191 {offsets = [0, 384], sizes = [2, 50], strides = [1, 1]} : vector<2x512xf32> to vector<2x50xf32>
    %207 = arith.negf %206 : vector<2x50xf32>
    %208 = math.exp %207 : vector<2x50xf32>
    %cst_70 = arith.constant 1.000000e+00 : f32
    %209 = vector.broadcast %cst_70 : f32 to vector<2x50xf32>
    %210 = arith.addf %209, %208 : vector<2x50xf32>
    %211 = arith.divf %209, %210 : vector<2x50xf32>
    %212 = arith.mulf %203, %184 : vector<2x50xf32>
    %213 = arith.mulf %197, %205 : vector<2x50xf32>
    %214 = arith.addf %212, %213 : vector<2x50xf32>
    %215 = math.tanh %214 : vector<2x50xf32>
    %216 = arith.mulf %211, %215 : vector<2x50xf32>
    %c12_71 = arith.constant 12 : index
    %c0_72 = arith.constant 0 : index
    %217 = vector.load %arg9[%c12_71, %c0_72] : memref<61x50xf32, #tpu.memory_space<vmem>>, vector<2x50xf32>
    tpu.vector_store %arg9[%c12_71, %c0_72], %216 {strides = array<i32>} : memref<61x50xf32, #tpu.memory_space<vmem>>, vector<2x50xf32>,
    %c0_73 = arith.constant 0 : index
    %c0_74 = arith.constant 0 : index
    %218 = vector.load %arg3[%c0_73, %c0_74] : memref<50x512xf32, #tpu.memory_space<vmem>>, vector<50x512xf32>
    %cst_75 = arith.constant dense<0.000000e+00> : vector<2x512xf32>
    %219 = tpu.matmul %216, %218, %cst_75 {dimension_numbers = #tpu.dot_dimension_numbers<[1], [0], [0], [1], [0, 0, 1, 1], [], []>} : vector<2x50xf32>, vector<50x512xf32>, vector<2x512xf32> -> vector<2x512xf32>
    %c14 = arith.constant 14 : index
    %c0_76 = arith.constant 0 : index
    %220 = vector.load %arg8[%c14, %c0_76] : memref<60x512xf32, #tpu.memory_space<vmem>>, vector<2x512xf32>
    %221 = arith.addf %219, %220 : vector<2x512xf32>
    %222 = vector.extract_strided_slice %221 {offsets = [0, 0], sizes = [2, 50], strides = [1, 1]} : vector<2x512xf32> to vector<2x50xf32>
    %223 = arith.negf %222 : vector<2x50xf32>
    %224 = math.exp %223 : vector<2x50xf32>
    %cst_77 = arith.constant 1.000000e+00 : f32
    %225 = vector.broadcast %cst_77 : f32 to vector<2x50xf32>
    %226 = arith.addf %225, %224 : vector<2x50xf32>
    %227 = arith.divf %225, %226 : vector<2x50xf32>
    %228 = vector.extract_strided_slice %221 {offsets = [0, 128], sizes = [2, 50], strides = [1, 1]} : vector<2x512xf32> to vector<2x50xf32>
    %229 = arith.negf %228 : vector<2x50xf32>
    %230 = math.exp %229 : vector<2x50xf32>
    %cst_78 = arith.constant 1.000000e+00 : f32
    %231 = vector.broadcast %cst_78 : f32 to vector<2x50xf32>
    %232 = arith.addf %231, %230 : vector<2x50xf32>
    %233 = arith.divf %231, %232 : vector<2x50xf32>
    %234 = vector.extract_strided_slice %221 {offsets = [0, 256], sizes = [2, 50], strides = [1, 1]} : vector<2x512xf32> to vector<2x50xf32>
    %235 = math.tanh %234 : vector<2x50xf32>
    %236 = vector.extract_strided_slice %221 {offsets = [0, 384], sizes = [2, 50], strides = [1, 1]} : vector<2x512xf32> to vector<2x50xf32>
    %237 = arith.negf %236 : vector<2x50xf32>
    %238 = math.exp %237 : vector<2x50xf32>
    %cst_79 = arith.constant 1.000000e+00 : f32
    %239 = vector.broadcast %cst_79 : f32 to vector<2x50xf32>
    %240 = arith.addf %239, %238 : vector<2x50xf32>
    %241 = arith.divf %239, %240 : vector<2x50xf32>
    %242 = arith.mulf %233, %214 : vector<2x50xf32>
    %243 = arith.mulf %227, %235 : vector<2x50xf32>
    %244 = arith.addf %242, %243 : vector<2x50xf32>
    %245 = math.tanh %244 : vector<2x50xf32>
    %246 = arith.mulf %241, %245 : vector<2x50xf32>
    %c14_80 = arith.constant 14 : index
    %c0_81 = arith.constant 0 : index
    %247 = vector.load %arg9[%c14_80, %c0_81] : memref<61x50xf32, #tpu.memory_space<vmem>>, vector<2x50xf32>
    tpu.vector_store %arg9[%c14_80, %c0_81], %246 {strides = array<i32>} : memref<61x50xf32, #tpu.memory_space<vmem>>, vector<2x50xf32>,
    %c0_82 = arith.constant 0 : index
    %c0_83 = arith.constant 0 : index
    %248 = vector.load %arg3[%c0_82, %c0_83] : memref<50x512xf32, #tpu.memory_space<vmem>>, vector<50x512xf32>
    %cst_84 = arith.constant dense<0.000000e+00> : vector<2x512xf32>
    %249 = tpu.matmul %246, %248, %cst_84 {dimension_numbers = #tpu.dot_dimension_numbers<[1], [0], [0], [1], [0, 0, 1, 1], [], []>} : vector<2x50xf32>, vector<50x512xf32>, vector<2x512xf32> -> vector<2x512xf32>
    %c16 = arith.constant 16 : index
    %c0_85 = arith.constant 0 : index
    %250 = vector.load %arg8[%c16, %c0_85] : memref<60x512xf32, #tpu.memory_space<vmem>>, vector<2x512xf32>
    %251 = arith.addf %249, %250 : vector<2x512xf32>
    %252 = vector.extract_strided_slice %251 {offsets = [0, 0], sizes = [2, 50], strides = [1, 1]} : vector<2x512xf32> to vector<2x50xf32>
    %253 = arith.negf %252 : vector<2x50xf32>
    %254 = math.exp %253 : vector<2x50xf32>
    %cst_86 = arith.constant 1.000000e+00 : f32
    %255 = vector.broadcast %cst_86 : f32 to vector<2x50xf32>
    %256 = arith.addf %255, %254 : vector<2x50xf32>
    %257 = arith.divf %255, %256 : vector<2x50xf32>
    %258 = vector.extract_strided_slice %251 {offsets = [0, 128], sizes = [2, 50], strides = [1, 1]} : vector<2x512xf32> to vector<2x50xf32>
    %259 = arith.negf %258 : vector<2x50xf32>
    %260 = math.exp %259 : vector<2x50xf32>
    %cst_87 = arith.constant 1.000000e+00 : f32
    %261 = vector.broadcast %cst_87 : f32 to vector<2x50xf32>
    %262 = arith.addf %261, %260 : vector<2x50xf32>
    %263 = arith.divf %261, %262 : vector<2x50xf32>
    %264 = vector.extract_strided_slice %251 {offsets = [0, 256], sizes = [2, 50], strides = [1, 1]} : vector<2x512xf32> to vector<2x50xf32>
    %265 = math.tanh %264 : vector<2x50xf32>
    %266 = vector.extract_strided_slice %251 {offsets = [0, 384], sizes = [2, 50], strides = [1, 1]} : vector<2x512xf32> to vector<2x50xf32>
    %267 = arith.negf %266 : vector<2x50xf32>
    %268 = math.exp %267 : vector<2x50xf32>
    %cst_88 = arith.constant 1.000000e+00 : f32
    %269 = vector.broadcast %cst_88 : f32 to vector<2x50xf32>
    %270 = arith.addf %269, %268 : vector<2x50xf32>
    %271 = arith.divf %269, %270 : vector<2x50xf32>
    %272 = arith.mulf %263, %244 : vector<2x50xf32>
    %273 = arith.mulf %257, %265 : vector<2x50xf32>
    %274 = arith.addf %272, %273 : vector<2x50xf32>
    %275 = math.tanh %274 : vector<2x50xf32>
    %276 = arith.mulf %271, %275 : vector<2x50xf32>
    %c16_89 = arith.constant 16 : index
    %c0_90 = arith.constant 0 : index
    %277 = vector.load %arg9[%c16_89, %c0_90] : memref<61x50xf32, #tpu.memory_space<vmem>>, vector<2x50xf32>
    tpu.vector_store %arg9[%c16_89, %c0_90], %276 {strides = array<i32>} : memref<61x50xf32, #tpu.memory_space<vmem>>, vector<2x50xf32>,
    %c0_91 = arith.constant 0 : index
    %c0_92 = arith.constant 0 : index
    %278 = vector.load %arg3[%c0_91, %c0_92] : memref<50x512xf32, #tpu.memory_space<vmem>>, vector<50x512xf32>
    %cst_93 = arith.constant dense<0.000000e+00> : vector<2x512xf32>
    %279 = tpu.matmul %276, %278, %cst_93 {dimension_numbers = #tpu.dot_dimension_numbers<[1], [0], [0], [1], [0, 0, 1, 1], [], []>} : vector<2x50xf32>, vector<50x512xf32>, vector<2x512xf32> -> vector<2x512xf32>
    %c18 = arith.constant 18 : index
    %c0_94 = arith.constant 0 : index
    %280 = vector.load %arg8[%c18, %c0_94] : memref<60x512xf32, #tpu.memory_space<vmem>>, vector<2x512xf32>
    %281 = arith.addf %279, %280 : vector<2x512xf32>
    %282 = vector.extract_strided_slice %281 {offsets = [0, 0], sizes = [2, 50], strides = [1, 1]} : vector<2x512xf32> to vector<2x50xf32>
    %283 = arith.negf %282 : vector<2x50xf32>
    %284 = math.exp %283 : vector<2x50xf32>
    %cst_95 = arith.constant 1.000000e+00 : f32
    %285 = vector.broadcast %cst_95 : f32 to vector<2x50xf32>
    %286 = arith.addf %285, %284 : vector<2x50xf32>
    %287 = arith.divf %285, %286 : vector<2x50xf32>
    %288 = vector.extract_strided_slice %281 {offsets = [0, 128], sizes = [2, 50], strides = [1, 1]} : vector<2x512xf32> to vector<2x50xf32>
    %289 = arith.negf %288 : vector<2x50xf32>
    %290 = math.exp %289 : vector<2x50xf32>
    %cst_96 = arith.constant 1.000000e+00 : f32
    %291 = vector.broadcast %cst_96 : f32 to vector<2x50xf32>
    %292 = arith.addf %291, %290 : vector<2x50xf32>
    %293 = arith.divf %291, %292 : vector<2x50xf32>
    %294 = vector.extract_strided_slice %281 {offsets = [0, 256], sizes = [2, 50], strides = [1, 1]} : vector<2x512xf32> to vector<2x50xf32>
    %295 = math.tanh %294 : vector<2x50xf32>
    %296 = vector.extract_strided_slice %281 {offsets = [0, 384], sizes = [2, 50], strides = [1, 1]} : vector<2x512xf32> to vector<2x50xf32>
    %297 = arith.negf %296 : vector<2x50xf32>
    %298 = math.exp %297 : vector<2x50xf32>
    %cst_97 = arith.constant 1.000000e+00 : f32
    %299 = vector.broadcast %cst_97 : f32 to vector<2x50xf32>
    %300 = arith.addf %299, %298 : vector<2x50xf32>
    %301 = arith.divf %299, %300 : vector<2x50xf32>
    %302 = arith.mulf %293, %274 : vector<2x50xf32>
    %303 = arith.mulf %287, %295 : vector<2x50xf32>
    %304 = arith.addf %302, %303 : vector<2x50xf32>
    %305 = math.tanh %304 : vector<2x50xf32>
    %306 = arith.mulf %301, %305 : vector<2x50xf32>
    %c18_98 = arith.constant 18 : index
    %c0_99 = arith.constant 0 : index
    %307 = vector.load %arg9[%c18_98, %c0_99] : memref<61x50xf32, #tpu.memory_space<vmem>>, vector<2x50xf32>
    tpu.vector_store %arg9[%c18_98, %c0_99], %306 {strides = array<i32>} : memref<61x50xf32, #tpu.memory_space<vmem>>, vector<2x50xf32>,
    %c0_100 = arith.constant 0 : index
    %c0_101 = arith.constant 0 : index
    %308 = vector.load %arg3[%c0_100, %c0_101] : memref<50x512xf32, #tpu.memory_space<vmem>>, vector<50x512xf32>
    %cst_102 = arith.constant dense<0.000000e+00> : vector<2x512xf32>
    %309 = tpu.matmul %306, %308, %cst_102 {dimension_numbers = #tpu.dot_dimension_numbers<[1], [0], [0], [1], [0, 0, 1, 1], [], []>} : vector<2x50xf32>, vector<50x512xf32>, vector<2x512xf32> -> vector<2x512xf32>
    %c20 = arith.constant 20 : index
    %c0_103 = arith.constant 0 : index
    %310 = vector.load %arg8[%c20, %c0_103] : memref<60x512xf32, #tpu.memory_space<vmem>>, vector<2x512xf32>
    %311 = arith.addf %309, %310 : vector<2x512xf32>
    %312 = vector.extract_strided_slice %311 {offsets = [0, 0], sizes = [2, 50], strides = [1, 1]} : vector<2x512xf32> to vector<2x50xf32>
    %313 = arith.negf %312 : vector<2x50xf32>
    %314 = math.exp %313 : vector<2x50xf32>
    %cst_104 = arith.constant 1.000000e+00 : f32
    %315 = vector.broadcast %cst_104 : f32 to vector<2x50xf32>
    %316 = arith.addf %315, %314 : vector<2x50xf32>
    %317 = arith.divf %315, %316 : vector<2x50xf32>
    %318 = vector.extract_strided_slice %311 {offsets = [0, 128], sizes = [2, 50], strides = [1, 1]} : vector<2x512xf32> to vector<2x50xf32>
    %319 = arith.negf %318 : vector<2x50xf32>
    %320 = math.exp %319 : vector<2x50xf32>
    %cst_105 = arith.constant 1.000000e+00 : f32
    %321 = vector.broadcast %cst_105 : f32 to vector<2x50xf32>
    %322 = arith.addf %321, %320 : vector<2x50xf32>
    %323 = arith.divf %321, %322 : vector<2x50xf32>
    %324 = vector.extract_strided_slice %311 {offsets = [0, 256], sizes = [2, 50], strides = [1, 1]} : vector<2x512xf32> to vector<2x50xf32>
    %325 = math.tanh %324 : vector<2x50xf32>
    %326 = vector.extract_strided_slice %311 {offsets = [0, 384], sizes = [2, 50], strides = [1, 1]} : vector<2x512xf32> to vector<2x50xf32>
    %327 = arith.negf %326 : vector<2x50xf32>
    %328 = math.exp %327 : vector<2x50xf32>
    %cst_106 = arith.constant 1.000000e+00 : f32
    %329 = vector.broadcast %cst_106 : f32 to vector<2x50xf32>
    %330 = arith.addf %329, %328 : vector<2x50xf32>
    %331 = arith.divf %329, %330 : vector<2x50xf32>
    %332 = arith.mulf %323, %304 : vector<2x50xf32>
    %333 = arith.mulf %317, %325 : vector<2x50xf32>
    %334 = arith.addf %332, %333 : vector<2x50xf32>
    %335 = math.tanh %334 : vector<2x50xf32>
    %336 = arith.mulf %331, %335 : vector<2x50xf32>
    %c20_107 = arith.constant 20 : index
    %c0_108 = arith.constant 0 : index
    %337 = vector.load %arg9[%c20_107, %c0_108] : memref<61x50xf32, #tpu.memory_space<vmem>>, vector<2x50xf32>
    tpu.vector_store %arg9[%c20_107, %c0_108], %336 {strides = array<i32>} : memref<61x50xf32, #tpu.memory_space<vmem>>, vector<2x50xf32>,
    %c0_109 = arith.constant 0 : index
    %c0_110 = arith.constant 0 : index
    %338 = vector.load %arg3[%c0_109, %c0_110] : memref<50x512xf32, #tpu.memory_space<vmem>>, vector<50x512xf32>
    %cst_111 = arith.constant dense<0.000000e+00> : vector<2x512xf32>
    %339 = tpu.matmul %336, %338, %cst_111 {dimension_numbers = #tpu.dot_dimension_numbers<[1], [0], [0], [1], [0, 0, 1, 1], [], []>} : vector<2x50xf32>, vector<50x512xf32>, vector<2x512xf32> -> vector<2x512xf32>
    %c22 = arith.constant 22 : index
    %c0_112 = arith.constant 0 : index
    %340 = vector.load %arg8[%c22, %c0_112] : memref<60x512xf32, #tpu.memory_space<vmem>>, vector<2x512xf32>
    %341 = arith.addf %339, %340 : vector<2x512xf32>
    %342 = vector.extract_strided_slice %341 {offsets = [0, 0], sizes = [2, 50], strides = [1, 1]} : vector<2x512xf32> to vector<2x50xf32>
    %343 = arith.negf %342 : vector<2x50xf32>
    %344 = math.exp %343 : vector<2x50xf32>
    %cst_113 = arith.constant 1.000000e+00 : f32
    %345 = vector.broadcast %cst_113 : f32 to vector<2x50xf32>
    %346 = arith.addf %345, %344 : vector<2x50xf32>
    %347 = arith.divf %345, %346 : vector<2x50xf32>
    %348 = vector.extract_strided_slice %341 {offsets = [0, 128], sizes = [2, 50], strides = [1, 1]} : vector<2x512xf32> to vector<2x50xf32>
    %349 = arith.negf %348 : vector<2x50xf32>
    %350 = math.exp %349 : vector<2x50xf32>
    %cst_114 = arith.constant 1.000000e+00 : f32
    %351 = vector.broadcast %cst_114 : f32 to vector<2x50xf32>
    %352 = arith.addf %351, %350 : vector<2x50xf32>
    %353 = arith.divf %351, %352 : vector<2x50xf32>
    %354 = vector.extract_strided_slice %341 {offsets = [0, 256], sizes = [2, 50], strides = [1, 1]} : vector<2x512xf32> to vector<2x50xf32>
    %355 = math.tanh %354 : vector<2x50xf32>
    %356 = vector.extract_strided_slice %341 {offsets = [0, 384], sizes = [2, 50], strides = [1, 1]} : vector<2x512xf32> to vector<2x50xf32>
    %357 = arith.negf %356 : vector<2x50xf32>
    %358 = math.exp %357 : vector<2x50xf32>
    %cst_115 = arith.constant 1.000000e+00 : f32
    %359 = vector.broadcast %cst_115 : f32 to vector<2x50xf32>
    %360 = arith.addf %359, %358 : vector<2x50xf32>
    %361 = arith.divf %359, %360 : vector<2x50xf32>
    %362 = arith.mulf %353, %334 : vector<2x50xf32>
    %363 = arith.mulf %347, %355 : vector<2x50xf32>
    %364 = arith.addf %362, %363 : vector<2x50xf32>
    %365 = math.tanh %364 : vector<2x50xf32>
    %366 = arith.mulf %361, %365 : vector<2x50xf32>
    %c22_116 = arith.constant 22 : index
    %c0_117 = arith.constant 0 : index
    %367 = vector.load %arg9[%c22_116, %c0_117] : memref<61x50xf32, #tpu.memory_space<vmem>>, vector<2x50xf32>
    tpu.vector_store %arg9[%c22_116, %c0_117], %366 {strides = array<i32>} : memref<61x50xf32, #tpu.memory_space<vmem>>, vector<2x50xf32>,
    %c0_118 = arith.constant 0 : index
    %c0_119 = arith.constant 0 : index
    %368 = vector.load %arg3[%c0_118, %c0_119] : memref<50x512xf32, #tpu.memory_space<vmem>>, vector<50x512xf32>
    %cst_120 = arith.constant dense<0.000000e+00> : vector<2x512xf32>
    %369 = tpu.matmul %366, %368, %cst_120 {dimension_numbers = #tpu.dot_dimension_numbers<[1], [0], [0], [1], [0, 0, 1, 1], [], []>} : vector<2x50xf32>, vector<50x512xf32>, vector<2x512xf32> -> vector<2x512xf32>
    %c24 = arith.constant 24 : index
    %c0_121 = arith.constant 0 : index
    %370 = vector.load %arg8[%c24, %c0_121] : memref<60x512xf32, #tpu.memory_space<vmem>>, vector<2x512xf32>
    %371 = arith.addf %369, %370 : vector<2x512xf32>
    %372 = vector.extract_strided_slice %371 {offsets = [0, 0], sizes = [2, 50], strides = [1, 1]} : vector<2x512xf32> to vector<2x50xf32>
    %373 = arith.negf %372 : vector<2x50xf32>
    %374 = math.exp %373 : vector<2x50xf32>
    %cst_122 = arith.constant 1.000000e+00 : f32
    %375 = vector.broadcast %cst_122 : f32 to vector<2x50xf32>
    %376 = arith.addf %375, %374 : vector<2x50xf32>
    %377 = arith.divf %375, %376 : vector<2x50xf32>
    %378 = vector.extract_strided_slice %371 {offsets = [0, 128], sizes = [2, 50], strides = [1, 1]} : vector<2x512xf32> to vector<2x50xf32>
    %379 = arith.negf %378 : vector<2x50xf32>
    %380 = math.exp %379 : vector<2x50xf32>
    %cst_123 = arith.constant 1.000000e+00 : f32
    %381 = vector.broadcast %cst_123 : f32 to vector<2x50xf32>
    %382 = arith.addf %381, %380 : vector<2x50xf32>
    %383 = arith.divf %381, %382 : vector<2x50xf32>
    %384 = vector.extract_strided_slice %371 {offsets = [0, 256], sizes = [2, 50], strides = [1, 1]} : vector<2x512xf32> to vector<2x50xf32>
    %385 = math.tanh %384 : vector<2x50xf32>
    %386 = vector.extract_strided_slice %371 {offsets = [0, 384], sizes = [2, 50], strides = [1, 1]} : vector<2x512xf32> to vector<2x50xf32>
    %387 = arith.negf %386 : vector<2x50xf32>
    %388 = math.exp %387 : vector<2x50xf32>
    %cst_124 = arith.constant 1.000000e+00 : f32
    %389 = vector.broadcast %cst_124 : f32 to vector<2x50xf32>
    %390 = arith.addf %389, %388 : vector<2x50xf32>
    %391 = arith.divf %389, %390 : vector<2x50xf32>
    %392 = arith.mulf %383, %364 : vector<2x50xf32>
    %393 = arith.mulf %377, %385 : vector<2x50xf32>
    %394 = arith.addf %392, %393 : vector<2x50xf32>
    %395 = math.tanh %394 : vector<2x50xf32>
    %396 = arith.mulf %391, %395 : vector<2x50xf32>
    %c24_125 = arith.constant 24 : index
    %c0_126 = arith.constant 0 : index
    %397 = vector.load %arg9[%c24_125, %c0_126] : memref<61x50xf32, #tpu.memory_space<vmem>>, vector<2x50xf32>
    tpu.vector_store %arg9[%c24_125, %c0_126], %396 {strides = array<i32>} : memref<61x50xf32, #tpu.memory_space<vmem>>, vector<2x50xf32>,
    %c0_127 = arith.constant 0 : index
    %c0_128 = arith.constant 0 : index
    %398 = vector.load %arg3[%c0_127, %c0_128] : memref<50x512xf32, #tpu.memory_space<vmem>>, vector<50x512xf32>
    %cst_129 = arith.constant dense<0.000000e+00> : vector<2x512xf32>
    %399 = tpu.matmul %396, %398, %cst_129 {dimension_numbers = #tpu.dot_dimension_numbers<[1], [0], [0], [1], [0, 0, 1, 1], [], []>} : vector<2x50xf32>, vector<50x512xf32>, vector<2x512xf32> -> vector<2x512xf32>
    %c26 = arith.constant 26 : index
    %c0_130 = arith.constant 0 : index
    %400 = vector.load %arg8[%c26, %c0_130] : memref<60x512xf32, #tpu.memory_space<vmem>>, vector<2x512xf32>
    %401 = arith.addf %399, %400 : vector<2x512xf32>
    %402 = vector.extract_strided_slice %401 {offsets = [0, 0], sizes = [2, 50], strides = [1, 1]} : vector<2x512xf32> to vector<2x50xf32>
    %403 = arith.negf %402 : vector<2x50xf32>
    %404 = math.exp %403 : vector<2x50xf32>
    %cst_131 = arith.constant 1.000000e+00 : f32
    %405 = vector.broadcast %cst_131 : f32 to vector<2x50xf32>
    %406 = arith.addf %405, %404 : vector<2x50xf32>
    %407 = arith.divf %405, %406 : vector<2x50xf32>
    %408 = vector.extract_strided_slice %401 {offsets = [0, 128], sizes = [2, 50], strides = [1, 1]} : vector<2x512xf32> to vector<2x50xf32>
    %409 = arith.negf %408 : vector<2x50xf32>
    %410 = math.exp %409 : vector<2x50xf32>
    %cst_132 = arith.constant 1.000000e+00 : f32
    %411 = vector.broadcast %cst_132 : f32 to vector<2x50xf32>
    %412 = arith.addf %411, %410 : vector<2x50xf32>
    %413 = arith.divf %411, %412 : vector<2x50xf32>
    %414 = vector.extract_strided_slice %401 {offsets = [0, 256], sizes = [2, 50], strides = [1, 1]} : vector<2x512xf32> to vector<2x50xf32>
    %415 = math.tanh %414 : vector<2x50xf32>
    %416 = vector.extract_strided_slice %401 {offsets = [0, 384], sizes = [2, 50], strides = [1, 1]} : vector<2x512xf32> to vector<2x50xf32>
    %417 = arith.negf %416 : vector<2x50xf32>
    %418 = math.exp %417 : vector<2x50xf32>
    %cst_133 = arith.constant 1.000000e+00 : f32
    %419 = vector.broadcast %cst_133 : f32 to vector<2x50xf32>
    %420 = arith.addf %419, %418 : vector<2x50xf32>
    %421 = arith.divf %419, %420 : vector<2x50xf32>
    %422 = arith.mulf %413, %394 : vector<2x50xf32>
    %423 = arith.mulf %407, %415 : vector<2x50xf32>
    %424 = arith.addf %422, %423 : vector<2x50xf32>
    %425 = math.tanh %424 : vector<2x50xf32>
    %426 = arith.mulf %421, %425 : vector<2x50xf32>
    %c26_134 = arith.constant 26 : index
    %c0_135 = arith.constant 0 : index
    %427 = vector.load %arg9[%c26_134, %c0_135] : memref<61x50xf32, #tpu.memory_space<vmem>>, vector<2x50xf32>
    tpu.vector_store %arg9[%c26_134, %c0_135], %426 {strides = array<i32>} : memref<61x50xf32, #tpu.memory_space<vmem>>, vector<2x50xf32>,
    %c0_136 = arith.constant 0 : index
    %c0_137 = arith.constant 0 : index
    %428 = vector.load %arg3[%c0_136, %c0_137] : memref<50x512xf32, #tpu.memory_space<vmem>>, vector<50x512xf32>
    %cst_138 = arith.constant dense<0.000000e+00> : vector<2x512xf32>
    %429 = tpu.matmul %426, %428, %cst_138 {dimension_numbers = #tpu.dot_dimension_numbers<[1], [0], [0], [1], [0, 0, 1, 1], [], []>} : vector<2x50xf32>, vector<50x512xf32>, vector<2x512xf32> -> vector<2x512xf32>
    %c28 = arith.constant 28 : index
    %c0_139 = arith.constant 0 : index
    %430 = vector.load %arg8[%c28, %c0_139] : memref<60x512xf32, #tpu.memory_space<vmem>>, vector<2x512xf32>
    %431 = arith.addf %429, %430 : vector<2x512xf32>
    %432 = vector.extract_strided_slice %431 {offsets = [0, 0], sizes = [2, 50], strides = [1, 1]} : vector<2x512xf32> to vector<2x50xf32>
    %433 = arith.negf %432 : vector<2x50xf32>
    %434 = math.exp %433 : vector<2x50xf32>
    %cst_140 = arith.constant 1.000000e+00 : f32
    %435 = vector.broadcast %cst_140 : f32 to vector<2x50xf32>
    %436 = arith.addf %435, %434 : vector<2x50xf32>
    %437 = arith.divf %435, %436 : vector<2x50xf32>
    %438 = vector.extract_strided_slice %431 {offsets = [0, 128], sizes = [2, 50], strides = [1, 1]} : vector<2x512xf32> to vector<2x50xf32>
    %439 = arith.negf %438 : vector<2x50xf32>
    %440 = math.exp %439 : vector<2x50xf32>
    %cst_141 = arith.constant 1.000000e+00 : f32
    %441 = vector.broadcast %cst_141 : f32 to vector<2x50xf32>
    %442 = arith.addf %441, %440 : vector<2x50xf32>
    %443 = arith.divf %441, %442 : vector<2x50xf32>
    %444 = vector.extract_strided_slice %431 {offsets = [0, 256], sizes = [2, 50], strides = [1, 1]} : vector<2x512xf32> to vector<2x50xf32>
    %445 = math.tanh %444 : vector<2x50xf32>
    %446 = vector.extract_strided_slice %431 {offsets = [0, 384], sizes = [2, 50], strides = [1, 1]} : vector<2x512xf32> to vector<2x50xf32>
    %447 = arith.negf %446 : vector<2x50xf32>
    %448 = math.exp %447 : vector<2x50xf32>
    %cst_142 = arith.constant 1.000000e+00 : f32
    %449 = vector.broadcast %cst_142 : f32 to vector<2x50xf32>
    %450 = arith.addf %449, %448 : vector<2x50xf32>
    %451 = arith.divf %449, %450 : vector<2x50xf32>
    %452 = arith.mulf %443, %424 : vector<2x50xf32>
    %453 = arith.mulf %437, %445 : vector<2x50xf32>
    %454 = arith.addf %452, %453 : vector<2x50xf32>
    %455 = math.tanh %454 : vector<2x50xf32>
    %456 = arith.mulf %451, %455 : vector<2x50xf32>
    %c28_143 = arith.constant 28 : index
    %c0_144 = arith.constant 0 : index
    %457 = vector.load %arg9[%c28_143, %c0_144] : memref<61x50xf32, #tpu.memory_space<vmem>>, vector<2x50xf32>
    tpu.vector_store %arg9[%c28_143, %c0_144], %456 {strides = array<i32>} : memref<61x50xf32, #tpu.memory_space<vmem>>, vector<2x50xf32>,
    %c0_145 = arith.constant 0 : index
    %c0_146 = arith.constant 0 : index
    %458 = vector.load %arg3[%c0_145, %c0_146] : memref<50x512xf32, #tpu.memory_space<vmem>>, vector<50x512xf32>
    %cst_147 = arith.constant dense<0.000000e+00> : vector<2x512xf32>
    %459 = tpu.matmul %456, %458, %cst_147 {dimension_numbers = #tpu.dot_dimension_numbers<[1], [0], [0], [1], [0, 0, 1, 1], [], []>} : vector<2x50xf32>, vector<50x512xf32>, vector<2x512xf32> -> vector<2x512xf32>
    %c30 = arith.constant 30 : index
    %c0_148 = arith.constant 0 : index
    %460 = vector.load %arg8[%c30, %c0_148] : memref<60x512xf32, #tpu.memory_space<vmem>>, vector<2x512xf32>
    %461 = arith.addf %459, %460 : vector<2x512xf32>
    %462 = vector.extract_strided_slice %461 {offsets = [0, 0], sizes = [2, 50], strides = [1, 1]} : vector<2x512xf32> to vector<2x50xf32>
    %463 = arith.negf %462 : vector<2x50xf32>
    %464 = math.exp %463 : vector<2x50xf32>
    %cst_149 = arith.constant 1.000000e+00 : f32
    %465 = vector.broadcast %cst_149 : f32 to vector<2x50xf32>
    %466 = arith.addf %465, %464 : vector<2x50xf32>
    %467 = arith.divf %465, %466 : vector<2x50xf32>
    %468 = vector.extract_strided_slice %461 {offsets = [0, 128], sizes = [2, 50], strides = [1, 1]} : vector<2x512xf32> to vector<2x50xf32>
    %469 = arith.negf %468 : vector<2x50xf32>
    %470 = math.exp %469 : vector<2x50xf32>
    %cst_150 = arith.constant 1.000000e+00 : f32
    %471 = vector.broadcast %cst_150 : f32 to vector<2x50xf32>
    %472 = arith.addf %471, %470 : vector<2x50xf32>
    %473 = arith.divf %471, %472 : vector<2x50xf32>
    %474 = vector.extract_strided_slice %461 {offsets = [0, 256], sizes = [2, 50], strides = [1, 1]} : vector<2x512xf32> to vector<2x50xf32>
    %475 = math.tanh %474 : vector<2x50xf32>
    %476 = vector.extract_strided_slice %461 {offsets = [0, 384], sizes = [2, 50], strides = [1, 1]} : vector<2x512xf32> to vector<2x50xf32>
    %477 = arith.negf %476 : vector<2x50xf32>
    %478 = math.exp %477 : vector<2x50xf32>
    %cst_151 = arith.constant 1.000000e+00 : f32
    %479 = vector.broadcast %cst_151 : f32 to vector<2x50xf32>
    %480 = arith.addf %479, %478 : vector<2x50xf32>
    %481 = arith.divf %479, %480 : vector<2x50xf32>
    %482 = arith.mulf %473, %454 : vector<2x50xf32>
    %483 = arith.mulf %467, %475 : vector<2x50xf32>
    %484 = arith.addf %482, %483 : vector<2x50xf32>
    %485 = math.tanh %484 : vector<2x50xf32>
    %486 = arith.mulf %481, %485 : vector<2x50xf32>
    %c30_152 = arith.constant 30 : index
    %c0_153 = arith.constant 0 : index
    %487 = vector.load %arg9[%c30_152, %c0_153] : memref<61x50xf32, #tpu.memory_space<vmem>>, vector<2x50xf32>
    tpu.vector_store %arg9[%c30_152, %c0_153], %486 {strides = array<i32>} : memref<61x50xf32, #tpu.memory_space<vmem>>, vector<2x50xf32>,
    %c0_154 = arith.constant 0 : index
    %c0_155 = arith.constant 0 : index
    %488 = vector.load %arg3[%c0_154, %c0_155] : memref<50x512xf32, #tpu.memory_space<vmem>>, vector<50x512xf32>
    %cst_156 = arith.constant dense<0.000000e+00> : vector<2x512xf32>
    %489 = tpu.matmul %486, %488, %cst_156 {dimension_numbers = #tpu.dot_dimension_numbers<[1], [0], [0], [1], [0, 0, 1, 1], [], []>} : vector<2x50xf32>, vector<50x512xf32>, vector<2x512xf32> -> vector<2x512xf32>
    %c32 = arith.constant 32 : index
    %c0_157 = arith.constant 0 : index
    %490 = vector.load %arg8[%c32, %c0_157] : memref<60x512xf32, #tpu.memory_space<vmem>>, vector<2x512xf32>
    %491 = arith.addf %489, %490 : vector<2x512xf32>
    %492 = vector.extract_strided_slice %491 {offsets = [0, 0], sizes = [2, 50], strides = [1, 1]} : vector<2x512xf32> to vector<2x50xf32>
    %493 = arith.negf %492 : vector<2x50xf32>
    %494 = math.exp %493 : vector<2x50xf32>
    %cst_158 = arith.constant 1.000000e+00 : f32
    %495 = vector.broadcast %cst_158 : f32 to vector<2x50xf32>
    %496 = arith.addf %495, %494 : vector<2x50xf32>
    %497 = arith.divf %495, %496 : vector<2x50xf32>
    %498 = vector.extract_strided_slice %491 {offsets = [0, 128], sizes = [2, 50], strides = [1, 1]} : vector<2x512xf32> to vector<2x50xf32>
    %499 = arith.negf %498 : vector<2x50xf32>
    %500 = math.exp %499 : vector<2x50xf32>
    %cst_159 = arith.constant 1.000000e+00 : f32
    %501 = vector.broadcast %cst_159 : f32 to vector<2x50xf32>
    %502 = arith.addf %501, %500 : vector<2x50xf32>
    %503 = arith.divf %501, %502 : vector<2x50xf32>
    %504 = vector.extract_strided_slice %491 {offsets = [0, 256], sizes = [2, 50], strides = [1, 1]} : vector<2x512xf32> to vector<2x50xf32>
    %505 = math.tanh %504 : vector<2x50xf32>
    %506 = vector.extract_strided_slice %491 {offsets = [0, 384], sizes = [2, 50], strides = [1, 1]} : vector<2x512xf32> to vector<2x50xf32>
    %507 = arith.negf %506 : vector<2x50xf32>
    %508 = math.exp %507 : vector<2x50xf32>
    %cst_160 = arith.constant 1.000000e+00 : f32
    %509 = vector.broadcast %cst_160 : f32 to vector<2x50xf32>
    %510 = arith.addf %509, %508 : vector<2x50xf32>
    %511 = arith.divf %509, %510 : vector<2x50xf32>
    %512 = arith.mulf %503, %484 : vector<2x50xf32>
    %513 = arith.mulf %497, %505 : vector<2x50xf32>
    %514 = arith.addf %512, %513 : vector<2x50xf32>
    %515 = math.tanh %514 : vector<2x50xf32>
    %516 = arith.mulf %511, %515 : vector<2x50xf32>
    %c32_161 = arith.constant 32 : index
    %c0_162 = arith.constant 0 : index
    %517 = vector.load %arg9[%c32_161, %c0_162] : memref<61x50xf32, #tpu.memory_space<vmem>>, vector<2x50xf32>
    tpu.vector_store %arg9[%c32_161, %c0_162], %516 {strides = array<i32>} : memref<61x50xf32, #tpu.memory_space<vmem>>, vector<2x50xf32>,
    %c0_163 = arith.constant 0 : index
    %c0_164 = arith.constant 0 : index
    %518 = vector.load %arg3[%c0_163, %c0_164] : memref<50x512xf32, #tpu.memory_space<vmem>>, vector<50x512xf32>
    %cst_165 = arith.constant dense<0.000000e+00> : vector<2x512xf32>
    %519 = tpu.matmul %516, %518, %cst_165 {dimension_numbers = #tpu.dot_dimension_numbers<[1], [0], [0], [1], [0, 0, 1, 1], [], []>} : vector<2x50xf32>, vector<50x512xf32>, vector<2x512xf32> -> vector<2x512xf32>
    %c34 = arith.constant 34 : index
    %c0_166 = arith.constant 0 : index
    %520 = vector.load %arg8[%c34, %c0_166] : memref<60x512xf32, #tpu.memory_space<vmem>>, vector<2x512xf32>
    %521 = arith.addf %519, %520 : vector<2x512xf32>
    %522 = vector.extract_strided_slice %521 {offsets = [0, 0], sizes = [2, 50], strides = [1, 1]} : vector<2x512xf32> to vector<2x50xf32>
    %523 = arith.negf %522 : vector<2x50xf32>
    %524 = math.exp %523 : vector<2x50xf32>
    %cst_167 = arith.constant 1.000000e+00 : f32
    %525 = vector.broadcast %cst_167 : f32 to vector<2x50xf32>
    %526 = arith.addf %525, %524 : vector<2x50xf32>
    %527 = arith.divf %525, %526 : vector<2x50xf32>
    %528 = vector.extract_strided_slice %521 {offsets = [0, 128], sizes = [2, 50], strides = [1, 1]} : vector<2x512xf32> to vector<2x50xf32>
    %529 = arith.negf %528 : vector<2x50xf32>
    %530 = math.exp %529 : vector<2x50xf32>
    %cst_168 = arith.constant 1.000000e+00 : f32
    %531 = vector.broadcast %cst_168 : f32 to vector<2x50xf32>
    %532 = arith.addf %531, %530 : vector<2x50xf32>
    %533 = arith.divf %531, %532 : vector<2x50xf32>
    %534 = vector.extract_strided_slice %521 {offsets = [0, 256], sizes = [2, 50], strides = [1, 1]} : vector<2x512xf32> to vector<2x50xf32>
    %535 = math.tanh %534 : vector<2x50xf32>
    %536 = vector.extract_strided_slice %521 {offsets = [0, 384], sizes = [2, 50], strides = [1, 1]} : vector<2x512xf32> to vector<2x50xf32>
    %537 = arith.negf %536 : vector<2x50xf32>
    %538 = math.exp %537 : vector<2x50xf32>
    %cst_169 = arith.constant 1.000000e+00 : f32
    %539 = vector.broadcast %cst_169 : f32 to vector<2x50xf32>
    %540 = arith.addf %539, %538 : vector<2x50xf32>
    %541 = arith.divf %539, %540 : vector<2x50xf32>
    %542 = arith.mulf %533, %514 : vector<2x50xf32>
    %543 = arith.mulf %527, %535 : vector<2x50xf32>
    %544 = arith.addf %542, %543 : vector<2x50xf32>
    %545 = math.tanh %544 : vector<2x50xf32>
    %546 = arith.mulf %541, %545 : vector<2x50xf32>
    %c34_170 = arith.constant 34 : index
    %c0_171 = arith.constant 0 : index
    %547 = vector.load %arg9[%c34_170, %c0_171] : memref<61x50xf32, #tpu.memory_space<vmem>>, vector<2x50xf32>
    tpu.vector_store %arg9[%c34_170, %c0_171], %546 {strides = array<i32>} : memref<61x50xf32, #tpu.memory_space<vmem>>, vector<2x50xf32>,
    %c0_172 = arith.constant 0 : index
    %c0_173 = arith.constant 0 : index
    %548 = vector.load %arg3[%c0_172, %c0_173] : memref<50x512xf32, #tpu.memory_space<vmem>>, vector<50x512xf32>
    %cst_174 = arith.constant dense<0.000000e+00> : vector<2x512xf32>
    %549 = tpu.matmul %546, %548, %cst_174 {dimension_numbers = #tpu.dot_dimension_numbers<[1], [0], [0], [1], [0, 0, 1, 1], [], []>} : vector<2x50xf32>, vector<50x512xf32>, vector<2x512xf32> -> vector<2x512xf32>
    %c36 = arith.constant 36 : index
    %c0_175 = arith.constant 0 : index
    %550 = vector.load %arg8[%c36, %c0_175] : memref<60x512xf32, #tpu.memory_space<vmem>>, vector<2x512xf32>
    %551 = arith.addf %549, %550 : vector<2x512xf32>
    %552 = vector.extract_strided_slice %551 {offsets = [0, 0], sizes = [2, 50], strides = [1, 1]} : vector<2x512xf32> to vector<2x50xf32>
    %553 = arith.negf %552 : vector<2x50xf32>
    %554 = math.exp %553 : vector<2x50xf32>
    %cst_176 = arith.constant 1.000000e+00 : f32
    %555 = vector.broadcast %cst_176 : f32 to vector<2x50xf32>
    %556 = arith.addf %555, %554 : vector<2x50xf32>
    %557 = arith.divf %555, %556 : vector<2x50xf32>
    %558 = vector.extract_strided_slice %551 {offsets = [0, 128], sizes = [2, 50], strides = [1, 1]} : vector<2x512xf32> to vector<2x50xf32>
    %559 = arith.negf %558 : vector<2x50xf32>
    %560 = math.exp %559 : vector<2x50xf32>
    %cst_177 = arith.constant 1.000000e+00 : f32
    %561 = vector.broadcast %cst_177 : f32 to vector<2x50xf32>
    %562 = arith.addf %561, %560 : vector<2x50xf32>
    %563 = arith.divf %561, %562 : vector<2x50xf32>
    %564 = vector.extract_strided_slice %551 {offsets = [0, 256], sizes = [2, 50], strides = [1, 1]} : vector<2x512xf32> to vector<2x50xf32>
    %565 = math.tanh %564 : vector<2x50xf32>
    %566 = vector.extract_strided_slice %551 {offsets = [0, 384], sizes = [2, 50], strides = [1, 1]} : vector<2x512xf32> to vector<2x50xf32>
    %567 = arith.negf %566 : vector<2x50xf32>
    %568 = math.exp %567 : vector<2x50xf32>
    %cst_178 = arith.constant 1.000000e+00 : f32
    %569 = vector.broadcast %cst_178 : f32 to vector<2x50xf32>
    %570 = arith.addf %569, %568 : vector<2x50xf32>
    %571 = arith.divf %569, %570 : vector<2x50xf32>
    %572 = arith.mulf %563, %544 : vector<2x50xf32>
    %573 = arith.mulf %557, %565 : vector<2x50xf32>
    %574 = arith.addf %572, %573 : vector<2x50xf32>
    %575 = math.tanh %574 : vector<2x50xf32>
    %576 = arith.mulf %571, %575 : vector<2x50xf32>
    %c36_179 = arith.constant 36 : index
    %c0_180 = arith.constant 0 : index
    %577 = vector.load %arg9[%c36_179, %c0_180] : memref<61x50xf32, #tpu.memory_space<vmem>>, vector<2x50xf32>
    tpu.vector_store %arg9[%c36_179, %c0_180], %576 {strides = array<i32>} : memref<61x50xf32, #tpu.memory_space<vmem>>, vector<2x50xf32>,
    %c0_181 = arith.constant 0 : index
    %c0_182 = arith.constant 0 : index
    %578 = vector.load %arg3[%c0_181, %c0_182] : memref<50x512xf32, #tpu.memory_space<vmem>>, vector<50x512xf32>
    %cst_183 = arith.constant dense<0.000000e+00> : vector<2x512xf32>
    %579 = tpu.matmul %576, %578, %cst_183 {dimension_numbers = #tpu.dot_dimension_numbers<[1], [0], [0], [1], [0, 0, 1, 1], [], []>} : vector<2x50xf32>, vector<50x512xf32>, vector<2x512xf32> -> vector<2x512xf32>
    %c38 = arith.constant 38 : index
    %c0_184 = arith.constant 0 : index
    %580 = vector.load %arg8[%c38, %c0_184] : memref<60x512xf32, #tpu.memory_space<vmem>>, vector<2x512xf32>
    %581 = arith.addf %579, %580 : vector<2x512xf32>
    %582 = vector.extract_strided_slice %581 {offsets = [0, 0], sizes = [2, 50], strides = [1, 1]} : vector<2x512xf32> to vector<2x50xf32>
    %583 = arith.negf %582 : vector<2x50xf32>
    %584 = math.exp %583 : vector<2x50xf32>
    %cst_185 = arith.constant 1.000000e+00 : f32
    %585 = vector.broadcast %cst_185 : f32 to vector<2x50xf32>
    %586 = arith.addf %585, %584 : vector<2x50xf32>
    %587 = arith.divf %585, %586 : vector<2x50xf32>
    %588 = vector.extract_strided_slice %581 {offsets = [0, 128], sizes = [2, 50], strides = [1, 1]} : vector<2x512xf32> to vector<2x50xf32>
    %589 = arith.negf %588 : vector<2x50xf32>
    %590 = math.exp %589 : vector<2x50xf32>
    %cst_186 = arith.constant 1.000000e+00 : f32
    %591 = vector.broadcast %cst_186 : f32 to vector<2x50xf32>
    %592 = arith.addf %591, %590 : vector<2x50xf32>
    %593 = arith.divf %591, %592 : vector<2x50xf32>
    %594 = vector.extract_strided_slice %581 {offsets = [0, 256], sizes = [2, 50], strides = [1, 1]} : vector<2x512xf32> to vector<2x50xf32>
    %595 = math.tanh %594 : vector<2x50xf32>
    %596 = vector.extract_strided_slice %581 {offsets = [0, 384], sizes = [2, 50], strides = [1, 1]} : vector<2x512xf32> to vector<2x50xf32>
    %597 = arith.negf %596 : vector<2x50xf32>
    %598 = math.exp %597 : vector<2x50xf32>
    %cst_187 = arith.constant 1.000000e+00 : f32
    %599 = vector.broadcast %cst_187 : f32 to vector<2x50xf32>
    %600 = arith.addf %599, %598 : vector<2x50xf32>
    %601 = arith.divf %599, %600 : vector<2x50xf32>
    %602 = arith.mulf %593, %574 : vector<2x50xf32>
    %603 = arith.mulf %587, %595 : vector<2x50xf32>
    %604 = arith.addf %602, %603 : vector<2x50xf32>
    %605 = math.tanh %604 : vector<2x50xf32>
    %606 = arith.mulf %601, %605 : vector<2x50xf32>
    %c38_188 = arith.constant 38 : index
    %c0_189 = arith.constant 0 : index
    %607 = vector.load %arg9[%c38_188, %c0_189] : memref<61x50xf32, #tpu.memory_space<vmem>>, vector<2x50xf32>
    tpu.vector_store %arg9[%c38_188, %c0_189], %606 {strides = array<i32>} : memref<61x50xf32, #tpu.memory_space<vmem>>, vector<2x50xf32>,
    %c0_190 = arith.constant 0 : index
    %c0_191 = arith.constant 0 : index
    %608 = vector.load %arg3[%c0_190, %c0_191] : memref<50x512xf32, #tpu.memory_space<vmem>>, vector<50x512xf32>
    %cst_192 = arith.constant dense<0.000000e+00> : vector<2x512xf32>
    %609 = tpu.matmul %606, %608, %cst_192 {dimension_numbers = #tpu.dot_dimension_numbers<[1], [0], [0], [1], [0, 0, 1, 1], [], []>} : vector<2x50xf32>, vector<50x512xf32>, vector<2x512xf32> -> vector<2x512xf32>
    %c40 = arith.constant 40 : index
    %c0_193 = arith.constant 0 : index
    %610 = vector.load %arg8[%c40, %c0_193] : memref<60x512xf32, #tpu.memory_space<vmem>>, vector<2x512xf32>
    %611 = arith.addf %609, %610 : vector<2x512xf32>
    %612 = vector.extract_strided_slice %611 {offsets = [0, 0], sizes = [2, 50], strides = [1, 1]} : vector<2x512xf32> to vector<2x50xf32>
    %613 = arith.negf %612 : vector<2x50xf32>
    %614 = math.exp %613 : vector<2x50xf32>
    %cst_194 = arith.constant 1.000000e+00 : f32
    %615 = vector.broadcast %cst_194 : f32 to vector<2x50xf32>
    %616 = arith.addf %615, %614 : vector<2x50xf32>
    %617 = arith.divf %615, %616 : vector<2x50xf32>
    %618 = vector.extract_strided_slice %611 {offsets = [0, 128], sizes = [2, 50], strides = [1, 1]} : vector<2x512xf32> to vector<2x50xf32>
    %619 = arith.negf %618 : vector<2x50xf32>
    %620 = math.exp %619 : vector<2x50xf32>
    %cst_195 = arith.constant 1.000000e+00 : f32
    %621 = vector.broadcast %cst_195 : f32 to vector<2x50xf32>
    %622 = arith.addf %621, %620 : vector<2x50xf32>
    %623 = arith.divf %621, %622 : vector<2x50xf32>
    %624 = vector.extract_strided_slice %611 {offsets = [0, 256], sizes = [2, 50], strides = [1, 1]} : vector<2x512xf32> to vector<2x50xf32>
    %625 = math.tanh %624 : vector<2x50xf32>
    %626 = vector.extract_strided_slice %611 {offsets = [0, 384], sizes = [2, 50], strides = [1, 1]} : vector<2x512xf32> to vector<2x50xf32>
    %627 = arith.negf %626 : vector<2x50xf32>
    %628 = math.exp %627 : vector<2x50xf32>
    %cst_196 = arith.constant 1.000000e+00 : f32
    %629 = vector.broadcast %cst_196 : f32 to vector<2x50xf32>
    %630 = arith.addf %629, %628 : vector<2x50xf32>
    %631 = arith.divf %629, %630 : vector<2x50xf32>
    %632 = arith.mulf %623, %604 : vector<2x50xf32>
    %633 = arith.mulf %617, %625 : vector<2x50xf32>
    %634 = arith.addf %632, %633 : vector<2x50xf32>
    %635 = math.tanh %634 : vector<2x50xf32>
    %636 = arith.mulf %631, %635 : vector<2x50xf32>
    %c40_197 = arith.constant 40 : index
    %c0_198 = arith.constant 0 : index
    %637 = vector.load %arg9[%c40_197, %c0_198] : memref<61x50xf32, #tpu.memory_space<vmem>>, vector<2x50xf32>
    tpu.vector_store %arg9[%c40_197, %c0_198], %636 {strides = array<i32>} : memref<61x50xf32, #tpu.memory_space<vmem>>, vector<2x50xf32>,
    %c0_199 = arith.constant 0 : index
    %c0_200 = arith.constant 0 : index
    %638 = vector.load %arg3[%c0_199, %c0_200] : memref<50x512xf32, #tpu.memory_space<vmem>>, vector<50x512xf32>
    %cst_201 = arith.constant dense<0.000000e+00> : vector<2x512xf32>
    %639 = tpu.matmul %636, %638, %cst_201 {dimension_numbers = #tpu.dot_dimension_numbers<[1], [0], [0], [1], [0, 0, 1, 1], [], []>} : vector<2x50xf32>, vector<50x512xf32>, vector<2x512xf32> -> vector<2x512xf32>
    %c42 = arith.constant 42 : index
    %c0_202 = arith.constant 0 : index
    %640 = vector.load %arg8[%c42, %c0_202] : memref<60x512xf32, #tpu.memory_space<vmem>>, vector<2x512xf32>
    %641 = arith.addf %639, %640 : vector<2x512xf32>
    %642 = vector.extract_strided_slice %641 {offsets = [0, 0], sizes = [2, 50], strides = [1, 1]} : vector<2x512xf32> to vector<2x50xf32>
    %643 = arith.negf %642 : vector<2x50xf32>
    %644 = math.exp %643 : vector<2x50xf32>
    %cst_203 = arith.constant 1.000000e+00 : f32
    %645 = vector.broadcast %cst_203 : f32 to vector<2x50xf32>
    %646 = arith.addf %645, %644 : vector<2x50xf32>
    %647 = arith.divf %645, %646 : vector<2x50xf32>
    %648 = vector.extract_strided_slice %641 {offsets = [0, 128], sizes = [2, 50], strides = [1, 1]} : vector<2x512xf32> to vector<2x50xf32>
    %649 = arith.negf %648 : vector<2x50xf32>
    %650 = math.exp %649 : vector<2x50xf32>
    %cst_204 = arith.constant 1.000000e+00 : f32
    %651 = vector.broadcast %cst_204 : f32 to vector<2x50xf32>
    %652 = arith.addf %651, %650 : vector<2x50xf32>
    %653 = arith.divf %651, %652 : vector<2x50xf32>
    %654 = vector.extract_strided_slice %641 {offsets = [0, 256], sizes = [2, 50], strides = [1, 1]} : vector<2x512xf32> to vector<2x50xf32>
    %655 = math.tanh %654 : vector<2x50xf32>
    %656 = vector.extract_strided_slice %641 {offsets = [0, 384], sizes = [2, 50], strides = [1, 1]} : vector<2x512xf32> to vector<2x50xf32>
    %657 = arith.negf %656 : vector<2x50xf32>
    %658 = math.exp %657 : vector<2x50xf32>
    %cst_205 = arith.constant 1.000000e+00 : f32
    %659 = vector.broadcast %cst_205 : f32 to vector<2x50xf32>
    %660 = arith.addf %659, %658 : vector<2x50xf32>
    %661 = arith.divf %659, %660 : vector<2x50xf32>
    %662 = arith.mulf %653, %634 : vector<2x50xf32>
    %663 = arith.mulf %647, %655 : vector<2x50xf32>
    %664 = arith.addf %662, %663 : vector<2x50xf32>
    %665 = math.tanh %664 : vector<2x50xf32>
    %666 = arith.mulf %661, %665 : vector<2x50xf32>
    %c42_206 = arith.constant 42 : index
    %c0_207 = arith.constant 0 : index
    %667 = vector.load %arg9[%c42_206, %c0_207] : memref<61x50xf32, #tpu.memory_space<vmem>>, vector<2x50xf32>
    tpu.vector_store %arg9[%c42_206, %c0_207], %666 {strides = array<i32>} : memref<61x50xf32, #tpu.memory_space<vmem>>, vector<2x50xf32>,
    %c0_208 = arith.constant 0 : index
    %c0_209 = arith.constant 0 : index
    %668 = vector.load %arg3[%c0_208, %c0_209] : memref<50x512xf32, #tpu.memory_space<vmem>>, vector<50x512xf32>
    %cst_210 = arith.constant dense<0.000000e+00> : vector<2x512xf32>
    %669 = tpu.matmul %666, %668, %cst_210 {dimension_numbers = #tpu.dot_dimension_numbers<[1], [0], [0], [1], [0, 0, 1, 1], [], []>} : vector<2x50xf32>, vector<50x512xf32>, vector<2x512xf32> -> vector<2x512xf32>
    %c44 = arith.constant 44 : index
    %c0_211 = arith.constant 0 : index
    %670 = vector.load %arg8[%c44, %c0_211] : memref<60x512xf32, #tpu.memory_space<vmem>>, vector<2x512xf32>
    %671 = arith.addf %669, %670 : vector<2x512xf32>
    %672 = vector.extract_strided_slice %671 {offsets = [0, 0], sizes = [2, 50], strides = [1, 1]} : vector<2x512xf32> to vector<2x50xf32>
    %673 = arith.negf %672 : vector<2x50xf32>
    %674 = math.exp %673 : vector<2x50xf32>
    %cst_212 = arith.constant 1.000000e+00 : f32
    %675 = vector.broadcast %cst_212 : f32 to vector<2x50xf32>
    %676 = arith.addf %675, %674 : vector<2x50xf32>
    %677 = arith.divf %675, %676 : vector<2x50xf32>
    %678 = vector.extract_strided_slice %671 {offsets = [0, 128], sizes = [2, 50], strides = [1, 1]} : vector<2x512xf32> to vector<2x50xf32>
    %679 = arith.negf %678 : vector<2x50xf32>
    %680 = math.exp %679 : vector<2x50xf32>
    %cst_213 = arith.constant 1.000000e+00 : f32
    %681 = vector.broadcast %cst_213 : f32 to vector<2x50xf32>
    %682 = arith.addf %681, %680 : vector<2x50xf32>
    %683 = arith.divf %681, %682 : vector<2x50xf32>
    %684 = vector.extract_strided_slice %671 {offsets = [0, 256], sizes = [2, 50], strides = [1, 1]} : vector<2x512xf32> to vector<2x50xf32>
    %685 = math.tanh %684 : vector<2x50xf32>
    %686 = vector.extract_strided_slice %671 {offsets = [0, 384], sizes = [2, 50], strides = [1, 1]} : vector<2x512xf32> to vector<2x50xf32>
    %687 = arith.negf %686 : vector<2x50xf32>
    %688 = math.exp %687 : vector<2x50xf32>
    %cst_214 = arith.constant 1.000000e+00 : f32
    %689 = vector.broadcast %cst_214 : f32 to vector<2x50xf32>
    %690 = arith.addf %689, %688 : vector<2x50xf32>
    %691 = arith.divf %689, %690 : vector<2x50xf32>
    %692 = arith.mulf %683, %664 : vector<2x50xf32>
    %693 = arith.mulf %677, %685 : vector<2x50xf32>
    %694 = arith.addf %692, %693 : vector<2x50xf32>
    %695 = math.tanh %694 : vector<2x50xf32>
    %696 = arith.mulf %691, %695 : vector<2x50xf32>
    %c44_215 = arith.constant 44 : index
    %c0_216 = arith.constant 0 : index
    %697 = vector.load %arg9[%c44_215, %c0_216] : memref<61x50xf32, #tpu.memory_space<vmem>>, vector<2x50xf32>
    tpu.vector_store %arg9[%c44_215, %c0_216], %696 {strides = array<i32>} : memref<61x50xf32, #tpu.memory_space<vmem>>, vector<2x50xf32>,
    %c0_217 = arith.constant 0 : index
    %c0_218 = arith.constant 0 : index
    %698 = vector.load %arg3[%c0_217, %c0_218] : memref<50x512xf32, #tpu.memory_space<vmem>>, vector<50x512xf32>
    %cst_219 = arith.constant dense<0.000000e+00> : vector<2x512xf32>
    %699 = tpu.matmul %696, %698, %cst_219 {dimension_numbers = #tpu.dot_dimension_numbers<[1], [0], [0], [1], [0, 0, 1, 1], [], []>} : vector<2x50xf32>, vector<50x512xf32>, vector<2x512xf32> -> vector<2x512xf32>
    %c46 = arith.constant 46 : index
    %c0_220 = arith.constant 0 : index
    %700 = vector.load %arg8[%c46, %c0_220] : memref<60x512xf32, #tpu.memory_space<vmem>>, vector<2x512xf32>
    %701 = arith.addf %699, %700 : vector<2x512xf32>
    %702 = vector.extract_strided_slice %701 {offsets = [0, 0], sizes = [2, 50], strides = [1, 1]} : vector<2x512xf32> to vector<2x50xf32>
    %703 = arith.negf %702 : vector<2x50xf32>
    %704 = math.exp %703 : vector<2x50xf32>
    %cst_221 = arith.constant 1.000000e+00 : f32
    %705 = vector.broadcast %cst_221 : f32 to vector<2x50xf32>
    %706 = arith.addf %705, %704 : vector<2x50xf32>
    %707 = arith.divf %705, %706 : vector<2x50xf32>
    %708 = vector.extract_strided_slice %701 {offsets = [0, 128], sizes = [2, 50], strides = [1, 1]} : vector<2x512xf32> to vector<2x50xf32>
    %709 = arith.negf %708 : vector<2x50xf32>
    %710 = math.exp %709 : vector<2x50xf32>
    %cst_222 = arith.constant 1.000000e+00 : f32
    %711 = vector.broadcast %cst_222 : f32 to vector<2x50xf32>
    %712 = arith.addf %711, %710 : vector<2x50xf32>
    %713 = arith.divf %711, %712 : vector<2x50xf32>
    %714 = vector.extract_strided_slice %701 {offsets = [0, 256], sizes = [2, 50], strides = [1, 1]} : vector<2x512xf32> to vector<2x50xf32>
    %715 = math.tanh %714 : vector<2x50xf32>
    %716 = vector.extract_strided_slice %701 {offsets = [0, 384], sizes = [2, 50], strides = [1, 1]} : vector<2x512xf32> to vector<2x50xf32>
    %717 = arith.negf %716 : vector<2x50xf32>
    %718 = math.exp %717 : vector<2x50xf32>
    %cst_223 = arith.constant 1.000000e+00 : f32
    %719 = vector.broadcast %cst_223 : f32 to vector<2x50xf32>
    %720 = arith.addf %719, %718 : vector<2x50xf32>
    %721 = arith.divf %719, %720 : vector<2x50xf32>
    %722 = arith.mulf %713, %694 : vector<2x50xf32>
    %723 = arith.mulf %707, %715 : vector<2x50xf32>
    %724 = arith.addf %722, %723 : vector<2x50xf32>
    %725 = math.tanh %724 : vector<2x50xf32>
    %726 = arith.mulf %721, %725 : vector<2x50xf32>
    %c46_224 = arith.constant 46 : index
    %c0_225 = arith.constant 0 : index
    %727 = vector.load %arg9[%c46_224, %c0_225] : memref<61x50xf32, #tpu.memory_space<vmem>>, vector<2x50xf32>
    tpu.vector_store %arg9[%c46_224, %c0_225], %726 {strides = array<i32>} : memref<61x50xf32, #tpu.memory_space<vmem>>, vector<2x50xf32>,
    %c0_226 = arith.constant 0 : index
    %c0_227 = arith.constant 0 : index
    %728 = vector.load %arg3[%c0_226, %c0_227] : memref<50x512xf32, #tpu.memory_space<vmem>>, vector<50x512xf32>
    %cst_228 = arith.constant dense<0.000000e+00> : vector<2x512xf32>
    %729 = tpu.matmul %726, %728, %cst_228 {dimension_numbers = #tpu.dot_dimension_numbers<[1], [0], [0], [1], [0, 0, 1, 1], [], []>} : vector<2x50xf32>, vector<50x512xf32>, vector<2x512xf32> -> vector<2x512xf32>
    %c48 = arith.constant 48 : index
    %c0_229 = arith.constant 0 : index
    %730 = vector.load %arg8[%c48, %c0_229] : memref<60x512xf32, #tpu.memory_space<vmem>>, vector<2x512xf32>
    %731 = arith.addf %729, %730 : vector<2x512xf32>
    %732 = vector.extract_strided_slice %731 {offsets = [0, 0], sizes = [2, 50], strides = [1, 1]} : vector<2x512xf32> to vector<2x50xf32>
    %733 = arith.negf %732 : vector<2x50xf32>
    %734 = math.exp %733 : vector<2x50xf32>
    %cst_230 = arith.constant 1.000000e+00 : f32
    %735 = vector.broadcast %cst_230 : f32 to vector<2x50xf32>
    %736 = arith.addf %735, %734 : vector<2x50xf32>
    %737 = arith.divf %735, %736 : vector<2x50xf32>
    %738 = vector.extract_strided_slice %731 {offsets = [0, 128], sizes = [2, 50], strides = [1, 1]} : vector<2x512xf32> to vector<2x50xf32>
    %739 = arith.negf %738 : vector<2x50xf32>
    %740 = math.exp %739 : vector<2x50xf32>
    %cst_231 = arith.constant 1.000000e+00 : f32
    %741 = vector.broadcast %cst_231 : f32 to vector<2x50xf32>
    %742 = arith.addf %741, %740 : vector<2x50xf32>
    %743 = arith.divf %741, %742 : vector<2x50xf32>
    %744 = vector.extract_strided_slice %731 {offsets = [0, 256], sizes = [2, 50], strides = [1, 1]} : vector<2x512xf32> to vector<2x50xf32>
    %745 = math.tanh %744 : vector<2x50xf32>
    %746 = vector.extract_strided_slice %731 {offsets = [0, 384], sizes = [2, 50], strides = [1, 1]} : vector<2x512xf32> to vector<2x50xf32>
    %747 = arith.negf %746 : vector<2x50xf32>
    %748 = math.exp %747 : vector<2x50xf32>
    %cst_232 = arith.constant 1.000000e+00 : f32
    %749 = vector.broadcast %cst_232 : f32 to vector<2x50xf32>
    %750 = arith.addf %749, %748 : vector<2x50xf32>
    %751 = arith.divf %749, %750 : vector<2x50xf32>
    %752 = arith.mulf %743, %724 : vector<2x50xf32>
    %753 = arith.mulf %737, %745 : vector<2x50xf32>
    %754 = arith.addf %752, %753 : vector<2x50xf32>
    %755 = math.tanh %754 : vector<2x50xf32>
    %756 = arith.mulf %751, %755 : vector<2x50xf32>
    %c48_233 = arith.constant 48 : index
    %c0_234 = arith.constant 0 : index
    %757 = vector.load %arg9[%c48_233, %c0_234] : memref<61x50xf32, #tpu.memory_space<vmem>>, vector<2x50xf32>
    tpu.vector_store %arg9[%c48_233, %c0_234], %756 {strides = array<i32>} : memref<61x50xf32, #tpu.memory_space<vmem>>, vector<2x50xf32>,
    %c0_235 = arith.constant 0 : index
    %c0_236 = arith.constant 0 : index
    %758 = vector.load %arg3[%c0_235, %c0_236] : memref<50x512xf32, #tpu.memory_space<vmem>>, vector<50x512xf32>
    %cst_237 = arith.constant dense<0.000000e+00> : vector<2x512xf32>
    %759 = tpu.matmul %756, %758, %cst_237 {dimension_numbers = #tpu.dot_dimension_numbers<[1], [0], [0], [1], [0, 0, 1, 1], [], []>} : vector<2x50xf32>, vector<50x512xf32>, vector<2x512xf32> -> vector<2x512xf32>
    %c50 = arith.constant 50 : index
    %c0_238 = arith.constant 0 : index
    %760 = vector.load %arg8[%c50, %c0_238] : memref<60x512xf32, #tpu.memory_space<vmem>>, vector<2x512xf32>
    %761 = arith.addf %759, %760 : vector<2x512xf32>
    %762 = vector.extract_strided_slice %761 {offsets = [0, 0], sizes = [2, 50], strides = [1, 1]} : vector<2x512xf32> to vector<2x50xf32>
    %763 = arith.negf %762 : vector<2x50xf32>
    %764 = math.exp %763 : vector<2x50xf32>
    %cst_239 = arith.constant 1.000000e+00 : f32
    %765 = vector.broadcast %cst_239 : f32 to vector<2x50xf32>
    %766 = arith.addf %765, %764 : vector<2x50xf32>
    %767 = arith.divf %765, %766 : vector<2x50xf32>
    %768 = vector.extract_strided_slice %761 {offsets = [0, 128], sizes = [2, 50], strides = [1, 1]} : vector<2x512xf32> to vector<2x50xf32>
    %769 = arith.negf %768 : vector<2x50xf32>
    %770 = math.exp %769 : vector<2x50xf32>
    %cst_240 = arith.constant 1.000000e+00 : f32
    %771 = vector.broadcast %cst_240 : f32 to vector<2x50xf32>
    %772 = arith.addf %771, %770 : vector<2x50xf32>
    %773 = arith.divf %771, %772 : vector<2x50xf32>
    %774 = vector.extract_strided_slice %761 {offsets = [0, 256], sizes = [2, 50], strides = [1, 1]} : vector<2x512xf32> to vector<2x50xf32>
    %775 = math.tanh %774 : vector<2x50xf32>
    %776 = vector.extract_strided_slice %761 {offsets = [0, 384], sizes = [2, 50], strides = [1, 1]} : vector<2x512xf32> to vector<2x50xf32>
    %777 = arith.negf %776 : vector<2x50xf32>
    %778 = math.exp %777 : vector<2x50xf32>
    %cst_241 = arith.constant 1.000000e+00 : f32
    %779 = vector.broadcast %cst_241 : f32 to vector<2x50xf32>
    %780 = arith.addf %779, %778 : vector<2x50xf32>
    %781 = arith.divf %779, %780 : vector<2x50xf32>
    %782 = arith.mulf %773, %754 : vector<2x50xf32>
    %783 = arith.mulf %767, %775 : vector<2x50xf32>
    %784 = arith.addf %782, %783 : vector<2x50xf32>
    %785 = math.tanh %784 : vector<2x50xf32>
    %786 = arith.mulf %781, %785 : vector<2x50xf32>
    %c50_242 = arith.constant 50 : index
    %c0_243 = arith.constant 0 : index
    %787 = vector.load %arg9[%c50_242, %c0_243] : memref<61x50xf32, #tpu.memory_space<vmem>>, vector<2x50xf32>
    tpu.vector_store %arg9[%c50_242, %c0_243], %786 {strides = array<i32>} : memref<61x50xf32, #tpu.memory_space<vmem>>, vector<2x50xf32>,
    %c0_244 = arith.constant 0 : index
    %c0_245 = arith.constant 0 : index
    %788 = vector.load %arg3[%c0_244, %c0_245] : memref<50x512xf32, #tpu.memory_space<vmem>>, vector<50x512xf32>
    %cst_246 = arith.constant dense<0.000000e+00> : vector<2x512xf32>
    %789 = tpu.matmul %786, %788, %cst_246 {dimension_numbers = #tpu.dot_dimension_numbers<[1], [0], [0], [1], [0, 0, 1, 1], [], []>} : vector<2x50xf32>, vector<50x512xf32>, vector<2x512xf32> -> vector<2x512xf32>
    %c52 = arith.constant 52 : index
    %c0_247 = arith.constant 0 : index
    %790 = vector.load %arg8[%c52, %c0_247] : memref<60x512xf32, #tpu.memory_space<vmem>>, vector<2x512xf32>
    %791 = arith.addf %789, %790 : vector<2x512xf32>
    %792 = vector.extract_strided_slice %791 {offsets = [0, 0], sizes = [2, 50], strides = [1, 1]} : vector<2x512xf32> to vector<2x50xf32>
    %793 = arith.negf %792 : vector<2x50xf32>
    %794 = math.exp %793 : vector<2x50xf32>
    %cst_248 = arith.constant 1.000000e+00 : f32
    %795 = vector.broadcast %cst_248 : f32 to vector<2x50xf32>
    %796 = arith.addf %795, %794 : vector<2x50xf32>
    %797 = arith.divf %795, %796 : vector<2x50xf32>
    %798 = vector.extract_strided_slice %791 {offsets = [0, 128], sizes = [2, 50], strides = [1, 1]} : vector<2x512xf32> to vector<2x50xf32>
    %799 = arith.negf %798 : vector<2x50xf32>
    %800 = math.exp %799 : vector<2x50xf32>
    %cst_249 = arith.constant 1.000000e+00 : f32
    %801 = vector.broadcast %cst_249 : f32 to vector<2x50xf32>
    %802 = arith.addf %801, %800 : vector<2x50xf32>
    %803 = arith.divf %801, %802 : vector<2x50xf32>
    %804 = vector.extract_strided_slice %791 {offsets = [0, 256], sizes = [2, 50], strides = [1, 1]} : vector<2x512xf32> to vector<2x50xf32>
    %805 = math.tanh %804 : vector<2x50xf32>
    %806 = vector.extract_strided_slice %791 {offsets = [0, 384], sizes = [2, 50], strides = [1, 1]} : vector<2x512xf32> to vector<2x50xf32>
    %807 = arith.negf %806 : vector<2x50xf32>
    %808 = math.exp %807 : vector<2x50xf32>
    %cst_250 = arith.constant 1.000000e+00 : f32
    %809 = vector.broadcast %cst_250 : f32 to vector<2x50xf32>
    %810 = arith.addf %809, %808 : vector<2x50xf32>
    %811 = arith.divf %809, %810 : vector<2x50xf32>
    %812 = arith.mulf %803, %784 : vector<2x50xf32>
    %813 = arith.mulf %797, %805 : vector<2x50xf32>
    %814 = arith.addf %812, %813 : vector<2x50xf32>
    %815 = math.tanh %814 : vector<2x50xf32>
    %816 = arith.mulf %811, %815 : vector<2x50xf32>
    %c52_251 = arith.constant 52 : index
    %c0_252 = arith.constant 0 : index
    %817 = vector.load %arg9[%c52_251, %c0_252] : memref<61x50xf32, #tpu.memory_space<vmem>>, vector<2x50xf32>
    tpu.vector_store %arg9[%c52_251, %c0_252], %816 {strides = array<i32>} : memref<61x50xf32, #tpu.memory_space<vmem>>, vector<2x50xf32>,
    %c0_253 = arith.constant 0 : index
    %c0_254 = arith.constant 0 : index
    %818 = vector.load %arg3[%c0_253, %c0_254] : memref<50x512xf32, #tpu.memory_space<vmem>>, vector<50x512xf32>
    %cst_255 = arith.constant dense<0.000000e+00> : vector<2x512xf32>
    %819 = tpu.matmul %816, %818, %cst_255 {dimension_numbers = #tpu.dot_dimension_numbers<[1], [0], [0], [1], [0, 0, 1, 1], [], []>} : vector<2x50xf32>, vector<50x512xf32>, vector<2x512xf32> -> vector<2x512xf32>
    %c54 = arith.constant 54 : index
    %c0_256 = arith.constant 0 : index
    %820 = vector.load %arg8[%c54, %c0_256] : memref<60x512xf32, #tpu.memory_space<vmem>>, vector<2x512xf32>
    %821 = arith.addf %819, %820 : vector<2x512xf32>
    %822 = vector.extract_strided_slice %821 {offsets = [0, 0], sizes = [2, 50], strides = [1, 1]} : vector<2x512xf32> to vector<2x50xf32>
    %823 = arith.negf %822 : vector<2x50xf32>
    %824 = math.exp %823 : vector<2x50xf32>
    %cst_257 = arith.constant 1.000000e+00 : f32
    %825 = vector.broadcast %cst_257 : f32 to vector<2x50xf32>
    %826 = arith.addf %825, %824 : vector<2x50xf32>
    %827 = arith.divf %825, %826 : vector<2x50xf32>
    %828 = vector.extract_strided_slice %821 {offsets = [0, 128], sizes = [2, 50], strides = [1, 1]} : vector<2x512xf32> to vector<2x50xf32>
    %829 = arith.negf %828 : vector<2x50xf32>
    %830 = math.exp %829 : vector<2x50xf32>
    %cst_258 = arith.constant 1.000000e+00 : f32
    %831 = vector.broadcast %cst_258 : f32 to vector<2x50xf32>
    %832 = arith.addf %831, %830 : vector<2x50xf32>
    %833 = arith.divf %831, %832 : vector<2x50xf32>
    %834 = vector.extract_strided_slice %821 {offsets = [0, 256], sizes = [2, 50], strides = [1, 1]} : vector<2x512xf32> to vector<2x50xf32>
    %835 = math.tanh %834 : vector<2x50xf32>
    %836 = vector.extract_strided_slice %821 {offsets = [0, 384], sizes = [2, 50], strides = [1, 1]} : vector<2x512xf32> to vector<2x50xf32>
    %837 = arith.negf %836 : vector<2x50xf32>
    %838 = math.exp %837 : vector<2x50xf32>
    %cst_259 = arith.constant 1.000000e+00 : f32
    %839 = vector.broadcast %cst_259 : f32 to vector<2x50xf32>
    %840 = arith.addf %839, %838 : vector<2x50xf32>
    %841 = arith.divf %839, %840 : vector<2x50xf32>
    %842 = arith.mulf %833, %814 : vector<2x50xf32>
    %843 = arith.mulf %827, %835 : vector<2x50xf32>
    %844 = arith.addf %842, %843 : vector<2x50xf32>
    %845 = math.tanh %844 : vector<2x50xf32>
    %846 = arith.mulf %841, %845 : vector<2x50xf32>
    %c54_260 = arith.constant 54 : index
    %c0_261 = arith.constant 0 : index
    %847 = vector.load %arg9[%c54_260, %c0_261] : memref<61x50xf32, #tpu.memory_space<vmem>>, vector<2x50xf32>
    tpu.vector_store %arg9[%c54_260, %c0_261], %846 {strides = array<i32>} : memref<61x50xf32, #tpu.memory_space<vmem>>, vector<2x50xf32>,
    %c0_262 = arith.constant 0 : index
    %c0_263 = arith.constant 0 : index
    %848 = vector.load %arg3[%c0_262, %c0_263] : memref<50x512xf32, #tpu.memory_space<vmem>>, vector<50x512xf32>
    %cst_264 = arith.constant dense<0.000000e+00> : vector<2x512xf32>
    %849 = tpu.matmul %846, %848, %cst_264 {dimension_numbers = #tpu.dot_dimension_numbers<[1], [0], [0], [1], [0, 0, 1, 1], [], []>} : vector<2x50xf32>, vector<50x512xf32>, vector<2x512xf32> -> vector<2x512xf32>
    %c56 = arith.constant 56 : index
    %c0_265 = arith.constant 0 : index
    %850 = vector.load %arg8[%c56, %c0_265] : memref<60x512xf32, #tpu.memory_space<vmem>>, vector<2x512xf32>
    %851 = arith.addf %849, %850 : vector<2x512xf32>
    %852 = vector.extract_strided_slice %851 {offsets = [0, 0], sizes = [2, 50], strides = [1, 1]} : vector<2x512xf32> to vector<2x50xf32>
    %853 = arith.negf %852 : vector<2x50xf32>
    %854 = math.exp %853 : vector<2x50xf32>
    %cst_266 = arith.constant 1.000000e+00 : f32
    %855 = vector.broadcast %cst_266 : f32 to vector<2x50xf32>
    %856 = arith.addf %855, %854 : vector<2x50xf32>
    %857 = arith.divf %855, %856 : vector<2x50xf32>
    %858 = vector.extract_strided_slice %851 {offsets = [0, 128], sizes = [2, 50], strides = [1, 1]} : vector<2x512xf32> to vector<2x50xf32>
    %859 = arith.negf %858 : vector<2x50xf32>
    %860 = math.exp %859 : vector<2x50xf32>
    %cst_267 = arith.constant 1.000000e+00 : f32
    %861 = vector.broadcast %cst_267 : f32 to vector<2x50xf32>
    %862 = arith.addf %861, %860 : vector<2x50xf32>
    %863 = arith.divf %861, %862 : vector<2x50xf32>
    %864 = vector.extract_strided_slice %851 {offsets = [0, 256], sizes = [2, 50], strides = [1, 1]} : vector<2x512xf32> to vector<2x50xf32>
    %865 = math.tanh %864 : vector<2x50xf32>
    %866 = vector.extract_strided_slice %851 {offsets = [0, 384], sizes = [2, 50], strides = [1, 1]} : vector<2x512xf32> to vector<2x50xf32>
    %867 = arith.negf %866 : vector<2x50xf32>
    %868 = math.exp %867 : vector<2x50xf32>
    %cst_268 = arith.constant 1.000000e+00 : f32
    %869 = vector.broadcast %cst_268 : f32 to vector<2x50xf32>
    %870 = arith.addf %869, %868 : vector<2x50xf32>
    %871 = arith.divf %869, %870 : vector<2x50xf32>
    %872 = arith.mulf %863, %844 : vector<2x50xf32>
    %873 = arith.mulf %857, %865 : vector<2x50xf32>
    %874 = arith.addf %872, %873 : vector<2x50xf32>
    %875 = math.tanh %874 : vector<2x50xf32>
    %876 = arith.mulf %871, %875 : vector<2x50xf32>
    %c56_269 = arith.constant 56 : index
    %c0_270 = arith.constant 0 : index
    %877 = vector.load %arg9[%c56_269, %c0_270] : memref<61x50xf32, #tpu.memory_space<vmem>>, vector<2x50xf32>
    tpu.vector_store %arg9[%c56_269, %c0_270], %876 {strides = array<i32>} : memref<61x50xf32, #tpu.memory_space<vmem>>, vector<2x50xf32>,
    %c0_271 = arith.constant 0 : index
    %c0_272 = arith.constant 0 : index
    %878 = vector.load %arg3[%c0_271, %c0_272] : memref<50x512xf32, #tpu.memory_space<vmem>>, vector<50x512xf32>
    %cst_273 = arith.constant dense<0.000000e+00> : vector<2x512xf32>
    %879 = tpu.matmul %876, %878, %cst_273 {dimension_numbers = #tpu.dot_dimension_numbers<[1], [0], [0], [1], [0, 0, 1, 1], [], []>} : vector<2x50xf32>, vector<50x512xf32>, vector<2x512xf32> -> vector<2x512xf32>
    %c58 = arith.constant 58 : index
    %c0_274 = arith.constant 0 : index
    %880 = vector.load %arg8[%c58, %c0_274] : memref<60x512xf32, #tpu.memory_space<vmem>>, vector<2x512xf32>
    %881 = arith.addf %879, %880 : vector<2x512xf32>
    %882 = vector.extract_strided_slice %881 {offsets = [0, 0], sizes = [2, 50], strides = [1, 1]} : vector<2x512xf32> to vector<2x50xf32>
    %883 = arith.negf %882 : vector<2x50xf32>
    %884 = math.exp %883 : vector<2x50xf32>
    %cst_275 = arith.constant 1.000000e+00 : f32
    %885 = vector.broadcast %cst_275 : f32 to vector<2x50xf32>
    %886 = arith.addf %885, %884 : vector<2x50xf32>
    %887 = arith.divf %885, %886 : vector<2x50xf32>
    %888 = vector.extract_strided_slice %881 {offsets = [0, 128], sizes = [2, 50], strides = [1, 1]} : vector<2x512xf32> to vector<2x50xf32>
    %889 = arith.negf %888 : vector<2x50xf32>
    %890 = math.exp %889 : vector<2x50xf32>
    %cst_276 = arith.constant 1.000000e+00 : f32
    %891 = vector.broadcast %cst_276 : f32 to vector<2x50xf32>
    %892 = arith.addf %891, %890 : vector<2x50xf32>
    %893 = arith.divf %891, %892 : vector<2x50xf32>
    %894 = vector.extract_strided_slice %881 {offsets = [0, 256], sizes = [2, 50], strides = [1, 1]} : vector<2x512xf32> to vector<2x50xf32>
    %895 = math.tanh %894 : vector<2x50xf32>
    %896 = vector.extract_strided_slice %881 {offsets = [0, 384], sizes = [2, 50], strides = [1, 1]} : vector<2x512xf32> to vector<2x50xf32>
    %897 = arith.negf %896 : vector<2x50xf32>
    %898 = math.exp %897 : vector<2x50xf32>
    %cst_277 = arith.constant 1.000000e+00 : f32
    %899 = vector.broadcast %cst_277 : f32 to vector<2x50xf32>
    %900 = arith.addf %899, %898 : vector<2x50xf32>
    %901 = arith.divf %899, %900 : vector<2x50xf32>
    %902 = arith.mulf %893, %874 : vector<2x50xf32>
    %903 = arith.mulf %887, %895 : vector<2x50xf32>
    %904 = arith.addf %902, %903 : vector<2x50xf32>
    %905 = math.tanh %904 : vector<2x50xf32>
    %906 = arith.mulf %901, %905 : vector<2x50xf32>
    %c58_278 = arith.constant 58 : index
    %c0_279 = arith.constant 0 : index
    %907 = vector.load %arg9[%c58_278, %c0_279] : memref<61x50xf32, #tpu.memory_space<vmem>>, vector<2x50xf32>
    tpu.vector_store %arg9[%c58_278, %c0_279], %906 {strides = array<i32>} : memref<61x50xf32, #tpu.memory_space<vmem>>, vector<2x50xf32>,
    %c0_280 = arith.constant 0 : index
    %c0_281 = arith.constant 0 : index
    %908 = vector.load %arg4[%c0_280, %c0_281] : memref<60x188xf32, #tpu.memory_space<vmem>>, vector<60x188xf32>
    %c0_282 = arith.constant 0 : index
    %c0_283 = arith.constant 0 : index
    %909 = vector.load %arg9[%c0_282, %c0_283] : memref<61x50xf32, #tpu.memory_space<vmem>>, vector<61x50xf32>
    %910 = vector.extract_strided_slice %908 {offsets = [0, 0], sizes = [60, 61], strides = [1, 1]} : vector<60x188xf32> to vector<60x61xf32>
    %cst_284 = arith.constant dense<0.000000e+00> : vector<60x50xf32>
    %911 = tpu.matmul %910, %909, %cst_284 {dimension_numbers = #tpu.dot_dimension_numbers<[1], [0], [0], [1], [0, 0, 1, 1], [], []>} : vector<60x61xf32>, vector<61x50xf32>, vector<60x50xf32> -> vector<60x50xf32>
    %cst_285 = arith.constant dense<0xFF800000> : vector<50xf32>
    %912 = vector.multi_reduction <maximumf>, %911, %cst_285 [0] : vector<60x50xf32> to vector<50xf32>
    %913 = vector.shape_cast %912 : vector<50xf32> to vector<1x50xf32>
    %914 = vector.broadcast %913 : vector<1x50xf32> to vector<60x50xf32>
    %915 = arith.subf %911, %914 : vector<60x50xf32>
    %916 = math.exp %915 : vector<60x50xf32>
    %917 = vector.extract_strided_slice %908 {offsets = [0, 128], sizes = [60, 60], strides = [1, 1]} : vector<60x188xf32> to vector<60x60xf32>
    %cst_286 = arith.constant dense<0.000000e+00> : vector<60x50xf32>
    %918 = tpu.matmul %917, %916, %cst_286 {dimension_numbers = #tpu.dot_dimension_numbers<[1], [0], [0], [1], [0, 0, 1, 1], [], []>} : vector<60x60xf32>, vector<60x50xf32>, vector<60x50xf32> -> vector<60x50xf32>
    %919 = tpu.reciprocal %918 {approx = true} : vector<60x50xf32> -> vector<60x50xf32>
    %920 = arith.mulf %916, %919 : vector<60x50xf32>
    %921 = vector.extract_strided_slice %909 {offsets = [0, 0], sizes = [60, 50], strides = [1, 1]} : vector<61x50xf32> to vector<60x50xf32>
    %922 = arith.mulf %920, %921 : vector<60x50xf32>
    %c0_287 = arith.constant 0 : index
    %c0_288 = arith.constant 0 : index
    %923 = vector.load %arg10[%c0_287, %c0_288] : memref<60x50xf32, #tpu.memory_space<vmem>>, vector<60x50xf32>
    tpu.vector_store %arg10[%c0_287, %c0_288], %922 {strides = array<i32>} : memref<60x50xf32, #tpu.memory_space<vmem>>, vector<60x50xf32>,
    %c0_289 = arith.constant 0 : index
    %c0_290 = arith.constant 0 : index
    %924 = vector.load %arg6[%c0_289, %c0_290] : memref<120x50xf32, #tpu.memory_space<vmem>>, vector<120x50xf32>
    %cst_291 = arith.constant 0.000000e+00 : f32
    %925 = vector.broadcast %cst_291 : f32 to vector<2x50xf32>
    %cst_292 = arith.constant 0.000000e+00 : f32
    %926 = vector.broadcast %cst_292 : f32 to vector<2x50xf32>
    %c0_293 = arith.constant 0 : index
    %c0_294 = arith.constant 0 : index
    %927 = vector.load %arg10[%c0_293, %c0_294] : memref<60x50xf32, #tpu.memory_space<vmem>>, vector<2x50xf32>
    %c0_295 = arith.constant 0 : index
    %c0_296 = arith.constant 0 : index
    %c0_297 = arith.constant 0 : index
    %928 = vector.load %arg5[%c0_295, %c0_296, %c0_297] : memref<30x50x50xf32, #tpu.memory_space<vmem>>, vector<1x50x50xf32>
    %929 = vector.shape_cast %928 : vector<1x50x50xf32> to vector<50x50xf32>
    %cst_298 = arith.constant dense<0.000000e+00> : vector<2x50xf32>
    %930 = tpu.matmul %927, %929, %cst_298 {dimension_numbers = #tpu.dot_dimension_numbers<[1], [0], [0], [1], [0, 0, 1, 1], [], []>} : vector<2x50xf32>, vector<50x50xf32>, vector<2x50xf32> -> vector<2x50xf32>
    %931 = arith.addf %925, %930 : vector<2x50xf32>
    %c2_299 = arith.constant 2 : index
    %c0_300 = arith.constant 0 : index
    %932 = vector.load %arg10[%c2_299, %c0_300] : memref<60x50xf32, #tpu.memory_space<vmem>>, vector<2x50xf32>
    %c1 = arith.constant 1 : index
    %c0_301 = arith.constant 0 : index
    %c0_302 = arith.constant 0 : index
    %933 = vector.load %arg5[%c1, %c0_301, %c0_302] : memref<30x50x50xf32, #tpu.memory_space<vmem>>, vector<1x50x50xf32>
    %934 = vector.shape_cast %933 : vector<1x50x50xf32> to vector<50x50xf32>
    %cst_303 = arith.constant dense<0.000000e+00> : vector<2x50xf32>
    %935 = tpu.matmul %932, %934, %cst_303 {dimension_numbers = #tpu.dot_dimension_numbers<[1], [0], [0], [1], [0, 0, 1, 1], [], []>} : vector<2x50xf32>, vector<50x50xf32>, vector<2x50xf32> -> vector<2x50xf32>
    %936 = arith.addf %926, %935 : vector<2x50xf32>
    %c4_304 = arith.constant 4 : index
    %c0_305 = arith.constant 0 : index
    %937 = vector.load %arg10[%c4_304, %c0_305] : memref<60x50xf32, #tpu.memory_space<vmem>>, vector<2x50xf32>
    %c2_306 = arith.constant 2 : index
    %c0_307 = arith.constant 0 : index
    %c0_308 = arith.constant 0 : index
    %938 = vector.load %arg5[%c2_306, %c0_307, %c0_308] : memref<30x50x50xf32, #tpu.memory_space<vmem>>, vector<1x50x50xf32>
    %939 = vector.shape_cast %938 : vector<1x50x50xf32> to vector<50x50xf32>
    %cst_309 = arith.constant dense<0.000000e+00> : vector<2x50xf32>
    %940 = tpu.matmul %937, %939, %cst_309 {dimension_numbers = #tpu.dot_dimension_numbers<[1], [0], [0], [1], [0, 0, 1, 1], [], []>} : vector<2x50xf32>, vector<50x50xf32>, vector<2x50xf32> -> vector<2x50xf32>
    %941 = arith.addf %931, %940 : vector<2x50xf32>
    %c6_310 = arith.constant 6 : index
    %c0_311 = arith.constant 0 : index
    %942 = vector.load %arg10[%c6_310, %c0_311] : memref<60x50xf32, #tpu.memory_space<vmem>>, vector<2x50xf32>
    %c3 = arith.constant 3 : index
    %c0_312 = arith.constant 0 : index
    %c0_313 = arith.constant 0 : index
    %943 = vector.load %arg5[%c3, %c0_312, %c0_313] : memref<30x50x50xf32, #tpu.memory_space<vmem>>, vector<1x50x50xf32>
    %944 = vector.shape_cast %943 : vector<1x50x50xf32> to vector<50x50xf32>
    %cst_314 = arith.constant dense<0.000000e+00> : vector<2x50xf32>
    %945 = tpu.matmul %942, %944, %cst_314 {dimension_numbers = #tpu.dot_dimension_numbers<[1], [0], [0], [1], [0, 0, 1, 1], [], []>} : vector<2x50xf32>, vector<50x50xf32>, vector<2x50xf32> -> vector<2x50xf32>
    %946 = arith.addf %936, %945 : vector<2x50xf32>
    %c8_315 = arith.constant 8 : index
    %c0_316 = arith.constant 0 : index
    %947 = vector.load %arg10[%c8_315, %c0_316] : memref<60x50xf32, #tpu.memory_space<vmem>>, vector<2x50xf32>
    %c4_317 = arith.constant 4 : index
    %c0_318 = arith.constant 0 : index
    %c0_319 = arith.constant 0 : index
    %948 = vector.load %arg5[%c4_317, %c0_318, %c0_319] : memref<30x50x50xf32, #tpu.memory_space<vmem>>, vector<1x50x50xf32>
    %949 = vector.shape_cast %948 : vector<1x50x50xf32> to vector<50x50xf32>
    %cst_320 = arith.constant dense<0.000000e+00> : vector<2x50xf32>
    %950 = tpu.matmul %947, %949, %cst_320 {dimension_numbers = #tpu.dot_dimension_numbers<[1], [0], [0], [1], [0, 0, 1, 1], [], []>} : vector<2x50xf32>, vector<50x50xf32>, vector<2x50xf32> -> vector<2x50xf32>
    %951 = arith.addf %941, %950 : vector<2x50xf32>
    %c10_321 = arith.constant 10 : index
    %c0_322 = arith.constant 0 : index
    %952 = vector.load %arg10[%c10_321, %c0_322] : memref<60x50xf32, #tpu.memory_space<vmem>>, vector<2x50xf32>
    %c5 = arith.constant 5 : index
    %c0_323 = arith.constant 0 : index
    %c0_324 = arith.constant 0 : index
    %953 = vector.load %arg5[%c5, %c0_323, %c0_324] : memref<30x50x50xf32, #tpu.memory_space<vmem>>, vector<1x50x50xf32>
    %954 = vector.shape_cast %953 : vector<1x50x50xf32> to vector<50x50xf32>
    %cst_325 = arith.constant dense<0.000000e+00> : vector<2x50xf32>
    %955 = tpu.matmul %952, %954, %cst_325 {dimension_numbers = #tpu.dot_dimension_numbers<[1], [0], [0], [1], [0, 0, 1, 1], [], []>} : vector<2x50xf32>, vector<50x50xf32>, vector<2x50xf32> -> vector<2x50xf32>
    %956 = arith.addf %946, %955 : vector<2x50xf32>
    %c12_326 = arith.constant 12 : index
    %c0_327 = arith.constant 0 : index
    %957 = vector.load %arg10[%c12_326, %c0_327] : memref<60x50xf32, #tpu.memory_space<vmem>>, vector<2x50xf32>
    %c6_328 = arith.constant 6 : index
    %c0_329 = arith.constant 0 : index
    %c0_330 = arith.constant 0 : index
    %958 = vector.load %arg5[%c6_328, %c0_329, %c0_330] : memref<30x50x50xf32, #tpu.memory_space<vmem>>, vector<1x50x50xf32>
    %959 = vector.shape_cast %958 : vector<1x50x50xf32> to vector<50x50xf32>
    %cst_331 = arith.constant dense<0.000000e+00> : vector<2x50xf32>
    %960 = tpu.matmul %957, %959, %cst_331 {dimension_numbers = #tpu.dot_dimension_numbers<[1], [0], [0], [1], [0, 0, 1, 1], [], []>} : vector<2x50xf32>, vector<50x50xf32>, vector<2x50xf32> -> vector<2x50xf32>
    %961 = arith.addf %951, %960 : vector<2x50xf32>
    %c14_332 = arith.constant 14 : index
    %c0_333 = arith.constant 0 : index
    %962 = vector.load %arg10[%c14_332, %c0_333] : memref<60x50xf32, #tpu.memory_space<vmem>>, vector<2x50xf32>
    %c7 = arith.constant 7 : index
    %c0_334 = arith.constant 0 : index
    %c0_335 = arith.constant 0 : index
    %963 = vector.load %arg5[%c7, %c0_334, %c0_335] : memref<30x50x50xf32, #tpu.memory_space<vmem>>, vector<1x50x50xf32>
    %964 = vector.shape_cast %963 : vector<1x50x50xf32> to vector<50x50xf32>
    %cst_336 = arith.constant dense<0.000000e+00> : vector<2x50xf32>
    %965 = tpu.matmul %962, %964, %cst_336 {dimension_numbers = #tpu.dot_dimension_numbers<[1], [0], [0], [1], [0, 0, 1, 1], [], []>} : vector<2x50xf32>, vector<50x50xf32>, vector<2x50xf32> -> vector<2x50xf32>
    %966 = arith.addf %956, %965 : vector<2x50xf32>
    %c16_337 = arith.constant 16 : index
    %c0_338 = arith.constant 0 : index
    %967 = vector.load %arg10[%c16_337, %c0_338] : memref<60x50xf32, #tpu.memory_space<vmem>>, vector<2x50xf32>
    %c8_339 = arith.constant 8 : index
    %c0_340 = arith.constant 0 : index
    %c0_341 = arith.constant 0 : index
    %968 = vector.load %arg5[%c8_339, %c0_340, %c0_341] : memref<30x50x50xf32, #tpu.memory_space<vmem>>, vector<1x50x50xf32>
    %969 = vector.shape_cast %968 : vector<1x50x50xf32> to vector<50x50xf32>
    %cst_342 = arith.constant dense<0.000000e+00> : vector<2x50xf32>
    %970 = tpu.matmul %967, %969, %cst_342 {dimension_numbers = #tpu.dot_dimension_numbers<[1], [0], [0], [1], [0, 0, 1, 1], [], []>} : vector<2x50xf32>, vector<50x50xf32>, vector<2x50xf32> -> vector<2x50xf32>
    %971 = arith.addf %961, %970 : vector<2x50xf32>
    %c18_343 = arith.constant 18 : index
    %c0_344 = arith.constant 0 : index
    %972 = vector.load %arg10[%c18_343, %c0_344] : memref<60x50xf32, #tpu.memory_space<vmem>>, vector<2x50xf32>
    %c9 = arith.constant 9 : index
    %c0_345 = arith.constant 0 : index
    %c0_346 = arith.constant 0 : index
    %973 = vector.load %arg5[%c9, %c0_345, %c0_346] : memref<30x50x50xf32, #tpu.memory_space<vmem>>, vector<1x50x50xf32>
    %974 = vector.shape_cast %973 : vector<1x50x50xf32> to vector<50x50xf32>
    %cst_347 = arith.constant dense<0.000000e+00> : vector<2x50xf32>
    %975 = tpu.matmul %972, %974, %cst_347 {dimension_numbers = #tpu.dot_dimension_numbers<[1], [0], [0], [1], [0, 0, 1, 1], [], []>} : vector<2x50xf32>, vector<50x50xf32>, vector<2x50xf32> -> vector<2x50xf32>
    %976 = arith.addf %966, %975 : vector<2x50xf32>
    %c20_348 = arith.constant 20 : index
    %c0_349 = arith.constant 0 : index
    %977 = vector.load %arg10[%c20_348, %c0_349] : memref<60x50xf32, #tpu.memory_space<vmem>>, vector<2x50xf32>
    %c10_350 = arith.constant 10 : index
    %c0_351 = arith.constant 0 : index
    %c0_352 = arith.constant 0 : index
    %978 = vector.load %arg5[%c10_350, %c0_351, %c0_352] : memref<30x50x50xf32, #tpu.memory_space<vmem>>, vector<1x50x50xf32>
    %979 = vector.shape_cast %978 : vector<1x50x50xf32> to vector<50x50xf32>
    %cst_353 = arith.constant dense<0.000000e+00> : vector<2x50xf32>
    %980 = tpu.matmul %977, %979, %cst_353 {dimension_numbers = #tpu.dot_dimension_numbers<[1], [0], [0], [1], [0, 0, 1, 1], [], []>} : vector<2x50xf32>, vector<50x50xf32>, vector<2x50xf32> -> vector<2x50xf32>
    %981 = arith.addf %971, %980 : vector<2x50xf32>
    %c22_354 = arith.constant 22 : index
    %c0_355 = arith.constant 0 : index
    %982 = vector.load %arg10[%c22_354, %c0_355] : memref<60x50xf32, #tpu.memory_space<vmem>>, vector<2x50xf32>
    %c11 = arith.constant 11 : index
    %c0_356 = arith.constant 0 : index
    %c0_357 = arith.constant 0 : index
    %983 = vector.load %arg5[%c11, %c0_356, %c0_357] : memref<30x50x50xf32, #tpu.memory_space<vmem>>, vector<1x50x50xf32>
    %984 = vector.shape_cast %983 : vector<1x50x50xf32> to vector<50x50xf32>
    %cst_358 = arith.constant dense<0.000000e+00> : vector<2x50xf32>
    %985 = tpu.matmul %982, %984, %cst_358 {dimension_numbers = #tpu.dot_dimension_numbers<[1], [0], [0], [1], [0, 0, 1, 1], [], []>} : vector<2x50xf32>, vector<50x50xf32>, vector<2x50xf32> -> vector<2x50xf32>
    %986 = arith.addf %976, %985 : vector<2x50xf32>
    %c24_359 = arith.constant 24 : index
    %c0_360 = arith.constant 0 : index
    %987 = vector.load %arg10[%c24_359, %c0_360] : memref<60x50xf32, #tpu.memory_space<vmem>>, vector<2x50xf32>
    %c12_361 = arith.constant 12 : index
    %c0_362 = arith.constant 0 : index
    %c0_363 = arith.constant 0 : index
    %988 = vector.load %arg5[%c12_361, %c0_362, %c0_363] : memref<30x50x50xf32, #tpu.memory_space<vmem>>, vector<1x50x50xf32>
    %989 = vector.shape_cast %988 : vector<1x50x50xf32> to vector<50x50xf32>
    %cst_364 = arith.constant dense<0.000000e+00> : vector<2x50xf32>
    %990 = tpu.matmul %987, %989, %cst_364 {dimension_numbers = #tpu.dot_dimension_numbers<[1], [0], [0], [1], [0, 0, 1, 1], [], []>} : vector<2x50xf32>, vector<50x50xf32>, vector<2x50xf32> -> vector<2x50xf32>
    %991 = arith.addf %981, %990 : vector<2x50xf32>
    %c26_365 = arith.constant 26 : index
    %c0_366 = arith.constant 0 : index
    %992 = vector.load %arg10[%c26_365, %c0_366] : memref<60x50xf32, #tpu.memory_space<vmem>>, vector<2x50xf32>
    %c13 = arith.constant 13 : index
    %c0_367 = arith.constant 0 : index
    %c0_368 = arith.constant 0 : index
    %993 = vector.load %arg5[%c13, %c0_367, %c0_368] : memref<30x50x50xf32, #tpu.memory_space<vmem>>, vector<1x50x50xf32>
    %994 = vector.shape_cast %993 : vector<1x50x50xf32> to vector<50x50xf32>
    %cst_369 = arith.constant dense<0.000000e+00> : vector<2x50xf32>
    %995 = tpu.matmul %992, %994, %cst_369 {dimension_numbers = #tpu.dot_dimension_numbers<[1], [0], [0], [1], [0, 0, 1, 1], [], []>} : vector<2x50xf32>, vector<50x50xf32>, vector<2x50xf32> -> vector<2x50xf32>
    %996 = arith.addf %986, %995 : vector<2x50xf32>
    %c28_370 = arith.constant 28 : index
    %c0_371 = arith.constant 0 : index
    %997 = vector.load %arg10[%c28_370, %c0_371] : memref<60x50xf32, #tpu.memory_space<vmem>>, vector<2x50xf32>
    %c14_372 = arith.constant 14 : index
    %c0_373 = arith.constant 0 : index
    %c0_374 = arith.constant 0 : index
    %998 = vector.load %arg5[%c14_372, %c0_373, %c0_374] : memref<30x50x50xf32, #tpu.memory_space<vmem>>, vector<1x50x50xf32>
    %999 = vector.shape_cast %998 : vector<1x50x50xf32> to vector<50x50xf32>
    %cst_375 = arith.constant dense<0.000000e+00> : vector<2x50xf32>
    %1000 = tpu.matmul %997, %999, %cst_375 {dimension_numbers = #tpu.dot_dimension_numbers<[1], [0], [0], [1], [0, 0, 1, 1], [], []>} : vector<2x50xf32>, vector<50x50xf32>, vector<2x50xf32> -> vector<2x50xf32>
    %1001 = arith.addf %991, %1000 : vector<2x50xf32>
    %c30_376 = arith.constant 30 : index
    %c0_377 = arith.constant 0 : index
    %1002 = vector.load %arg10[%c30_376, %c0_377] : memref<60x50xf32, #tpu.memory_space<vmem>>, vector<2x50xf32>
    %c15 = arith.constant 15 : index
    %c0_378 = arith.constant 0 : index
    %c0_379 = arith.constant 0 : index
    %1003 = vector.load %arg5[%c15, %c0_378, %c0_379] : memref<30x50x50xf32, #tpu.memory_space<vmem>>, vector<1x50x50xf32>
    %1004 = vector.shape_cast %1003 : vector<1x50x50xf32> to vector<50x50xf32>
    %cst_380 = arith.constant dense<0.000000e+00> : vector<2x50xf32>
    %1005 = tpu.matmul %1002, %1004, %cst_380 {dimension_numbers = #tpu.dot_dimension_numbers<[1], [0], [0], [1], [0, 0, 1, 1], [], []>} : vector<2x50xf32>, vector<50x50xf32>, vector<2x50xf32> -> vector<2x50xf32>
    %1006 = arith.addf %996, %1005 : vector<2x50xf32>
    %c32_381 = arith.constant 32 : index
    %c0_382 = arith.constant 0 : index
    %1007 = vector.load %arg10[%c32_381, %c0_382] : memref<60x50xf32, #tpu.memory_space<vmem>>, vector<2x50xf32>
    %c16_383 = arith.constant 16 : index
    %c0_384 = arith.constant 0 : index
    %c0_385 = arith.constant 0 : index
    %1008 = vector.load %arg5[%c16_383, %c0_384, %c0_385] : memref<30x50x50xf32, #tpu.memory_space<vmem>>, vector<1x50x50xf32>
    %1009 = vector.shape_cast %1008 : vector<1x50x50xf32> to vector<50x50xf32>
    %cst_386 = arith.constant dense<0.000000e+00> : vector<2x50xf32>
    %1010 = tpu.matmul %1007, %1009, %cst_386 {dimension_numbers = #tpu.dot_dimension_numbers<[1], [0], [0], [1], [0, 0, 1, 1], [], []>} : vector<2x50xf32>, vector<50x50xf32>, vector<2x50xf32> -> vector<2x50xf32>
    %1011 = arith.addf %1001, %1010 : vector<2x50xf32>
    %c34_387 = arith.constant 34 : index
    %c0_388 = arith.constant 0 : index
    %1012 = vector.load %arg10[%c34_387, %c0_388] : memref<60x50xf32, #tpu.memory_space<vmem>>, vector<2x50xf32>
    %c17 = arith.constant 17 : index
    %c0_389 = arith.constant 0 : index
    %c0_390 = arith.constant 0 : index
    %1013 = vector.load %arg5[%c17, %c0_389, %c0_390] : memref<30x50x50xf32, #tpu.memory_space<vmem>>, vector<1x50x50xf32>
    %1014 = vector.shape_cast %1013 : vector<1x50x50xf32> to vector<50x50xf32>
    %cst_391 = arith.constant dense<0.000000e+00> : vector<2x50xf32>
    %1015 = tpu.matmul %1012, %1014, %cst_391 {dimension_numbers = #tpu.dot_dimension_numbers<[1], [0], [0], [1], [0, 0, 1, 1], [], []>} : vector<2x50xf32>, vector<50x50xf32>, vector<2x50xf32> -> vector<2x50xf32>
    %1016 = arith.addf %1006, %1015 : vector<2x50xf32>
    %c36_392 = arith.constant 36 : index
    %c0_393 = arith.constant 0 : index
    %1017 = vector.load %arg10[%c36_392, %c0_393] : memref<60x50xf32, #tpu.memory_space<vmem>>, vector<2x50xf32>
    %c18_394 = arith.constant 18 : index
    %c0_395 = arith.constant 0 : index
    %c0_396 = arith.constant 0 : index
    %1018 = vector.load %arg5[%c18_394, %c0_395, %c0_396] : memref<30x50x50xf32, #tpu.memory_space<vmem>>, vector<1x50x50xf32>
    %1019 = vector.shape_cast %1018 : vector<1x50x50xf32> to vector<50x50xf32>
    %cst_397 = arith.constant dense<0.000000e+00> : vector<2x50xf32>
    %1020 = tpu.matmul %1017, %1019, %cst_397 {dimension_numbers = #tpu.dot_dimension_numbers<[1], [0], [0], [1], [0, 0, 1, 1], [], []>} : vector<2x50xf32>, vector<50x50xf32>, vector<2x50xf32> -> vector<2x50xf32>
    %1021 = arith.addf %1011, %1020 : vector<2x50xf32>
    %c38_398 = arith.constant 38 : index
    %c0_399 = arith.constant 0 : index
    %1022 = vector.load %arg10[%c38_398, %c0_399] : memref<60x50xf32, #tpu.memory_space<vmem>>, vector<2x50xf32>
    %c19 = arith.constant 19 : index
    %c0_400 = arith.constant 0 : index
    %c0_401 = arith.constant 0 : index
    %1023 = vector.load %arg5[%c19, %c0_400, %c0_401] : memref<30x50x50xf32, #tpu.memory_space<vmem>>, vector<1x50x50xf32>
    %1024 = vector.shape_cast %1023 : vector<1x50x50xf32> to vector<50x50xf32>
    %cst_402 = arith.constant dense<0.000000e+00> : vector<2x50xf32>
    %1025 = tpu.matmul %1022, %1024, %cst_402 {dimension_numbers = #tpu.dot_dimension_numbers<[1], [0], [0], [1], [0, 0, 1, 1], [], []>} : vector<2x50xf32>, vector<50x50xf32>, vector<2x50xf32> -> vector<2x50xf32>
    %1026 = arith.addf %1016, %1025 : vector<2x50xf32>
    %c40_403 = arith.constant 40 : index
    %c0_404 = arith.constant 0 : index
    %1027 = vector.load %arg10[%c40_403, %c0_404] : memref<60x50xf32, #tpu.memory_space<vmem>>, vector<2x50xf32>
    %c20_405 = arith.constant 20 : index
    %c0_406 = arith.constant 0 : index
    %c0_407 = arith.constant 0 : index
    %1028 = vector.load %arg5[%c20_405, %c0_406, %c0_407] : memref<30x50x50xf32, #tpu.memory_space<vmem>>, vector<1x50x50xf32>
    %1029 = vector.shape_cast %1028 : vector<1x50x50xf32> to vector<50x50xf32>
    %cst_408 = arith.constant dense<0.000000e+00> : vector<2x50xf32>
    %1030 = tpu.matmul %1027, %1029, %cst_408 {dimension_numbers = #tpu.dot_dimension_numbers<[1], [0], [0], [1], [0, 0, 1, 1], [], []>} : vector<2x50xf32>, vector<50x50xf32>, vector<2x50xf32> -> vector<2x50xf32>
    %1031 = arith.addf %1021, %1030 : vector<2x50xf32>
    %c42_409 = arith.constant 42 : index
    %c0_410 = arith.constant 0 : index
    %1032 = vector.load %arg10[%c42_409, %c0_410] : memref<60x50xf32, #tpu.memory_space<vmem>>, vector<2x50xf32>
    %c21 = arith.constant 21 : index
    %c0_411 = arith.constant 0 : index
    %c0_412 = arith.constant 0 : index
    %1033 = vector.load %arg5[%c21, %c0_411, %c0_412] : memref<30x50x50xf32, #tpu.memory_space<vmem>>, vector<1x50x50xf32>
    %1034 = vector.shape_cast %1033 : vector<1x50x50xf32> to vector<50x50xf32>
    %cst_413 = arith.constant dense<0.000000e+00> : vector<2x50xf32>
    %1035 = tpu.matmul %1032, %1034, %cst_413 {dimension_numbers = #tpu.dot_dimension_numbers<[1], [0], [0], [1], [0, 0, 1, 1], [], []>} : vector<2x50xf32>, vector<50x50xf32>, vector<2x50xf32> -> vector<2x50xf32>
    %1036 = arith.addf %1026, %1035 : vector<2x50xf32>
    %c44_414 = arith.constant 44 : index
    %c0_415 = arith.constant 0 : index
    %1037 = vector.load %arg10[%c44_414, %c0_415] : memref<60x50xf32, #tpu.memory_space<vmem>>, vector<2x50xf32>
    %c22_416 = arith.constant 22 : index
    %c0_417 = arith.constant 0 : index
    %c0_418 = arith.constant 0 : index
    %1038 = vector.load %arg5[%c22_416, %c0_417, %c0_418] : memref<30x50x50xf32, #tpu.memory_space<vmem>>, vector<1x50x50xf32>
    %1039 = vector.shape_cast %1038 : vector<1x50x50xf32> to vector<50x50xf32>
    %cst_419 = arith.constant dense<0.000000e+00> : vector<2x50xf32>
    %1040 = tpu.matmul %1037, %1039, %cst_419 {dimension_numbers = #tpu.dot_dimension_numbers<[1], [0], [0], [1], [0, 0, 1, 1], [], []>} : vector<2x50xf32>, vector<50x50xf32>, vector<2x50xf32> -> vector<2x50xf32>
    %1041 = arith.addf %1031, %1040 : vector<2x50xf32>
    %c46_420 = arith.constant 46 : index
    %c0_421 = arith.constant 0 : index
    %1042 = vector.load %arg10[%c46_420, %c0_421] : memref<60x50xf32, #tpu.memory_space<vmem>>, vector<2x50xf32>
    %c23 = arith.constant 23 : index
    %c0_422 = arith.constant 0 : index
    %c0_423 = arith.constant 0 : index
    %1043 = vector.load %arg5[%c23, %c0_422, %c0_423] : memref<30x50x50xf32, #tpu.memory_space<vmem>>, vector<1x50x50xf32>
    %1044 = vector.shape_cast %1043 : vector<1x50x50xf32> to vector<50x50xf32>
    %cst_424 = arith.constant dense<0.000000e+00> : vector<2x50xf32>
    %1045 = tpu.matmul %1042, %1044, %cst_424 {dimension_numbers = #tpu.dot_dimension_numbers<[1], [0], [0], [1], [0, 0, 1, 1], [], []>} : vector<2x50xf32>, vector<50x50xf32>, vector<2x50xf32> -> vector<2x50xf32>
    %1046 = arith.addf %1036, %1045 : vector<2x50xf32>
    %c48_425 = arith.constant 48 : index
    %c0_426 = arith.constant 0 : index
    %1047 = vector.load %arg10[%c48_425, %c0_426] : memref<60x50xf32, #tpu.memory_space<vmem>>, vector<2x50xf32>
    %c24_427 = arith.constant 24 : index
    %c0_428 = arith.constant 0 : index
    %c0_429 = arith.constant 0 : index
    %1048 = vector.load %arg5[%c24_427, %c0_428, %c0_429] : memref<30x50x50xf32, #tpu.memory_space<vmem>>, vector<1x50x50xf32>
    %1049 = vector.shape_cast %1048 : vector<1x50x50xf32> to vector<50x50xf32>
    %cst_430 = arith.constant dense<0.000000e+00> : vector<2x50xf32>
    %1050 = tpu.matmul %1047, %1049, %cst_430 {dimension_numbers = #tpu.dot_dimension_numbers<[1], [0], [0], [1], [0, 0, 1, 1], [], []>} : vector<2x50xf32>, vector<50x50xf32>, vector<2x50xf32> -> vector<2x50xf32>
    %1051 = arith.addf %1041, %1050 : vector<2x50xf32>
    %c50_431 = arith.constant 50 : index
    %c0_432 = arith.constant 0 : index
    %1052 = vector.load %arg10[%c50_431, %c0_432] : memref<60x50xf32, #tpu.memory_space<vmem>>, vector<2x50xf32>
    %c25 = arith.constant 25 : index
    %c0_433 = arith.constant 0 : index
    %c0_434 = arith.constant 0 : index
    %1053 = vector.load %arg5[%c25, %c0_433, %c0_434] : memref<30x50x50xf32, #tpu.memory_space<vmem>>, vector<1x50x50xf32>
    %1054 = vector.shape_cast %1053 : vector<1x50x50xf32> to vector<50x50xf32>
    %cst_435 = arith.constant dense<0.000000e+00> : vector<2x50xf32>
    %1055 = tpu.matmul %1052, %1054, %cst_435 {dimension_numbers = #tpu.dot_dimension_numbers<[1], [0], [0], [1], [0, 0, 1, 1], [], []>} : vector<2x50xf32>, vector<50x50xf32>, vector<2x50xf32> -> vector<2x50xf32>
    %1056 = arith.addf %1046, %1055 : vector<2x50xf32>
    %c52_436 = arith.constant 52 : index
    %c0_437 = arith.constant 0 : index
    %1057 = vector.load %arg10[%c52_436, %c0_437] : memref<60x50xf32, #tpu.memory_space<vmem>>, vector<2x50xf32>
    %c26_438 = arith.constant 26 : index
    %c0_439 = arith.constant 0 : index
    %c0_440 = arith.constant 0 : index
    %1058 = vector.load %arg5[%c26_438, %c0_439, %c0_440] : memref<30x50x50xf32, #tpu.memory_space<vmem>>, vector<1x50x50xf32>
    %1059 = vector.shape_cast %1058 : vector<1x50x50xf32> to vector<50x50xf32>
    %cst_441 = arith.constant dense<0.000000e+00> : vector<2x50xf32>
    %1060 = tpu.matmul %1057, %1059, %cst_441 {dimension_numbers = #tpu.dot_dimension_numbers<[1], [0], [0], [1], [0, 0, 1, 1], [], []>} : vector<2x50xf32>, vector<50x50xf32>, vector<2x50xf32> -> vector<2x50xf32>
    %1061 = arith.addf %1051, %1060 : vector<2x50xf32>
    %c54_442 = arith.constant 54 : index
    %c0_443 = arith.constant 0 : index
    %1062 = vector.load %arg10[%c54_442, %c0_443] : memref<60x50xf32, #tpu.memory_space<vmem>>, vector<2x50xf32>
    %c27 = arith.constant 27 : index
    %c0_444 = arith.constant 0 : index
    %c0_445 = arith.constant 0 : index
    %1063 = vector.load %arg5[%c27, %c0_444, %c0_445] : memref<30x50x50xf32, #tpu.memory_space<vmem>>, vector<1x50x50xf32>
    %1064 = vector.shape_cast %1063 : vector<1x50x50xf32> to vector<50x50xf32>
    %cst_446 = arith.constant dense<0.000000e+00> : vector<2x50xf32>
    %1065 = tpu.matmul %1062, %1064, %cst_446 {dimension_numbers = #tpu.dot_dimension_numbers<[1], [0], [0], [1], [0, 0, 1, 1], [], []>} : vector<2x50xf32>, vector<50x50xf32>, vector<2x50xf32> -> vector<2x50xf32>
    %1066 = arith.addf %1056, %1065 : vector<2x50xf32>
    %c56_447 = arith.constant 56 : index
    %c0_448 = arith.constant 0 : index
    %1067 = vector.load %arg10[%c56_447, %c0_448] : memref<60x50xf32, #tpu.memory_space<vmem>>, vector<2x50xf32>
    %c28_449 = arith.constant 28 : index
    %c0_450 = arith.constant 0 : index
    %c0_451 = arith.constant 0 : index
    %1068 = vector.load %arg5[%c28_449, %c0_450, %c0_451] : memref<30x50x50xf32, #tpu.memory_space<vmem>>, vector<1x50x50xf32>
    %1069 = vector.shape_cast %1068 : vector<1x50x50xf32> to vector<50x50xf32>
    %cst_452 = arith.constant dense<0.000000e+00> : vector<2x50xf32>
    %1070 = tpu.matmul %1067, %1069, %cst_452 {dimension_numbers = #tpu.dot_dimension_numbers<[1], [0], [0], [1], [0, 0, 1, 1], [], []>} : vector<2x50xf32>, vector<50x50xf32>, vector<2x50xf32> -> vector<2x50xf32>
    %1071 = arith.addf %1061, %1070 : vector<2x50xf32>
    %c58_453 = arith.constant 58 : index
    %c0_454 = arith.constant 0 : index
    %1072 = vector.load %arg10[%c58_453, %c0_454] : memref<60x50xf32, #tpu.memory_space<vmem>>, vector<2x50xf32>
    %c29 = arith.constant 29 : index
    %c0_455 = arith.constant 0 : index
    %c0_456 = arith.constant 0 : index
    %1073 = vector.load %arg5[%c29, %c0_455, %c0_456] : memref<30x50x50xf32, #tpu.memory_space<vmem>>, vector<1x50x50xf32>
    %1074 = vector.shape_cast %1073 : vector<1x50x50xf32> to vector<50x50xf32>
    %cst_457 = arith.constant dense<0.000000e+00> : vector<2x50xf32>
    %1075 = tpu.matmul %1072, %1074, %cst_457 {dimension_numbers = #tpu.dot_dimension_numbers<[1], [0], [0], [1], [0, 0, 1, 1], [], []>} : vector<2x50xf32>, vector<50x50xf32>, vector<2x50xf32> -> vector<2x50xf32>
    %1076 = arith.addf %1066, %1075 : vector<2x50xf32>
    %1077 = arith.addf %1071, %1076 : vector<2x50xf32>
    %1078 = vector.extract_strided_slice %924 {offsets = [112, 0], sizes = [1, 50], strides = [1, 1]} : vector<120x50xf32> to vector<1x50xf32>
    %1079 = vector.broadcast %1078 : vector<1x50xf32> to vector<2x50xf32>
    %1080 = arith.addf %1077, %1079 : vector<2x50xf32>
    %cst_458 = arith.constant 0.000000e+00 : f32
    %1081 = vector.broadcast %cst_458 : f32 to vector<2x50xf32>
    %1082 = arith.maximumf %1080, %1081 : vector<2x50xf32>
    %1083 = vector.extract_strided_slice %924 {offsets = [0, 0], sizes = [50, 10], strides = [1, 1]} : vector<120x50xf32> to vector<50x10xf32>
    %cst_459 = arith.constant dense<0.000000e+00> : vector<2x10xf32>
    %1084 = tpu.matmul %1082, %1083, %cst_459 {dimension_numbers = #tpu.dot_dimension_numbers<[1], [0], [0], [1], [0, 0, 1, 1], [], []>} : vector<2x50xf32>, vector<50x10xf32>, vector<2x10xf32> -> vector<2x10xf32>
    %1085 = vector.extract_strided_slice %924 {offsets = [113, 0], sizes = [1, 10], strides = [1, 1]} : vector<120x50xf32> to vector<1x10xf32>
    %1086 = vector.broadcast %1085 : vector<1x10xf32> to vector<2x10xf32>
    %1087 = arith.addf %1084, %1086 : vector<2x10xf32>
    %cst_460 = arith.constant 0.000000e+00 : f32
    %1088 = vector.broadcast %cst_460 : f32 to vector<2x10xf32>
    %1089 = arith.maximumf %1087, %1088 : vector<2x10xf32>
    %c0_461 = arith.constant 0 : index
    %c0_462 = arith.constant 0 : index
    %1090 = vector.load %arg1[%c0_461, %c0_462] : memref<2x17xf32, #tpu.memory_space<vmem>>, vector<2x17xf32>
    %1091 = vector.extract_strided_slice %924 {offsets = [56, 0], sizes = [17, 10], strides = [1, 1]} : vector<120x50xf32> to vector<17x10xf32>
    %cst_463 = arith.constant dense<0.000000e+00> : vector<2x10xf32>
    %1092 = tpu.matmul %1090, %1091, %cst_463 {dimension_numbers = #tpu.dot_dimension_numbers<[1], [0], [0], [1], [0, 0, 1, 1], [], []>} : vector<2x17xf32>, vector<17x10xf32>, vector<2x10xf32> -> vector<2x10xf32>
    %cst_464 = arith.constant 0.000000e+00 : f32
    %1093 = vector.broadcast %cst_464 : f32 to vector<2x10xf32>
    %1094 = arith.maximumf %1092, %1093 : vector<2x10xf32>
    %1095 = vector.extract_strided_slice %924 {offsets = [80, 0], sizes = [10, 1], strides = [1, 1]} : vector<120x50xf32> to vector<10x1xf32>
    %cst_465 = arith.constant dense<0.000000e+00> : vector<2x1xf32>
    %1096 = tpu.matmul %1089, %1095, %cst_465 {dimension_numbers = #tpu.dot_dimension_numbers<[1], [0], [0], [1], [0, 0, 1, 1], [], []>} : vector<2x10xf32>, vector<10x1xf32>, vector<2x1xf32> -> vector<2x1xf32>
    %1097 = vector.extract_strided_slice %924 {offsets = [96, 0], sizes = [10, 1], strides = [1, 1]} : vector<120x50xf32> to vector<10x1xf32>
    %cst_466 = arith.constant dense<0.000000e+00> : vector<2x1xf32>
    %1098 = tpu.matmul %1094, %1097, %cst_466 {dimension_numbers = #tpu.dot_dimension_numbers<[1], [0], [0], [1], [0, 0, 1, 1], [], []>} : vector<2x10xf32>, vector<10x1xf32>, vector<2x1xf32> -> vector<2x1xf32>
    %1099 = arith.addf %1096, %1098 : vector<2x1xf32>
    %1100 = vector.extract_strided_slice %924 {offsets = [114, 0], sizes = [1, 1], strides = [1, 1]} : vector<120x50xf32> to vector<1x1xf32>
    %1101 = vector.broadcast %1100 : vector<1x1xf32> to vector<2x1xf32>
    %1102 = arith.addf %1099, %1101 : vector<2x1xf32>
    %c0_467 = arith.constant 0 : index
    %c0_468 = arith.constant 0 : index
    %1103 = vector.load %arg7[%c0_467, %c0_468] : memref<2x1xf32, #tpu.memory_space<vmem>>, vector<2x1xf32>
    tpu.vector_store %arg7[%c0_467, %c0_468], %1102 {strides = array<i32>} : memref<2x1xf32, #tpu.memory_space<vmem>>, vector<2x1xf32>,
    return
  }
}

</mosaic_0001>

<llo_original>
// kernel: mul.35
$region0: #{mul.35}
  #allocation0 [shape = 's32[1]{0}', space=sflag, size = 0x4, scoped, tag = 'scoped memory for mul.35']
  %s0 = inlined_call_operand.vmem [shape: f32[60,60], index: 0, kind: input, shape index: {}]
  %s1 = inlined_call_operand.vmem [shape: f32[60,60], index: 1, kind: input, shape index: {}]
  %s2 = inlined_call_operand.vmem [shape: f32[60,60], index: 2, kind: output, shape index: {}]
  %v3 = vld [vmem:[%s0] sm:$0xff]
  %v4 = vld [vmem:[%s1] sm:$0xff]
  %5 = xla_tuple %v3, %v4
  %6 = xla_tuple %5
  %v7 = vmul.f32 %v3, %v4
  %8 = xla_tuple %v7
  %9 = vst [vmem:[%s2] sm:$0xff] %v7
  %s10 = scalar_lea.vmem %s0, 8
  %v11 = vld [vmem:[%s10] sm:$0xff]
  %s12 = scalar_lea.vmem %s1, 8
  %v13 = vld [vmem:[%s12] sm:$0xff]
  %14 = xla_tuple %v11, %v13
  %15 = xla_tuple %14
  %v16 = vmul.f32 %v11, %v13
  %17 = xla_tuple %v16
  %s18 = scalar_lea.vmem %s2, 8
  %19 = vst [vmem:[%s18] sm:$0xff] %v16
  %s20 = scalar_lea.vmem %s0, 16
  %v21 = vld [vmem:[%s20] sm:$0xff]
  %s22 = scalar_lea.vmem %s1, 16
  %v23 = vld [vmem:[%s22] sm:$0xff]
  %24 = xla_tuple %v21, %v23
  %25 = xla_tuple %24
  %v26 = vmul.f32 %v21, %v23
  %27 = xla_tuple %v26
  %s28 = scalar_lea.vmem %s2, 16
  %29 = vst [vmem:[%s28] sm:$0xff] %v26
  %s30 = scalar_lea.vmem %s0, 24
  %v31 = vld [vmem:[%s30] sm:$0xff]
  %s32 = scalar_lea.vmem %s1, 24
  %v33 = vld [vmem:[%s32] sm:$0xff]
  %34 = xla_tuple %v31, %v33
  %35 = xla_tuple %34
  %v36 = vmul.f32 %v31, %v33
  %37 = xla_tuple %v36
  %s38 = scalar_lea.vmem %s2, 24
  %39 = vst [vmem:[%s38] sm:$0xff] %v36
  %s40 = scalar_lea.vmem %s0, 32
  %v41 = vld [vmem:[%s40] sm:$0xff]
  %s42 = scalar_lea.vmem %s1, 32
  %v43 = vld [vmem:[%s42] sm:$0xff]
  %44 = xla_tuple %v41, %v43
  %45 = xla_tuple %44
  %v46 = vmul.f32 %v41, %v43
  %47 = xla_tuple %v46
  %s48 = scalar_lea.vmem %s2, 32
  %49 = vst [vmem:[%s48] sm:$0xff] %v46
  %s50 = scalar_lea.vmem %s0, 40
  %v51 = vld [vmem:[%s50] sm:$0xff]
  %s52 = scalar_lea.vmem %s1, 40
  %v53 = vld [vmem:[%s52] sm:$0xff]
  %54 = xla_tuple %v51, %v53
  %55 = xla_tuple %54
  %v56 = vmul.f32 %v51, %v53
  %57 = xla_tuple %v56
  %s58 = scalar_lea.vmem %s2, 40
  %59 = vst [vmem:[%s58] sm:$0xff] %v56
  %s60 = scalar_lea.vmem %s0, 48
  %v61 = vld [vmem:[%s60] sm:$0xff]
  %s62 = scalar_lea.vmem %s1, 48
  %v63 = vld [vmem:[%s62] sm:$0xff]
  %64 = xla_tuple %v61, %v63
  %65 = xla_tuple %64
  %v66 = vmul.f32 %v61, %v63
  %67 = xla_tuple %v66
  %s68 = scalar_lea.vmem %s2, 48
  %69 = vst [vmem:[%s68] sm:$0xff] %v66
  %s70 = scalar_lea.vmem %s0, 56
  %v71 = vld [vmem:[%s70] sm:$0xff]
  %s72 = scalar_lea.vmem %s1, 56
  %v73 = vld [vmem:[%s72] sm:$0xff]
  %74 = xla_tuple %v71, %v73
  %75 = xla_tuple %74
  %v76 = vmul.f32 %v71, %v73
  %77 = xla_tuple %v76
  %s78 = scalar_lea.vmem %s2, 56
  %79 = vst [vmem:[%s78] sm:$0xff] %v76

// kernel: model_forward.1
$region0: #{model_forward.1}
  #allocation0 [shape = 'u32[]', space=smem, size = 0x4, offset = 0x4, fixed_abs, tag = 'smem constant byte address 0x4 - core index']
  #allocation1 [shape = 'u32[72,128]{1,0:T(1,128)}', space=vmem, size = 0x9000, scoped, tag = 'internal scratch']
  #allocation2 [shape = 'f32[60,512]{1,0:T(8,128)}', space=vmem, size = 0x20000, scoped, tag = 'scratch operand']
  #allocation3 [shape = 'f32[61,50]{1,0:T(8,128)}', space=vmem, size = 0x8000, scoped, tag = 'scratch operand']
  #allocation4 [shape = 'f32[60,50]{1,0:T(8,128)}', space=vmem, size = 0x8000, scoped, tag = 'scratch operand']
  %s0 = inlined_call_operand.vmem [shape: f32[60,9], index: 0, kind: input, shape index: {}]
  %s1 = inlined_call_operand.vmem [shape: f32[2,17], index: 1, kind: input, shape index: {}]
  %s2 = inlined_call_operand.vmem [shape: f32[9,512], index: 2, kind: input, shape index: {}]
  %s3 = inlined_call_operand.vmem [shape: f32[50,512], index: 3, kind: input, shape index: {}]
  %s4 = inlined_call_operand.vmem [shape: f32[60,188], index: 4, kind: input, shape index: {}]
  %s5 = inlined_call_operand.vmem [shape: f32[30,50,50], index: 5, kind: input, shape index: {}]
  %s6 = inlined_call_operand.vmem [shape: f32[120,50], index: 6, kind: input, shape index: {}]
  %s7 = inlined_call_operand.vmem [shape: f32[2,1], index: 7, kind: output, shape index: {}]
  %s8 = sld [smem:[#allocation0]]
  $region38: #{model_forward.1} parent=0
    _
  %s10 = ssub.s32 1, %s8
  %s11 = scalar_select 0, %s10, %s8
  // Predicated region
  $region2: #{model_forward.1} parent=0 // pred_check
    _
  $region3: #{model_forward.1} parent=0 // pred_check_branch
    %13 = sbr.rel (0) target = $region5
  $region4: #{model_forward.1} parent=0 // pred_region
    _
  $region5: #{model_forward.1} parent=0 // pred_fallthru
    _
  // Predicated region
  $region6: #{model_forward.1} parent=0 // pred_check
    _
  $region7: #{model_forward.1} parent=0 // pred_check_branch
    %15 = sbr.rel (0) target = $region9
  $region8: #{model_forward.1} parent=0 // pred_region
    _
  $region9: #{model_forward.1} parent=0 // pred_fallthru
    _
  // Predicated region
  $region10: #{model_forward.1} parent=0 // pred_check
    _
  $region11: #{model_forward.1} parent=0 // pred_check_branch
    %17 = sbr.rel (0) target = $region13
  $region12: #{model_forward.1} parent=0 // pred_region
    _
  $region13: #{model_forward.1} parent=0 // pred_fallthru
    _
  // Predicated region
  $region14: #{model_forward.1} parent=0 // pred_check
    _
  $region15: #{model_forward.1} parent=0 // pred_check_branch
    %19 = sbr.rel (0) target = $region17
  $region16: #{model_forward.1} parent=0 // pred_region
    _
  $region17: #{model_forward.1} parent=0 // pred_fallthru
    _
  // Predicated region
  $region18: #{model_forward.1} parent=0 // pred_check
    _
  $region19: #{model_forward.1} parent=0 // pred_check_branch
    %21 = sbr.rel (0) target = $region21
  $region20: #{model_forward.1} parent=0 // pred_region
    _
  $region21: #{model_forward.1} parent=0 // pred_fallthru
    _
  // Predicated region
  $region22: #{model_forward.1} parent=0 // pred_check
    _
  $region23: #{model_forward.1} parent=0 // pred_check_branch
    %23 = sbr.rel (0) target = $region25
  $region24: #{model_forward.1} parent=0 // pred_region
    _
  $region25: #{model_forward.1} parent=0 // pred_fallthru
    _
  // Predicated region
  $region26: #{model_forward.1} parent=0 // pred_check
    _
  $region27: #{model_forward.1} parent=0 // pred_check_branch
    %25 = sbr.rel (0) target = $region29
  $region28: #{model_forward.1} parent=0 // pred_region
    _
  $region29: #{model_forward.1} parent=0 // pred_fallthru
    _
  %vm26 = vcmask 401408
  %27 = vst.msk [vmem:[#allocation3 + $0x3c] sm:$0x1] %vm26, 1.0
  %v28 = vld [vmem:[%s0] sm:$0xff]
  %v29 = vld [vmem:[%s0 + $0x8] sm:$0xff]
  %v30 = vld [vmem:[%s0 + $0x10] sm:$0xff]
  %v31 = vld [vmem:[%s0 + $0x18] sm:$0xff]
  %v32 = vld [vmem:[%s0 + $0x20] sm:$0xff]
  %v33 = vld [vmem:[%s0 + $0x28] sm:$0xff]
  %v34 = vld [vmem:[%s0 + $0x30] sm:$0xff]
  %v35 = vld [vmem:[%s0 + $0x38] sm:$0xf]
  %v36 = vld [vmem:[%s2] sm:$0xff]
  %v37 = vld [vmem:[%s2 + $0x8] sm:$0xff]
  %v38 = vld [vmem:[%s2 + $0x10] sm:$0xff]
  %v39 = vld [vmem:[%s2 + $0x18] sm:$0xff]
  %v40 = vld [vmem:[%s2 + $0x20] sm:$0x1]
  %v41 = vld [vmem:[%s2 + $0x28] sm:$0x1]
  %v42 = vld [vmem:[%s2 + $0x30] sm:$0x1]
  %v43 = vld [vmem:[%s2 + $0x38] sm:$0x1]
  %vm44 = vcmask 72704
  %v46 = vsel %vm44, %v28, 0
  %v49 = vsel %vm44, %v29, 0
  %v52 = vsel %vm44, %v30, 0
  %v55 = vsel %vm44, %v31, 0
  %v58 = vsel %vm44, %v32, 0
  %v61 = vsel %vm44, %v33, 0
  %v64 = vsel %vm44, %v34, 0
  %v67 = vsel %vm44, %v35, 0
  %vm69 = vcmask 1040384
  %v71 = vsel %vm69, %v40, 0
  %v74 = vsel %vm69, %v41, 0
  %v77 = vsel %vm69, %v42, 0
  %v80 = vsel %vm69, %v43, 0
  %82 = vmatpush.msra.mxu0 0.0
  %83 = vmatpush.msra.mxu0 0.0
  %84 = vmatpush.msra.mxu0 0.0
  %85 = vmatpush.msra.mxu0 0.0
  %86 = vmatpush.msra.mxu0 0.0
  %87 = vmatpush.msra.mxu0 0.0
  %88 = vmatpush.msra.mxu0 0.0
  %89 = vmatpush.msra.mxu0 0.0
  %90 = vmatpush.msra.mxu0 0.0
  %91 = vmatpush.msra.mxu0 0.0
  %92 = vmatpush.msra.mxu0 0.0
  %93 = vmatpush.msra.mxu0 0.0
  %94 = vmatpush.msra.mxu0 0.0
  %95 = vmatpush.msra.mxu0 0.0
  %96 = vmatpush.msra.mxu0 %v71
  %97 = vmatpush.msra.mxu0 %v36
  %98 = vmatmul.f32.gmra.mxu0 %v46
  %v99 = vpop.f32.mrf.mxu0
  %v100 = vadd.f32 0.0, %v99
  %101 = vmatmul.f32.gmra.mxu0 %v49
  %v102 = vpop.f32.mrf.mxu0
  %v103 = vadd.f32 0.0, %v102
  %104 = vmatmul.f32.gmra.mxu0 %v52
  %v105 = vpop.f32.mrf.mxu0
  %v106 = vadd.f32 0.0, %v105
  %107 = vmatmul.f32.gmra.mxu0 %v55
  %v108 = vpop.f32.mrf.mxu0
  %v109 = vadd.f32 0.0, %v108
  %110 = vmatmul.f32.gmra.mxu0 %v58
  %v111 = vpop.f32.mrf.mxu0
  %v112 = vadd.f32 0.0, %v111
  %113 = vmatmul.f32.gmra.mxu0 %v61
  %v114 = vpop.f32.mrf.mxu0
  %v115 = vadd.f32 0.0, %v114
  %116 = vmatmul.f32.gmra.mxu0 %v64
  %v117 = vpop.f32.mrf.mxu0
  %v118 = vadd.f32 0.0, %v117
  %119 = vmatmul.f32.gmra.mxu0 %v67
  %v120 = vpop.f32.mrf.mxu0
  %v121 = vadd.f32 0.0, %v120
  %122 = vdwg.mxu0
  %123 = vmatpush.msra.mxu0 0.0
  %124 = vmatpush.msra.mxu0 0.0
  %125 = vmatpush.msra.mxu0 0.0
  %126 = vmatpush.msra.mxu0 0.0
  %127 = vmatpush.msra.mxu0 0.0
  %128 = vmatpush.msra.mxu0 0.0
  %129 = vmatpush.msra.mxu0 0.0
  %130 = vmatpush.msra.mxu0 0.0
  %131 = vmatpush.msra.mxu0 0.0
  %132 = vmatpush.msra.mxu0 0.0
  %133 = vmatpush.msra.mxu0 0.0
  %134 = vmatpush.msra.mxu0 0.0
  %135 = vmatpush.msra.mxu0 0.0
  %136 = vmatpush.msra.mxu0 0.0
  %137 = vmatpush.msra.mxu0 %v74
  %138 = vmatpush.msra.mxu0 %v37
  %139 = vmatmul.f32.gmra.mxu0 %v46
  %v140 = vpop.f32.mrf.mxu0
  %v141 = vadd.f32 0.0, %v140
  %142 = vmatmul.f32.gmra.mxu0 %v49
  %v143 = vpop.f32.mrf.mxu0
  %v144 = vadd.f32 0.0, %v143
  %145 = vmatmul.f32.gmra.mxu0 %v52
  %v146 = vpop.f32.mrf.mxu0
  %v147 = vadd.f32 0.0, %v146
  %148 = vmatmul.f32.gmra.mxu0 %v55
  %v149 = vpop.f32.mrf.mxu0
  %v150 = vadd.f32 0.0, %v149
  %151 = vmatmul.f32.gmra.mxu0 %v58
  %v152 = vpop.f32.mrf.mxu0
  %v153 = vadd.f32 0.0, %v152
  %154 = vmatmul.f32.gmra.mxu0 %v61
  %v155 = vpop.f32.mrf.mxu0
  %v156 = vadd.f32 0.0, %v155
  %157 = vmatmul.f32.gmra.mxu0 %v64
  %v158 = vpop.f32.mrf.mxu0
  %v159 = vadd.f32 0.0, %v158
  %160 = vmatmul.f32.gmra.mxu0 %v67
  %v161 = vpop.f32.mrf.mxu0
  %v162 = vadd.f32 0.0, %v161
  %163 = vdwg.mxu0
  %164 = vmatpush.msra.mxu0 0.0
  %165 = vmatpush.msra.mxu0 0.0
  %166 = vmatpush.msra.mxu0 0.0
  %167 = vmatpush.msra.mxu0 0.0
  %168 = vmatpush.msra.mxu0 0.0
  %169 = vmatpush.msra.mxu0 0.0
  %170 = vmatpush.msra.mxu0 0.0
  %171 = vmatpush.msra.mxu0 0.0
  %172 = vmatpush.msra.mxu0 0.0
  %173 = vmatpush.msra.mxu0 0.0
  %174 = vmatpush.msra.mxu0 0.0
  %175 = vmatpush.msra.mxu0 0.0
  %176 = vmatpush.msra.mxu0 0.0
  %177 = vmatpush.msra.mxu0 0.0
  %178 = vmatpush.msra.mxu0 %v77
  %179 = vmatpush.msra.mxu0 %v38
  %180 = vmatmul.f32.gmra.mxu0 %v46
  %v181 = vpop.f32.mrf.mxu0
  %v182 = vadd.f32 0.0, %v181
  %183 = vmatmul.f32.gmra.mxu0 %v49
  %v184 = vpop.f32.mrf.mxu0
  %v185 = vadd.f32 0.0, %v184
  %186 = vmatmul.f32.gmra.mxu0 %v52
  %v187 = vpop.f32.mrf.mxu0
  %v188 = vadd.f32 0.0, %v187
  %189 = vmatmul.f32.gmra.mxu0 %v55
  %v190 = vpop.f32.mrf.mxu0
  %v191 = vadd.f32 0.0, %v190
  %192 = vmatmul.f32.gmra.mxu0 %v58
  %v193 = vpop.f32.mrf.mxu0
  %v194 = vadd.f32 0.0, %v193
  %195 = vmatmul.f32.gmra.mxu0 %v61
  %v196 = vpop.f32.mrf.mxu0
  %v197 = vadd.f32 0.0, %v196
  %198 = vmatmul.f32.gmra.mxu0 %v64
  %v199 = vpop.f32.mrf.mxu0
  %v200 = vadd.f32 0.0, %v199
  %201 = vmatmul.f32.gmra.mxu0 %v67
  %v202 = vpop.f32.mrf.mxu0
  %v203 = vadd.f32 0.0, %v202
  %204 = vdwg.mxu0
  %205 = vmatpush.msra.mxu0 0.0
  %206 = vmatpush.msra.mxu0 0.0
  %207 = vmatpush.msra.mxu0 0.0
  %208 = vmatpush.msra.mxu0 0.0
  %209 = vmatpush.msra.mxu0 0.0
  %210 = vmatpush.msra.mxu0 0.0
  %211 = vmatpush.msra.mxu0 0.0
  %212 = vmatpush.msra.mxu0 0.0
  %213 = vmatpush.msra.mxu0 0.0
  %214 = vmatpush.msra.mxu0 0.0
  %215 = vmatpush.msra.mxu0 0.0
  %216 = vmatpush.msra.mxu0 0.0
  %217 = vmatpush.msra.mxu0 0.0
  %218 = vmatpush.msra.mxu0 0.0
  %219 = vmatpush.msra.mxu0 %v80
  %220 = vmatpush.msra.mxu0 %v39
  %221 = vmatmul.f32.gmra.mxu0 %v46
  %v222 = vpop.f32.mrf.mxu0
  %v223 = vadd.f32 0.0, %v222
  %224 = vmatmul.f32.gmra.mxu0 %v49
  %v225 = vpop.f32.mrf.mxu0
  %v226 = vadd.f32 0.0, %v225
  %227 = vmatmul.f32.gmra.mxu0 %v52
  %v228 = vpop.f32.mrf.mxu0
  %v229 = vadd.f32 0.0, %v228
  %230 = vmatmul.f32.gmra.mxu0 %v55
  %v231 = vpop.f32.mrf.mxu0
  %v232 = vadd.f32 0.0, %v231
  %233 = vmatmul.f32.gmra.mxu0 %v58
  %v234 = vpop.f32.mrf.mxu0
  %v235 = vadd.f32 0.0, %v234
  %236 = vmatmul.f32.gmra.mxu0 %v61
  %v237 = vpop.f32.mrf.mxu0
  %v238 = vadd.f32 0.0, %v237
  %239 = vmatmul.f32.gmra.mxu0 %v64
  %v240 = vpop.f32.mrf.mxu0
  %v241 = vadd.f32 0.0, %v240
  %242 = vmatmul.f32.gmra.mxu0 %v67
  %v243 = vpop.f32.mrf.mxu0
  %v244 = vadd.f32 0.0, %v243
  %245 = vdwg.mxu0
  %246 = vst [vmem:[#allocation2] sm:$0xff] %v100
  %247 = vst [vmem:[#allocation2 + $0x8] sm:$0xff] %v141
  %248 = vst [vmem:[#allocation2 + $0x10] sm:$0xff] %v182
  %249 = vst [vmem:[#allocation2 + $0x18] sm:$0xff] %v223
  %250 = vst [vmem:[#allocation2 + $0x20] sm:$0xff] %v103
  %251 = vst [vmem:[#allocation2 + $0x28] sm:$0xff] %v144
  %252 = vst [vmem:[#allocation2 + $0x30] sm:$0xff] %v185
  %253 = vst [vmem:[#allocation2 + $0x38] sm:$0xff] %v226
  %254 = vst [vmem:[#allocation2 + $0x40] sm:$0xff] %v106
  %255 = vst [vmem:[#allocation2 + $0x48] sm:$0xff] %v147
  %256 = vst [vmem:[#allocation2 + $0x50] sm:$0xff] %v188
  %257 = vst [vmem:[#allocation2 + $0x58] sm:$0xff] %v229
  %258 = vst [vmem:[#allocation2 + $0x60] sm:$0xff] %v109
  %259 = vst [vmem:[#allocation2 + $0x68] sm:$0xff] %v150
  %260 = vst [vmem:[#allocation2 + $0x70] sm:$0xff] %v191
  %261 = vst [vmem:[#allocation2 + $0x78] sm:$0xff] %v232
  %262 = vst [vmem:[#allocation2 + $0x80] sm:$0xff] %v112
  %263 = vst [vmem:[#allocation2 + $0x88] sm:$0xff] %v153
  %264 = vst [vmem:[#allocation2 + $0x90] sm:$0xff] %v194
  %265 = vst [vmem:[#allocation2 + $0x98] sm:$0xff] %v235
  %266 = vst [vmem:[#allocation2 + $0xa0] sm:$0xff] %v115
  %267 = vst [vmem:[#allocation2 + $0xa8] sm:$0xff] %v156
  %268 = vst [vmem:[#allocation2 + $0xb0] sm:$0xff] %v197
  %269 = vst [vmem:[#allocation2 + $0xb8] sm:$0xff] %v238
  %270 = vst [vmem:[#allocation2 + $0xc0] sm:$0xff] %v118
  %271 = vst [vmem:[#allocation2 + $0xc8] sm:$0xff] %v159
  %272 = vst [vmem:[#allocation2 + $0xd0] sm:$0xff] %v200
  %273 = vst [vmem:[#allocation2 + $0xd8] sm:$0xff] %v241
  %274 = vst [vmem:[#allocation2 + $0xe0] sm:$0xf] %v121
  %275 = vst [vmem:[#allocation2 + $0xe8] sm:$0xf] %v162
  %276 = vst [vmem:[#allocation2 + $0xf0] sm:$0xf] %v203
  %277 = vst [vmem:[#allocation2 + $0xf8] sm:$0xf] %v244
  %v278 = vld [vmem:[%s3] sm:$0xff]
  %v279 = vld [vmem:[%s3 + $0x8] sm:$0xff]
  %v280 = vld [vmem:[%s3 + $0x10] sm:$0xff]
  %v281 = vld [vmem:[%s3 + $0x18] sm:$0xff]
  %v282 = vld [vmem:[%s3 + $0x20] sm:$0xff]
  %v283 = vld [vmem:[%s3 + $0x28] sm:$0xff]
  %v284 = vld [vmem:[%s3 + $0x30] sm:$0xff]
  %v285 = vld [vmem:[%s3 + $0x38] sm:$0xff]
  %v286 = vld [vmem:[%s3 + $0x40] sm:$0xff]
  %v287 = vld [vmem:[%s3 + $0x48] sm:$0xff]
  %v288 = vld [vmem:[%s3 + $0x50] sm:$0xff]
  %v289 = vld [vmem:[%s3 + $0x58] sm:$0xff]
  %v290 = vld [vmem:[%s3 + $0x60] sm:$0xff]
  %v291 = vld [vmem:[%s3 + $0x68] sm:$0xff]
  %v292 = vld [vmem:[%s3 + $0x70] sm:$0xff]
  %v293 = vld [vmem:[%s3 + $0x78] sm:$0xff]
  %v294 = vld [vmem:[%s3 + $0x80] sm:$0xff]
  %v295 = vld [vmem:[%s3 + $0x88] sm:$0xff]
  %v296 = vld [vmem:[%s3 + $0x90] sm:$0xff]
  %v297 = vld [vmem:[%s3 + $0x98] sm:$0xff]
  %v298 = vld [vmem:[%s3 + $0xa0] sm:$0xff]
  %v299 = vld [vmem:[%s3 + $0xa8] sm:$0xff]
  %v300 = vld [vmem:[%s3 + $0xb0] sm:$0xff]
  %v301 = vld [vmem:[%s3 + $0xb8] sm:$0xff]
  %v302 = vld [vmem:[%s3 + $0xc0] sm:$0x3]
  %v303 = vld [vmem:[%s3 + $0xc8] sm:$0x3]
  %v304 = vld [vmem:[%s3 + $0xd0] sm:$0x3]
  %v305 = vld [vmem:[%s3 + $0xd8] sm:$0x3]
  %v306 = vld [vmem:[#allocation2] sm:$0x3]
  %v307 = vld [vmem:[#allocation2 + $0x8] sm:$0x3]
  %v308 = vld [vmem:[#allocation2 + $0x10] sm:$0x3]
  %v309 = vld [vmem:[#allocation2 + $0x18] sm:$0x3]
  %vm310 = vcmask 408576
  %v312 = vsel %vm310, 0.0, 0
  %vm314 = vcmask 1041408
  %v316 = vsel %vm314, %v302, 0
  %v319 = vsel %vm314, %v303, 0
  %v322 = vsel %vm314, %v304, 0
  %v325 = vsel %vm314, %v305, 0
  %327 = vmatpush.msra.mxu0 0.0
  %328 = vmatpush.msra.mxu0 0.0
  %329 = vmatpush.msra.mxu0 0.0
  %330 = vmatpush.msra.mxu0 0.0
  %331 = vmatpush.msra.mxu0 0.0
  %332 = vmatpush.msra.mxu0 0.0
  %333 = vmatpush.msra.mxu0 0.0
  %334 = vmatpush.msra.mxu0 0.0
  %335 = vmatpush.msra.mxu0 0.0
  %336 = vmatpush.msra.mxu0 %v316
  %337 = vmatpush.msra.mxu0 %v298
  %338 = vmatpush.msra.mxu0 %v294
  %339 = vmatpush.msra.mxu0 %v290
  %340 = vmatpush.msra.mxu0 %v286
  %341 = vmatpush.msra.mxu0 %v282
  %342 = vmatpush.msra.mxu0 %v278
  %343 = vmatmul.f32.gmra.mxu0 %v312
  %v344 = vpop.f32.mrf.mxu0
  %v345 = vadd.f32 %v306, %v344
  %346 = vdwg.mxu0
  %347 = vmatpush.msra.mxu0 0.0
  %348 = vmatpush.msra.mxu0 0.0
  %349 = vmatpush.msra.mxu0 0.0
  %350 = vmatpush.msra.mxu0 0.0
  %351 = vmatpush.msra.mxu0 0.0
  %352 = vmatpush.msra.mxu0 0.0
  %353 = vmatpush.msra.mxu0 0.0
  %354 = vmatpush.msra.mxu0 0.0
  %355 = vmatpush.msra.mxu0 0.0
  %356 = vmatpush.msra.mxu0 %v319
  %357 = vmatpush.msra.mxu0 %v299
  %358 = vmatpush.msra.mxu0 %v295
  %359 = vmatpush.msra.mxu0 %v291
  %360 = vmatpush.msra.mxu0 %v287
  %361 = vmatpush.msra.mxu0 %v283
  %362 = vmatpush.msra.mxu0 %v279
  %363 = vmatmul.f32.gmra.mxu0 %v312
  %v364 = vpop.f32.mrf.mxu0
  %v365 = vadd.f32 %v307, %v364
  %366 = vdwg.mxu0
  %367 = vmatpush.msra.mxu0 0.0
  %368 = vmatpush.msra.mxu0 0.0
  %369 = vmatpush.msra.mxu0 0.0
  %370 = vmatpush.msra.mxu0 0.0
  %371 = vmatpush.msra.mxu0 0.0
  %372 = vmatpush.msra.mxu0 0.0
  %373 = vmatpush.msra.mxu0 0.0
  %374 = vmatpush.msra.mxu0 0.0
  %375 = vmatpush.msra.mxu0 0.0
  %376 = vmatpush.msra.mxu0 %v322
  %377 = vmatpush.msra.mxu0 %v300
  %378 = vmatpush.msra.mxu0 %v296
  %379 = vmatpush.msra.mxu0 %v292
  %380 = vmatpush.msra.mxu0 %v288
  %381 = vmatpush.msra.mxu0 %v284
  %382 = vmatpush.msra.mxu0 %v280
  %383 = vmatmul.f32.gmra.mxu0 %v312
  %v384 = vpop.f32.mrf.mxu0
  %v385 = vadd.f32 %v308, %v384
  %386 = vdwg.mxu0
  %387 = vmatpush.msra.mxu0 0.0
  %388 = vmatpush.msra.mxu0 0.0
  %389 = vmatpush.msra.mxu0 0.0
  %390 = vmatpush.msra.mxu0 0.0
  %391 = vmatpush.msra.mxu0 0.0
  %392 = vmatpush.msra.mxu0 0.0
  %393 = vmatpush.msra.mxu0 0.0
  %394 = vmatpush.msra.mxu0 0.0
  %395 = vmatpush.msra.mxu0 0.0
  %396 = vmatpush.msra.mxu0 %v325
  %397 = vmatpush.msra.mxu0 %v301
  %398 = vmatpush.msra.mxu0 %v297
  %399 = vmatpush.msra.mxu0 %v293
  %400 = vmatpush.msra.mxu0 %v289
  %401 = vmatpush.msra.mxu0 %v285
  %402 = vmatpush.msra.mxu0 %v281
  %403 = vmatmul.f32.gmra.mxu0 %v312
  %v404 = vpop.f32.mrf.mxu0
  %v405 = vadd.f32 %v309, %v404
  %406 = vdwg.mxu0
  %v407 = vxor.u32 %v345, 2147483648
  %v408 = vmul.f32 %v407, 1.442695
  %v409 = vpow.pop %v408
  %v410 = vadd.f32 %v409, 1.0
  %v411 = vrcp.pop %v410
  %v412 = vmul.f32 %v410, %v411
  %v413 = vsub.f32 1.0, %v412
  %v414 = vmul.f32 %v411, %v413
  %v415 = vadd.f32 %v411, %v414
  %vm416 = vweird.f32 %v410
  %vm417 = vweird.f32 %v411
  %vm418 = vmor %vm416, %vm417
  %v419 = vsel %vm418, %v411, %v415
  %v420 = vand.u32 2147483647, %v410
  %vm421 = vcmp.eq.f32.partialorder %v420, 8.507059e+37
  %v422 = vand.u32 %v410, 2147483648
  %v423 = vor.u32 1.1754944e-38, %v422
  %v424 = vsel %vm421, %v423, %v419
  %v425 = vmul.f32 1.0, %v424
  %v426 = vxor.u32 %v365, 2147483648
  %v427 = vmul.f32 %v426, 1.442695
  %v428 = vpow.pop %v427
  %v429 = vadd.f32 %v428, 1.0
  %v430 = vrcp.pop %v429
  %v431 = vmul.f32 %v429, %v430
  %v432 = vsub.f32 1.0, %v431
  %v433 = vmul.f32 %v430, %v432
  %v434 = vadd.f32 %v430, %v433
  %vm435 = vweird.f32 %v429
  %vm436 = vweird.f32 %v430
  %vm437 = vmor %vm435, %vm436
  %v438 = vsel %vm437, %v430, %v434
  %v439 = vand.u32 2147483647, %v429
  %vm440 = vcmp.eq.f32.partialorder %v439, 8.507059e+37
  %v441 = vand.u32 %v429, 2147483648
  %v442 = vor.u32 1.1754944e-38, %v441
  %v443 = vsel %vm440, %v442, %v438
  %v444 = vmul.f32 1.0, %v443
  %v445 = vtanh.pop %v385
  %v446 = vxor.u32 %v405, 2147483648
  %v447 = vmul.f32 %v446, 1.442695
  %v448 = vpow.pop %v447
  %v449 = vadd.f32 %v448, 1.0
  %v450 = vrcp.pop %v449
  %v451 = vmul.f32 %v449, %v450
  %v452 = vsub.f32 1.0, %v451
  %v453 = vmul.f32 %v450, %v452
  %v454 = vadd.f32 %v450, %v453
  %vm455 = vweird.f32 %v449
  %vm456 = vweird.f32 %v450
  %vm457 = vmor %vm455, %vm456
  %v458 = vsel %vm457, %v450, %v454
  %v459 = vand.u32 2147483647, %v449
  %vm460 = vcmp.eq.f32.partialorder %v459, 8.507059e+37
  %v461 = vand.u32 %v449, 2147483648
  %v462 = vor.u32 1.1754944e-38, %v461
  %v463 = vsel %vm460, %v462, %v458
  %v464 = vmul.f32 1.0, %v463
  %v465 = vmul.f32 %v444, 0.0
  %v466 = vmul.f32 %v425, %v445
  %v467 = vadd.f32 %v465, %v466
  %v468 = vtanh.pop %v467
  %v469 = vmul.f32 %v464, %v468
  %vm470 = vcmask 402432
  %471 = vst.msk [vmem:[#allocation3] sm:$0x3] %vm470, %v469
  %v472 = vld [vmem:[%s3] sm:$0xff]
  %v473 = vld [vmem:[%s3 + $0x8] sm:$0xff]
  %v474 = vld [vmem:[%s3 + $0x10] sm:$0xff]
  %v475 = vld [vmem:[%s3 + $0x18] sm:$0xff]
  %v476 = vld [vmem:[%s3 + $0x20] sm:$0xff]
  %v477 = vld [vmem:[%s3 + $0x28] sm:$0xff]
  %v478 = vld [vmem:[%s3 + $0x30] sm:$0xff]
  %v479 = vld [vmem:[%s3 + $0x38] sm:$0xff]
  %v480 = vld [vmem:[%s3 + $0x40] sm:$0xff]
  %v481 = vld [vmem:[%s3 + $0x48] sm:$0xff]
  %v482 = vld [vmem:[%s3 + $0x50] sm:$0xff]
  %v483 = vld [vmem:[%s3 + $0x58] sm:$0xff]
  %v484 = vld [vmem:[%s3 + $0x60] sm:$0xff]
  %v485 = vld [vmem:[%s3 + $0x68] sm:$0xff]
  %v486 = vld [vmem:[%s3 + $0x70] sm:$0xff]
  %v487 = vld [vmem:[%s3 + $0x78] sm:$0xff]
  %v488 = vld [vmem:[%s3 + $0x80] sm:$0xff]
  %v489 = vld [vmem:[%s3 + $0x88] sm:$0xff]
  %v490 = vld [vmem:[%s3 + $0x90] sm:$0xff]
  %v491 = vld [vmem:[%s3 + $0x98] sm:$0xff]
  %v492 = vld [vmem:[%s3 + $0xa0] sm:$0xff]
  %v493 = vld [vmem:[%s3 + $0xa8] sm:$0xff]
  %v494 = vld [vmem:[%s3 + $0xb0] sm:$0xff]
  %v495 = vld [vmem:[%s3 + $0xb8] sm:$0xff]
  %v496 = vld [vmem:[%s3 + $0xc0] sm:$0x3]
  %v497 = vld [vmem:[%s3 + $0xc8] sm:$0x3]
  %v498 = vld [vmem:[%s3 + $0xd0] sm:$0x3]
  %v499 = vld [vmem:[%s3 + $0xd8] sm:$0x3]
  %v500 = vld [vmem:[#allocation2] sm:$0xc]
  %v501 = vld [vmem:[#allocation2 + $0x8] sm:$0xc]
  %v502 = vld [vmem:[#allocation2 + $0x10] sm:$0xc]
  %v503 = vld [vmem:[#allocation2 + $0x18] sm:$0xc]
  %v508 = vrot.slane %v500, 2
  %v509 = vrot.slane %v501, 2
  %v510 = vrot.slane %v502, 2
  %v511 = vrot.slane %v503, 2
  %v517 = vsel %vm310, %v469, 0
  %v520 = vsel %vm314, %v496, 0
  %v523 = vsel %vm314, %v497, 0
  %v526 = vsel %vm314, %v498, 0
  %v529 = vsel %vm314, %v499, 0
  %531 = vmatpush.msra.mxu0 0.0
  %532 = vmatpush.msra.mxu0 0.0
  %533 = vmatpush.msra.mxu0 0.0
  %534 = vmatpush.msra.mxu0 0.0
  %535 = vmatpush.msra.mxu0 0.0
  %536 = vmatpush.msra.mxu0 0.0
  %537 = vmatpush.msra.mxu0 0.0
  %538 = vmatpush.msra.mxu0 0.0
  %539 = vmatpush.msra.mxu0 0.0
  %540 = vmatpush.msra.mxu0 %v520
  %541 = vmatpush.msra.mxu0 %v492
  %542 = vmatpush.msra.mxu0 %v488
  %543 = vmatpush.msra.mxu0 %v484
  %544 = vmatpush.msra.mxu0 %v480
  %545 = vmatpush.msra.mxu0 %v476
  %546 = vmatpush.msra.mxu0 %v472
  %547 = vmatmul.f32.gmra.mxu0 %v517
  %v548 = vpop.f32.mrf.mxu0
  %v549 = vadd.f32 %v508, %v548
  %550 = vdwg.mxu0
  %551 = vmatpush.msra.mxu0 0.0
  %552 = vmatpush.msra.mxu0 0.0
  %553 = vmatpush.msra.mxu0 0.0
  %554 = vmatpush.msra.mxu0 0.0
  %555 = vmatpush.msra.mxu0 0.0
  %556 = vmatpush.msra.mxu0 0.0
  %557 = vmatpush.msra.mxu0 0.0
  %558 = vmatpush.msra.mxu0 0.0
  %559 = vmatpush.msra.mxu0 0.0
  %560 = vmatpush.msra.mxu0 %v523
  %561 = vmatpush.msra.mxu0 %v493
  %562 = vmatpush.msra.mxu0 %v489
  %563 = vmatpush.msra.mxu0 %v485
  %564 = vmatpush.msra.mxu0 %v481
  %565 = vmatpush.msra.mxu0 %v477
  %566 = vmatpush.msra.mxu0 %v473
  %567 = vmatmul.f32.gmra.mxu0 %v517
  %v568 = vpop.f32.mrf.mxu0
  %v569 = vadd.f32 %v509, %v568
  %570 = vdwg.mxu0
  %571 = vmatpush.msra.mxu0 0.0
  %572 = vmatpush.msra.mxu0 0.0
  %573 = vmatpush.msra.mxu0 0.0
  %574 = vmatpush.msra.mxu0 0.0
  %575 = vmatpush.msra.mxu0 0.0
  %576 = vmatpush.msra.mxu0 0.0
  %577 = vmatpush.msra.mxu0 0.0
  %578 = vmatpush.msra.mxu0 0.0
  %579 = vmatpush.msra.mxu0 0.0
  %580 = vmatpush.msra.mxu0 %v526
  %581 = vmatpush.msra.mxu0 %v494
  %582 = vmatpush.msra.mxu0 %v490
  %583 = vmatpush.msra.mxu0 %v486
  %584 = vmatpush.msra.mxu0 %v482
  %585 = vmatpush.msra.mxu0 %v478
  %586 = vmatpush.msra.mxu0 %v474
  %587 = vmatmul.f32.gmra.mxu0 %v517
  %v588 = vpop.f32.mrf.mxu0
  %v589 = vadd.f32 %v510, %v588
  %590 = vdwg.mxu0
  %591 = vmatpush.msra.mxu0 0.0
  %592 = vmatpush.msra.mxu0 0.0
  %593 = vmatpush.msra.mxu0 0.0
  %594 = vmatpush.msra.mxu0 0.0
  %595 = vmatpush.msra.mxu0 0.0
  %596 = vmatpush.msra.mxu0 0.0
  %597 = vmatpush.msra.mxu0 0.0
  %598 = vmatpush.msra.mxu0 0.0
  %599 = vmatpush.msra.mxu0 0.0
  %600 = vmatpush.msra.mxu0 %v529
  %601 = vmatpush.msra.mxu0 %v495
  %602 = vmatpush.msra.mxu0 %v491
  %603 = vmatpush.msra.mxu0 %v487
  %604 = vmatpush.msra.mxu0 %v483
  %605 = vmatpush.msra.mxu0 %v479
  %606 = vmatpush.msra.mxu0 %v475
  %607 = vmatmul.f32.gmra.mxu0 %v517
  %v608 = vpop.f32.mrf.mxu0
  %v609 = vadd.f32 %v511, %v608
  %610 = vdwg.mxu0
  %v611 = vxor.u32 %v549, 2147483648
  %v612 = vmul.f32 %v611, 1.442695
  %v613 = vpow.pop %v612
  %v614 = vadd.f32 %v613, 1.0
  %v615 = vrcp.pop %v614
  %v616 = vmul.f32 %v614, %v615
  %v617 = vsub.f32 1.0, %v616
  %v618 = vmul.f32 %v615, %v617
  %v619 = vadd.f32 %v615, %v618
  %vm620 = vweird.f32 %v614
  %vm621 = vweird.f32 %v615
  %vm622 = vmor %vm620, %vm621
  %v623 = vsel %vm622, %v615, %v619
  %v624 = vand.u32 2147483647, %v614
  %vm625 = vcmp.eq.f32.partialorder %v624, 8.507059e+37
  %v626 = vand.u32 %v614, 2147483648
  %v627 = vor.u32 1.1754944e-38, %v626
  %v628 = vsel %vm625, %v627, %v623
  %v629 = vmul.f32 1.0, %v628
  %v630 = vxor.u32 %v569, 2147483648
  %v631 = vmul.f32 %v630, 1.442695
  %v632 = vpow.pop %v631
  %v633 = vadd.f32 %v632, 1.0
  %v634 = vrcp.pop %v633
  %v635 = vmul.f32 %v633, %v634
  %v636 = vsub.f32 1.0, %v635
  %v637 = vmul.f32 %v634, %v636
  %v638 = vadd.f32 %v634, %v637
  %vm639 = vweird.f32 %v633
  %vm640 = vweird.f32 %v634
  %vm641 = vmor %vm639, %vm640
  %v642 = vsel %vm641, %v634, %v638
  %v643 = vand.u32 2147483647, %v633
  %vm644 = vcmp.eq.f32.partialorder %v643, 8.507059e+37
  %v645 = vand.u32 %v633, 2147483648
  %v646 = vor.u32 1.1754944e-38, %v645
  %v647 = vsel %vm644, %v646, %v642
  %v648 = vmul.f32 1.0, %v647
  %v649 = vtanh.pop %v589
  %v650 = vxor.u32 %v609, 2147483648
  %v651 = vmul.f32 %v650, 1.442695
  %v652 = vpow.pop %v651
  %v653 = vadd.f32 %v652, 1.0
  %v654 = vrcp.pop %v653
  %v655 = vmul.f32 %v653, %v654
  %v656 = vsub.f32 1.0, %v655
  %v657 = vmul.f32 %v654, %v656
  %v658 = vadd.f32 %v654, %v657
  %vm659 = vweird.f32 %v653
  %vm660 = vweird.f32 %v654
  %vm661 = vmor %vm659, %vm660
  %v662 = vsel %vm661, %v654, %v658
  %v663 = vand.u32 2147483647, %v653
  %vm664 = vcmp.eq.f32.partialorder %v663, 8.507059e+37
  %v665 = vand.u32 %v653, 2147483648
  %v666 = vor.u32 1.1754944e-38, %v665
  %v667 = vsel %vm664, %v666, %v662
  %v668 = vmul.f32 1.0, %v667
  %v669 = vmul.f32 %v648, %v467
  %v670 = vmul.f32 %v629, %v649
  %v671 = vadd.f32 %v669, %v670
  %v672 = vtanh.pop %v671
  %v673 = vmul.f32 %v668, %v672
  %674 = vst.msk [vmem:[#allocation3 + $0x2] sm:$0x3] %vm470, %v673
  %v675 = vld [vmem:[%s3] sm:$0xff]
  %v676 = vld [vmem:[%s3 + $0x8] sm:$0xff]
  %v677 = vld [vmem:[%s3 + $0x10] sm:$0xff]
  %v678 = vld [vmem:[%s3 + $0x18] sm:$0xff]
  %v679 = vld [vmem:[%s3 + $0x20] sm:$0xff]
  %v680 = vld [vmem:[%s3 + $0x28] sm:$0xff]
  %v681 = vld [vmem:[%s3 + $0x30] sm:$0xff]
  %v682 = vld [vmem:[%s3 + $0x38] sm:$0xff]
  %v683 = vld [vmem:[%s3 + $0x40] sm:$0xff]
  %v684 = vld [vmem:[%s3 + $0x48] sm:$0xff]
  %v685 = vld [vmem:[%s3 + $0x50] sm:$0xff]
  %v686 = vld [vmem:[%s3 + $0x58] sm:$0xff]
  %v687 = vld [vmem:[%s3 + $0x60] sm:$0xff]
  %v688 = vld [vmem:[%s3 + $0x68] sm:$0xff]
  %v689 = vld [vmem:[%s3 + $0x70] sm:$0xff]
  %v690 = vld [vmem:[%s3 + $0x78] sm:$0xff]
  %v691 = vld [vmem:[%s3 + $0x80] sm:$0xff]
  %v692 = vld [vmem:[%s3 + $0x88] sm:$0xff]
  %v693 = vld [vmem:[%s3 + $0x90] sm:$0xff]
  %v694 = vld [vmem:[%s3 + $0x98] sm:$0xff]
  %v695 = vld [vmem:[%s3 + $0xa0] sm:$0xff]
  %v696 = vld [vmem:[%s3 + $0xa8] sm:$0xff]
  %v697 = vld [vmem:[%s3 + $0xb0] sm:$0xff]
  %v698 = vld [vmem:[%s3 + $0xb8] sm:$0xff]
  %v699 = vld [vmem:[%s3 + $0xc0] sm:$0x3]
  %v700 = vld [vmem:[%s3 + $0xc8] sm:$0x3]
  %v701 = vld [vmem:[%s3 + $0xd0] sm:$0x3]
  %v702 = vld [vmem:[%s3 + $0xd8] sm:$0x3]
  %v703 = vld [vmem:[#allocation2] sm:$0x30]
  %v704 = vld [vmem:[#allocation2 + $0x8] sm:$0x30]
  %v705 = vld [vmem:[#allocation2 + $0x10] sm:$0x30]
  %v706 = vld [vmem:[#allocation2 + $0x18] sm:$0x30]
  %v711 = vrot.slane %v703, 4
  %v712 = vrot.slane %v704, 4
  %v713 = vrot.slane %v705, 4
  %v714 = vrot.slane %v706, 4
  %v720 = vsel %vm310, %v673, 0
  %v723 = vsel %vm314, %v699, 0
  %v726 = vsel %vm314, %v700, 0
  %v729 = vsel %vm314, %v701, 0
  %v732 = vsel %vm314, %v702, 0
  %734 = vmatpush.msra.mxu0 0.0
  %735 = vmatpush.msra.mxu0 0.0
  %736 = vmatpush.msra.mxu0 0.0
  %737 = vmatpush.msra.mxu0 0.0
  %738 = vmatpush.msra.mxu0 0.0
  %739 = vmatpush.msra.mxu0 0.0
  %740 = vmatpush.msra.mxu0 0.0
  %741 = vmatpush.msra.mxu0 0.0
  %742 = vmatpush.msra.mxu0 0.0
  %743 = vmatpush.msra.mxu0 %v723
  %744 = vmatpush.msra.mxu0 %v695
  %745 = vmatpush.msra.mxu0 %v691
  %746 = vmatpush.msra.mxu0 %v687
  %747 = vmatpush.msra.mxu0 %v683
  %748 = vmatpush.msra.mxu0 %v679
  %749 = vmatpush.msra.mxu0 %v675
  %750 = vmatmul.f32.gmra.mxu0 %v720
  %v751 = vpop.f32.mrf.mxu0
  %v752 = vadd.f32 %v711, %v751
  %753 = vdwg.mxu0
  %754 = vmatpush.msra.mxu0 0.0
  %755 = vmatpush.msra.mxu0 0.0
  %756 = vmatpush.msra.mxu0 0.0
  %757 = vmatpush.msra.mxu0 0.0
  %758 = vmatpush.msra.mxu0 0.0
  %759 = vmatpush.msra.mxu0 0.0
  %760 = vmatpush.msra.mxu0 0.0
  %761 = vmatpush.msra.mxu0 0.0
  %762 = vmatpush.msra.mxu0 0.0
  %763 = vmatpush.msra.mxu0 %v726
  %764 = vmatpush.msra.mxu0 %v696
  %765 = vmatpush.msra.mxu0 %v692
  %766 = vmatpush.msra.mxu0 %v688
  %767 = vmatpush.msra.mxu0 %v684
  %768 = vmatpush.msra.mxu0 %v680
  %769 = vmatpush.msra.mxu0 %v676
  %770 = vmatmul.f32.gmra.mxu0 %v720
  %v771 = vpop.f32.mrf.mxu0
  %v772 = vadd.f32 %v712, %v771
  %773 = vdwg.mxu0
  %774 = vmatpush.msra.mxu0 0.0
  %775 = vmatpush.msra.mxu0 0.0
  %776 = vmatpush.msra.mxu0 0.0
  %777 = vmatpush.msra.mxu0 0.0
  %778 = vmatpush.msra.mxu0 0.0
  %779 = vmatpush.msra.mxu0 0.0
  %780 = vmatpush.msra.mxu0 0.0
  %781 = vmatpush.msra.mxu0 0.0
  %782 = vmatpush.msra.mxu0 0.0
  %783 = vmatpush.msra.mxu0 %v729
  %784 = vmatpush.msra.mxu0 %v697
  %785 = vmatpush.msra.mxu0 %v693
  %786 = vmatpush.msra.mxu0 %v689
  %787 = vmatpush.msra.mxu0 %v685
  %788 = vmatpush.msra.mxu0 %v681
  %789 = vmatpush.msra.mxu0 %v677
  %790 = vmatmul.f32.gmra.mxu0 %v720
  %v791 = vpop.f32.mrf.mxu0
  %v792 = vadd.f32 %v713, %v791
  %793 = vdwg.mxu0
  %794 = vmatpush.msra.mxu0 0.0
  %795 = vmatpush.msra.mxu0 0.0
  %796 = vmatpush.msra.mxu0 0.0
  %797 = vmatpush.msra.mxu0 0.0
  %798 = vmatpush.msra.mxu0 0.0
  %799 = vmatpush.msra.mxu0 0.0
  %800 = vmatpush.msra.mxu0 0.0
  %801 = vmatpush.msra.mxu0 0.0
  %802 = vmatpush.msra.mxu0 0.0
  %803 = vmatpush.msra.mxu0 %v732
  %804 = vmatpush.msra.mxu0 %v698
  %805 = vmatpush.msra.mxu0 %v694
  %806 = vmatpush.msra.mxu0 %v690
  %807 = vmatpush.msra.mxu0 %v686
  %808 = vmatpush.msra.mxu0 %v682
  %809 = vmatpush.msra.mxu0 %v678
  %810 = vmatmul.f32.gmra.mxu0 %v720
  %v811 = vpop.f32.mrf.mxu0
  %v812 = vadd.f32 %v714, %v811
  %813 = vdwg.mxu0
  %v814 = vxor.u32 %v752, 2147483648
  %v815 = vmul.f32 %v814, 1.442695
  %v816 = vpow.pop %v815
  %v817 = vadd.f32 %v816, 1.0
  %v818 = vrcp.pop %v817
  %v819 = vmul.f32 %v817, %v818
  %v820 = vsub.f32 1.0, %v819
  %v821 = vmul.f32 %v818, %v820
  %v822 = vadd.f32 %v818, %v821
  %vm823 = vweird.f32 %v817
  %vm824 = vweird.f32 %v818
  %vm825 = vmor %vm823, %vm824
  %v826 = vsel %vm825, %v818, %v822
  %v827 = vand.u32 2147483647, %v817
  %vm828 = vcmp.eq.f32.partialorder %v827, 8.507059e+37
  %v829 = vand.u32 %v817, 2147483648
  %v830 = vor.u32 1.1754944e-38, %v829
  %v831 = vsel %vm828, %v830, %v826
  %v832 = vmul.f32 1.0, %v831
  %v833 = vxor.u32 %v772, 2147483648
  %v834 = vmul.f32 %v833, 1.442695
  %v835 = vpow.pop %v834
  %v836 = vadd.f32 %v835, 1.0
  %v837 = vrcp.pop %v836
  %v838 = vmul.f32 %v836, %v837
  %v839 = vsub.f32 1.0, %v838
  %v840 = vmul.f32 %v837, %v839
  %v841 = vadd.f32 %v837, %v840
  %vm842 = vweird.f32 %v836
  %vm843 = vweird.f32 %v837
  %vm844 = vmor %vm842, %vm843
  %v845 = vsel %vm844, %v837, %v841
  %v846 = vand.u32 2147483647, %v836
  %vm847 = vcmp.eq.f32.partialorder %v846, 8.507059e+37
  %v848 = vand.u32 %v836, 2147483648
  %v849 = vor.u32 1.1754944e-38, %v848
  %v850 = vsel %vm847, %v849, %v845
  %v851 = vmul.f32 1.0, %v850
  %v852 = vtanh.pop %v792
  %v853 = vxor.u32 %v812, 2147483648
  %v854 = vmul.f32 %v853, 1.442695
  %v855 = vpow.pop %v854
  %v856 = vadd.f32 %v855, 1.0
  %v857 = vrcp.pop %v856
  %v858 = vmul.f32 %v856, %v857
  %v859 = vsub.f32 1.0, %v858
  %v860 = vmul.f32 %v857, %v859
  %v861 = vadd.f32 %v857, %v860
  %vm862 = vweird.f32 %v856
  %vm863 = vweird.f32 %v857
  %vm864 = vmor %vm862, %vm863
  %v865 = vsel %vm864, %v857, %v861
  %v866 = vand.u32 2147483647, %v856
  %vm867 = vcmp.eq.f32.partialorder %v866, 8.507059e+37
  %v868 = vand.u32 %v856, 2147483648
  %v869 = vor.u32 1.1754944e-38, %v868
  %v870 = vsel %vm867, %v869, %v865
  %v871 = vmul.f32 1.0, %v870
  %v872 = vmul.f32 %v851, %v671
  %v873 = vmul.f32 %v832, %v852
  %v874 = vadd.f32 %v872, %v873
  %v875 = vtanh.pop %v874
  %v876 = vmul.f32 %v871, %v875
  %877 = vst.msk [vmem:[#allocation3 + $0x4] sm:$0x3] %vm470, %v876
  %v878 = vld [vmem:[%s3] sm:$0xff]
  %v879 = vld [vmem:[%s3 + $0x8] sm:$0xff]
  %v880 = vld [vmem:[%s3 + $0x10] sm:$0xff]
  %v881 = vld [vmem:[%s3 + $0x18] sm:$0xff]
  %v882 = vld [vmem:[%s3 + $0x20] sm:$0xff]
  %v883 = vld [vmem:[%s3 + $0x28] sm:$0xff]
  %v884 = vld [vmem:[%s3 + $0x30] sm:$0xff]
  %v885 = vld [vmem:[%s3 + $0x38] sm:$0xff]
  %v886 = vld [vmem:[%s3 + $0x40] sm:$0xff]
  %v887 = vld [vmem:[%s3 + $0x48] sm:$0xff]
  %v888 = vld [vmem:[%s3 + $0x50] sm:$0xff]
  %v889 = vld [vmem:[%s3 + $0x58] sm:$0xff]
  %v890 = vld [vmem:[%s3 + $0x60] sm:$0xff]
  %v891 = vld [vmem:[%s3 + $0x68] sm:$0xff]
  %v892 = vld [vmem:[%s3 + $0x70] sm:$0xff]
  %v893 = vld [vmem:[%s3 + $0x78] sm:$0xff]
  %v894 = vld [vmem:[%s3 + $0x80] sm:$0xff]
  %v895 = vld [vmem:[%s3 + $0x88] sm:$0xff]
  %v896 = vld [vmem:[%s3 + $0x90] sm:$0xff]
  %v897 = vld [vmem:[%s3 + $0x98] sm:$0xff]
  %v898 = vld [vmem:[%s3 + $0xa0] sm:$0xff]
  %v899 = vld [vmem:[%s3 + $0xa8] sm:$0xff]
  %v900 = vld [vmem:[%s3 + $0xb0] sm:$0xff]
  %v901 = vld [vmem:[%s3 + $0xb8] sm:$0xff]
  %v902 = vld [vmem:[%s3 + $0xc0] sm:$0x3]
  %v903 = vld [vmem:[%s3 + $0xc8] sm:$0x3]
  %v904 = vld [vmem:[%s3 + $0xd0] sm:$0x3]
  %v905 = vld [vmem:[%s3 + $0xd8] sm:$0x3]
  %v906 = vld [vmem:[#allocation2] sm:$0xc0]
  %v907 = vld [vmem:[#allocation2 + $0x8] sm:$0xc0]
  %v908 = vld [vmem:[#allocation2 + $0x10] sm:$0xc0]
  %v909 = vld [vmem:[#allocation2 + $0x18] sm:$0xc0]
  %v914 = vrot.slane %v906, 6
  %v915 = vrot.slane %v907, 6
  %v916 = vrot.slane %v908, 6
  %v917 = vrot.slane %v909, 6
  %v923 = vsel %vm310, %v876, 0
  %v926 = vsel %vm314, %v902, 0
  %v929 = vsel %vm314, %v903, 0
  %v932 = vsel %vm314, %v904, 0
  %v935 = vsel %vm314, %v905, 0
  %937 = vmatpush.msra.mxu0 0.0
  %938 = vmatpush.msra.mxu0 0.0
  %939 = vmatpush.msra.mxu0 0.0
  %940 = vmatpush.msra.mxu0 0.0
  %941 = vmatpush.msra.mxu0 0.0
  %942 = vmatpush.msra.mxu0 0.0
  %943 = vmatpush.msra.mxu0 0.0
  %944 = vmatpush.msra.mxu0 0.0
  %945 = vmatpush.msra.mxu0 0.0
  %946 = vmatpush.msra.mxu0 %v926
  %947 = vmatpush.msra.mxu0 %v898
  %948 = vmatpush.msra.mxu0 %v894
  %949 = vmatpush.msra.mxu0 %v890
  %950 = vmatpush.msra.mxu0 %v886
  %951 = vmatpush.msra.mxu0 %v882
  %952 = vmatpush.msra.mxu0 %v878
  %953 = vmatmul.f32.gmra.mxu0 %v923
  %v954 = vpop.f32.mrf.mxu0
  %v955 = vadd.f32 %v914, %v954
  %956 = vdwg.mxu0
  %957 = vmatpush.msra.mxu0 0.0
  %958 = vmatpush.msra.mxu0 0.0
  %959 = vmatpush.msra.mxu0 0.0
  %960 = vmatpush.msra.mxu0 0.0
  %961 = vmatpush.msra.mxu0 0.0
  %962 = vmatpush.msra.mxu0 0.0
  %963 = vmatpush.msra.mxu0 0.0
  %964 = vmatpush.msra.mxu0 0.0
  %965 = vmatpush.msra.mxu0 0.0
  %966 = vmatpush.msra.mxu0 %v929
  %967 = vmatpush.msra.mxu0 %v899
  %968 = vmatpush.msra.mxu0 %v895
  %969 = vmatpush.msra.mxu0 %v891
  %970 = vmatpush.msra.mxu0 %v887
  %971 = vmatpush.msra.mxu0 %v883
  %972 = vmatpush.msra.mxu0 %v879
  %973 = vmatmul.f32.gmra.mxu0 %v923
  %v974 = vpop.f32.mrf.mxu0
  %v975 = vadd.f32 %v915, %v974
  %976 = vdwg.mxu0
  %977 = vmatpush.msra.mxu0 0.0
  %978 = vmatpush.msra.mxu0 0.0
  %979 = vmatpush.msra.mxu0 0.0
  %980 = vmatpush.msra.mxu0 0.0
  %981 = vmatpush.msra.mxu0 0.0
  %982 = vmatpush.msra.mxu0 0.0
  %983 = vmatpush.msra.mxu0 0.0
  %984 = vmatpush.msra.mxu0 0.0
  %985 = vmatpush.msra.mxu0 0.0
  %986 = vmatpush.msra.mxu0 %v932
  %987 = vmatpush.msra.mxu0 %v900
  %988 = vmatpush.msra.mxu0 %v896
  %989 = vmatpush.msra.mxu0 %v892
  %990 = vmatpush.msra.mxu0 %v888
  %991 = vmatpush.msra.mxu0 %v884
  %992 = vmatpush.msra.mxu0 %v880
  %993 = vmatmul.f32.gmra.mxu0 %v923
  %v994 = vpop.f32.mrf.mxu0
  %v995 = vadd.f32 %v916, %v994
  %996 = vdwg.mxu0
  %997 = vmatpush.msra.mxu0 0.0
  %998 = vmatpush.msra.mxu0 0.0
  %999 = vmatpush.msra.mxu0 0.0
  %1000 = vmatpush.msra.mxu0 0.0
  %1001 = vmatpush.msra.mxu0 0.0
  %1002 = vmatpush.msra.mxu0 0.0
  %1003 = vmatpush.msra.mxu0 0.0
  %1004 = vmatpush.msra.mxu0 0.0
  %1005 = vmatpush.msra.mxu0 0.0
  %1006 = vmatpush.msra.mxu0 %v935
  %1007 = vmatpush.msra.mxu0 %v901
  %1008 = vmatpush.msra.mxu0 %v897
  %1009 = vmatpush.msra.mxu0 %v893
  %1010 = vmatpush.msra.mxu0 %v889
  %1011 = vmatpush.msra.mxu0 %v885
  %1012 = vmatpush.msra.mxu0 %v881
  %1013 = vmatmul.f32.gmra.mxu0 %v923
  %v1014 = vpop.f32.mrf.mxu0
  %v1015 = vadd.f32 %v917, %v1014
  %1016 = vdwg.mxu0
  %v1017 = vxor.u32 %v955, 2147483648
  %v1018 = vmul.f32 %v1017, 1.442695
  %v1019 = vpow.pop %v1018
  %v1020 = vadd.f32 %v1019, 1.0
  %v1021 = vrcp.pop %v1020
  %v1022 = vmul.f32 %v1020, %v1021
  %v1023 = vsub.f32 1.0, %v1022
  %v1024 = vmul.f32 %v1021, %v1023
  %v1025 = vadd.f32 %v1021, %v1024
  %vm1026 = vweird.f32 %v1020
  %vm1027 = vweird.f32 %v1021
  %vm1028 = vmor %vm1026, %vm1027
  %v1029 = vsel %vm1028, %v1021, %v1025
  %v1030 = vand.u32 2147483647, %v1020
  %vm1031 = vcmp.eq.f32.partialorder %v1030, 8.507059e+37
  %v1032 = vand.u32 %v1020, 2147483648
  %v1033 = vor.u32 1.1754944e-38, %v1032
  %v1034 = vsel %vm1031, %v1033, %v1029
  %v1035 = vmul.f32 1.0, %v1034
  %v1036 = vxor.u32 %v975, 2147483648
  %v1037 = vmul.f32 %v1036, 1.442695
  %v1038 = vpow.pop %v1037
  %v1039 = vadd.f32 %v1038, 1.0
  %v1040 = vrcp.pop %v1039
  %v1041 = vmul.f32 %v1039, %v1040
  %v1042 = vsub.f32 1.0, %v1041
  %v1043 = vmul.f32 %v1040, %v1042
  %v1044 = vadd.f32 %v1040, %v1043
  %vm1045 = vweird.f32 %v1039
  %vm1046 = vweird.f32 %v1040
  %vm1047 = vmor %vm1045, %vm1046
  %v1048 = vsel %vm1047, %v1040, %v1044
  %v1049 = vand.u32 2147483647, %v1039
  %vm1050 = vcmp.eq.f32.partialorder %v1049, 8.507059e+37
  %v1051 = vand.u32 %v1039, 2147483648
  %v1052 = vor.u32 1.1754944e-38, %v1051
  %v1053 = vsel %vm1050, %v1052, %v1048
  %v1054 = vmul.f32 1.0, %v1053
  %v1055 = vtanh.pop %v995
  %v1056 = vxor.u32 %v1015, 2147483648
  %v1057 = vmul.f32 %v1056, 1.442695
  %v1058 = vpow.pop %v1057
  %v1059 = vadd.f32 %v1058, 1.0
  %v1060 = vrcp.pop %v1059
  %v1061 = vmul.f32 %v1059, %v1060
  %v1062 = vsub.f32 1.0, %v1061
  %v1063 = vmul.f32 %v1060, %v1062
  %v1064 = vadd.f32 %v1060, %v1063
  %vm1065 = vweird.f32 %v1059
  %vm1066 = vweird.f32 %v1060
  %vm1067 = vmor %vm1065, %vm1066
  %v1068 = vsel %vm1067, %v1060, %v1064
  %v1069 = vand.u32 2147483647, %v1059
  %vm1070 = vcmp.eq.f32.partialorder %v1069, 8.507059e+37
  %v1071 = vand.u32 %v1059, 2147483648
  %v1072 = vor.u32 1.1754944e-38, %v1071
  %v1073 = vsel %vm1070, %v1072, %v1068
  %v1074 = vmul.f32 1.0, %v1073
  %v1075 = vmul.f32 %v1054, %v874
  %v1076 = vmul.f32 %v1035, %v1055
  %v1077 = vadd.f32 %v1075, %v1076
  %v1078 = vtanh.pop %v1077
  %v1079 = vmul.f32 %v1074, %v1078
  %1080 = vst.msk [vmem:[#allocation3 + $0x6] sm:$0x3] %vm470, %v1079
  %v1081 = vld [vmem:[%s3] sm:$0xff]
  %v1082 = vld [vmem:[%s3 + $0x8] sm:$0xff]
  %v1083 = vld [vmem:[%s3 + $0x10] sm:$0xff]
  %v1084 = vld [vmem:[%s3 + $0x18] sm:$0xff]
  %v1085 = vld [vmem:[%s3 + $0x20] sm:$0xff]
  %v1086 = vld [vmem:[%s3 + $0x28] sm:$0xff]
  %v1087 = vld [vmem:[%s3 + $0x30] sm:$0xff]
  %v1088 = vld [vmem:[%s3 + $0x38] sm:$0xff]
  %v1089 = vld [vmem:[%s3 + $0x40] sm:$0xff]
  %v1090 = vld [vmem:[%s3 + $0x48] sm:$0xff]
  %v1091 = vld [vmem:[%s3 + $0x50] sm:$0xff]
  %v1092 = vld [vmem:[%s3 + $0x58] sm:$0xff]
  %v1093 = vld [vmem:[%s3 + $0x60] sm:$0xff]
  %v1094 = vld [vmem:[%s3 + $0x68] sm:$0xff]
  %v1095 = vld [vmem:[%s3 + $0x70] sm:$0xff]
  %v1096 = vld [vmem:[%s3 + $0x78] sm:$0xff]
  %v1097 = vld [vmem:[%s3 + $0x80] sm:$0xff]
  %v1098 = vld [vmem:[%s3 + $0x88] sm:$0xff]
  %v1099 = vld [vmem:[%s3 + $0x90] sm:$0xff]
  %v1100 = vld [vmem:[%s3 + $0x98] sm:$0xff]
  %v1101 = vld [vmem:[%s3 + $0xa0] sm:$0xff]
  %v1102 = vld [vmem:[%s3 + $0xa8] sm:$0xff]
  %v1103 = vld [vmem:[%s3 + $0xb0] sm:$0xff]
  %v1104 = vld [vmem:[%s3 + $0xb8] sm:$0xff]
  %v1105 = vld [vmem:[%s3 + $0xc0] sm:$0x3]
  %v1106 = vld [vmem:[%s3 + $0xc8] sm:$0x3]
  %v1107 = vld [vmem:[%s3 + $0xd0] sm:$0x3]
  %v1108 = vld [vmem:[%s3 + $0xd8] sm:$0x3]
  %v1109 = vld [vmem:[#allocation2 + $0x20] sm:$0x3]
  %v1110 = vld [vmem:[#allocation2 + $0x28] sm:$0x3]
  %v1111 = vld [vmem:[#allocation2 + $0x30] sm:$0x3]
  %v1112 = vld [vmem:[#allocation2 + $0x38] sm:$0x3]
  %v1114 = vsel %vm310, %v1079, 0
  %v1117 = vsel %vm314, %v1105, 0
  %v1120 = vsel %vm314, %v1106, 0
  %v1123 = vsel %vm314, %v1107, 0
  %v1126 = vsel %vm314, %v1108, 0
  %1128 = vmatpush.msra.mxu0 0.0
  %1129 = vmatpush.msra.mxu0 0.0
  %1130 = vmatpush.msra.mxu0 0.0
  %1131 = vmatpush.msra.mxu0 0.0
  %1132 = vmatpush.msra.mxu0 0.0
  %1133 = vmatpush.msra.mxu0 0.0
  %1134 = vmatpush.msra.mxu0 0.0
  %1135 = vmatpush.msra.mxu0 0.0
  %1136 = vmatpush.msra.mxu0 0.0
  %1137 = vmatpush.msra.mxu0 %v1117
  %1138 = vmatpush.msra.mxu0 %v1101
  %1139 = vmatpush.msra.mxu0 %v1097
  %1140 = vmatpush.msra.mxu0 %v1093
  %1141 = vmatpush.msra.mxu0 %v1089
  %1142 = vmatpush.msra.mxu0 %v1085
  %1143 = vmatpush.msra.mxu0 %v1081
  %1144 = vmatmul.f32.gmra.mxu0 %v1114
  %v1145 = vpop.f32.mrf.mxu0
  %v1146 = vadd.f32 %v1109, %v1145
  %1147 = vdwg.mxu0
  %1148 = vmatpush.msra.mxu0 0.0
  %1149 = vmatpush.msra.mxu0 0.0
  %1150 = vmatpush.msra.mxu0 0.0
  %1151 = vmatpush.msra.mxu0 0.0
  %1152 = vmatpush.msra.mxu0 0.0
  %1153 = vmatpush.msra.mxu0 0.0
  %1154 = vmatpush.msra.mxu0 0.0
  %1155 = vmatpush.msra.mxu0 0.0
  %1156 = vmatpush.msra.mxu0 0.0
  %1157 = vmatpush.msra.mxu0 %v1120
  %1158 = vmatpush.msra.mxu0 %v1102
  %1159 = vmatpush.msra.mxu0 %v1098
  %1160 = vmatpush.msra.mxu0 %v1094
  %1161 = vmatpush.msra.mxu0 %v1090
  %1162 = vmatpush.msra.mxu0 %v1086
  %1163 = vmatpush.msra.mxu0 %v1082
  %1164 = vmatmul.f32.gmra.mxu0 %v1114
  %v1165 = vpop.f32.mrf.mxu0
  %v1166 = vadd.f32 %v1110, %v1165
  %1167 = vdwg.mxu0
  %1168 = vmatpush.msra.mxu0 0.0
  %1169 = vmatpush.msra.mxu0 0.0
  %1170 = vmatpush.msra.mxu0 0.0
  %1171 = vmatpush.msra.mxu0 0.0
  %1172 = vmatpush.msra.mxu0 0.0
  %1173 = vmatpush.msra.mxu0 0.0
  %1174 = vmatpush.msra.mxu0 0.0
  %1175 = vmatpush.msra.mxu0 0.0
  %1176 = vmatpush.msra.mxu0 0.0
  %1177 = vmatpush.msra.mxu0 %v1123
  %1178 = vmatpush.msra.mxu0 %v1103
  %1179 = vmatpush.msra.mxu0 %v1099
  %1180 = vmatpush.msra.mxu0 %v1095
  %1181 = vmatpush.msra.mxu0 %v1091
  %1182 = vmatpush.msra.mxu0 %v1087
  %1183 = vmatpush.msra.mxu0 %v1083
  %1184 = vmatmul.f32.gmra.mxu0 %v1114
  %v1185 = vpop.f32.mrf.mxu0
  %v1186 = vadd.f32 %v1111, %v1185
  %1187 = vdwg.mxu0
  %1188 = vmatpush.msra.mxu0 0.0
  %1189 = vmatpush.msra.mxu0 0.0
  %1190 = vmatpush.msra.mxu0 0.0
  %1191 = vmatpush.msra.mxu0 0.0
  %1192 = vmatpush.msra.mxu0 0.0
  %1193 = vmatpush.msra.mxu0 0.0
  %1194 = vmatpush.msra.mxu0 0.0
  %1195 = vmatpush.msra.mxu0 0.0
  %1196 = vmatpush.msra.mxu0 0.0
  %1197 = vmatpush.msra.mxu0 %v1126
  %1198 = vmatpush.msra.mxu0 %v1104
  %1199 = vmatpush.msra.mxu0 %v1100
  %1200 = vmatpush.msra.mxu0 %v1096
  %1201 = vmatpush.msra.mxu0 %v1092
  %1202 = vmatpush.msra.mxu0 %v1088
  %1203 = vmatpush.msra.mxu0 %v1084
  %1204 = vmatmul.f32.gmra.mxu0 %v1114
  %v1205 = vpop.f32.mrf.mxu0
  %v1206 = vadd.f32 %v1112, %v1205
  %1207 = vdwg.mxu0
  %v1208 = vxor.u32 %v1146, 2147483648
  %v1209 = vmul.f32 %v1208, 1.442695
  %v1210 = vpow.pop %v1209
  %v1211 = vadd.f32 %v1210, 1.0
  %v1212 = vrcp.pop %v1211
  %v1213 = vmul.f32 %v1211, %v1212
  %v1214 = vsub.f32 1.0, %v1213
  %v1215 = vmul.f32 %v1212, %v1214
  %v1216 = vadd.f32 %v1212, %v1215
  %vm1217 = vweird.f32 %v1211
  %vm1218 = vweird.f32 %v1212
  %vm1219 = vmor %vm1217, %vm1218
  %v1220 = vsel %vm1219, %v1212, %v1216
  %v1221 = vand.u32 2147483647, %v1211
  %vm1222 = vcmp.eq.f32.partialorder %v1221, 8.507059e+37
  %v1223 = vand.u32 %v1211, 2147483648
  %v1224 = vor.u32 1.1754944e-38, %v1223
  %v1225 = vsel %vm1222, %v1224, %v1220
  %v1226 = vmul.f32 1.0, %v1225
  %v1227 = vxor.u32 %v1166, 2147483648
  %v1228 = vmul.f32 %v1227, 1.442695
  %v1229 = vpow.pop %v1228
  %v1230 = vadd.f32 %v1229, 1.0
  %v1231 = vrcp.pop %v1230
  %v1232 = vmul.f32 %v1230, %v1231
  %v1233 = vsub.f32 1.0, %v1232
  %v1234 = vmul.f32 %v1231, %v1233
  %v1235 = vadd.f32 %v1231, %v1234
  %vm1236 = vweird.f32 %v1230
  %vm1237 = vweird.f32 %v1231
  %vm1238 = vmor %vm1236, %vm1237
  %v1239 = vsel %vm1238, %v1231, %v1235
  %v1240 = vand.u32 2147483647, %v1230
  %vm1241 = vcmp.eq.f32.partialorder %v1240, 8.507059e+37
  %v1242 = vand.u32 %v1230, 2147483648
  %v1243 = vor.u32 1.1754944e-38, %v1242
  %v1244 = vsel %vm1241, %v1243, %v1239
  %v1245 = vmul.f32 1.0, %v1244
  %v1246 = vtanh.pop %v1186
  %v1247 = vxor.u32 %v1206, 2147483648
  %v1248 = vmul.f32 %v1247, 1.442695
  %v1249 = vpow.pop %v1248
  %v1250 = vadd.f32 %v1249, 1.0
  %v1251 = vrcp.pop %v1250
  %v1252 = vmul.f32 %v1250, %v1251
  %v1253 = vsub.f32 1.0, %v1252
  %v1254 = vmul.f32 %v1251, %v1253
  %v1255 = vadd.f32 %v1251, %v1254
  %vm1256 = vweird.f32 %v1250
  %vm1257 = vweird.f32 %v1251
  %vm1258 = vmor %vm1256, %vm1257
  %v1259 = vsel %vm1258, %v1251, %v1255
  %v1260 = vand.u32 2147483647, %v1250
  %vm1261 = vcmp.eq.f32.partialorder %v1260, 8.507059e+37
  %v1262 = vand.u32 %v1250, 2147483648
  %v1263 = vor.u32 1.1754944e-38, %v1262
  %v1264 = vsel %vm1261, %v1263, %v1259
  %v1265 = vmul.f32 1.0, %v1264
  %v1266 = vmul.f32 %v1245, %v1077
  %v1267 = vmul.f32 %v1226, %v1246
  %v1268 = vadd.f32 %v1266, %v1267
  %v1269 = vtanh.pop %v1268
  %v1270 = vmul.f32 %v1265, %v1269
  %1271 = vst.msk [vmem:[#allocation3 + $0x8] sm:$0x3] %vm470, %v1270
  %v1272 = vld [vmem:[%s3] sm:$0xff]
  %v1273 = vld [vmem:[%s3 + $0x8] sm:$0xff]
  %v1274 = vld [vmem:[%s3 + $0x10] sm:$0xff]
  %v1275 = vld [vmem:[%s3 + $0x18] sm:$0xff]
  %v1276 = vld [vmem:[%s3 + $0x20] sm:$0xff]
  %v1277 = vld [vmem:[%s3 + $0x28] sm:$0xff]
  %v1278 = vld [vmem:[%s3 + $0x30] sm:$0xff]
  %v1279 = vld [vmem:[%s3 + $0x38] sm:$0xff]
  %v1280 = vld [vmem:[%s3 + $0x40] sm:$0xff]
  %v1281 = vld [vmem:[%s3 + $0x48] sm:$0xff]
  %v1282 = vld [vmem:[%s3 + $0x50] sm:$0xff]
  %v1283 = vld [vmem:[%s3 + $0x58] sm:$0xff]
  %v1284 = vld [vmem:[%s3 + $0x60] sm:$0xff]
  %v1285 = vld [vmem:[%s3 + $0x68] sm:$0xff]
  %v1286 = vld [vmem:[%s3 + $0x70] sm:$0xff]
  %v1287 = vld [vmem:[%s3 + $0x78] sm:$0xff]
  %v1288 = vld [vmem:[%s3 + $0x80] sm:$0xff]
  %v1289 = vld [vmem:[%s3 + $0x88] sm:$0xff]
  %v1290 = vld [vmem:[%s3 + $0x90] sm:$0xff]
  %v1291 = vld [vmem:[%s3 + $0x98] sm:$0xff]
  %v1292 = vld [vmem:[%s3 + $0xa0] sm:$0xff]
  %v1293 = vld [vmem:[%s3 + $0xa8] sm:$0xff]
  %v1294 = vld [vmem:[%s3 + $0xb0] sm:$0xff]
  %v1295 = vld [vmem:[%s3 + $0xb8] sm:$0xff]
  %v1296 = vld [vmem:[%s3 + $0xc0] sm:$0x3]
  %v1297 = vld [vmem:[%s3 + $0xc8] sm:$0x3]
  %v1298 = vld [vmem:[%s3 + $0xd0] sm:$0x3]
  %v1299 = vld [vmem:[%s3 + $0xd8] sm:$0x3]
  %v1300 = vld [vmem:[#allocation2 + $0x20] sm:$0xc]
  %v1301 = vld [vmem:[#allocation2 + $0x28] sm:$0xc]
  %v1302 = vld [vmem:[#allocation2 + $0x30] sm:$0xc]
  %v1303 = vld [vmem:[#allocation2 + $0x38] sm:$0xc]
  %v1308 = vrot.slane %v1300, 2
  %v1309 = vrot.slane %v1301, 2
  %v1310 = vrot.slane %v1302, 2
  %v1311 = vrot.slane %v1303, 2
  %v1317 = vsel %vm310, %v1270, 0
  %v1320 = vsel %vm314, %v1296, 0
  %v1323 = vsel %vm314, %v1297, 0
  %v1326 = vsel %vm314, %v1298, 0
  %v1329 = vsel %vm314, %v1299, 0
  %1331 = vmatpush.msra.mxu0 0.0
  %1332 = vmatpush.msra.mxu0 0.0
  %1333 = vmatpush.msra.mxu0 0.0
  %1334 = vmatpush.msra.mxu0 0.0
  %1335 = vmatpush.msra.mxu0 0.0
  %1336 = vmatpush.msra.mxu0 0.0
  %1337 = vmatpush.msra.mxu0 0.0
  %1338 = vmatpush.msra.mxu0 0.0
  %1339 = vmatpush.msra.mxu0 0.0
  %1340 = vmatpush.msra.mxu0 %v1320
  %1341 = vmatpush.msra.mxu0 %v1292
  %1342 = vmatpush.msra.mxu0 %v1288
  %1343 = vmatpush.msra.mxu0 %v1284
  %1344 = vmatpush.msra.mxu0 %v1280
  %1345 = vmatpush.msra.mxu0 %v1276
  %1346 = vmatpush.msra.mxu0 %v1272
  %1347 = vmatmul.f32.gmra.mxu0 %v1317
  %v1348 = vpop.f32.mrf.mxu0
  %v1349 = vadd.f32 %v1308, %v1348
  %1350 = vdwg.mxu0
  %1351 = vmatpush.msra.mxu0 0.0
  %1352 = vmatpush.msra.mxu0 0.0
  %1353 = vmatpush.msra.mxu0 0.0
  %1354 = vmatpush.msra.mxu0 0.0
  %1355 = vmatpush.msra.mxu0 0.0
  %1356 = vmatpush.msra.mxu0 0.0
  %1357 = vmatpush.msra.mxu0 0.0
  %1358 = vmatpush.msra.mxu0 0.0
  %1359 = vmatpush.msra.mxu0 0.0
  %1360 = vmatpush.msra.mxu0 %v1323
  %1361 = vmatpush.msra.mxu0 %v1293
  %1362 = vmatpush.msra.mxu0 %v1289
  %1363 = vmatpush.msra.mxu0 %v1285
  %1364 = vmatpush.msra.mxu0 %v1281
  %1365 = vmatpush.msra.mxu0 %v1277
  %1366 = vmatpush.msra.mxu0 %v1273
  %1367 = vmatmul.f32.gmra.mxu0 %v1317
  %v1368 = vpop.f32.mrf.mxu0
  %v1369 = vadd.f32 %v1309, %v1368
  %1370 = vdwg.mxu0
  %1371 = vmatpush.msra.mxu0 0.0
  %1372 = vmatpush.msra.mxu0 0.0
  %1373 = vmatpush.msra.mxu0 0.0
  %1374 = vmatpush.msra.mxu0 0.0
  %1375 = vmatpush.msra.mxu0 0.0
  %1376 = vmatpush.msra.mxu0 0.0
  %1377 = vmatpush.msra.mxu0 0.0
  %1378 = vmatpush.msra.mxu0 0.0
  %1379 = vmatpush.msra.mxu0 0.0
  %1380 = vmatpush.msra.mxu0 %v1326
  %1381 = vmatpush.msra.mxu0 %v1294
  %1382 = vmatpush.msra.mxu0 %v1290
  %1383 = vmatpush.msra.mxu0 %v1286
  %1384 = vmatpush.msra.mxu0 %v1282
  %1385 = vmatpush.msra.mxu0 %v1278
  %1386 = vmatpush.msra.mxu0 %v1274
  %1387 = vmatmul.f32.gmra.mxu0 %v1317
  %v1388 = vpop.f32.mrf.mxu0
  %v1389 = vadd.f32 %v1310, %v1388
  %1390 = vdwg.mxu0
  %1391 = vmatpush.msra.mxu0 0.0
  %1392 = vmatpush.msra.mxu0 0.0
  %1393 = vmatpush.msra.mxu0 0.0
  %1394 = vmatpush.msra.mxu0 0.0
  %1395 = vmatpush.msra.mxu0 0.0
  %1396 = vmatpush.msra.mxu0 0.0
  %1397 = vmatpush.msra.mxu0 0.0
  %1398 = vmatpush.msra.mxu0 0.0
  %1399 = vmatpush.msra.mxu0 0.0
  %1400 = vmatpush.msra.mxu0 %v1329
  %1401 = vmatpush.msra.mxu0 %v1295
  %1402 = vmatpush.msra.mxu0 %v1291
  %1403 = vmatpush.msra.mxu0 %v1287
  %1404 = vmatpush.msra.mxu0 %v1283
  %1405 = vmatpush.msra.mxu0 %v1279
  %1406 = vmatpush.msra.mxu0 %v1275
  %1407 = vmatmul.f32.gmra.mxu0 %v1317
  %v1408 = vpop.f32.mrf.mxu0
  %v1409 = vadd.f32 %v1311, %v1408
  %1410 = vdwg.mxu0
  %v1411 = vxor.u32 %v1349, 2147483648
  %v1412 = vmul.f32 %v1411, 1.442695
  %v1413 = vpow.pop %v1412
  %v1414 = vadd.f32 %v1413, 1.0
  %v1415 = vrcp.pop %v1414
  %v1416 = vmul.f32 %v1414, %v1415
  %v1417 = vsub.f32 1.0, %v1416
  %v1418 = vmul.f32 %v1415, %v1417
  %v1419 = vadd.f32 %v1415, %v1418
  %vm1420 = vweird.f32 %v1414
  %vm1421 = vweird.f32 %v1415
  %vm1422 = vmor %vm1420, %vm1421
  %v1423 = vsel %vm1422, %v1415, %v1419
  %v1424 = vand.u32 2147483647, %v1414
  %vm1425 = vcmp.eq.f32.partialorder %v1424, 8.507059e+37
  %v1426 = vand.u32 %v1414, 2147483648
  %v1427 = vor.u32 1.1754944e-38, %v1426
  %v1428 = vsel %vm1425, %v1427, %v1423
  %v1429 = vmul.f32 1.0, %v1428
  %v1430 = vxor.u32 %v1369, 2147483648
  %v1431 = vmul.f32 %v1430, 1.442695
  %v1432 = vpow.pop %v1431
  %v1433 = vadd.f32 %v1432, 1.0
  %v1434 = vrcp.pop %v1433
  %v1435 = vmul.f32 %v1433, %v1434
  %v1436 = vsub.f32 1.0, %v1435
  %v1437 = vmul.f32 %v1434, %v1436
  %v1438 = vadd.f32 %v1434, %v1437
  %vm1439 = vweird.f32 %v1433
  %vm1440 = vweird.f32 %v1434
  %vm1441 = vmor %vm1439, %vm1440
  %v1442 = vsel %vm1441, %v1434, %v1438
  %v1443 = vand.u32 2147483647, %v1433
  %vm1444 = vcmp.eq.f32.partialorder %v1443, 8.507059e+37
  %v1445 = vand.u32 %v1433, 2147483648
  %v1446 = vor.u32 1.1754944e-38, %v1445
  %v1447 = vsel %vm1444, %v1446, %v1442
  %v1448 = vmul.f32 1.0, %v1447
  %v1449 = vtanh.pop %v1389
  %v1450 = vxor.u32 %v1409, 2147483648
  %v1451 = vmul.f32 %v1450, 1.442695
  %v1452 = vpow.pop %v1451
  %v1453 = vadd.f32 %v1452, 1.0
  %v1454 = vrcp.pop %v1453
  %v1455 = vmul.f32 %v1453, %v1454
  %v1456 = vsub.f32 1.0, %v1455
  %v1457 = vmul.f32 %v1454, %v1456
  %v1458 = vadd.f32 %v1454, %v1457
  %vm1459 = vweird.f32 %v1453
  %vm1460 = vweird.f32 %v1454
  %vm1461 = vmor %vm1459, %vm1460
  %v1462 = vsel %vm1461, %v1454, %v1458
  %v1463 = vand.u32 2147483647, %v1453
  %vm1464 = vcmp.eq.f32.partialorder %v1463, 8.507059e+37
  %v1465 = vand.u32 %v1453, 2147483648
  %v1466 = vor.u32 1.1754944e-38, %v1465
  %v1467 = vsel %vm1464, %v1466, %v1462
  %v1468 = vmul.f32 1.0, %v1467
  %v1469 = vmul.f32 %v1448, %v1268
  %v1470 = vmul.f32 %v1429, %v1449
  %v1471 = vadd.f32 %v1469, %v1470
  %v1472 = vtanh.pop %v1471
  %v1473 = vmul.f32 %v1468, %v1472
  %1474 = vst.msk [vmem:[#allocation3 + $0xa] sm:$0x3] %vm470, %v1473
  %v1475 = vld [vmem:[%s3] sm:$0xff]
  %v1476 = vld [vmem:[%s3 + $0x8] sm:$0xff]
  %v1477 = vld [vmem:[%s3 + $0x10] sm:$0xff]
  %v1478 = vld [vmem:[%s3 + $0x18] sm:$0xff]
  %v1479 = vld [vmem:[%s3 + $0x20] sm:$0xff]
  %v1480 = vld [vmem:[%s3 + $0x28] sm:$0xff]
  %v1481 = vld [vmem:[%s3 + $0x30] sm:$0xff]
  %v1482 = vld [vmem:[%s3 + $0x38] sm:$0xff]
  %v1483 = vld [vmem:[%s3 + $0x40] sm:$0xff]
  %v1484 = vld [vmem:[%s3 + $0x48] sm:$0xff]
  %v1485 = vld [vmem:[%s3 + $0x50] sm:$0xff]
  %v1486 = vld [vmem:[%s3 + $0x58] sm:$0xff]
  %v1487 = vld [vmem:[%s3 + $0x60] sm:$0xff]
  %v1488 = vld [vmem:[%s3 + $0x68] sm:$0xff]
  %v1489 = vld [vmem:[%s3 + $0x70] sm:$0xff]
  %v1490 = vld [vmem:[%s3 + $0x78] sm:$0xff]
  %v1491 = vld [vmem:[%s3 + $0x80] sm:$0xff]
  %v1492 = vld [vmem:[%s3 + $0x88] sm:$0xff]
  %v1493 = vld [vmem:[%s3 + $0x90] sm:$0xff]
  %v1494 = vld [vmem:[%s3 + $0x98] sm:$0xff]
  %v1495 = vld [vmem:[%s3 + $0xa0] sm:$0xff]
  %v1496 = vld [vmem:[%s3 + $0xa8] sm:$0xff]
  %v1497 = vld [vmem:[%s3 + $0xb0] sm:$0xff]
  %v1498 = vld [vmem:[%s3 + $0xb8] sm:$0xff]
  %v1499 = vld [vmem:[%s3 + $0xc0] sm:$0x3]
  %v1500 = vld [vmem:[%s3 + $0xc8] sm:$0x3]
  %v1501 = vld [vmem:[%s3 + $0xd0] sm:$0x3]
  %v1502 = vld [vmem:[%s3 + $0xd8] sm:$0x3]
  %v1503 = vld [vmem:[#allocation2 + $0x20] sm:$0x30]
  %v1504 = vld [vmem:[#allocation2 + $0x28] sm:$0x30]
  %v1505 = vld [vmem:[#allocation2 + $0x30] sm:$0x30]
  %v1506 = vld [vmem:[#allocation2 + $0x38] sm:$0x30]
  %v1511 = vrot.slane %v1503, 4
  %v1512 = vrot.slane %v1504, 4
  %v1513 = vrot.slane %v1505, 4
  %v1514 = vrot.slane %v1506, 4
  %v1520 = vsel %vm310, %v1473, 0
  %v1523 = vsel %vm314, %v1499, 0
  %v1526 = vsel %vm314, %v1500, 0
  %v1529 = vsel %vm314, %v1501, 0
  %v1532 = vsel %vm314, %v1502, 0
  %1534 = vmatpush.msra.mxu0 0.0
  %1535 = vmatpush.msra.mxu0 0.0
  %1536 = vmatpush.msra.mxu0 0.0
  %1537 = vmatpush.msra.mxu0 0.0
  %1538 = vmatpush.msra.mxu0 0.0
  %1539 = vmatpush.msra.mxu0 0.0
  %1540 = vmatpush.msra.mxu0 0.0
  %1541 = vmatpush.msra.mxu0 0.0
  %1542 = vmatpush.msra.mxu0 0.0
  %1543 = vmatpush.msra.mxu0 %v1523
  %1544 = vmatpush.msra.mxu0 %v1495
  %1545 = vmatpush.msra.mxu0 %v1491
  %1546 = vmatpush.msra.mxu0 %v1487
  %1547 = vmatpush.msra.mxu0 %v1483
  %1548 = vmatpush.msra.mxu0 %v1479
  %1549 = vmatpush.msra.mxu0 %v1475
  %1550 = vmatmul.f32.gmra.mxu0 %v1520
  %v1551 = vpop.f32.mrf.mxu0
  %v1552 = vadd.f32 %v1511, %v1551
  %1553 = vdwg.mxu0
  %1554 = vmatpush.msra.mxu0 0.0
  %1555 = vmatpush.msra.mxu0 0.0
  %1556 = vmatpush.msra.mxu0 0.0
  %1557 = vmatpush.msra.mxu0 0.0
  %1558 = vmatpush.msra.mxu0 0.0
  %1559 = vmatpush.msra.mxu0 0.0
  %1560 = vmatpush.msra.mxu0 0.0
  %1561 = vmatpush.msra.mxu0 0.0
  %1562 = vmatpush.msra.mxu0 0.0
  %1563 = vmatpush.msra.mxu0 %v1526
  %1564 = vmatpush.msra.mxu0 %v1496
  %1565 = vmatpush.msra.mxu0 %v1492
  %1566 = vmatpush.msra.mxu0 %v1488
  %1567 = vmatpush.msra.mxu0 %v1484
  %1568 = vmatpush.msra.mxu0 %v1480
  %1569 = vmatpush.msra.mxu0 %v1476
  %1570 = vmatmul.f32.gmra.mxu0 %v1520
  %v1571 = vpop.f32.mrf.mxu0
  %v1572 = vadd.f32 %v1512, %v1571
  %1573 = vdwg.mxu0
  %1574 = vmatpush.msra.mxu0 0.0
  %1575 = vmatpush.msra.mxu0 0.0
  %1576 = vmatpush.msra.mxu0 0.0
  %1577 = vmatpush.msra.mxu0 0.0
  %1578 = vmatpush.msra.mxu0 0.0
  %1579 = vmatpush.msra.mxu0 0.0
  %1580 = vmatpush.msra.mxu0 0.0
  %1581 = vmatpush.msra.mxu0 0.0
  %1582 = vmatpush.msra.mxu0 0.0
  %1583 = vmatpush.msra.mxu0 %v1529
  %1584 = vmatpush.msra.mxu0 %v1497
  %1585 = vmatpush.msra.mxu0 %v1493
  %1586 = vmatpush.msra.mxu0 %v1489
  %1587 = vmatpush.msra.mxu0 %v1485
  %1588 = vmatpush.msra.mxu0 %v1481
  %1589 = vmatpush.msra.mxu0 %v1477
  %1590 = vmatmul.f32.gmra.mxu0 %v1520
  %v1591 = vpop.f32.mrf.mxu0
  %v1592 = vadd.f32 %v1513, %v1591
  %1593 = vdwg.mxu0
  %1594 = vmatpush.msra.mxu0 0.0
  %1595 = vmatpush.msra.mxu0 0.0
  %1596 = vmatpush.msra.mxu0 0.0
  %1597 = vmatpush.msra.mxu0 0.0
  %1598 = vmatpush.msra.mxu0 0.0
  %1599 = vmatpush.msra.mxu0 0.0
  %1600 = vmatpush.msra.mxu0 0.0
  %1601 = vmatpush.msra.mxu0 0.0
  %1602 = vmatpush.msra.mxu0 0.0
  %1603 = vmatpush.msra.mxu0 %v1532
  %1604 = vmatpush.msra.mxu0 %v1498
  %1605 = vmatpush.msra.mxu0 %v1494
  %1606 = vmatpush.msra.mxu0 %v1490
  %1607 = vmatpush.msra.mxu0 %v1486
  %1608 = vmatpush.msra.mxu0 %v1482
  %1609 = vmatpush.msra.mxu0 %v1478
  %1610 = vmatmul.f32.gmra.mxu0 %v1520
  %v1611 = vpop.f32.mrf.mxu0
  %v1612 = vadd.f32 %v1514, %v1611
  %1613 = vdwg.mxu0
  %v1614 = vxor.u32 %v1552, 2147483648
  %v1615 = vmul.f32 %v1614, 1.442695
  %v1616 = vpow.pop %v1615
  %v1617 = vadd.f32 %v1616, 1.0
  %v1618 = vrcp.pop %v1617
  %v1619 = vmul.f32 %v1617, %v1618
  %v1620 = vsub.f32 1.0, %v1619
  %v1621 = vmul.f32 %v1618, %v1620
  %v1622 = vadd.f32 %v1618, %v1621
  %vm1623 = vweird.f32 %v1617
  %vm1624 = vweird.f32 %v1618
  %vm1625 = vmor %vm1623, %vm1624
  %v1626 = vsel %vm1625, %v1618, %v1622
  %v1627 = vand.u32 2147483647, %v1617
  %vm1628 = vcmp.eq.f32.partialorder %v1627, 8.507059e+37
  %v1629 = vand.u32 %v1617, 2147483648
  %v1630 = vor.u32 1.1754944e-38, %v1629
  %v1631 = vsel %vm1628, %v1630, %v1626
  %v1632 = vmul.f32 1.0, %v1631
  %v1633 = vxor.u32 %v1572, 2147483648
  %v1634 = vmul.f32 %v1633, 1.442695
  %v1635 = vpow.pop %v1634
  %v1636 = vadd.f32 %v1635, 1.0
  %v1637 = vrcp.pop %v1636
  %v1638 = vmul.f32 %v1636, %v1637
  %v1639 = vsub.f32 1.0, %v1638
  %v1640 = vmul.f32 %v1637, %v1639
  %v1641 = vadd.f32 %v1637, %v1640
  %vm1642 = vweird.f32 %v1636
  %vm1643 = vweird.f32 %v1637
  %vm1644 = vmor %vm1642, %vm1643
  %v1645 = vsel %vm1644, %v1637, %v1641
  %v1646 = vand.u32 2147483647, %v1636
  %vm1647 = vcmp.eq.f32.partialorder %v1646, 8.507059e+37
  %v1648 = vand.u32 %v1636, 2147483648
  %v1649 = vor.u32 1.1754944e-38, %v1648
  %v1650 = vsel %vm1647, %v1649, %v1645
  %v1651 = vmul.f32 1.0, %v1650
  %v1652 = vtanh.pop %v1592
  %v1653 = vxor.u32 %v1612, 2147483648
  %v1654 = vmul.f32 %v1653, 1.442695
  %v1655 = vpow.pop %v1654
  %v1656 = vadd.f32 %v1655, 1.0
  %v1657 = vrcp.pop %v1656
  %v1658 = vmul.f32 %v1656, %v1657
  %v1659 = vsub.f32 1.0, %v1658
  %v1660 = vmul.f32 %v1657, %v1659
  %v1661 = vadd.f32 %v1657, %v1660
  %vm1662 = vweird.f32 %v1656
  %vm1663 = vweird.f32 %v1657
  %vm1664 = vmor %vm1662, %vm1663
  %v1665 = vsel %vm1664, %v1657, %v1661
  %v1666 = vand.u32 2147483647, %v1656
  %vm1667 = vcmp.eq.f32.partialorder %v1666, 8.507059e+37
  %v1668 = vand.u32 %v1656, 2147483648
  %v1669 = vor.u32 1.1754944e-38, %v1668
  %v1670 = vsel %vm1667, %v1669, %v1665
  %v1671 = vmul.f32 1.0, %v1670
  %v1672 = vmul.f32 %v1651, %v1471
  %v1673 = vmul.f32 %v1632, %v1652
  %v1674 = vadd.f32 %v1672, %v1673
  %v1675 = vtanh.pop %v1674
  %v1676 = vmul.f32 %v1671, %v1675
  %1677 = vst.msk [vmem:[#allocation3 + $0xc] sm:$0x3] %vm470, %v1676
  %v1678 = vld [vmem:[%s3] sm:$0xff]
  %v1679 = vld [vmem:[%s3 + $0x8] sm:$0xff]
  %v1680 = vld [vmem:[%s3 + $0x10] sm:$0xff]
  %v1681 = vld [vmem:[%s3 + $0x18] sm:$0xff]
  %v1682 = vld [vmem:[%s3 + $0x20] sm:$0xff]
  %v1683 = vld [vmem:[%s3 + $0x28] sm:$0xff]
  %v1684 = vld [vmem:[%s3 + $0x30] sm:$0xff]
  %v1685 = vld [vmem:[%s3 + $0x38] sm:$0xff]
  %v1686 = vld [vmem:[%s3 + $0x40] sm:$0xff]
  %v1687 = vld [vmem:[%s3 + $0x48] sm:$0xff]
  %v1688 = vld [vmem:[%s3 + $0x50] sm:$0xff]
  %v1689 = vld [vmem:[%s3 + $0x58] sm:$0xff]
  %v1690 = vld [vmem:[%s3 + $0x60] sm:$0xff]
  %v1691 = vld [vmem:[%s3 + $0x68] sm:$0xff]
  %v1692 = vld [vmem:[%s3 + $0x70] sm:$0xff]
  %v1693 = vld [vmem:[%s3 + $0x78] sm:$0xff]
  %v1694 = vld [vmem:[%s3 + $0x80] sm:$0xff]
  %v1695 = vld [vmem:[%s3 + $0x88] sm:$0xff]
  %v1696 = vld [vmem:[%s3 + $0x90] sm:$0xff]
  %v1697 = vld [vmem:[%s3 + $0x98] sm:$0xff]
  %v1698 = vld [vmem:[%s3 + $0xa0] sm:$0xff]
  %v1699 = vld [vmem:[%s3 + $0xa8] sm:$0xff]
  %v1700 = vld [vmem:[%s3 + $0xb0] sm:$0xff]
  %v1701 = vld [vmem:[%s3 + $0xb8] sm:$0xff]
  %v1702 = vld [vmem:[%s3 + $0xc0] sm:$0x3]
  %v1703 = vld [vmem:[%s3 + $0xc8] sm:$0x3]
  %v1704 = vld [vmem:[%s3 + $0xd0] sm:$0x3]
  %v1705 = vld [vmem:[%s3 + $0xd8] sm:$0x3]
  %v1706 = vld [vmem:[#allocation2 + $0x20] sm:$0xc0]
  %v1707 = vld [vmem:[#allocation2 + $0x28] sm:$0xc0]
  %v1708 = vld [vmem:[#allocation2 + $0x30] sm:$0xc0]
  %v1709 = vld [vmem:[#allocation2 + $0x38] sm:$0xc0]
  %v1714 = vrot.slane %v1706, 6
  %v1715 = vrot.slane %v1707, 6
  %v1716 = vrot.slane %v1708, 6
  %v1717 = vrot.slane %v1709, 6
  %v1723 = vsel %vm310, %v1676, 0
  %v1726 = vsel %vm314, %v1702, 0
  %v1729 = vsel %vm314, %v1703, 0
  %v1732 = vsel %vm314, %v1704, 0
  %v1735 = vsel %vm314, %v1705, 0
  %1737 = vmatpush.msra.mxu0 0.0
  %1738 = vmatpush.msra.mxu0 0.0
  %1739 = vmatpush.msra.mxu0 0.0
  %1740 = vmatpush.msra.mxu0 0.0
  %1741 = vmatpush.msra.mxu0 0.0
  %1742 = vmatpush.msra.mxu0 0.0
  %1743 = vmatpush.msra.mxu0 0.0
  %1744 = vmatpush.msra.mxu0 0.0
  %1745 = vmatpush.msra.mxu0 0.0
  %1746 = vmatpush.msra.mxu0 %v1726
  %1747 = vmatpush.msra.mxu0 %v1698
  %1748 = vmatpush.msra.mxu0 %v1694
  %1749 = vmatpush.msra.mxu0 %v1690
  %1750 = vmatpush.msra.mxu0 %v1686
  %1751 = vmatpush.msra.mxu0 %v1682
  %1752 = vmatpush.msra.mxu0 %v1678
  %1753 = vmatmul.f32.gmra.mxu0 %v1723
  %v1754 = vpop.f32.mrf.mxu0
  %v1755 = vadd.f32 %v1714, %v1754
  %1756 = vdwg.mxu0
  %1757 = vmatpush.msra.mxu0 0.0
  %1758 = vmatpush.msra.mxu0 0.0
  %1759 = vmatpush.msra.mxu0 0.0
  %1760 = vmatpush.msra.mxu0 0.0
  %1761 = vmatpush.msra.mxu0 0.0
  %1762 = vmatpush.msra.mxu0 0.0
  %1763 = vmatpush.msra.mxu0 0.0
  %1764 = vmatpush.msra.mxu0 0.0
  %1765 = vmatpush.msra.mxu0 0.0
  %1766 = vmatpush.msra.mxu0 %v1729
  %1767 = vmatpush.msra.mxu0 %v1699
  %1768 = vmatpush.msra.mxu0 %v1695
  %1769 = vmatpush.msra.mxu0 %v1691
  %1770 = vmatpush.msra.mxu0 %v1687
  %1771 = vmatpush.msra.mxu0 %v1683
  %1772 = vmatpush.msra.mxu0 %v1679
  %1773 = vmatmul.f32.gmra.mxu0 %v1723
  %v1774 = vpop.f32.mrf.mxu0
  %v1775 = vadd.f32 %v1715, %v1774
  %1776 = vdwg.mxu0
  %1777 = vmatpush.msra.mxu0 0.0
  %1778 = vmatpush.msra.mxu0 0.0
  %1779 = vmatpush.msra.mxu0 0.0
  %1780 = vmatpush.msra.mxu0 0.0
  %1781 = vmatpush.msra.mxu0 0.0
  %1782 = vmatpush.msra.mxu0 0.0
  %1783 = vmatpush.msra.mxu0 0.0
  %1784 = vmatpush.msra.mxu0 0.0
  %1785 = vmatpush.msra.mxu0 0.0
  %1786 = vmatpush.msra.mxu0 %v1732
  %1787 = vmatpush.msra.mxu0 %v1700
  %1788 = vmatpush.msra.mxu0 %v1696
  %1789 = vmatpush.msra.mxu0 %v1692
  %1790 = vmatpush.msra.mxu0 %v1688
  %1791 = vmatpush.msra.mxu0 %v1684
  %1792 = vmatpush.msra.mxu0 %v1680
  %1793 = vmatmul.f32.gmra.mxu0 %v1723
  %v1794 = vpop.f32.mrf.mxu0
  %v1795 = vadd.f32 %v1716, %v1794
  %1796 = vdwg.mxu0
  %1797 = vmatpush.msra.mxu0 0.0
  %1798 = vmatpush.msra.mxu0 0.0
  %1799 = vmatpush.msra.mxu0 0.0
  %1800 = vmatpush.msra.mxu0 0.0
  %1801 = vmatpush.msra.mxu0 0.0
  %1802 = vmatpush.msra.mxu0 0.0
  %1803 = vmatpush.msra.mxu0 0.0
  %1804 = vmatpush.msra.mxu0 0.0
  %1805 = vmatpush.msra.mxu0 0.0
  %1806 = vmatpush.msra.mxu0 %v1735
  %1807 = vmatpush.msra.mxu0 %v1701
  %1808 = vmatpush.msra.mxu0 %v1697
  %1809 = vmatpush.msra.mxu0 %v1693
  %1810 = vmatpush.msra.mxu0 %v1689
  %1811 = vmatpush.msra.mxu0 %v1685
  %1812 = vmatpush.msra.mxu0 %v1681
  %1813 = vmatmul.f32.gmra.mxu0 %v1723
  %v1814 = vpop.f32.mrf.mxu0
  %v1815 = vadd.f32 %v1717, %v1814
  %1816 = vdwg.mxu0
  %v1817 = vxor.u32 %v1755, 2147483648
  %v1818 = vmul.f32 %v1817, 1.442695
  %v1819 = vpow.pop %v1818
  %v1820 = vadd.f32 %v1819, 1.0
  %v1821 = vrcp.pop %v1820
  %v1822 = vmul.f32 %v1820, %v1821
  %v1823 = vsub.f32 1.0, %v1822
  %v1824 = vmul.f32 %v1821, %v1823
  %v1825 = vadd.f32 %v1821, %v1824
  %vm1826 = vweird.f32 %v1820
  %vm1827 = vweird.f32 %v1821
  %vm1828 = vmor %vm1826, %vm1827
  %v1829 = vsel %vm1828, %v1821, %v1825
  %v1830 = vand.u32 2147483647, %v1820
  %vm1831 = vcmp.eq.f32.partialorder %v1830, 8.507059e+37
  %v1832 = vand.u32 %v1820, 2147483648
  %v1833 = vor.u32 1.1754944e-38, %v1832
  %v1834 = vsel %vm1831, %v1833, %v1829
  %v1835 = vmul.f32 1.0, %v1834
  %v1836 = vxor.u32 %v1775, 2147483648
  %v1837 = vmul.f32 %v1836, 1.442695
  %v1838 = vpow.pop %v1837
  %v1839 = vadd.f32 %v1838, 1.0
  %v1840 = vrcp.pop %v1839
  %v1841 = vmul.f32 %v1839, %v1840
  %v1842 = vsub.f32 1.0, %v1841
  %v1843 = vmul.f32 %v1840, %v1842
  %v1844 = vadd.f32 %v1840, %v1843
  %vm1845 = vweird.f32 %v1839
  %vm1846 = vweird.f32 %v1840
  %vm1847 = vmor %vm1845, %vm1846
  %v1848 = vsel %vm1847, %v1840, %v1844
  %v1849 = vand.u32 2147483647, %v1839
  %vm1850 = vcmp.eq.f32.partialorder %v1849, 8.507059e+37
  %v1851 = vand.u32 %v1839, 2147483648
  %v1852 = vor.u32 1.1754944e-38, %v1851
  %v1853 = vsel %vm1850, %v1852, %v1848
  %v1854 = vmul.f32 1.0, %v1853
  %v1855 = vtanh.pop %v1795
  %v1856 = vxor.u32 %v1815, 2147483648
  %v1857 = vmul.f32 %v1856, 1.442695
  %v1858 = vpow.pop %v1857
  %v1859 = vadd.f32 %v1858, 1.0
  %v1860 = vrcp.pop %v1859
  %v1861 = vmul.f32 %v1859, %v1860
  %v1862 = vsub.f32 1.0, %v1861
  %v1863 = vmul.f32 %v1860, %v1862
  %v1864 = vadd.f32 %v1860, %v1863
  %vm1865 = vweird.f32 %v1859
  %vm1866 = vweird.f32 %v1860
  %vm1867 = vmor %vm1865, %vm1866
  %v1868 = vsel %vm1867, %v1860, %v1864
  %v1869 = vand.u32 2147483647, %v1859
  %vm1870 = vcmp.eq.f32.partialorder %v1869, 8.507059e+37
  %v1871 = vand.u32 %v1859, 2147483648
  %v1872 = vor.u32 1.1754944e-38, %v1871
  %v1873 = vsel %vm1870, %v1872, %v1868
  %v1874 = vmul.f32 1.0, %v1873
  %v1875 = vmul.f32 %v1854, %v1674
  %v1876 = vmul.f32 %v1835, %v1855
  %v1877 = vadd.f32 %v1875, %v1876
  %v1878 = vtanh.pop %v1877
  %v1879 = vmul.f32 %v1874, %v1878
  %1880 = vst.msk [vmem:[#allocation3 + $0xe] sm:$0x3] %vm470, %v1879
  %v1881 = vld [vmem:[%s3] sm:$0xff]
  %v1882 = vld [vmem:[%s3 + $0x8] sm:$0xff]
  %v1883 = vld [vmem:[%s3 + $0x10] sm:$0xff]
  %v1884 = vld [vmem:[%s3 + $0x18] sm:$0xff]
  %v1885 = vld [vmem:[%s3 + $0x20] sm:$0xff]
  %v1886 = vld [vmem:[%s3 + $0x28] sm:$0xff]
  %v1887 = vld [vmem:[%s3 + $0x30] sm:$0xff]
  %v1888 = vld [vmem:[%s3 + $0x38] sm:$0xff]
  %v1889 = vld [vmem:[%s3 + $0x40] sm:$0xff]
  %v1890 = vld [vmem:[%s3 + $0x48] sm:$0xff]
  %v1891 = vld [vmem:[%s3 + $0x50] sm:$0xff]
  %v1892 = vld [vmem:[%s3 + $0x58] sm:$0xff]
  %v1893 = vld [vmem:[%s3 + $0x60] sm:$0xff]
  %v1894 = vld [vmem:[%s3 + $0x68] sm:$0xff]
  %v1895 = vld [vmem:[%s3 + $0x70] sm:$0xff]
  %v1896 = vld [vmem:[%s3 + $0x78] sm:$0xff]
  %v1897 = vld [vmem:[%s3 + $0x80] sm:$0xff]
  %v1898 = vld [vmem:[%s3 + $0x88] sm:$0xff]
  %v1899 = vld [vmem:[%s3 + $0x90] sm:$0xff]
  %v1900 = vld [vmem:[%s3 + $0x98] sm:$0xff]
  %v1901 = vld [vmem:[%s3 + $0xa0] sm:$0xff]
  %v1902 = vld [vmem:[%s3 + $0xa8] sm:$0xff]
  %v1903 = vld [vmem:[%s3 + $0xb0] sm:$0xff]
  %v1904 = vld [vmem:[%s3 + $0xb8] sm:$0xff]
  %v1905 = vld [vmem:[%s3 + $0xc0] sm:$0x3]
  %v1906 = vld [vmem:[%s3 + $0xc8] sm:$0x3]
  %v1907 = vld [vmem:[%s3 + $0xd0] sm:$0x3]
  %v1908 = vld [vmem:[%s3 + $0xd8] sm:$0x3]
  %v1909 = vld [vmem:[#allocation2 + $0x40] sm:$0x3]
  %v1910 = vld [vmem:[#allocation2 + $0x48] sm:$0x3]
  %v1911 = vld [vmem:[#allocation2 + $0x50] sm:$0x3]
  %v1912 = vld [vmem:[#allocation2 + $0x58] sm:$0x3]
  %v1914 = vsel %vm310, %v1879, 0
  %v1917 = vsel %vm314, %v1905, 0
  %v1920 = vsel %vm314, %v1906, 0
  %v1923 = vsel %vm314, %v1907, 0
  %v1926 = vsel %vm314, %v1908, 0
  %1928 = vmatpush.msra.mxu0 0.0
  %1929 = vmatpush.msra.mxu0 0.0
  %1930 = vmatpush.msra.mxu0 0.0
  %1931 = vmatpush.msra.mxu0 0.0
  %1932 = vmatpush.msra.mxu0 0.0
  %1933 = vmatpush.msra.mxu0 0.0
  %1934 = vmatpush.msra.mxu0 0.0
  %1935 = vmatpush.msra.mxu0 0.0
  %1936 = vmatpush.msra.mxu0 0.0
  %1937 = vmatpush.msra.mxu0 %v1917
  %1938 = vmatpush.msra.mxu0 %v1901
  %1939 = vmatpush.msra.mxu0 %v1897
  %1940 = vmatpush.msra.mxu0 %v1893
  %1941 = vmatpush.msra.mxu0 %v1889
  %1942 = vmatpush.msra.mxu0 %v1885
  %1943 = vmatpush.msra.mxu0 %v1881
  %1944 = vmatmul.f32.gmra.mxu0 %v1914
  %v1945 = vpop.f32.mrf.mxu0
  %v1946 = vadd.f32 %v1909, %v1945
  %1947 = vdwg.mxu0
  %1948 = vmatpush.msra.mxu0 0.0
  %1949 = vmatpush.msra.mxu0 0.0
  %1950 = vmatpush.msra.mxu0 0.0
  %1951 = vmatpush.msra.mxu0 0.0
  %1952 = vmatpush.msra.mxu0 0.0
  %1953 = vmatpush.msra.mxu0 0.0
  %1954 = vmatpush.msra.mxu0 0.0
  %1955 = vmatpush.msra.mxu0 0.0
  %1956 = vmatpush.msra.mxu0 0.0
  %1957 = vmatpush.msra.mxu0 %v1920
  %1958 = vmatpush.msra.mxu0 %v1902
  %1959 = vmatpush.msra.mxu0 %v1898
  %1960 = vmatpush.msra.mxu0 %v1894
  %1961 = vmatpush.msra.mxu0 %v1890
  %1962 = vmatpush.msra.mxu0 %v1886
  %1963 = vmatpush.msra.mxu0 %v1882
  %1964 = vmatmul.f32.gmra.mxu0 %v1914
  %v1965 = vpop.f32.mrf.mxu0
  %v1966 = vadd.f32 %v1910, %v1965
  %1967 = vdwg.mxu0
  %1968 = vmatpush.msra.mxu0 0.0
  %1969 = vmatpush.msra.mxu0 0.0
  %1970 = vmatpush.msra.mxu0 0.0
  %1971 = vmatpush.msra.mxu0 0.0
  %1972 = vmatpush.msra.mxu0 0.0
  %1973 = vmatpush.msra.mxu0 0.0
  %1974 = vmatpush.msra.mxu0 0.0
  %1975 = vmatpush.msra.mxu0 0.0
  %1976 = vmatpush.msra.mxu0 0.0
  %1977 = vmatpush.msra.mxu0 %v1923
  %1978 = vmatpush.msra.mxu0 %v1903
  %1979 = vmatpush.msra.mxu0 %v1899
  %1980 = vmatpush.msra.mxu0 %v1895
  %1981 = vmatpush.msra.mxu0 %v1891
  %1982 = vmatpush.msra.mxu0 %v1887
  %1983 = vmatpush.msra.mxu0 %v1883
  %1984 = vmatmul.f32.gmra.mxu0 %v1914
  %v1985 = vpop.f32.mrf.mxu0
  %v1986 = vadd.f32 %v1911, %v1985
  %1987 = vdwg.mxu0
  %1988 = vmatpush.msra.mxu0 0.0
  %1989 = vmatpush.msra.mxu0 0.0
  %1990 = vmatpush.msra.mxu0 0.0
  %1991 = vmatpush.msra.mxu0 0.0
  %1992 = vmatpush.msra.mxu0 0.0
  %1993 = vmatpush.msra.mxu0 0.0
  %1994 = vmatpush.msra.mxu0 0.0
  %1995 = vmatpush.msra.mxu0 0.0
  %1996 = vmatpush.msra.mxu0 0.0
  %1997 = vmatpush.msra.mxu0 %v1926
  %1998 = vmatpush.msra.mxu0 %v1904
  %1999 = vmatpush.msra.mxu0 %v1900
  %2000 = vmatpush.msra.mxu0 %v1896
  %2001 = vmatpush.msra.mxu0 %v1892
  %2002 = vmatpush.msra.mxu0 %v1888
  %2003 = vmatpush.msra.mxu0 %v1884
  %2004 = vmatmul.f32.gmra.mxu0 %v1914
  %v2005 = vpop.f32.mrf.mxu0
  %v2006 = vadd.f32 %v1912, %v2005
  %2007 = vdwg.mxu0
  %v2008 = vxor.u32 %v1946, 2147483648
  %v2009 = vmul.f32 %v2008, 1.442695
  %v2010 = vpow.pop %v2009
  %v2011 = vadd.f32 %v2010, 1.0
  %v2012 = vrcp.pop %v2011
  %v2013 = vmul.f32 %v2011, %v2012
  %v2014 = vsub.f32 1.0, %v2013
  %v2015 = vmul.f32 %v2012, %v2014
  %v2016 = vadd.f32 %v2012, %v2015
  %vm2017 = vweird.f32 %v2011
  %vm2018 = vweird.f32 %v2012
  %vm2019 = vmor %vm2017, %vm2018
  %v2020 = vsel %vm2019, %v2012, %v2016
  %v2021 = vand.u32 2147483647, %v2011
  %vm2022 = vcmp.eq.f32.partialorder %v2021, 8.507059e+37
  %v2023 = vand.u32 %v2011, 2147483648
  %v2024 = vor.u32 1.1754944e-38, %v2023
  %v2025 = vsel %vm2022, %v2024, %v2020
  %v2026 = vmul.f32 1.0, %v2025
  %v2027 = vxor.u32 %v1966, 2147483648
  %v2028 = vmul.f32 %v2027, 1.442695
  %v2029 = vpow.pop %v2028
  %v2030 = vadd.f32 %v2029, 1.0
  %v2031 = vrcp.pop %v2030
  %v2032 = vmul.f32 %v2030, %v2031
  %v2033 = vsub.f32 1.0, %v2032
  %v2034 = vmul.f32 %v2031, %v2033
  %v2035 = vadd.f32 %v2031, %v2034
  %vm2036 = vweird.f32 %v2030
  %vm2037 = vweird.f32 %v2031
  %vm2038 = vmor %vm2036, %vm2037
  %v2039 = vsel %vm2038, %v2031, %v2035
  %v2040 = vand.u32 2147483647, %v2030
  %vm2041 = vcmp.eq.f32.partialorder %v2040, 8.507059e+37
  %v2042 = vand.u32 %v2030, 2147483648
  %v2043 = vor.u32 1.1754944e-38, %v2042
  %v2044 = vsel %vm2041, %v2043, %v2039
  %v2045 = vmul.f32 1.0, %v2044
  %v2046 = vtanh.pop %v1986
  %v2047 = vxor.u32 %v2006, 2147483648
  %v2048 = vmul.f32 %v2047, 1.442695
  %v2049 = vpow.pop %v2048
  %v2050 = vadd.f32 %v2049, 1.0
  %v2051 = vrcp.pop %v2050
  %v2052 = vmul.f32 %v2050, %v2051
  %v2053 = vsub.f32 1.0, %v2052
  %v2054 = vmul.f32 %v2051, %v2053
  %v2055 = vadd.f32 %v2051, %v2054
  %vm2056 = vweird.f32 %v2050
  %vm2057 = vweird.f32 %v2051
  %vm2058 = vmor %vm2056, %vm2057
  %v2059 = vsel %vm2058, %v2051, %v2055
  %v2060 = vand.u32 2147483647, %v2050
  %vm2061 = vcmp.eq.f32.partialorder %v2060, 8.507059e+37
  %v2062 = vand.u32 %v2050, 2147483648
  %v2063 = vor.u32 1.1754944e-38, %v2062
  %v2064 = vsel %vm2061, %v2063, %v2059
  %v2065 = vmul.f32 1.0, %v2064
  %v2066 = vmul.f32 %v2045, %v1877
  %v2067 = vmul.f32 %v2026, %v2046
  %v2068 = vadd.f32 %v2066, %v2067
  %v2069 = vtanh.pop %v2068
  %v2070 = vmul.f32 %v2065, %v2069
  %2071 = vst.msk [vmem:[#allocation3 + $0x10] sm:$0x3] %vm470, %v2070
  %v2072 = vld [vmem:[%s3] sm:$0xff]
  %v2073 = vld [vmem:[%s3 + $0x8] sm:$0xff]
  %v2074 = vld [vmem:[%s3 + $0x10] sm:$0xff]
  %v2075 = vld [vmem:[%s3 + $0x18] sm:$0xff]
  %v2076 = vld [vmem:[%s3 + $0x20] sm:$0xff]
  %v2077 = vld [vmem:[%s3 + $0x28] sm:$0xff]
  %v2078 = vld [vmem:[%s3 + $0x30] sm:$0xff]
  %v2079 = vld [vmem:[%s3 + $0x38] sm:$0xff]
  %v2080 = vld [vmem:[%s3 + $0x40] sm:$0xff]
  %v2081 = vld [vmem:[%s3 + $0x48] sm:$0xff]
  %v2082 = vld [vmem:[%s3 + $0x50] sm:$0xff]
  %v2083 = vld [vmem:[%s3 + $0x58] sm:$0xff]
  %v2084 = vld [vmem:[%s3 + $0x60] sm:$0xff]
  %v2085 = vld [vmem:[%s3 + $0x68] sm:$0xff]
  %v2086 = vld [vmem:[%s3 + $0x70] sm:$0xff]
  %v2087 = vld [vmem:[%s3 + $0x78] sm:$0xff]
  %v2088 = vld [vmem:[%s3 + $0x80] sm:$0xff]
  %v2089 = vld [vmem:[%s3 + $0x88] sm:$0xff]
  %v2090 = vld [vmem:[%s3 + $0x90] sm:$0xff]
  %v2091 = vld [vmem:[%s3 + $0x98] sm:$0xff]
  %v2092 = vld [vmem:[%s3 + $0xa0] sm:$0xff]
  %v2093 = vld [vmem:[%s3 + $0xa8] sm:$0xff]
  %v2094 = vld [vmem:[%s3 + $0xb0] sm:$0xff]
  %v2095 = vld [vmem:[%s3 + $0xb8] sm:$0xff]
  %v2096 = vld [vmem:[%s3 + $0xc0] sm:$0x3]
  %v2097 = vld [vmem:[%s3 + $0xc8] sm:$0x3]
  %v2098 = vld [vmem:[%s3 + $0xd0] sm:$0x3]
  %v2099 = vld [vmem:[%s3 + $0xd8] sm:$0x3]
  %v2100 = vld [vmem:[#allocation2 + $0x40] sm:$0xc]
  %v2101 = vld [vmem:[#allocation2 + $0x48] sm:$0xc]
  %v2102 = vld [vmem:[#allocation2 + $0x50] sm:$0xc]
  %v2103 = vld [vmem:[#allocation2 + $0x58] sm:$0xc]
  %v2108 = vrot.slane %v2100, 2
  %v2109 = vrot.slane %v2101, 2
  %v2110 = vrot.slane %v2102, 2
  %v2111 = vrot.slane %v2103, 2
  %v2117 = vsel %vm310, %v2070, 0
  %v2120 = vsel %vm314, %v2096, 0
  %v2123 = vsel %vm314, %v2097, 0
  %v2126 = vsel %vm314, %v2098, 0
  %v2129 = vsel %vm314, %v2099, 0
  %2131 = vmatpush.msra.mxu0 0.0
  %2132 = vmatpush.msra.mxu0 0.0
  %2133 = vmatpush.msra.mxu0 0.0
  %2134 = vmatpush.msra.mxu0 0.0
  %2135 = vmatpush.msra.mxu0 0.0
  %2136 = vmatpush.msra.mxu0 0.0
  %2137 = vmatpush.msra.mxu0 0.0
  %2138 = vmatpush.msra.mxu0 0.0
  %2139 = vmatpush.msra.mxu0 0.0
  %2140 = vmatpush.msra.mxu0 %v2120
  %2141 = vmatpush.msra.mxu0 %v2092
  %2142 = vmatpush.msra.mxu0 %v2088
  %2143 = vmatpush.msra.mxu0 %v2084
  %2144 = vmatpush.msra.mxu0 %v2080
  %2145 = vmatpush.msra.mxu0 %v2076
  %2146 = vmatpush.msra.mxu0 %v2072
  %2147 = vmatmul.f32.gmra.mxu0 %v2117
  %v2148 = vpop.f32.mrf.mxu0
  %v2149 = vadd.f32 %v2108, %v2148
  %2150 = vdwg.mxu0
  %2151 = vmatpush.msra.mxu0 0.0
  %2152 = vmatpush.msra.mxu0 0.0
  %2153 = vmatpush.msra.mxu0 0.0
  %2154 = vmatpush.msra.mxu0 0.0
  %2155 = vmatpush.msra.mxu0 0.0
  %2156 = vmatpush.msra.mxu0 0.0
  %2157 = vmatpush.msra.mxu0 0.0
  %2158 = vmatpush.msra.mxu0 0.0
  %2159 = vmatpush.msra.mxu0 0.0
  %2160 = vmatpush.msra.mxu0 %v2123
  %2161 = vmatpush.msra.mxu0 %v2093
  %2162 = vmatpush.msra.mxu0 %v2089
  %2163 = vmatpush.msra.mxu0 %v2085
  %2164 = vmatpush.msra.mxu0 %v2081
  %2165 = vmatpush.msra.mxu0 %v2077
  %2166 = vmatpush.msra.mxu0 %v2073
  %2167 = vmatmul.f32.gmra.mxu0 %v2117
  %v2168 = vpop.f32.mrf.mxu0
  %v2169 = vadd.f32 %v2109, %v2168
  %2170 = vdwg.mxu0
  %2171 = vmatpush.msra.mxu0 0.0
  %2172 = vmatpush.msra.mxu0 0.0
  %2173 = vmatpush.msra.mxu0 0.0
  %2174 = vmatpush.msra.mxu0 0.0
  %2175 = vmatpush.msra.mxu0 0.0
  %2176 = vmatpush.msra.mxu0 0.0
  %2177 = vmatpush.msra.mxu0 0.0
  %2178 = vmatpush.msra.mxu0 0.0
  %2179 = vmatpush.msra.mxu0 0.0
  %2180 = vmatpush.msra.mxu0 %v2126
  %2181 = vmatpush.msra.mxu0 %v2094
  %2182 = vmatpush.msra.mxu0 %v2090
  %2183 = vmatpush.msra.mxu0 %v2086
  %2184 = vmatpush.msra.mxu0 %v2082
  %2185 = vmatpush.msra.mxu0 %v2078
  %2186 = vmatpush.msra.mxu0 %v2074
  %2187 = vmatmul.f32.gmra.mxu0 %v2117
  %v2188 = vpop.f32.mrf.mxu0
  %v2189 = vadd.f32 %v2110, %v2188
  %2190 = vdwg.mxu0
  %2191 = vmatpush.msra.mxu0 0.0
  %2192 = vmatpush.msra.mxu0 0.0
  %2193 = vmatpush.msra.mxu0 0.0
  %2194 = vmatpush.msra.mxu0 0.0
  %2195 = vmatpush.msra.mxu0 0.0
  %2196 = vmatpush.msra.mxu0 0.0
  %2197 = vmatpush.msra.mxu0 0.0
  %2198 = vmatpush.msra.mxu0 0.0
  %2199 = vmatpush.msra.mxu0 0.0
  %2200 = vmatpush.msra.mxu0 %v2129
  %2201 = vmatpush.msra.mxu0 %v2095
  %2202 = vmatpush.msra.mxu0 %v2091
  %2203 = vmatpush.msra.mxu0 %v2087
  %2204 = vmatpush.msra.mxu0 %v2083
  %2205 = vmatpush.msra.mxu0 %v2079
  %2206 = vmatpush.msra.mxu0 %v2075
  %2207 = vmatmul.f32.gmra.mxu0 %v2117
  %v2208 = vpop.f32.mrf.mxu0
  %v2209 = vadd.f32 %v2111, %v2208
  %2210 = vdwg.mxu0
  %v2211 = vxor.u32 %v2149, 2147483648
  %v2212 = vmul.f32 %v2211, 1.442695
  %v2213 = vpow.pop %v2212
  %v2214 = vadd.f32 %v2213, 1.0
  %v2215 = vrcp.pop %v2214
  %v2216 = vmul.f32 %v2214, %v2215
  %v2217 = vsub.f32 1.0, %v2216
  %v2218 = vmul.f32 %v2215, %v2217
  %v2219 = vadd.f32 %v2215, %v2218
  %vm2220 = vweird.f32 %v2214
  %vm2221 = vweird.f32 %v2215
  %vm2222 = vmor %vm2220, %vm2221
  %v2223 = vsel %vm2222, %v2215, %v2219
  %v2224 = vand.u32 2147483647, %v2214
  %vm2225 = vcmp.eq.f32.partialorder %v2224, 8.507059e+37
  %v2226 = vand.u32 %v2214, 2147483648
  %v2227 = vor.u32 1.1754944e-38, %v2226
  %v2228 = vsel %vm2225, %v2227, %v2223
  %v2229 = vmul.f32 1.0, %v2228
  %v2230 = vxor.u32 %v2169, 2147483648
  %v2231 = vmul.f32 %v2230, 1.442695
  %v2232 = vpow.pop %v2231
  %v2233 = vadd.f32 %v2232, 1.0
  %v2234 = vrcp.pop %v2233
  %v2235 = vmul.f32 %v2233, %v2234
  %v2236 = vsub.f32 1.0, %v2235
  %v2237 = vmul.f32 %v2234, %v2236
  %v2238 = vadd.f32 %v2234, %v2237
  %vm2239 = vweird.f32 %v2233
  %vm2240 = vweird.f32 %v2234
  %vm2241 = vmor %vm2239, %vm2240
  %v2242 = vsel %vm2241, %v2234, %v2238
  %v2243 = vand.u32 2147483647, %v2233
  %vm2244 = vcmp.eq.f32.partialorder %v2243, 8.507059e+37
  %v2245 = vand.u32 %v2233, 2147483648
  %v2246 = vor.u32 1.1754944e-38, %v2245
  %v2247 = vsel %vm2244, %v2246, %v2242
  %v2248 = vmul.f32 1.0, %v2247
  %v2249 = vtanh.pop %v2189
  %v2250 = vxor.u32 %v2209, 2147483648
  %v2251 = vmul.f32 %v2250, 1.442695
  %v2252 = vpow.pop %v2251
  %v2253 = vadd.f32 %v2252, 1.0
  %v2254 = vrcp.pop %v2253
  %v2255 = vmul.f32 %v2253, %v2254
  %v2256 = vsub.f32 1.0, %v2255
  %v2257 = vmul.f32 %v2254, %v2256
  %v2258 = vadd.f32 %v2254, %v2257
  %vm2259 = vweird.f32 %v2253
  %vm2260 = vweird.f32 %v2254
  %vm2261 = vmor %vm2259, %vm2260
  %v2262 = vsel %vm2261, %v2254, %v2258
  %v2263 = vand.u32 2147483647, %v2253
  %vm2264 = vcmp.eq.f32.partialorder %v2263, 8.507059e+37
  %v2265 = vand.u32 %v2253, 2147483648
  %v2266 = vor.u32 1.1754944e-38, %v2265
  %v2267 = vsel %vm2264, %v2266, %v2262
  %v2268 = vmul.f32 1.0, %v2267
  %v2269 = vmul.f32 %v2248, %v2068
  %v2270 = vmul.f32 %v2229, %v2249
  %v2271 = vadd.f32 %v2269, %v2270
  %v2272 = vtanh.pop %v2271
  %v2273 = vmul.f32 %v2268, %v2272
  %2274 = vst.msk [vmem:[#allocation3 + $0x12] sm:$0x3] %vm470, %v2273
  %v2275 = vld [vmem:[%s3] sm:$0xff]
  %v2276 = vld [vmem:[%s3 + $0x8] sm:$0xff]
  %v2277 = vld [vmem:[%s3 + $0x10] sm:$0xff]
  %v2278 = vld [vmem:[%s3 + $0x18] sm:$0xff]
  %v2279 = vld [vmem:[%s3 + $0x20] sm:$0xff]
  %v2280 = vld [vmem:[%s3 + $0x28] sm:$0xff]
  %v2281 = vld [vmem:[%s3 + $0x30] sm:$0xff]
  %v2282 = vld [vmem:[%s3 + $0x38] sm:$0xff]
  %v2283 = vld [vmem:[%s3 + $0x40] sm:$0xff]
  %v2284 = vld [vmem:[%s3 + $0x48] sm:$0xff]
  %v2285 = vld [vmem:[%s3 + $0x50] sm:$0xff]
  %v2286 = vld [vmem:[%s3 + $0x58] sm:$0xff]
  %v2287 = vld [vmem:[%s3 + $0x60] sm:$0xff]
  %v2288 = vld [vmem:[%s3 + $0x68] sm:$0xff]
  %v2289 = vld [vmem:[%s3 + $0x70] sm:$0xff]
  %v2290 = vld [vmem:[%s3 + $0x78] sm:$0xff]
  %v2291 = vld [vmem:[%s3 + $0x80] sm:$0xff]
  %v2292 = vld [vmem:[%s3 + $0x88] sm:$0xff]
  %v2293 = vld [vmem:[%s3 + $0x90] sm:$0xff]
  %v2294 = vld [vmem:[%s3 + $0x98] sm:$0xff]
  %v2295 = vld [vmem:[%s3 + $0xa0] sm:$0xff]
  %v2296 = vld [vmem:[%s3 + $0xa8] sm:$0xff]
  %v2297 = vld [vmem:[%s3 + $0xb0] sm:$0xff]
  %v2298 = vld [vmem:[%s3 + $0xb8] sm:$0xff]
  %v2299 = vld [vmem:[%s3 + $0xc0] sm:$0x3]
  %v2300 = vld [vmem:[%s3 + $0xc8] sm:$0x3]
  %v2301 = vld [vmem:[%s3 + $0xd0] sm:$0x3]
  %v2302 = vld [vmem:[%s3 + $0xd8] sm:$0x3]
  %v2303 = vld [vmem:[#allocation2 + $0x40] sm:$0x30]
  %v2304 = vld [vmem:[#allocation2 + $0x48] sm:$0x30]
  %v2305 = vld [vmem:[#allocation2 + $0x50] sm:$0x30]
  %v2306 = vld [vmem:[#allocation2 + $0x58] sm:$0x30]
  %v2311 = vrot.slane %v2303, 4
  %v2312 = vrot.slane %v2304, 4
  %v2313 = vrot.slane %v2305, 4
  %v2314 = vrot.slane %v2306, 4
  %v2320 = vsel %vm310, %v2273, 0
  %v2323 = vsel %vm314, %v2299, 0
  %v2326 = vsel %vm314, %v2300, 0
  %v2329 = vsel %vm314, %v2301, 0
  %v2332 = vsel %vm314, %v2302, 0
  %2334 = vmatpush.msra.mxu0 0.0
  %2335 = vmatpush.msra.mxu0 0.0
  %2336 = vmatpush.msra.mxu0 0.0
  %2337 = vmatpush.msra.mxu0 0.0
  %2338 = vmatpush.msra.mxu0 0.0
  %2339 = vmatpush.msra.mxu0 0.0
  %2340 = vmatpush.msra.mxu0 0.0
  %2341 = vmatpush.msra.mxu0 0.0
  %2342 = vmatpush.msra.mxu0 0.0
  %2343 = vmatpush.msra.mxu0 %v2323
  %2344 = vmatpush.msra.mxu0 %v2295
  %2345 = vmatpush.msra.mxu0 %v2291
  %2346 = vmatpush.msra.mxu0 %v2287
  %2347 = vmatpush.msra.mxu0 %v2283
  %2348 = vmatpush.msra.mxu0 %v2279
  %2349 = vmatpush.msra.mxu0 %v2275
  %2350 = vmatmul.f32.gmra.mxu0 %v2320
  %v2351 = vpop.f32.mrf.mxu0
  %v2352 = vadd.f32 %v2311, %v2351
  %2353 = vdwg.mxu0
  %2354 = vmatpush.msra.mxu0 0.0
  %2355 = vmatpush.msra.mxu0 0.0
  %2356 = vmatpush.msra.mxu0 0.0
  %2357 = vmatpush.msra.mxu0 0.0
  %2358 = vmatpush.msra.mxu0 0.0
  %2359 = vmatpush.msra.mxu0 0.0
  %2360 = vmatpush.msra.mxu0 0.0
  %2361 = vmatpush.msra.mxu0 0.0
  %2362 = vmatpush.msra.mxu0 0.0
  %2363 = vmatpush.msra.mxu0 %v2326
  %2364 = vmatpush.msra.mxu0 %v2296
  %2365 = vmatpush.msra.mxu0 %v2292
  %2366 = vmatpush.msra.mxu0 %v2288
  %2367 = vmatpush.msra.mxu0 %v2284
  %2368 = vmatpush.msra.mxu0 %v2280
  %2369 = vmatpush.msra.mxu0 %v2276
  %2370 = vmatmul.f32.gmra.mxu0 %v2320
  %v2371 = vpop.f32.mrf.mxu0
  %v2372 = vadd.f32 %v2312, %v2371
  %2373 = vdwg.mxu0
  %2374 = vmatpush.msra.mxu0 0.0
  %2375 = vmatpush.msra.mxu0 0.0
  %2376 = vmatpush.msra.mxu0 0.0
  %2377 = vmatpush.msra.mxu0 0.0
  %2378 = vmatpush.msra.mxu0 0.0
  %2379 = vmatpush.msra.mxu0 0.0
  %2380 = vmatpush.msra.mxu0 0.0
  %2381 = vmatpush.msra.mxu0 0.0
  %2382 = vmatpush.msra.mxu0 0.0
  %2383 = vmatpush.msra.mxu0 %v2329
  %2384 = vmatpush.msra.mxu0 %v2297
  %2385 = vmatpush.msra.mxu0 %v2293
  %2386 = vmatpush.msra.mxu0 %v2289
  %2387 = vmatpush.msra.mxu0 %v2285
  %2388 = vmatpush.msra.mxu0 %v2281
  %2389 = vmatpush.msra.mxu0 %v2277
  %2390 = vmatmul.f32.gmra.mxu0 %v2320
  %v2391 = vpop.f32.mrf.mxu0
  %v2392 = vadd.f32 %v2313, %v2391
  %2393 = vdwg.mxu0
  %2394 = vmatpush.msra.mxu0 0.0
  %2395 = vmatpush.msra.mxu0 0.0
  %2396 = vmatpush.msra.mxu0 0.0
  %2397 = vmatpush.msra.mxu0 0.0
  %2398 = vmatpush.msra.mxu0 0.0
  %2399 = vmatpush.msra.mxu0 0.0
  %2400 = vmatpush.msra.mxu0 0.0
  %2401 = vmatpush.msra.mxu0 0.0
  %2402 = vmatpush.msra.mxu0 0.0
  %2403 = vmatpush.msra.mxu0 %v2332
  %2404 = vmatpush.msra.mxu0 %v2298
  %2405 = vmatpush.msra.mxu0 %v2294
  %2406 = vmatpush.msra.mxu0 %v2290
  %2407 = vmatpush.msra.mxu0 %v2286
  %2408 = vmatpush.msra.mxu0 %v2282
  %2409 = vmatpush.msra.mxu0 %v2278
  %2410 = vmatmul.f32.gmra.mxu0 %v2320
  %v2411 = vpop.f32.mrf.mxu0
  %v2412 = vadd.f32 %v2314, %v2411
  %2413 = vdwg.mxu0
  %v2414 = vxor.u32 %v2352, 2147483648
  %v2415 = vmul.f32 %v2414, 1.442695
  %v2416 = vpow.pop %v2415
  %v2417 = vadd.f32 %v2416, 1.0
  %v2418 = vrcp.pop %v2417
  %v2419 = vmul.f32 %v2417, %v2418
  %v2420 = vsub.f32 1.0, %v2419
  %v2421 = vmul.f32 %v2418, %v2420
  %v2422 = vadd.f32 %v2418, %v2421
  %vm2423 = vweird.f32 %v2417
  %vm2424 = vweird.f32 %v2418
  %vm2425 = vmor %vm2423, %vm2424
  %v2426 = vsel %vm2425, %v2418, %v2422
  %v2427 = vand.u32 2147483647, %v2417
  %vm2428 = vcmp.eq.f32.partialorder %v2427, 8.507059e+37
  %v2429 = vand.u32 %v2417, 2147483648
  %v2430 = vor.u32 1.1754944e-38, %v2429
  %v2431 = vsel %vm2428, %v2430, %v2426
  %v2432 = vmul.f32 1.0, %v2431
  %v2433 = vxor.u32 %v2372, 2147483648
  %v2434 = vmul.f32 %v2433, 1.442695
  %v2435 = vpow.pop %v2434
  %v2436 = vadd.f32 %v2435, 1.0
  %v2437 = vrcp.pop %v2436
  %v2438 = vmul.f32 %v2436, %v2437
  %v2439 = vsub.f32 1.0, %v2438
  %v2440 = vmul.f32 %v2437, %v2439
  %v2441 = vadd.f32 %v2437, %v2440
  %vm2442 = vweird.f32 %v2436
  %vm2443 = vweird.f32 %v2437
  %vm2444 = vmor %vm2442, %vm2443
  %v2445 = vsel %vm2444, %v2437, %v2441
  %v2446 = vand.u32 2147483647, %v2436
  %vm2447 = vcmp.eq.f32.partialorder %v2446, 8.507059e+37
  %v2448 = vand.u32 %v2436, 2147483648
  %v2449 = vor.u32 1.1754944e-38, %v2448
  %v2450 = vsel %vm2447, %v2449, %v2445
  %v2451 = vmul.f32 1.0, %v2450
  %v2452 = vtanh.pop %v2392
  %v2453 = vxor.u32 %v2412, 2147483648
  %v2454 = vmul.f32 %v2453, 1.442695
  %v2455 = vpow.pop %v2454
  %v2456 = vadd.f32 %v2455, 1.0
  %v2457 = vrcp.pop %v2456
  %v2458 = vmul.f32 %v2456, %v2457
  %v2459 = vsub.f32 1.0, %v2458
  %v2460 = vmul.f32 %v2457, %v2459
  %v2461 = vadd.f32 %v2457, %v2460
  %vm2462 = vweird.f32 %v2456
  %vm2463 = vweird.f32 %v2457
  %vm2464 = vmor %vm2462, %vm2463
  %v2465 = vsel %vm2464, %v2457, %v2461
  %v2466 = vand.u32 2147483647, %v2456
  %vm2467 = vcmp.eq.f32.partialorder %v2466, 8.507059e+37
  %v2468 = vand.u32 %v2456, 2147483648
  %v2469 = vor.u32 1.1754944e-38, %v2468
  %v2470 = vsel %vm2467, %v2469, %v2465
  %v2471 = vmul.f32 1.0, %v2470
  %v2472 = vmul.f32 %v2451, %v2271
  %v2473 = vmul.f32 %v2432, %v2452
  %v2474 = vadd.f32 %v2472, %v2473
  %v2475 = vtanh.pop %v2474
  %v2476 = vmul.f32 %v2471, %v2475
  %2477 = vst.msk [vmem:[#allocation3 + $0x14] sm:$0x3] %vm470, %v2476
  %v2478 = vld [vmem:[%s3] sm:$0xff]
  %v2479 = vld [vmem:[%s3 + $0x8] sm:$0xff]
  %v2480 = vld [vmem:[%s3 + $0x10] sm:$0xff]
  %v2481 = vld [vmem:[%s3 + $0x18] sm:$0xff]
  %v2482 = vld [vmem:[%s3 + $0x20] sm:$0xff]
  %v2483 = vld [vmem:[%s3 + $0x28] sm:$0xff]
  %v2484 = vld [vmem:[%s3 + $0x30] sm:$0xff]
  %v2485 = vld [vmem:[%s3 + $0x38] sm:$0xff]
  %v2486 = vld [vmem:[%s3 + $0x40] sm:$0xff]
  %v2487 = vld [vmem:[%s3 + $0x48] sm:$0xff]
  %v2488 = vld [vmem:[%s3 + $0x50] sm:$0xff]
  %v2489 = vld [vmem:[%s3 + $0x58] sm:$0xff]
  %v2490 = vld [vmem:[%s3 + $0x60] sm:$0xff]
  %v2491 = vld [vmem:[%s3 + $0x68] sm:$0xff]
  %v2492 = vld [vmem:[%s3 + $0x70] sm:$0xff]
  %v2493 = vld [vmem:[%s3 + $0x78] sm:$0xff]
  %v2494 = vld [vmem:[%s3 + $0x80] sm:$0xff]
  %v2495 = vld [vmem:[%s3 + $0x88] sm:$0xff]
  %v2496 = vld [vmem:[%s3 + $0x90] sm:$0xff]
  %v2497 = vld [vmem:[%s3 + $0x98] sm:$0xff]
  %v2498 = vld [vmem:[%s3 + $0xa0] sm:$0xff]
  %v2499 = vld [vmem:[%s3 + $0xa8] sm:$0xff]
  %v2500 = vld [vmem:[%s3 + $0xb0] sm:$0xff]
  %v2501 = vld [vmem:[%s3 + $0xb8] sm:$0xff]
  %v2502 = vld [vmem:[%s3 + $0xc0] sm:$0x3]
  %v2503 = vld [vmem:[%s3 + $0xc8] sm:$0x3]
  %v2504 = vld [vmem:[%s3 + $0xd0] sm:$0x3]
  %v2505 = vld [vmem:[%s3 + $0xd8] sm:$0x3]
  %v2506 = vld [vmem:[#allocation2 + $0x40] sm:$0xc0]
  %v2507 = vld [vmem:[#allocation2 + $0x48] sm:$0xc0]
  %v2508 = vld [vmem:[#allocation2 + $0x50] sm:$0xc0]
  %v2509 = vld [vmem:[#allocation2 + $0x58] sm:$0xc0]
  %v2514 = vrot.slane %v2506, 6
  %v2515 = vrot.slane %v2507, 6
  %v2516 = vrot.slane %v2508, 6
  %v2517 = vrot.slane %v2509, 6
  %v2523 = vsel %vm310, %v2476, 0
  %v2526 = vsel %vm314, %v2502, 0
  %v2529 = vsel %vm314, %v2503, 0
  %v2532 = vsel %vm314, %v2504, 0
  %v2535 = vsel %vm314, %v2505, 0
  %2537 = vmatpush.msra.mxu0 0.0
  %2538 = vmatpush.msra.mxu0 0.0
  %2539 = vmatpush.msra.mxu0 0.0
  %2540 = vmatpush.msra.mxu0 0.0
  %2541 = vmatpush.msra.mxu0 0.0
  %2542 = vmatpush.msra.mxu0 0.0
  %2543 = vmatpush.msra.mxu0 0.0
  %2544 = vmatpush.msra.mxu0 0.0
  %2545 = vmatpush.msra.mxu0 0.0
  %2546 = vmatpush.msra.mxu0 %v2526
  %2547 = vmatpush.msra.mxu0 %v2498
  %2548 = vmatpush.msra.mxu0 %v2494
  %2549 = vmatpush.msra.mxu0 %v2490
  %2550 = vmatpush.msra.mxu0 %v2486
  %2551 = vmatpush.msra.mxu0 %v2482
  %2552 = vmatpush.msra.mxu0 %v2478
  %2553 = vmatmul.f32.gmra.mxu0 %v2523
  %v2554 = vpop.f32.mrf.mxu0
  %v2555 = vadd.f32 %v2514, %v2554
  %2556 = vdwg.mxu0
  %2557 = vmatpush.msra.mxu0 0.0
  %2558 = vmatpush.msra.mxu0 0.0
  %2559 = vmatpush.msra.mxu0 0.0
  %2560 = vmatpush.msra.mxu0 0.0
  %2561 = vmatpush.msra.mxu0 0.0
  %2562 = vmatpush.msra.mxu0 0.0
  %2563 = vmatpush.msra.mxu0 0.0
  %2564 = vmatpush.msra.mxu0 0.0
  %2565 = vmatpush.msra.mxu0 0.0
  %2566 = vmatpush.msra.mxu0 %v2529
  %2567 = vmatpush.msra.mxu0 %v2499
  %2568 = vmatpush.msra.mxu0 %v2495
  %2569 = vmatpush.msra.mxu0 %v2491
  %2570 = vmatpush.msra.mxu0 %v2487
  %2571 = vmatpush.msra.mxu0 %v2483
  %2572 = vmatpush.msra.mxu0 %v2479
  %2573 = vmatmul.f32.gmra.mxu0 %v2523
  %v2574 = vpop.f32.mrf.mxu0
  %v2575 = vadd.f32 %v2515, %v2574
  %2576 = vdwg.mxu0
  %2577 = vmatpush.msra.mxu0 0.0
  %2578 = vmatpush.msra.mxu0 0.0
  %2579 = vmatpush.msra.mxu0 0.0
  %2580 = vmatpush.msra.mxu0 0.0
  %2581 = vmatpush.msra.mxu0 0.0
  %2582 = vmatpush.msra.mxu0 0.0
  %2583 = vmatpush.msra.mxu0 0.0
  %2584 = vmatpush.msra.mxu0 0.0
  %2585 = vmatpush.msra.mxu0 0.0
  %2586 = vmatpush.msra.mxu0 %v2532
  %2587 = vmatpush.msra.mxu0 %v2500
  %2588 = vmatpush.msra.mxu0 %v2496
  %2589 = vmatpush.msra.mxu0 %v2492
  %2590 = vmatpush.msra.mxu0 %v2488
  %2591 = vmatpush.msra.mxu0 %v2484
  %2592 = vmatpush.msra.mxu0 %v2480
  %2593 = vmatmul.f32.gmra.mxu0 %v2523
  %v2594 = vpop.f32.mrf.mxu0
  %v2595 = vadd.f32 %v2516, %v2594
  %2596 = vdwg.mxu0
  %2597 = vmatpush.msra.mxu0 0.0
  %2598 = vmatpush.msra.mxu0 0.0
  %2599 = vmatpush.msra.mxu0 0.0
  %2600 = vmatpush.msra.mxu0 0.0
  %2601 = vmatpush.msra.mxu0 0.0
  %2602 = vmatpush.msra.mxu0 0.0
  %2603 = vmatpush.msra.mxu0 0.0
  %2604 = vmatpush.msra.mxu0 0.0
  %2605 = vmatpush.msra.mxu0 0.0
  %2606 = vmatpush.msra.mxu0 %v2535
  %2607 = vmatpush.msra.mxu0 %v2501
  %2608 = vmatpush.msra.mxu0 %v2497
  %2609 = vmatpush.msra.mxu0 %v2493
  %2610 = vmatpush.msra.mxu0 %v2489
  %2611 = vmatpush.msra.mxu0 %v2485
  %2612 = vmatpush.msra.mxu0 %v2481
  %2613 = vmatmul.f32.gmra.mxu0 %v2523
  %v2614 = vpop.f32.mrf.mxu0
  %v2615 = vadd.f32 %v2517, %v2614
  %2616 = vdwg.mxu0
  %v2617 = vxor.u32 %v2555, 2147483648
  %v2618 = vmul.f32 %v2617, 1.442695
  %v2619 = vpow.pop %v2618
  %v2620 = vadd.f32 %v2619, 1.0
  %v2621 = vrcp.pop %v2620
  %v2622 = vmul.f32 %v2620, %v2621
  %v2623 = vsub.f32 1.0, %v2622
  %v2624 = vmul.f32 %v2621, %v2623
  %v2625 = vadd.f32 %v2621, %v2624
  %vm2626 = vweird.f32 %v2620
  %vm2627 = vweird.f32 %v2621
  %vm2628 = vmor %vm2626, %vm2627
  %v2629 = vsel %vm2628, %v2621, %v2625
  %v2630 = vand.u32 2147483647, %v2620
  %vm2631 = vcmp.eq.f32.partialorder %v2630, 8.507059e+37
  %v2632 = vand.u32 %v2620, 2147483648
  %v2633 = vor.u32 1.1754944e-38, %v2632
  %v2634 = vsel %vm2631, %v2633, %v2629
  %v2635 = vmul.f32 1.0, %v2634
  %v2636 = vxor.u32 %v2575, 2147483648
  %v2637 = vmul.f32 %v2636, 1.442695
  %v2638 = vpow.pop %v2637
  %v2639 = vadd.f32 %v2638, 1.0
  %v2640 = vrcp.pop %v2639
  %v2641 = vmul.f32 %v2639, %v2640
  %v2642 = vsub.f32 1.0, %v2641
  %v2643 = vmul.f32 %v2640, %v2642
  %v2644 = vadd.f32 %v2640, %v2643
  %vm2645 = vweird.f32 %v2639
  %vm2646 = vweird.f32 %v2640
  %vm2647 = vmor %vm2645, %vm2646
  %v2648 = vsel %vm2647, %v2640, %v2644
  %v2649 = vand.u32 2147483647, %v2639
  %vm2650 = vcmp.eq.f32.partialorder %v2649, 8.507059e+37
  %v2651 = vand.u32 %v2639, 2147483648
  %v2652 = vor.u32 1.1754944e-38, %v2651
  %v2653 = vsel %vm2650, %v2652, %v2648
  %v2654 = vmul.f32 1.0, %v2653
  %v2655 = vtanh.pop %v2595
  %v2656 = vxor.u32 %v2615, 2147483648
  %v2657 = vmul.f32 %v2656, 1.442695
  %v2658 = vpow.pop %v2657
  %v2659 = vadd.f32 %v2658, 1.0
  %v2660 = vrcp.pop %v2659
  %v2661 = vmul.f32 %v2659, %v2660
  %v2662 = vsub.f32 1.0, %v2661
  %v2663 = vmul.f32 %v2660, %v2662
  %v2664 = vadd.f32 %v2660, %v2663
  %vm2665 = vweird.f32 %v2659
  %vm2666 = vweird.f32 %v2660
  %vm2667 = vmor %vm2665, %vm2666
  %v2668 = vsel %vm2667, %v2660, %v2664
  %v2669 = vand.u32 2147483647, %v2659
  %vm2670 = vcmp.eq.f32.partialorder %v2669, 8.507059e+37
  %v2671 = vand.u32 %v2659, 2147483648
  %v2672 = vor.u32 1.1754944e-38, %v2671
  %v2673 = vsel %vm2670, %v2672, %v2668
  %v2674 = vmul.f32 1.0, %v2673
  %v2675 = vmul.f32 %v2654, %v2474
  %v2676 = vmul.f32 %v2635, %v2655
  %v2677 = vadd.f32 %v2675, %v2676
  %v2678 = vtanh.pop %v2677
  %v2679 = vmul.f32 %v2674, %v2678
  %2680 = vst.msk [vmem:[#allocation3 + $0x16] sm:$0x3] %vm470, %v2679
  %v2681 = vld [vmem:[%s3] sm:$0xff]
  %v2682 = vld [vmem:[%s3 + $0x8] sm:$0xff]
  %v2683 = vld [vmem:[%s3 + $0x10] sm:$0xff]
  %v2684 = vld [vmem:[%s3 + $0x18] sm:$0xff]
  %v2685 = vld [vmem:[%s3 + $0x20] sm:$0xff]
  %v2686 = vld [vmem:[%s3 + $0x28] sm:$0xff]
  %v2687 = vld [vmem:[%s3 + $0x30] sm:$0xff]
  %v2688 = vld [vmem:[%s3 + $0x38] sm:$0xff]
  %v2689 = vld [vmem:[%s3 + $0x40] sm:$0xff]
  %v2690 = vld [vmem:[%s3 + $0x48] sm:$0xff]
  %v2691 = vld [vmem:[%s3 + $0x50] sm:$0xff]
  %v2692 = vld [vmem:[%s3 + $0x58] sm:$0xff]
  %v2693 = vld [vmem:[%s3 + $0x60] sm:$0xff]
  %v2694 = vld [vmem:[%s3 + $0x68] sm:$0xff]
  %v2695 = vld [vmem:[%s3 + $0x70] sm:$0xff]
  %v2696 = vld [vmem:[%s3 + $0x78] sm:$0xff]
  %v2697 = vld [vmem:[%s3 + $0x80] sm:$0xff]
  %v2698 = vld [vmem:[%s3 + $0x88] sm:$0xff]
  %v2699 = vld [vmem:[%s3 + $0x90] sm:$0xff]
  %v2700 = vld [vmem:[%s3 + $0x98] sm:$0xff]
  %v2701 = vld [vmem:[%s3 + $0xa0] sm:$0xff]
  %v2702 = vld [vmem:[%s3 + $0xa8] sm:$0xff]
  %v2703 = vld [vmem:[%s3 + $0xb0] sm:$0xff]
  %v2704 = vld [vmem:[%s3 + $0xb8] sm:$0xff]
  %v2705 = vld [vmem:[%s3 + $0xc0] sm:$0x3]
  %v2706 = vld [vmem:[%s3 + $0xc8] sm:$0x3]
  %v2707 = vld [vmem:[%s3 + $0xd0] sm:$0x3]
  %v2708 = vld [vmem:[%s3 + $0xd8] sm:$0x3]
  %v2709 = vld [vmem:[#allocation2 + $0x60] sm:$0x3]
  %v2710 = vld [vmem:[#allocation2 + $0x68] sm:$0x3]
  %v2711 = vld [vmem:[#allocation2 + $0x70] sm:$0x3]
  %v2712 = vld [vmem:[#allocation2 + $0x78] sm:$0x3]
  %v2714 = vsel %vm310, %v2679, 0
  %v2717 = vsel %vm314, %v2705, 0
  %v2720 = vsel %vm314, %v2706, 0
  %v2723 = vsel %vm314, %v2707, 0
  %v2726 = vsel %vm314, %v2708, 0
  %2728 = vmatpush.msra.mxu0 0.0
  %2729 = vmatpush.msra.mxu0 0.0
  %2730 = vmatpush.msra.mxu0 0.0
  %2731 = vmatpush.msra.mxu0 0.0
  %2732 = vmatpush.msra.mxu0 0.0
  %2733 = vmatpush.msra.mxu0 0.0
  %2734 = vmatpush.msra.mxu0 0.0
  %2735 = vmatpush.msra.mxu0 0.0
  %2736 = vmatpush.msra.mxu0 0.0
  %2737 = vmatpush.msra.mxu0 %v2717
  %2738 = vmatpush.msra.mxu0 %v2701
  %2739 = vmatpush.msra.mxu0 %v2697
  %2740 = vmatpush.msra.mxu0 %v2693
  %2741 = vmatpush.msra.mxu0 %v2689
  %2742 = vmatpush.msra.mxu0 %v2685
  %2743 = vmatpush.msra.mxu0 %v2681
  %2744 = vmatmul.f32.gmra.mxu0 %v2714
  %v2745 = vpop.f32.mrf.mxu0
  %v2746 = vadd.f32 %v2709, %v2745
  %2747 = vdwg.mxu0
  %2748 = vmatpush.msra.mxu0 0.0
  %2749 = vmatpush.msra.mxu0 0.0
  %2750 = vmatpush.msra.mxu0 0.0
  %2751 = vmatpush.msra.mxu0 0.0
  %2752 = vmatpush.msra.mxu0 0.0
  %2753 = vmatpush.msra.mxu0 0.0
  %2754 = vmatpush.msra.mxu0 0.0
  %2755 = vmatpush.msra.mxu0 0.0
  %2756 = vmatpush.msra.mxu0 0.0
  %2757 = vmatpush.msra.mxu0 %v2720
  %2758 = vmatpush.msra.mxu0 %v2702
  %2759 = vmatpush.msra.mxu0 %v2698
  %2760 = vmatpush.msra.mxu0 %v2694
  %2761 = vmatpush.msra.mxu0 %v2690
  %2762 = vmatpush.msra.mxu0 %v2686
  %2763 = vmatpush.msra.mxu0 %v2682
  %2764 = vmatmul.f32.gmra.mxu0 %v2714
  %v2765 = vpop.f32.mrf.mxu0
  %v2766 = vadd.f32 %v2710, %v2765
  %2767 = vdwg.mxu0
  %2768 = vmatpush.msra.mxu0 0.0
  %2769 = vmatpush.msra.mxu0 0.0
  %2770 = vmatpush.msra.mxu0 0.0
  %2771 = vmatpush.msra.mxu0 0.0
  %2772 = vmatpush.msra.mxu0 0.0
  %2773 = vmatpush.msra.mxu0 0.0
  %2774 = vmatpush.msra.mxu0 0.0
  %2775 = vmatpush.msra.mxu0 0.0
  %2776 = vmatpush.msra.mxu0 0.0
  %2777 = vmatpush.msra.mxu0 %v2723
  %2778 = vmatpush.msra.mxu0 %v2703
  %2779 = vmatpush.msra.mxu0 %v2699
  %2780 = vmatpush.msra.mxu0 %v2695
  %2781 = vmatpush.msra.mxu0 %v2691
  %2782 = vmatpush.msra.mxu0 %v2687
  %2783 = vmatpush.msra.mxu0 %v2683
  %2784 = vmatmul.f32.gmra.mxu0 %v2714
  %v2785 = vpop.f32.mrf.mxu0
  %v2786 = vadd.f32 %v2711, %v2785
  %2787 = vdwg.mxu0
  %2788 = vmatpush.msra.mxu0 0.0
  %2789 = vmatpush.msra.mxu0 0.0
  %2790 = vmatpush.msra.mxu0 0.0
  %2791 = vmatpush.msra.mxu0 0.0
  %2792 = vmatpush.msra.mxu0 0.0
  %2793 = vmatpush.msra.mxu0 0.0
  %2794 = vmatpush.msra.mxu0 0.0
  %2795 = vmatpush.msra.mxu0 0.0
  %2796 = vmatpush.msra.mxu0 0.0
  %2797 = vmatpush.msra.mxu0 %v2726
  %2798 = vmatpush.msra.mxu0 %v2704
  %2799 = vmatpush.msra.mxu0 %v2700
  %2800 = vmatpush.msra.mxu0 %v2696
  %2801 = vmatpush.msra.mxu0 %v2692
  %2802 = vmatpush.msra.mxu0 %v2688
  %2803 = vmatpush.msra.mxu0 %v2684
  %2804 = vmatmul.f32.gmra.mxu0 %v2714
  %v2805 = vpop.f32.mrf.mxu0
  %v2806 = vadd.f32 %v2712, %v2805
  %2807 = vdwg.mxu0
  %v2808 = vxor.u32 %v2746, 2147483648
  %v2809 = vmul.f32 %v2808, 1.442695
  %v2810 = vpow.pop %v2809
  %v2811 = vadd.f32 %v2810, 1.0
  %v2812 = vrcp.pop %v2811
  %v2813 = vmul.f32 %v2811, %v2812
  %v2814 = vsub.f32 1.0, %v2813
  %v2815 = vmul.f32 %v2812, %v2814
  %v2816 = vadd.f32 %v2812, %v2815
  %vm2817 = vweird.f32 %v2811
  %vm2818 = vweird.f32 %v2812
  %vm2819 = vmor %vm2817, %vm2818
  %v2820 = vsel %vm2819, %v2812, %v2816
  %v2821 = vand.u32 2147483647, %v2811
  %vm2822 = vcmp.eq.f32.partialorder %v2821, 8.507059e+37
  %v2823 = vand.u32 %v2811, 2147483648
  %v2824 = vor.u32 1.1754944e-38, %v2823
  %v2825 = vsel %vm2822, %v2824, %v2820
  %v2826 = vmul.f32 1.0, %v2825
  %v2827 = vxor.u32 %v2766, 2147483648
  %v2828 = vmul.f32 %v2827, 1.442695
  %v2829 = vpow.pop %v2828
  %v2830 = vadd.f32 %v2829, 1.0
  %v2831 = vrcp.pop %v2830
  %v2832 = vmul.f32 %v2830, %v2831
  %v2833 = vsub.f32 1.0, %v2832
  %v2834 = vmul.f32 %v2831, %v2833
  %v2835 = vadd.f32 %v2831, %v2834
  %vm2836 = vweird.f32 %v2830
  %vm2837 = vweird.f32 %v2831
  %vm2838 = vmor %vm2836, %vm2837
  %v2839 = vsel %vm2838, %v2831, %v2835
  %v2840 = vand.u32 2147483647, %v2830
  %vm2841 = vcmp.eq.f32.partialorder %v2840, 8.507059e+37
  %v2842 = vand.u32 %v2830, 2147483648
  %v2843 = vor.u32 1.1754944e-38, %v2842
  %v2844 = vsel %vm2841, %v2843, %v2839
  %v2845 = vmul.f32 1.0, %v2844
  %v2846 = vtanh.pop %v2786
  %v2847 = vxor.u32 %v2806, 2147483648
  %v2848 = vmul.f32 %v2847, 1.442695
  %v2849 = vpow.pop %v2848
  %v2850 = vadd.f32 %v2849, 1.0
  %v2851 = vrcp.pop %v2850
  %v2852 = vmul.f32 %v2850, %v2851
  %v2853 = vsub.f32 1.0, %v2852
  %v2854 = vmul.f32 %v2851, %v2853
  %v2855 = vadd.f32 %v2851, %v2854
  %vm2856 = vweird.f32 %v2850
  %vm2857 = vweird.f32 %v2851
  %vm2858 = vmor %vm2856, %vm2857
  %v2859 = vsel %vm2858, %v2851, %v2855
  %v2860 = vand.u32 2147483647, %v2850
  %vm2861 = vcmp.eq.f32.partialorder %v2860, 8.507059e+37
  %v2862 = vand.u32 %v2850, 2147483648
  %v2863 = vor.u32 1.1754944e-38, %v2862
  %v2864 = vsel %vm2861, %v2863, %v2859
  %v2865 = vmul.f32 1.0, %v2864
  %v2866 = vmul.f32 %v2845, %v2677
  %v2867 = vmul.f32 %v2826, %v2846
  %v2868 = vadd.f32 %v2866, %v2867
  %v2869 = vtanh.pop %v2868
  %v2870 = vmul.f32 %v2865, %v2869
  %2871 = vst.msk [vmem:[#allocation3 + $0x18] sm:$0x3] %vm470, %v2870
  %v2872 = vld [vmem:[%s3] sm:$0xff]
  %v2873 = vld [vmem:[%s3 + $0x8] sm:$0xff]
  %v2874 = vld [vmem:[%s3 + $0x10] sm:$0xff]
  %v2875 = vld [vmem:[%s3 + $0x18] sm:$0xff]
  %v2876 = vld [vmem:[%s3 + $0x20] sm:$0xff]
  %v2877 = vld [vmem:[%s3 + $0x28] sm:$0xff]
  %v2878 = vld [vmem:[%s3 + $0x30] sm:$0xff]
  %v2879 = vld [vmem:[%s3 + $0x38] sm:$0xff]
  %v2880 = vld [vmem:[%s3 + $0x40] sm:$0xff]
  %v2881 = vld [vmem:[%s3 + $0x48] sm:$0xff]
  %v2882 = vld [vmem:[%s3 + $0x50] sm:$0xff]
  %v2883 = vld [vmem:[%s3 + $0x58] sm:$0xff]
  %v2884 = vld [vmem:[%s3 + $0x60] sm:$0xff]
  %v2885 = vld [vmem:[%s3 + $0x68] sm:$0xff]
  %v2886 = vld [vmem:[%s3 + $0x70] sm:$0xff]
  %v2887 = vld [vmem:[%s3 + $0x78] sm:$0xff]
  %v2888 = vld [vmem:[%s3 + $0x80] sm:$0xff]
  %v2889 = vld [vmem:[%s3 + $0x88] sm:$0xff]
  %v2890 = vld [vmem:[%s3 + $0x90] sm:$0xff]
  %v2891 = vld [vmem:[%s3 + $0x98] sm:$0xff]
  %v2892 = vld [vmem:[%s3 + $0xa0] sm:$0xff]
  %v2893 = vld [vmem:[%s3 + $0xa8] sm:$0xff]
  %v2894 = vld [vmem:[%s3 + $0xb0] sm:$0xff]
  %v2895 = vld [vmem:[%s3 + $0xb8] sm:$0xff]
  %v2896 = vld [vmem:[%s3 + $0xc0] sm:$0x3]
  %v2897 = vld [vmem:[%s3 + $0xc8] sm:$0x3]
  %v2898 = vld [vmem:[%s3 + $0xd0] sm:$0x3]
  %v2899 = vld [vmem:[%s3 + $0xd8] sm:$0x3]
  %v2900 = vld [vmem:[#allocation2 + $0x60] sm:$0xc]
  %v2901 = vld [vmem:[#allocation2 + $0x68] sm:$0xc]
  %v2902 = vld [vmem:[#allocation2 + $0x70] sm:$0xc]
  %v2903 = vld [vmem:[#allocation2 + $0x78] sm:$0xc]
  %v2908 = vrot.slane %v2900, 2
  %v2909 = vrot.slane %v2901, 2
  %v2910 = vrot.slane %v2902, 2
  %v2911 = vrot.slane %v2903, 2
  %v2917 = vsel %vm310, %v2870, 0
  %v2920 = vsel %vm314, %v2896, 0
  %v2923 = vsel %vm314, %v2897, 0
  %v2926 = vsel %vm314, %v2898, 0
  %v2929 = vsel %vm314, %v2899, 0
  %2931 = vmatpush.msra.mxu0 0.0
  %2932 = vmatpush.msra.mxu0 0.0
  %2933 = vmatpush.msra.mxu0 0.0
  %2934 = vmatpush.msra.mxu0 0.0
  %2935 = vmatpush.msra.mxu0 0.0
  %2936 = vmatpush.msra.mxu0 0.0
  %2937 = vmatpush.msra.mxu0 0.0
  %2938 = vmatpush.msra.mxu0 0.0
  %2939 = vmatpush.msra.mxu0 0.0
  %2940 = vmatpush.msra.mxu0 %v2920
  %2941 = vmatpush.msra.mxu0 %v2892
  %2942 = vmatpush.msra.mxu0 %v2888
  %2943 = vmatpush.msra.mxu0 %v2884
  %2944 = vmatpush.msra.mxu0 %v2880
  %2945 = vmatpush.msra.mxu0 %v2876
  %2946 = vmatpush.msra.mxu0 %v2872
  %2947 = vmatmul.f32.gmra.mxu0 %v2917
  %v2948 = vpop.f32.mrf.mxu0
  %v2949 = vadd.f32 %v2908, %v2948
  %2950 = vdwg.mxu0
  %2951 = vmatpush.msra.mxu0 0.0
  %2952 = vmatpush.msra.mxu0 0.0
  %2953 = vmatpush.msra.mxu0 0.0
  %2954 = vmatpush.msra.mxu0 0.0
  %2955 = vmatpush.msra.mxu0 0.0
  %2956 = vmatpush.msra.mxu0 0.0
  %2957 = vmatpush.msra.mxu0 0.0
  %2958 = vmatpush.msra.mxu0 0.0
  %2959 = vmatpush.msra.mxu0 0.0
  %2960 = vmatpush.msra.mxu0 %v2923
  %2961 = vmatpush.msra.mxu0 %v2893
  %2962 = vmatpush.msra.mxu0 %v2889
  %2963 = vmatpush.msra.mxu0 %v2885
  %2964 = vmatpush.msra.mxu0 %v2881
  %2965 = vmatpush.msra.mxu0 %v2877
  %2966 = vmatpush.msra.mxu0 %v2873
  %2967 = vmatmul.f32.gmra.mxu0 %v2917
  %v2968 = vpop.f32.mrf.mxu0
  %v2969 = vadd.f32 %v2909, %v2968
  %2970 = vdwg.mxu0
  %2971 = vmatpush.msra.mxu0 0.0
  %2972 = vmatpush.msra.mxu0 0.0
  %2973 = vmatpush.msra.mxu0 0.0
  %2974 = vmatpush.msra.mxu0 0.0
  %2975 = vmatpush.msra.mxu0 0.0
  %2976 = vmatpush.msra.mxu0 0.0
  %2977 = vmatpush.msra.mxu0 0.0
  %2978 = vmatpush.msra.mxu0 0.0
  %2979 = vmatpush.msra.mxu0 0.0
  %2980 = vmatpush.msra.mxu0 %v2926
  %2981 = vmatpush.msra.mxu0 %v2894
  %2982 = vmatpush.msra.mxu0 %v2890
  %2983 = vmatpush.msra.mxu0 %v2886
  %2984 = vmatpush.msra.mxu0 %v2882
  %2985 = vmatpush.msra.mxu0 %v2878
  %2986 = vmatpush.msra.mxu0 %v2874
  %2987 = vmatmul.f32.gmra.mxu0 %v2917
  %v2988 = vpop.f32.mrf.mxu0
  %v2989 = vadd.f32 %v2910, %v2988
  %2990 = vdwg.mxu0
  %2991 = vmatpush.msra.mxu0 0.0
  %2992 = vmatpush.msra.mxu0 0.0
  %2993 = vmatpush.msra.mxu0 0.0
  %2994 = vmatpush.msra.mxu0 0.0
  %2995 = vmatpush.msra.mxu0 0.0
  %2996 = vmatpush.msra.mxu0 0.0
  %2997 = vmatpush.msra.mxu0 0.0
  %2998 = vmatpush.msra.mxu0 0.0
  %2999 = vmatpush.msra.mxu0 0.0
  %3000 = vmatpush.msra.mxu0 %v2929
  %3001 = vmatpush.msra.mxu0 %v2895
  %3002 = vmatpush.msra.mxu0 %v2891
  %3003 = vmatpush.msra.mxu0 %v2887
  %3004 = vmatpush.msra.mxu0 %v2883
  %3005 = vmatpush.msra.mxu0 %v2879
  %3006 = vmatpush.msra.mxu0 %v2875
  %3007 = vmatmul.f32.gmra.mxu0 %v2917
  %v3008 = vpop.f32.mrf.mxu0
  %v3009 = vadd.f32 %v2911, %v3008
  %3010 = vdwg.mxu0
  %v3011 = vxor.u32 %v2949, 2147483648
  %v3012 = vmul.f32 %v3011, 1.442695
  %v3013 = vpow.pop %v3012
  %v3014 = vadd.f32 %v3013, 1.0
  %v3015 = vrcp.pop %v3014
  %v3016 = vmul.f32 %v3014, %v3015
  %v3017 = vsub.f32 1.0, %v3016
  %v3018 = vmul.f32 %v3015, %v3017
  %v3019 = vadd.f32 %v3015, %v3018
  %vm3020 = vweird.f32 %v3014
  %vm3021 = vweird.f32 %v3015
  %vm3022 = vmor %vm3020, %vm3021
  %v3023 = vsel %vm3022, %v3015, %v3019
  %v3024 = vand.u32 2147483647, %v3014
  %vm3025 = vcmp.eq.f32.partialorder %v3024, 8.507059e+37
  %v3026 = vand.u32 %v3014, 2147483648
  %v3027 = vor.u32 1.1754944e-38, %v3026
  %v3028 = vsel %vm3025, %v3027, %v3023
  %v3029 = vmul.f32 1.0, %v3028
  %v3030 = vxor.u32 %v2969, 2147483648
  %v3031 = vmul.f32 %v3030, 1.442695
  %v3032 = vpow.pop %v3031
  %v3033 = vadd.f32 %v3032, 1.0
  %v3034 = vrcp.pop %v3033
  %v3035 = vmul.f32 %v3033, %v3034
  %v3036 = vsub.f32 1.0, %v3035
  %v3037 = vmul.f32 %v3034, %v3036
  %v3038 = vadd.f32 %v3034, %v3037
  %vm3039 = vweird.f32 %v3033
  %vm3040 = vweird.f32 %v3034
  %vm3041 = vmor %vm3039, %vm3040
  %v3042 = vsel %vm3041, %v3034, %v3038
  %v3043 = vand.u32 2147483647, %v3033
  %vm3044 = vcmp.eq.f32.partialorder %v3043, 8.507059e+37
  %v3045 = vand.u32 %v3033, 2147483648
  %v3046 = vor.u32 1.1754944e-38, %v3045
  %v3047 = vsel %vm3044, %v3046, %v3042
  %v3048 = vmul.f32 1.0, %v3047
  %v3049 = vtanh.pop %v2989
  %v3050 = vxor.u32 %v3009, 2147483648
  %v3051 = vmul.f32 %v3050, 1.442695
  %v3052 = vpow.pop %v3051
  %v3053 = vadd.f32 %v3052, 1.0
  %v3054 = vrcp.pop %v3053
  %v3055 = vmul.f32 %v3053, %v3054
  %v3056 = vsub.f32 1.0, %v3055
  %v3057 = vmul.f32 %v3054, %v3056
  %v3058 = vadd.f32 %v3054, %v3057
  %vm3059 = vweird.f32 %v3053
  %vm3060 = vweird.f32 %v3054
  %vm3061 = vmor %vm3059, %vm3060
  %v3062 = vsel %vm3061, %v3054, %v3058
  %v3063 = vand.u32 2147483647, %v3053
  %vm3064 = vcmp.eq.f32.partialorder %v3063, 8.507059e+37
  %v3065 = vand.u32 %v3053, 2147483648
  %v3066 = vor.u32 1.1754944e-38, %v3065
  %v3067 = vsel %vm3064, %v3066, %v3062
  %v3068 = vmul.f32 1.0, %v3067
  %v3069 = vmul.f32 %v3048, %v2868
  %v3070 = vmul.f32 %v3029, %v3049
  %v3071 = vadd.f32 %v3069, %v3070
  %v3072 = vtanh.pop %v3071
  %v3073 = vmul.f32 %v3068, %v3072
  %3074 = vst.msk [vmem:[#allocation3 + $0x1a] sm:$0x3] %vm470, %v3073
  %v3075 = vld [vmem:[%s3] sm:$0xff]
  %v3076 = vld [vmem:[%s3 + $0x8] sm:$0xff]
  %v3077 = vld [vmem:[%s3 + $0x10] sm:$0xff]
  %v3078 = vld [vmem:[%s3 + $0x18] sm:$0xff]
  %v3079 = vld [vmem:[%s3 + $0x20] sm:$0xff]
  %v3080 = vld [vmem:[%s3 + $0x28] sm:$0xff]
  %v3081 = vld [vmem:[%s3 + $0x30] sm:$0xff]
  %v3082 = vld [vmem:[%s3 + $0x38] sm:$0xff]
  %v3083 = vld [vmem:[%s3 + $0x40] sm:$0xff]
  %v3084 = vld [vmem:[%s3 + $0x48] sm:$0xff]
  %v3085 = vld [vmem:[%s3 + $0x50] sm:$0xff]
  %v3086 = vld [vmem:[%s3 + $0x58] sm:$0xff]
  %v3087 = vld [vmem:[%s3 + $0x60] sm:$0xff]
  %v3088 = vld [vmem:[%s3 + $0x68] sm:$0xff]
  %v3089 = vld [vmem:[%s3 + $0x70] sm:$0xff]
  %v3090 = vld [vmem:[%s3 + $0x78] sm:$0xff]
  %v3091 = vld [vmem:[%s3 + $0x80] sm:$0xff]
  %v3092 = vld [vmem:[%s3 + $0x88] sm:$0xff]
  %v3093 = vld [vmem:[%s3 + $0x90] sm:$0xff]
  %v3094 = vld [vmem:[%s3 + $0x98] sm:$0xff]
  %v3095 = vld [vmem:[%s3 + $0xa0] sm:$0xff]
  %v3096 = vld [vmem:[%s3 + $0xa8] sm:$0xff]
  %v3097 = vld [vmem:[%s3 + $0xb0] sm:$0xff]
  %v3098 = vld [vmem:[%s3 + $0xb8] sm:$0xff]
  %v3099 = vld [vmem:[%s3 + $0xc0] sm:$0x3]
  %v3100 = vld [vmem:[%s3 + $0xc8] sm:$0x3]
  %v3101 = vld [vmem:[%s3 + $0xd0] sm:$0x3]
  %v3102 = vld [vmem:[%s3 + $0xd8] sm:$0x3]
  %v3103 = vld [vmem:[#allocation2 + $0x60] sm:$0x30]
  %v3104 = vld [vmem:[#allocation2 + $0x68] sm:$0x30]
  %v3105 = vld [vmem:[#allocation2 + $0x70] sm:$0x30]
  %v3106 = vld [vmem:[#allocation2 + $0x78] sm:$0x30]
  %v3111 = vrot.slane %v3103, 4
  %v3112 = vrot.slane %v3104, 4
  %v3113 = vrot.slane %v3105, 4
  %v3114 = vrot.slane %v3106, 4
  %v3120 = vsel %vm310, %v3073, 0
  %v3123 = vsel %vm314, %v3099, 0
  %v3126 = vsel %vm314, %v3100, 0
  %v3129 = vsel %vm314, %v3101, 0
  %v3132 = vsel %vm314, %v3102, 0
  %3134 = vmatpush.msra.mxu0 0.0
  %3135 = vmatpush.msra.mxu0 0.0
  %3136 = vmatpush.msra.mxu0 0.0
  %3137 = vmatpush.msra.mxu0 0.0
  %3138 = vmatpush.msra.mxu0 0.0
  %3139 = vmatpush.msra.mxu0 0.0
  %3140 = vmatpush.msra.mxu0 0.0
  %3141 = vmatpush.msra.mxu0 0.0
  %3142 = vmatpush.msra.mxu0 0.0
  %3143 = vmatpush.msra.mxu0 %v3123
  %3144 = vmatpush.msra.mxu0 %v3095
  %3145 = vmatpush.msra.mxu0 %v3091
  %3146 = vmatpush.msra.mxu0 %v3087
  %3147 = vmatpush.msra.mxu0 %v3083
  %3148 = vmatpush.msra.mxu0 %v3079
  %3149 = vmatpush.msra.mxu0 %v3075
  %3150 = vmatmul.f32.gmra.mxu0 %v3120
  %v3151 = vpop.f32.mrf.mxu0
  %v3152 = vadd.f32 %v3111, %v3151
  %3153 = vdwg.mxu0
  %3154 = vmatpush.msra.mxu0 0.0
  %3155 = vmatpush.msra.mxu0 0.0
  %3156 = vmatpush.msra.mxu0 0.0
  %3157 = vmatpush.msra.mxu0 0.0
  %3158 = vmatpush.msra.mxu0 0.0
  %3159 = vmatpush.msra.mxu0 0.0
  %3160 = vmatpush.msra.mxu0 0.0
  %3161 = vmatpush.msra.mxu0 0.0
  %3162 = vmatpush.msra.mxu0 0.0
  %3163 = vmatpush.msra.mxu0 %v3126
  %3164 = vmatpush.msra.mxu0 %v3096
  %3165 = vmatpush.msra.mxu0 %v3092
  %3166 = vmatpush.msra.mxu0 %v3088
  %3167 = vmatpush.msra.mxu0 %v3084
  %3168 = vmatpush.msra.mxu0 %v3080
  %3169 = vmatpush.msra.mxu0 %v3076
  %3170 = vmatmul.f32.gmra.mxu0 %v3120
  %v3171 = vpop.f32.mrf.mxu0
  %v3172 = vadd.f32 %v3112, %v3171
  %3173 = vdwg.mxu0
  %3174 = vmatpush.msra.mxu0 0.0
  %3175 = vmatpush.msra.mxu0 0.0
  %3176 = vmatpush.msra.mxu0 0.0
  %3177 = vmatpush.msra.mxu0 0.0
  %3178 = vmatpush.msra.mxu0 0.0
  %3179 = vmatpush.msra.mxu0 0.0
  %3180 = vmatpush.msra.mxu0 0.0
  %3181 = vmatpush.msra.mxu0 0.0
  %3182 = vmatpush.msra.mxu0 0.0
  %3183 = vmatpush.msra.mxu0 %v3129
  %3184 = vmatpush.msra.mxu0 %v3097
  %3185 = vmatpush.msra.mxu0 %v3093
  %3186 = vmatpush.msra.mxu0 %v3089
  %3187 = vmatpush.msra.mxu0 %v3085
  %3188 = vmatpush.msra.mxu0 %v3081
  %3189 = vmatpush.msra.mxu0 %v3077
  %3190 = vmatmul.f32.gmra.mxu0 %v3120
  %v3191 = vpop.f32.mrf.mxu0
  %v3192 = vadd.f32 %v3113, %v3191
  %3193 = vdwg.mxu0
  %3194 = vmatpush.msra.mxu0 0.0
  %3195 = vmatpush.msra.mxu0 0.0
  %3196 = vmatpush.msra.mxu0 0.0
  %3197 = vmatpush.msra.mxu0 0.0
  %3198 = vmatpush.msra.mxu0 0.0
  %3199 = vmatpush.msra.mxu0 0.0
  %3200 = vmatpush.msra.mxu0 0.0
  %3201 = vmatpush.msra.mxu0 0.0
  %3202 = vmatpush.msra.mxu0 0.0
  %3203 = vmatpush.msra.mxu0 %v3132
  %3204 = vmatpush.msra.mxu0 %v3098
  %3205 = vmatpush.msra.mxu0 %v3094
  %3206 = vmatpush.msra.mxu0 %v3090
  %3207 = vmatpush.msra.mxu0 %v3086
  %3208 = vmatpush.msra.mxu0 %v3082
  %3209 = vmatpush.msra.mxu0 %v3078
  %3210 = vmatmul.f32.gmra.mxu0 %v3120
  %v3211 = vpop.f32.mrf.mxu0
  %v3212 = vadd.f32 %v3114, %v3211
  %3213 = vdwg.mxu0
  %v3214 = vxor.u32 %v3152, 2147483648
  %v3215 = vmul.f32 %v3214, 1.442695
  %v3216 = vpow.pop %v3215
  %v3217 = vadd.f32 %v3216, 1.0
  %v3218 = vrcp.pop %v3217
  %v3219 = vmul.f32 %v3217, %v3218
  %v3220 = vsub.f32 1.0, %v3219
  %v3221 = vmul.f32 %v3218, %v3220
  %v3222 = vadd.f32 %v3218, %v3221
  %vm3223 = vweird.f32 %v3217
  %vm3224 = vweird.f32 %v3218
  %vm3225 = vmor %vm3223, %vm3224
  %v3226 = vsel %vm3225, %v3218, %v3222
  %v3227 = vand.u32 2147483647, %v3217
  %vm3228 = vcmp.eq.f32.partialorder %v3227, 8.507059e+37
  %v3229 = vand.u32 %v3217, 2147483648
  %v3230 = vor.u32 1.1754944e-38, %v3229
  %v3231 = vsel %vm3228, %v3230, %v3226
  %v3232 = vmul.f32 1.0, %v3231
  %v3233 = vxor.u32 %v3172, 2147483648
  %v3234 = vmul.f32 %v3233, 1.442695
  %v3235 = vpow.pop %v3234
  %v3236 = vadd.f32 %v3235, 1.0
  %v3237 = vrcp.pop %v3236
  %v3238 = vmul.f32 %v3236, %v3237
  %v3239 = vsub.f32 1.0, %v3238
  %v3240 = vmul.f32 %v3237, %v3239
  %v3241 = vadd.f32 %v3237, %v3240
  %vm3242 = vweird.f32 %v3236
  %vm3243 = vweird.f32 %v3237
  %vm3244 = vmor %vm3242, %vm3243
  %v3245 = vsel %vm3244, %v3237, %v3241
  %v3246 = vand.u32 2147483647, %v3236
  %vm3247 = vcmp.eq.f32.partialorder %v3246, 8.507059e+37
  %v3248 = vand.u32 %v3236, 2147483648
  %v3249 = vor.u32 1.1754944e-38, %v3248
  %v3250 = vsel %vm3247, %v3249, %v3245
  %v3251 = vmul.f32 1.0, %v3250
  %v3252 = vtanh.pop %v3192
  %v3253 = vxor.u32 %v3212, 2147483648
  %v3254 = vmul.f32 %v3253, 1.442695
  %v3255 = vpow.pop %v3254
  %v3256 = vadd.f32 %v3255, 1.0
  %v3257 = vrcp.pop %v3256
  %v3258 = vmul.f32 %v3256, %v3257
  %v3259 = vsub.f32 1.0, %v3258
  %v3260 = vmul.f32 %v3257, %v3259
  %v3261 = vadd.f32 %v3257, %v3260
  %vm3262 = vweird.f32 %v3256
  %vm3263 = vweird.f32 %v3257
  %vm3264 = vmor %vm3262, %vm3263
  %v3265 = vsel %vm3264, %v3257, %v3261
  %v3266 = vand.u32 2147483647, %v3256
  %vm3267 = vcmp.eq.f32.partialorder %v3266, 8.507059e+37
  %v3268 = vand.u32 %v3256, 2147483648
  %v3269 = vor.u32 1.1754944e-38, %v3268
  %v3270 = vsel %vm3267, %v3269, %v3265
  %v3271 = vmul.f32 1.0, %v3270
  %v3272 = vmul.f32 %v3251, %v3071
  %v3273 = vmul.f32 %v3232, %v3252
  %v3274 = vadd.f32 %v3272, %v3273
  %v3275 = vtanh.pop %v3274
  %v3276 = vmul.f32 %v3271, %v3275
  %3277 = vst.msk [vmem:[#allocation3 + $0x1c] sm:$0x3] %vm470, %v3276
  %v3278 = vld [vmem:[%s3] sm:$0xff]
  %v3279 = vld [vmem:[%s3 + $0x8] sm:$0xff]
  %v3280 = vld [vmem:[%s3 + $0x10] sm:$0xff]
  %v3281 = vld [vmem:[%s3 + $0x18] sm:$0xff]
  %v3282 = vld [vmem:[%s3 + $0x20] sm:$0xff]
  %v3283 = vld [vmem:[%s3 + $0x28] sm:$0xff]
  %v3284 = vld [vmem:[%s3 + $0x30] sm:$0xff]
  %v3285 = vld [vmem:[%s3 + $0x38] sm:$0xff]
  %v3286 = vld [vmem:[%s3 + $0x40] sm:$0xff]
  %v3287 = vld [vmem:[%s3 + $0x48] sm:$0xff]
  %v3288 = vld [vmem:[%s3 + $0x50] sm:$0xff]
  %v3289 = vld [vmem:[%s3 + $0x58] sm:$0xff]
  %v3290 = vld [vmem:[%s3 + $0x60] sm:$0xff]
  %v3291 = vld [vmem:[%s3 + $0x68] sm:$0xff]
  %v3292 = vld [vmem:[%s3 + $0x70] sm:$0xff]
  %v3293 = vld [vmem:[%s3 + $0x78] sm:$0xff]
  %v3294 = vld [vmem:[%s3 + $0x80] sm:$0xff]
  %v3295 = vld [vmem:[%s3 + $0x88] sm:$0xff]
  %v3296 = vld [vmem:[%s3 + $0x90] sm:$0xff]
  %v3297 = vld [vmem:[%s3 + $0x98] sm:$0xff]
  %v3298 = vld [vmem:[%s3 + $0xa0] sm:$0xff]
  %v3299 = vld [vmem:[%s3 + $0xa8] sm:$0xff]
  %v3300 = vld [vmem:[%s3 + $0xb0] sm:$0xff]
  %v3301 = vld [vmem:[%s3 + $0xb8] sm:$0xff]
  %v3302 = vld [vmem:[%s3 + $0xc0] sm:$0x3]
  %v3303 = vld [vmem:[%s3 + $0xc8] sm:$0x3]
  %v3304 = vld [vmem:[%s3 + $0xd0] sm:$0x3]
  %v3305 = vld [vmem:[%s3 + $0xd8] sm:$0x3]
  %v3306 = vld [vmem:[#allocation2 + $0x60] sm:$0xc0]
  %v3307 = vld [vmem:[#allocation2 + $0x68] sm:$0xc0]
  %v3308 = vld [vmem:[#allocation2 + $0x70] sm:$0xc0]
  %v3309 = vld [vmem:[#allocation2 + $0x78] sm:$0xc0]
  %v3314 = vrot.slane %v3306, 6
  %v3315 = vrot.slane %v3307, 6
  %v3316 = vrot.slane %v3308, 6
  %v3317 = vrot.slane %v3309, 6
  %v3323 = vsel %vm310, %v3276, 0
  %v3326 = vsel %vm314, %v3302, 0
  %v3329 = vsel %vm314, %v3303, 0
  %v3332 = vsel %vm314, %v3304, 0
  %v3335 = vsel %vm314, %v3305, 0
  %3337 = vmatpush.msra.mxu0 0.0
  %3338 = vmatpush.msra.mxu0 0.0
  %3339 = vmatpush.msra.mxu0 0.0
  %3340 = vmatpush.msra.mxu0 0.0
  %3341 = vmatpush.msra.mxu0 0.0
  %3342 = vmatpush.msra.mxu0 0.0
  %3343 = vmatpush.msra.mxu0 0.0
  %3344 = vmatpush.msra.mxu0 0.0
  %3345 = vmatpush.msra.mxu0 0.0
  %3346 = vmatpush.msra.mxu0 %v3326
  %3347 = vmatpush.msra.mxu0 %v3298
  %3348 = vmatpush.msra.mxu0 %v3294
  %3349 = vmatpush.msra.mxu0 %v3290
  %3350 = vmatpush.msra.mxu0 %v3286
  %3351 = vmatpush.msra.mxu0 %v3282
  %3352 = vmatpush.msra.mxu0 %v3278
  %3353 = vmatmul.f32.gmra.mxu0 %v3323
  %v3354 = vpop.f32.mrf.mxu0
  %v3355 = vadd.f32 %v3314, %v3354
  %3356 = vdwg.mxu0
  %3357 = vmatpush.msra.mxu0 0.0
  %3358 = vmatpush.msra.mxu0 0.0
  %3359 = vmatpush.msra.mxu0 0.0
  %3360 = vmatpush.msra.mxu0 0.0
  %3361 = vmatpush.msra.mxu0 0.0
  %3362 = vmatpush.msra.mxu0 0.0
  %3363 = vmatpush.msra.mxu0 0.0
  %3364 = vmatpush.msra.mxu0 0.0
  %3365 = vmatpush.msra.mxu0 0.0
  %3366 = vmatpush.msra.mxu0 %v3329
  %3367 = vmatpush.msra.mxu0 %v3299
  %3368 = vmatpush.msra.mxu0 %v3295
  %3369 = vmatpush.msra.mxu0 %v3291
  %3370 = vmatpush.msra.mxu0 %v3287
  %3371 = vmatpush.msra.mxu0 %v3283
  %3372 = vmatpush.msra.mxu0 %v3279
  %3373 = vmatmul.f32.gmra.mxu0 %v3323
  %v3374 = vpop.f32.mrf.mxu0
  %v3375 = vadd.f32 %v3315, %v3374
  %3376 = vdwg.mxu0
  %3377 = vmatpush.msra.mxu0 0.0
  %3378 = vmatpush.msra.mxu0 0.0
  %3379 = vmatpush.msra.mxu0 0.0
  %3380 = vmatpush.msra.mxu0 0.0
  %3381 = vmatpush.msra.mxu0 0.0
  %3382 = vmatpush.msra.mxu0 0.0
  %3383 = vmatpush.msra.mxu0 0.0
  %3384 = vmatpush.msra.mxu0 0.0
  %3385 = vmatpush.msra.mxu0 0.0
  %3386 = vmatpush.msra.mxu0 %v3332
  %3387 = vmatpush.msra.mxu0 %v3300
  %3388 = vmatpush.msra.mxu0 %v3296
  %3389 = vmatpush.msra.mxu0 %v3292
  %3390 = vmatpush.msra.mxu0 %v3288
  %3391 = vmatpush.msra.mxu0 %v3284
  %3392 = vmatpush.msra.mxu0 %v3280
  %3393 = vmatmul.f32.gmra.mxu0 %v3323
  %v3394 = vpop.f32.mrf.mxu0
  %v3395 = vadd.f32 %v3316, %v3394
  %3396 = vdwg.mxu0
  %3397 = vmatpush.msra.mxu0 0.0
  %3398 = vmatpush.msra.mxu0 0.0
  %3399 = vmatpush.msra.mxu0 0.0
  %3400 = vmatpush.msra.mxu0 0.0
  %3401 = vmatpush.msra.mxu0 0.0
  %3402 = vmatpush.msra.mxu0 0.0
  %3403 = vmatpush.msra.mxu0 0.0
  %3404 = vmatpush.msra.mxu0 0.0
  %3405 = vmatpush.msra.mxu0 0.0
  %3406 = vmatpush.msra.mxu0 %v3335
  %3407 = vmatpush.msra.mxu0 %v3301
  %3408 = vmatpush.msra.mxu0 %v3297
  %3409 = vmatpush.msra.mxu0 %v3293
  %3410 = vmatpush.msra.mxu0 %v3289
  %3411 = vmatpush.msra.mxu0 %v3285
  %3412 = vmatpush.msra.mxu0 %v3281
  %3413 = vmatmul.f32.gmra.mxu0 %v3323
  %v3414 = vpop.f32.mrf.mxu0
  %v3415 = vadd.f32 %v3317, %v3414
  %3416 = vdwg.mxu0
  %v3417 = vxor.u32 %v3355, 2147483648
  %v3418 = vmul.f32 %v3417, 1.442695
  %v3419 = vpow.pop %v3418
  %v3420 = vadd.f32 %v3419, 1.0
  %v3421 = vrcp.pop %v3420
  %v3422 = vmul.f32 %v3420, %v3421
  %v3423 = vsub.f32 1.0, %v3422
  %v3424 = vmul.f32 %v3421, %v3423
  %v3425 = vadd.f32 %v3421, %v3424
  %vm3426 = vweird.f32 %v3420
  %vm3427 = vweird.f32 %v3421
  %vm3428 = vmor %vm3426, %vm3427
  %v3429 = vsel %vm3428, %v3421, %v3425
  %v3430 = vand.u32 2147483647, %v3420
  %vm3431 = vcmp.eq.f32.partialorder %v3430, 8.507059e+37
  %v3432 = vand.u32 %v3420, 2147483648
  %v3433 = vor.u32 1.1754944e-38, %v3432
  %v3434 = vsel %vm3431, %v3433, %v3429
  %v3435 = vmul.f32 1.0, %v3434
  %v3436 = vxor.u32 %v3375, 2147483648
  %v3437 = vmul.f32 %v3436, 1.442695
  %v3438 = vpow.pop %v3437
  %v3439 = vadd.f32 %v3438, 1.0
  %v3440 = vrcp.pop %v3439
  %v3441 = vmul.f32 %v3439, %v3440
  %v3442 = vsub.f32 1.0, %v3441
  %v3443 = vmul.f32 %v3440, %v3442
  %v3444 = vadd.f32 %v3440, %v3443
  %vm3445 = vweird.f32 %v3439
  %vm3446 = vweird.f32 %v3440
  %vm3447 = vmor %vm3445, %vm3446
  %v3448 = vsel %vm3447, %v3440, %v3444
  %v3449 = vand.u32 2147483647, %v3439
  %vm3450 = vcmp.eq.f32.partialorder %v3449, 8.507059e+37
  %v3451 = vand.u32 %v3439, 2147483648
  %v3452 = vor.u32 1.1754944e-38, %v3451
  %v3453 = vsel %vm3450, %v3452, %v3448
  %v3454 = vmul.f32 1.0, %v3453
  %v3455 = vtanh.pop %v3395
  %v3456 = vxor.u32 %v3415, 2147483648
  %v3457 = vmul.f32 %v3456, 1.442695
  %v3458 = vpow.pop %v3457
  %v3459 = vadd.f32 %v3458, 1.0
  %v3460 = vrcp.pop %v3459
  %v3461 = vmul.f32 %v3459, %v3460
  %v3462 = vsub.f32 1.0, %v3461
  %v3463 = vmul.f32 %v3460, %v3462
  %v3464 = vadd.f32 %v3460, %v3463
  %vm3465 = vweird.f32 %v3459
  %vm3466 = vweird.f32 %v3460
  %vm3467 = vmor %vm3465, %vm3466
  %v3468 = vsel %vm3467, %v3460, %v3464
  %v3469 = vand.u32 2147483647, %v3459
  %vm3470 = vcmp.eq.f32.partialorder %v3469, 8.507059e+37
  %v3471 = vand.u32 %v3459, 2147483648
  %v3472 = vor.u32 1.1754944e-38, %v3471
  %v3473 = vsel %vm3470, %v3472, %v3468
  %v3474 = vmul.f32 1.0, %v3473
  %v3475 = vmul.f32 %v3454, %v3274
  %v3476 = vmul.f32 %v3435, %v3455
  %v3477 = vadd.f32 %v3475, %v3476
  %v3478 = vtanh.pop %v3477
  %v3479 = vmul.f32 %v3474, %v3478
  %3480 = vst.msk [vmem:[#allocation3 + $0x1e] sm:$0x3] %vm470, %v3479
  %v3481 = vld [vmem:[%s3] sm:$0xff]
  %v3482 = vld [vmem:[%s3 + $0x8] sm:$0xff]
  %v3483 = vld [vmem:[%s3 + $0x10] sm:$0xff]
  %v3484 = vld [vmem:[%s3 + $0x18] sm:$0xff]
  %v3485 = vld [vmem:[%s3 + $0x20] sm:$0xff]
  %v3486 = vld [vmem:[%s3 + $0x28] sm:$0xff]
  %v3487 = vld [vmem:[%s3 + $0x30] sm:$0xff]
  %v3488 = vld [vmem:[%s3 + $0x38] sm:$0xff]
  %v3489 = vld [vmem:[%s3 + $0x40] sm:$0xff]
  %v3490 = vld [vmem:[%s3 + $0x48] sm:$0xff]
  %v3491 = vld [vmem:[%s3 + $0x50] sm:$0xff]
  %v3492 = vld [vmem:[%s3 + $0x58] sm:$0xff]
  %v3493 = vld [vmem:[%s3 + $0x60] sm:$0xff]
  %v3494 = vld [vmem:[%s3 + $0x68] sm:$0xff]
  %v3495 = vld [vmem:[%s3 + $0x70] sm:$0xff]
  %v3496 = vld [vmem:[%s3 + $0x78] sm:$0xff]
  %v3497 = vld [vmem:[%s3 + $0x80] sm:$0xff]
  %v3498 = vld [vmem:[%s3 + $0x88] sm:$0xff]
  %v3499 = vld [vmem:[%s3 + $0x90] sm:$0xff]
  %v3500 = vld [vmem:[%s3 + $0x98] sm:$0xff]
  %v3501 = vld [vmem:[%s3 + $0xa0] sm:$0xff]
  %v3502 = vld [vmem:[%s3 + $0xa8] sm:$0xff]
  %v3503 = vld [vmem:[%s3 + $0xb0] sm:$0xff]
  %v3504 = vld [vmem:[%s3 + $0xb8] sm:$0xff]
  %v3505 = vld [vmem:[%s3 + $0xc0] sm:$0x3]
  %v3506 = vld [vmem:[%s3 + $0xc8] sm:$0x3]
  %v3507 = vld [vmem:[%s3 + $0xd0] sm:$0x3]
  %v3508 = vld [vmem:[%s3 + $0xd8] sm:$0x3]
  %v3509 = vld [vmem:[#allocation2 + $0x80] sm:$0x3]
  %v3510 = vld [vmem:[#allocation2 + $0x88] sm:$0x3]
  %v3511 = vld [vmem:[#allocation2 + $0x90] sm:$0x3]
  %v3512 = vld [vmem:[#allocation2 + $0x98] sm:$0x3]
  %v3514 = vsel %vm310, %v3479, 0
  %v3517 = vsel %vm314, %v3505, 0
  %v3520 = vsel %vm314, %v3506, 0
  %v3523 = vsel %vm314, %v3507, 0
  %v3526 = vsel %vm314, %v3508, 0
  %3528 = vmatpush.msra.mxu0 0.0
  %3529 = vmatpush.msra.mxu0 0.0
  %3530 = vmatpush.msra.mxu0 0.0
  %3531 = vmatpush.msra.mxu0 0.0
  %3532 = vmatpush.msra.mxu0 0.0
  %3533 = vmatpush.msra.mxu0 0.0
  %3534 = vmatpush.msra.mxu0 0.0
  %3535 = vmatpush.msra.mxu0 0.0
  %3536 = vmatpush.msra.mxu0 0.0
  %3537 = vmatpush.msra.mxu0 %v3517
  %3538 = vmatpush.msra.mxu0 %v3501
  %3539 = vmatpush.msra.mxu0 %v3497
  %3540 = vmatpush.msra.mxu0 %v3493
  %3541 = vmatpush.msra.mxu0 %v3489
  %3542 = vmatpush.msra.mxu0 %v3485
  %3543 = vmatpush.msra.mxu0 %v3481
  %3544 = vmatmul.f32.gmra.mxu0 %v3514
  %v3545 = vpop.f32.mrf.mxu0
  %v3546 = vadd.f32 %v3509, %v3545
  %3547 = vdwg.mxu0
  %3548 = vmatpush.msra.mxu0 0.0
  %3549 = vmatpush.msra.mxu0 0.0
  %3550 = vmatpush.msra.mxu0 0.0
  %3551 = vmatpush.msra.mxu0 0.0
  %3552 = vmatpush.msra.mxu0 0.0
  %3553 = vmatpush.msra.mxu0 0.0
  %3554 = vmatpush.msra.mxu0 0.0
  %3555 = vmatpush.msra.mxu0 0.0
  %3556 = vmatpush.msra.mxu0 0.0
  %3557 = vmatpush.msra.mxu0 %v3520
  %3558 = vmatpush.msra.mxu0 %v3502
  %3559 = vmatpush.msra.mxu0 %v3498
  %3560 = vmatpush.msra.mxu0 %v3494
  %3561 = vmatpush.msra.mxu0 %v3490
  %3562 = vmatpush.msra.mxu0 %v3486
  %3563 = vmatpush.msra.mxu0 %v3482
  %3564 = vmatmul.f32.gmra.mxu0 %v3514
  %v3565 = vpop.f32.mrf.mxu0
  %v3566 = vadd.f32 %v3510, %v3565
  %3567 = vdwg.mxu0
  %3568 = vmatpush.msra.mxu0 0.0
  %3569 = vmatpush.msra.mxu0 0.0
  %3570 = vmatpush.msra.mxu0 0.0
  %3571 = vmatpush.msra.mxu0 0.0
  %3572 = vmatpush.msra.mxu0 0.0
  %3573 = vmatpush.msra.mxu0 0.0
  %3574 = vmatpush.msra.mxu0 0.0
  %3575 = vmatpush.msra.mxu0 0.0
  %3576 = vmatpush.msra.mxu0 0.0
  %3577 = vmatpush.msra.mxu0 %v3523
  %3578 = vmatpush.msra.mxu0 %v3503
  %3579 = vmatpush.msra.mxu0 %v3499
  %3580 = vmatpush.msra.mxu0 %v3495
  %3581 = vmatpush.msra.mxu0 %v3491
  %3582 = vmatpush.msra.mxu0 %v3487
  %3583 = vmatpush.msra.mxu0 %v3483
  %3584 = vmatmul.f32.gmra.mxu0 %v3514
  %v3585 = vpop.f32.mrf.mxu0
  %v3586 = vadd.f32 %v3511, %v3585
  %3587 = vdwg.mxu0
  %3588 = vmatpush.msra.mxu0 0.0
  %3589 = vmatpush.msra.mxu0 0.0
  %3590 = vmatpush.msra.mxu0 0.0
  %3591 = vmatpush.msra.mxu0 0.0
  %3592 = vmatpush.msra.mxu0 0.0
  %3593 = vmatpush.msra.mxu0 0.0
  %3594 = vmatpush.msra.mxu0 0.0
  %3595 = vmatpush.msra.mxu0 0.0
  %3596 = vmatpush.msra.mxu0 0.0
  %3597 = vmatpush.msra.mxu0 %v3526
  %3598 = vmatpush.msra.mxu0 %v3504
  %3599 = vmatpush.msra.mxu0 %v3500
  %3600 = vmatpush.msra.mxu0 %v3496
  %3601 = vmatpush.msra.mxu0 %v3492
  %3602 = vmatpush.msra.mxu0 %v3488
  %3603 = vmatpush.msra.mxu0 %v3484
  %3604 = vmatmul.f32.gmra.mxu0 %v3514
  %v3605 = vpop.f32.mrf.mxu0
  %v3606 = vadd.f32 %v3512, %v3605
  %3607 = vdwg.mxu0
  %v3608 = vxor.u32 %v3546, 2147483648
  %v3609 = vmul.f32 %v3608, 1.442695
  %v3610 = vpow.pop %v3609
  %v3611 = vadd.f32 %v3610, 1.0
  %v3612 = vrcp.pop %v3611
  %v3613 = vmul.f32 %v3611, %v3612
  %v3614 = vsub.f32 1.0, %v3613
  %v3615 = vmul.f32 %v3612, %v3614
  %v3616 = vadd.f32 %v3612, %v3615
  %vm3617 = vweird.f32 %v3611
  %vm3618 = vweird.f32 %v3612
  %vm3619 = vmor %vm3617, %vm3618
  %v3620 = vsel %vm3619, %v3612, %v3616
  %v3621 = vand.u32 2147483647, %v3611
  %vm3622 = vcmp.eq.f32.partialorder %v3621, 8.507059e+37
  %v3623 = vand.u32 %v3611, 2147483648
  %v3624 = vor.u32 1.1754944e-38, %v3623
  %v3625 = vsel %vm3622, %v3624, %v3620
  %v3626 = vmul.f32 1.0, %v3625
  %v3627 = vxor.u32 %v3566, 2147483648
  %v3628 = vmul.f32 %v3627, 1.442695
  %v3629 = vpow.pop %v3628
  %v3630 = vadd.f32 %v3629, 1.0
  %v3631 = vrcp.pop %v3630
  %v3632 = vmul.f32 %v3630, %v3631
  %v3633 = vsub.f32 1.0, %v3632
  %v3634 = vmul.f32 %v3631, %v3633
  %v3635 = vadd.f32 %v3631, %v3634
  %vm3636 = vweird.f32 %v3630
  %vm3637 = vweird.f32 %v3631
  %vm3638 = vmor %vm3636, %vm3637
  %v3639 = vsel %vm3638, %v3631, %v3635
  %v3640 = vand.u32 2147483647, %v3630
  %vm3641 = vcmp.eq.f32.partialorder %v3640, 8.507059e+37
  %v3642 = vand.u32 %v3630, 2147483648
  %v3643 = vor.u32 1.1754944e-38, %v3642
  %v3644 = vsel %vm3641, %v3643, %v3639
  %v3645 = vmul.f32 1.0, %v3644
  %v3646 = vtanh.pop %v3586
  %v3647 = vxor.u32 %v3606, 2147483648
  %v3648 = vmul.f32 %v3647, 1.442695
  %v3649 = vpow.pop %v3648
  %v3650 = vadd.f32 %v3649, 1.0
  %v3651 = vrcp.pop %v3650
  %v3652 = vmul.f32 %v3650, %v3651
  %v3653 = vsub.f32 1.0, %v3652
  %v3654 = vmul.f32 %v3651, %v3653
  %v3655 = vadd.f32 %v3651, %v3654
  %vm3656 = vweird.f32 %v3650
  %vm3657 = vweird.f32 %v3651
  %vm3658 = vmor %vm3656, %vm3657
  %v3659 = vsel %vm3658, %v3651, %v3655
  %v3660 = vand.u32 2147483647, %v3650
  %vm3661 = vcmp.eq.f32.partialorder %v3660, 8.507059e+37
  %v3662 = vand.u32 %v3650, 2147483648
  %v3663 = vor.u32 1.1754944e-38, %v3662
  %v3664 = vsel %vm3661, %v3663, %v3659
  %v3665 = vmul.f32 1.0, %v3664
  %v3666 = vmul.f32 %v3645, %v3477
  %v3667 = vmul.f32 %v3626, %v3646
  %v3668 = vadd.f32 %v3666, %v3667
  %v3669 = vtanh.pop %v3668
  %v3670 = vmul.f32 %v3665, %v3669
  %3671 = vst.msk [vmem:[#allocation3 + $0x20] sm:$0x3] %vm470, %v3670
  %v3672 = vld [vmem:[%s3] sm:$0xff]
  %v3673 = vld [vmem:[%s3 + $0x8] sm:$0xff]
  %v3674 = vld [vmem:[%s3 + $0x10] sm:$0xff]
  %v3675 = vld [vmem:[%s3 + $0x18] sm:$0xff]
  %v3676 = vld [vmem:[%s3 + $0x20] sm:$0xff]
  %v3677 = vld [vmem:[%s3 + $0x28] sm:$0xff]
  %v3678 = vld [vmem:[%s3 + $0x30] sm:$0xff]
  %v3679 = vld [vmem:[%s3 + $0x38] sm:$0xff]
  %v3680 = vld [vmem:[%s3 + $0x40] sm:$0xff]
  %v3681 = vld [vmem:[%s3 + $0x48] sm:$0xff]
  %v3682 = vld [vmem:[%s3 + $0x50] sm:$0xff]
  %v3683 = vld [vmem:[%s3 + $0x58] sm:$0xff]
  %v3684 = vld [vmem:[%s3 + $0x60] sm:$0xff]
  %v3685 = vld [vmem:[%s3 + $0x68] sm:$0xff]
  %v3686 = vld [vmem:[%s3 + $0x70] sm:$0xff]
  %v3687 = vld [vmem:[%s3 + $0x78] sm:$0xff]
  %v3688 = vld [vmem:[%s3 + $0x80] sm:$0xff]
  %v3689 = vld [vmem:[%s3 + $0x88] sm:$0xff]
  %v3690 = vld [vmem:[%s3 + $0x90] sm:$0xff]
  %v3691 = vld [vmem:[%s3 + $0x98] sm:$0xff]
  %v3692 = vld [vmem:[%s3 + $0xa0] sm:$0xff]
  %v3693 = vld [vmem:[%s3 + $0xa8] sm:$0xff]
  %v3694 = vld [vmem:[%s3 + $0xb0] sm:$0xff]
  %v3695 = vld [vmem:[%s3 + $0xb8] sm:$0xff]
  %v3696 = vld [vmem:[%s3 + $0xc0] sm:$0x3]
  %v3697 = vld [vmem:[%s3 + $0xc8] sm:$0x3]
  %v3698 = vld [vmem:[%s3 + $0xd0] sm:$0x3]
  %v3699 = vld [vmem:[%s3 + $0xd8] sm:$0x3]
  %v3700 = vld [vmem:[#allocation2 + $0x80] sm:$0xc]
  %v3701 = vld [vmem:[#allocation2 + $0x88] sm:$0xc]
  %v3702 = vld [vmem:[#allocation2 + $0x90] sm:$0xc]
  %v3703 = vld [vmem:[#allocation2 + $0x98] sm:$0xc]
  %v3708 = vrot.slane %v3700, 2
  %v3709 = vrot.slane %v3701, 2
  %v3710 = vrot.slane %v3702, 2
  %v3711 = vrot.slane %v3703, 2
  %v3717 = vsel %vm310, %v3670, 0
  %v3720 = vsel %vm314, %v3696, 0
  %v3723 = vsel %vm314, %v3697, 0
  %v3726 = vsel %vm314, %v3698, 0
  %v3729 = vsel %vm314, %v3699, 0
  %3731 = vmatpush.msra.mxu0 0.0
  %3732 = vmatpush.msra.mxu0 0.0
  %3733 = vmatpush.msra.mxu0 0.0
  %3734 = vmatpush.msra.mxu0 0.0
  %3735 = vmatpush.msra.mxu0 0.0
  %3736 = vmatpush.msra.mxu0 0.0
  %3737 = vmatpush.msra.mxu0 0.0
  %3738 = vmatpush.msra.mxu0 0.0
  %3739 = vmatpush.msra.mxu0 0.0
  %3740 = vmatpush.msra.mxu0 %v3720
  %3741 = vmatpush.msra.mxu0 %v3692
  %3742 = vmatpush.msra.mxu0 %v3688
  %3743 = vmatpush.msra.mxu0 %v3684
  %3744 = vmatpush.msra.mxu0 %v3680
  %3745 = vmatpush.msra.mxu0 %v3676
  %3746 = vmatpush.msra.mxu0 %v3672
  %3747 = vmatmul.f32.gmra.mxu0 %v3717
  %v3748 = vpop.f32.mrf.mxu0
  %v3749 = vadd.f32 %v3708, %v3748
  %3750 = vdwg.mxu0
  %3751 = vmatpush.msra.mxu0 0.0
  %3752 = vmatpush.msra.mxu0 0.0
  %3753 = vmatpush.msra.mxu0 0.0
  %3754 = vmatpush.msra.mxu0 0.0
  %3755 = vmatpush.msra.mxu0 0.0
  %3756 = vmatpush.msra.mxu0 0.0
  %3757 = vmatpush.msra.mxu0 0.0
  %3758 = vmatpush.msra.mxu0 0.0
  %3759 = vmatpush.msra.mxu0 0.0
  %3760 = vmatpush.msra.mxu0 %v3723
  %3761 = vmatpush.msra.mxu0 %v3693
  %3762 = vmatpush.msra.mxu0 %v3689
  %3763 = vmatpush.msra.mxu0 %v3685
  %3764 = vmatpush.msra.mxu0 %v3681
  %3765 = vmatpush.msra.mxu0 %v3677
  %3766 = vmatpush.msra.mxu0 %v3673
  %3767 = vmatmul.f32.gmra.mxu0 %v3717
  %v3768 = vpop.f32.mrf.mxu0
  %v3769 = vadd.f32 %v3709, %v3768
  %3770 = vdwg.mxu0
  %3771 = vmatpush.msra.mxu0 0.0
  %3772 = vmatpush.msra.mxu0 0.0
  %3773 = vmatpush.msra.mxu0 0.0
  %3774 = vmatpush.msra.mxu0 0.0
  %3775 = vmatpush.msra.mxu0 0.0
  %3776 = vmatpush.msra.mxu0 0.0
  %3777 = vmatpush.msra.mxu0 0.0
  %3778 = vmatpush.msra.mxu0 0.0
  %3779 = vmatpush.msra.mxu0 0.0
  %3780 = vmatpush.msra.mxu0 %v3726
  %3781 = vmatpush.msra.mxu0 %v3694
  %3782 = vmatpush.msra.mxu0 %v3690
  %3783 = vmatpush.msra.mxu0 %v3686
  %3784 = vmatpush.msra.mxu0 %v3682
  %3785 = vmatpush.msra.mxu0 %v3678
  %3786 = vmatpush.msra.mxu0 %v3674
  %3787 = vmatmul.f32.gmra.mxu0 %v3717
  %v3788 = vpop.f32.mrf.mxu0
  %v3789 = vadd.f32 %v3710, %v3788
  %3790 = vdwg.mxu0
  %3791 = vmatpush.msra.mxu0 0.0
  %3792 = vmatpush.msra.mxu0 0.0
  %3793 = vmatpush.msra.mxu0 0.0
  %3794 = vmatpush.msra.mxu0 0.0
  %3795 = vmatpush.msra.mxu0 0.0
  %3796 = vmatpush.msra.mxu0 0.0
  %3797 = vmatpush.msra.mxu0 0.0
  %3798 = vmatpush.msra.mxu0 0.0
  %3799 = vmatpush.msra.mxu0 0.0
  %3800 = vmatpush.msra.mxu0 %v3729
  %3801 = vmatpush.msra.mxu0 %v3695
  %3802 = vmatpush.msra.mxu0 %v3691
  %3803 = vmatpush.msra.mxu0 %v3687
  %3804 = vmatpush.msra.mxu0 %v3683
  %3805 = vmatpush.msra.mxu0 %v3679
  %3806 = vmatpush.msra.mxu0 %v3675
  %3807 = vmatmul.f32.gmra.mxu0 %v3717
  %v3808 = vpop.f32.mrf.mxu0
  %v3809 = vadd.f32 %v3711, %v3808
  %3810 = vdwg.mxu0
  %v3811 = vxor.u32 %v3749, 2147483648
  %v3812 = vmul.f32 %v3811, 1.442695
  %v3813 = vpow.pop %v3812
  %v3814 = vadd.f32 %v3813, 1.0
  %v3815 = vrcp.pop %v3814
  %v3816 = vmul.f32 %v3814, %v3815
  %v3817 = vsub.f32 1.0, %v3816
  %v3818 = vmul.f32 %v3815, %v3817
  %v3819 = vadd.f32 %v3815, %v3818
  %vm3820 = vweird.f32 %v3814
  %vm3821 = vweird.f32 %v3815
  %vm3822 = vmor %vm3820, %vm3821
  %v3823 = vsel %vm3822, %v3815, %v3819
  %v3824 = vand.u32 2147483647, %v3814
  %vm3825 = vcmp.eq.f32.partialorder %v3824, 8.507059e+37
  %v3826 = vand.u32 %v3814, 2147483648
  %v3827 = vor.u32 1.1754944e-38, %v3826
  %v3828 = vsel %vm3825, %v3827, %v3823
  %v3829 = vmul.f32 1.0, %v3828
  %v3830 = vxor.u32 %v3769, 2147483648
  %v3831 = vmul.f32 %v3830, 1.442695
  %v3832 = vpow.pop %v3831
  %v3833 = vadd.f32 %v3832, 1.0
  %v3834 = vrcp.pop %v3833
  %v3835 = vmul.f32 %v3833, %v3834
  %v3836 = vsub.f32 1.0, %v3835
  %v3837 = vmul.f32 %v3834, %v3836
  %v3838 = vadd.f32 %v3834, %v3837
  %vm3839 = vweird.f32 %v3833
  %vm3840 = vweird.f32 %v3834
  %vm3841 = vmor %vm3839, %vm3840
  %v3842 = vsel %vm3841, %v3834, %v3838
  %v3843 = vand.u32 2147483647, %v3833
  %vm3844 = vcmp.eq.f32.partialorder %v3843, 8.507059e+37
  %v3845 = vand.u32 %v3833, 2147483648
  %v3846 = vor.u32 1.1754944e-38, %v3845
  %v3847 = vsel %vm3844, %v3846, %v3842
  %v3848 = vmul.f32 1.0, %v3847
  %v3849 = vtanh.pop %v3789
  %v3850 = vxor.u32 %v3809, 2147483648
  %v3851 = vmul.f32 %v3850, 1.442695
  %v3852 = vpow.pop %v3851
  %v3853 = vadd.f32 %v3852, 1.0
  %v3854 = vrcp.pop %v3853
  %v3855 = vmul.f32 %v3853, %v3854
  %v3856 = vsub.f32 1.0, %v3855
  %v3857 = vmul.f32 %v3854, %v3856
  %v3858 = vadd.f32 %v3854, %v3857
  %vm3859 = vweird.f32 %v3853
  %vm3860 = vweird.f32 %v3854
  %vm3861 = vmor %vm3859, %vm3860
  %v3862 = vsel %vm3861, %v3854, %v3858
  %v3863 = vand.u32 2147483647, %v3853
  %vm3864 = vcmp.eq.f32.partialorder %v3863, 8.507059e+37
  %v3865 = vand.u32 %v3853, 2147483648
  %v3866 = vor.u32 1.1754944e-38, %v3865
  %v3867 = vsel %vm3864, %v3866, %v3862
  %v3868 = vmul.f32 1.0, %v3867
  %v3869 = vmul.f32 %v3848, %v3668
  %v3870 = vmul.f32 %v3829, %v3849
  %v3871 = vadd.f32 %v3869, %v3870
  %v3872 = vtanh.pop %v3871
  %v3873 = vmul.f32 %v3868, %v3872
  %3874 = vst.msk [vmem:[#allocation3 + $0x22] sm:$0x3] %vm470, %v3873
  %v3875 = vld [vmem:[%s3] sm:$0xff]
  %v3876 = vld [vmem:[%s3 + $0x8] sm:$0xff]
  %v3877 = vld [vmem:[%s3 + $0x10] sm:$0xff]
  %v3878 = vld [vmem:[%s3 + $0x18] sm:$0xff]
  %v3879 = vld [vmem:[%s3 + $0x20] sm:$0xff]
  %v3880 = vld [vmem:[%s3 + $0x28] sm:$0xff]
  %v3881 = vld [vmem:[%s3 + $0x30] sm:$0xff]
  %v3882 = vld [vmem:[%s3 + $0x38] sm:$0xff]
  %v3883 = vld [vmem:[%s3 + $0x40] sm:$0xff]
  %v3884 = vld [vmem:[%s3 + $0x48] sm:$0xff]
  %v3885 = vld [vmem:[%s3 + $0x50] sm:$0xff]
  %v3886 = vld [vmem:[%s3 + $0x58] sm:$0xff]
  %v3887 = vld [vmem:[%s3 + $0x60] sm:$0xff]
  %v3888 = vld [vmem:[%s3 + $0x68] sm:$0xff]
  %v3889 = vld [vmem:[%s3 + $0x70] sm:$0xff]
  %v3890 = vld [vmem:[%s3 + $0x78] sm:$0xff]
  %v3891 = vld [vmem:[%s3 + $0x80] sm:$0xff]
  %v3892 = vld [vmem:[%s3 + $0x88] sm:$0xff]
  %v3893 = vld [vmem:[%s3 + $0x90] sm:$0xff]
  %v3894 = vld [vmem:[%s3 + $0x98] sm:$0xff]
  %v3895 = vld [vmem:[%s3 + $0xa0] sm:$0xff]
  %v3896 = vld [vmem:[%s3 + $0xa8] sm:$0xff]
  %v3897 = vld [vmem:[%s3 + $0xb0] sm:$0xff]
  %v3898 = vld [vmem:[%s3 + $0xb8] sm:$0xff]
  %v3899 = vld [vmem:[%s3 + $0xc0] sm:$0x3]
  %v3900 = vld [vmem:[%s3 + $0xc8] sm:$0x3]
  %v3901 = vld [vmem:[%s3 + $0xd0] sm:$0x3]
  %v3902 = vld [vmem:[%s3 + $0xd8] sm:$0x3]
  %v3903 = vld [vmem:[#allocation2 + $0x80] sm:$0x30]
  %v3904 = vld [vmem:[#allocation2 + $0x88] sm:$0x30]
  %v3905 = vld [vmem:[#allocation2 + $0x90] sm:$0x30]
  %v3906 = vld [vmem:[#allocation2 + $0x98] sm:$0x30]
  %v3911 = vrot.slane %v3903, 4
  %v3912 = vrot.slane %v3904, 4
  %v3913 = vrot.slane %v3905, 4
  %v3914 = vrot.slane %v3906, 4
  %v3920 = vsel %vm310, %v3873, 0
  %v3923 = vsel %vm314, %v3899, 0
  %v3926 = vsel %vm314, %v3900, 0
  %v3929 = vsel %vm314, %v3901, 0
  %v3932 = vsel %vm314, %v3902, 0
  %3934 = vmatpush.msra.mxu0 0.0
  %3935 = vmatpush.msra.mxu0 0.0
  %3936 = vmatpush.msra.mxu0 0.0
  %3937 = vmatpush.msra.mxu0 0.0
  %3938 = vmatpush.msra.mxu0 0.0
  %3939 = vmatpush.msra.mxu0 0.0
  %3940 = vmatpush.msra.mxu0 0.0
  %3941 = vmatpush.msra.mxu0 0.0
  %3942 = vmatpush.msra.mxu0 0.0
  %3943 = vmatpush.msra.mxu0 %v3923
  %3944 = vmatpush.msra.mxu0 %v3895
  %3945 = vmatpush.msra.mxu0 %v3891
  %3946 = vmatpush.msra.mxu0 %v3887
  %3947 = vmatpush.msra.mxu0 %v3883
  %3948 = vmatpush.msra.mxu0 %v3879
  %3949 = vmatpush.msra.mxu0 %v3875
  %3950 = vmatmul.f32.gmra.mxu0 %v3920
  %v3951 = vpop.f32.mrf.mxu0
  %v3952 = vadd.f32 %v3911, %v3951
  %3953 = vdwg.mxu0
  %3954 = vmatpush.msra.mxu0 0.0
  %3955 = vmatpush.msra.mxu0 0.0
  %3956 = vmatpush.msra.mxu0 0.0
  %3957 = vmatpush.msra.mxu0 0.0
  %3958 = vmatpush.msra.mxu0 0.0
  %3959 = vmatpush.msra.mxu0 0.0
  %3960 = vmatpush.msra.mxu0 0.0
  %3961 = vmatpush.msra.mxu0 0.0
  %3962 = vmatpush.msra.mxu0 0.0
  %3963 = vmatpush.msra.mxu0 %v3926
  %3964 = vmatpush.msra.mxu0 %v3896
  %3965 = vmatpush.msra.mxu0 %v3892
  %3966 = vmatpush.msra.mxu0 %v3888
  %3967 = vmatpush.msra.mxu0 %v3884
  %3968 = vmatpush.msra.mxu0 %v3880
  %3969 = vmatpush.msra.mxu0 %v3876
  %3970 = vmatmul.f32.gmra.mxu0 %v3920
  %v3971 = vpop.f32.mrf.mxu0
  %v3972 = vadd.f32 %v3912, %v3971
  %3973 = vdwg.mxu0
  %3974 = vmatpush.msra.mxu0 0.0
  %3975 = vmatpush.msra.mxu0 0.0
  %3976 = vmatpush.msra.mxu0 0.0
  %3977 = vmatpush.msra.mxu0 0.0
  %3978 = vmatpush.msra.mxu0 0.0
  %3979 = vmatpush.msra.mxu0 0.0
  %3980 = vmatpush.msra.mxu0 0.0
  %3981 = vmatpush.msra.mxu0 0.0
  %3982 = vmatpush.msra.mxu0 0.0
  %3983 = vmatpush.msra.mxu0 %v3929
  %3984 = vmatpush.msra.mxu0 %v3897
  %3985 = vmatpush.msra.mxu0 %v3893
  %3986 = vmatpush.msra.mxu0 %v3889
  %3987 = vmatpush.msra.mxu0 %v3885
  %3988 = vmatpush.msra.mxu0 %v3881
  %3989 = vmatpush.msra.mxu0 %v3877
  %3990 = vmatmul.f32.gmra.mxu0 %v3920
  %v3991 = vpop.f32.mrf.mxu0
  %v3992 = vadd.f32 %v3913, %v3991
  %3993 = vdwg.mxu0
  %3994 = vmatpush.msra.mxu0 0.0
  %3995 = vmatpush.msra.mxu0 0.0
  %3996 = vmatpush.msra.mxu0 0.0
  %3997 = vmatpush.msra.mxu0 0.0
  %3998 = vmatpush.msra.mxu0 0.0
  %3999 = vmatpush.msra.mxu0 0.0
  %4000 = vmatpush.msra.mxu0 0.0
  %4001 = vmatpush.msra.mxu0 0.0
  %4002 = vmatpush.msra.mxu0 0.0
  %4003 = vmatpush.msra.mxu0 %v3932
  %4004 = vmatpush.msra.mxu0 %v3898
  %4005 = vmatpush.msra.mxu0 %v3894
  %4006 = vmatpush.msra.mxu0 %v3890
  %4007 = vmatpush.msra.mxu0 %v3886
  %4008 = vmatpush.msra.mxu0 %v3882
  %4009 = vmatpush.msra.mxu0 %v3878
  %4010 = vmatmul.f32.gmra.mxu0 %v3920
  %v4011 = vpop.f32.mrf.mxu0
  %v4012 = vadd.f32 %v3914, %v4011
  %4013 = vdwg.mxu0
  %v4014 = vxor.u32 %v3952, 2147483648
  %v4015 = vmul.f32 %v4014, 1.442695
  %v4016 = vpow.pop %v4015
  %v4017 = vadd.f32 %v4016, 1.0
  %v4018 = vrcp.pop %v4017
  %v4019 = vmul.f32 %v4017, %v4018
  %v4020 = vsub.f32 1.0, %v4019
  %v4021 = vmul.f32 %v4018, %v4020
  %v4022 = vadd.f32 %v4018, %v4021
  %vm4023 = vweird.f32 %v4017
  %vm4024 = vweird.f32 %v4018
  %vm4025 = vmor %vm4023, %vm4024
  %v4026 = vsel %vm4025, %v4018, %v4022
  %v4027 = vand.u32 2147483647, %v4017
  %vm4028 = vcmp.eq.f32.partialorder %v4027, 8.507059e+37
  %v4029 = vand.u32 %v4017, 2147483648
  %v4030 = vor.u32 1.1754944e-38, %v4029
  %v4031 = vsel %vm4028, %v4030, %v4026
  %v4032 = vmul.f32 1.0, %v4031
  %v4033 = vxor.u32 %v3972, 2147483648
  %v4034 = vmul.f32 %v4033, 1.442695
  %v4035 = vpow.pop %v4034
  %v4036 = vadd.f32 %v4035, 1.0
  %v4037 = vrcp.pop %v4036
  %v4038 = vmul.f32 %v4036, %v4037
  %v4039 = vsub.f32 1.0, %v4038
  %v4040 = vmul.f32 %v4037, %v4039
  %v4041 = vadd.f32 %v4037, %v4040
  %vm4042 = vweird.f32 %v4036
  %vm4043 = vweird.f32 %v4037
  %vm4044 = vmor %vm4042, %vm4043
  %v4045 = vsel %vm4044, %v4037, %v4041
  %v4046 = vand.u32 2147483647, %v4036
  %vm4047 = vcmp.eq.f32.partialorder %v4046, 8.507059e+37
  %v4048 = vand.u32 %v4036, 2147483648
  %v4049 = vor.u32 1.1754944e-38, %v4048
  %v4050 = vsel %vm4047, %v4049, %v4045
  %v4051 = vmul.f32 1.0, %v4050
  %v4052 = vtanh.pop %v3992
  %v4053 = vxor.u32 %v4012, 2147483648
  %v4054 = vmul.f32 %v4053, 1.442695
  %v4055 = vpow.pop %v4054
  %v4056 = vadd.f32 %v4055, 1.0
  %v4057 = vrcp.pop %v4056
  %v4058 = vmul.f32 %v4056, %v4057
  %v4059 = vsub.f32 1.0, %v4058
  %v4060 = vmul.f32 %v4057, %v4059
  %v4061 = vadd.f32 %v4057, %v4060
  %vm4062 = vweird.f32 %v4056
  %vm4063 = vweird.f32 %v4057
  %vm4064 = vmor %vm4062, %vm4063
  %v4065 = vsel %vm4064, %v4057, %v4061
  %v4066 = vand.u32 2147483647, %v4056
  %vm4067 = vcmp.eq.f32.partialorder %v4066, 8.507059e+37
  %v4068 = vand.u32 %v4056, 2147483648
  %v4069 = vor.u32 1.1754944e-38, %v4068
  %v4070 = vsel %vm4067, %v4069, %v4065
  %v4071 = vmul.f32 1.0, %v4070
  %v4072 = vmul.f32 %v4051, %v3871
  %v4073 = vmul.f32 %v4032, %v4052
  %v4074 = vadd.f32 %v4072, %v4073
  %v4075 = vtanh.pop %v4074
  %v4076 = vmul.f32 %v4071, %v4075
  %4077 = vst.msk [vmem:[#allocation3 + $0x24] sm:$0x3] %vm470, %v4076
  %v4078 = vld [vmem:[%s3] sm:$0xff]
  %v4079 = vld [vmem:[%s3 + $0x8] sm:$0xff]
  %v4080 = vld [vmem:[%s3 + $0x10] sm:$0xff]
  %v4081 = vld [vmem:[%s3 + $0x18] sm:$0xff]
  %v4082 = vld [vmem:[%s3 + $0x20] sm:$0xff]
  %v4083 = vld [vmem:[%s3 + $0x28] sm:$0xff]
  %v4084 = vld [vmem:[%s3 + $0x30] sm:$0xff]
  %v4085 = vld [vmem:[%s3 + $0x38] sm:$0xff]
  %v4086 = vld [vmem:[%s3 + $0x40] sm:$0xff]
  %v4087 = vld [vmem:[%s3 + $0x48] sm:$0xff]
  %v4088 = vld [vmem:[%s3 + $0x50] sm:$0xff]
  %v4089 = vld [vmem:[%s3 + $0x58] sm:$0xff]
  %v4090 = vld [vmem:[%s3 + $0x60] sm:$0xff]
  %v4091 = vld [vmem:[%s3 + $0x68] sm:$0xff]
  %v4092 = vld [vmem:[%s3 + $0x70] sm:$0xff]
  %v4093 = vld [vmem:[%s3 + $0x78] sm:$0xff]
  %v4094 = vld [vmem:[%s3 + $0x80] sm:$0xff]
  %v4095 = vld [vmem:[%s3 + $0x88] sm:$0xff]
  %v4096 = vld [vmem:[%s3 + $0x90] sm:$0xff]
  %v4097 = vld [vmem:[%s3 + $0x98] sm:$0xff]
  %v4098 = vld [vmem:[%s3 + $0xa0] sm:$0xff]
  %v4099 = vld [vmem:[%s3 + $0xa8] sm:$0xff]
  %v4100 = vld [vmem:[%s3 + $0xb0] sm:$0xff]
  %v4101 = vld [vmem:[%s3 + $0xb8] sm:$0xff]
  %v4102 = vld [vmem:[%s3 + $0xc0] sm:$0x3]
  %v4103 = vld [vmem:[%s3 + $0xc8] sm:$0x3]
  %v4104 = vld [vmem:[%s3 + $0xd0] sm:$0x3]
  %v4105 = vld [vmem:[%s3 + $0xd8] sm:$0x3]
  %v4106 = vld [vmem:[#allocation2 + $0x80] sm:$0xc0]
  %v4107 = vld [vmem:[#allocation2 + $0x88] sm:$0xc0]
  %v4108 = vld [vmem:[#allocation2 + $0x90] sm:$0xc0]
  %v4109 = vld [vmem:[#allocation2 + $0x98] sm:$0xc0]
  %v4114 = vrot.slane %v4106, 6
  %v4115 = vrot.slane %v4107, 6
  %v4116 = vrot.slane %v4108, 6
  %v4117 = vrot.slane %v4109, 6
  %v4123 = vsel %vm310, %v4076, 0
  %v4126 = vsel %vm314, %v4102, 0
  %v4129 = vsel %vm314, %v4103, 0
  %v4132 = vsel %vm314, %v4104, 0
  %v4135 = vsel %vm314, %v4105, 0
  %4137 = vmatpush.msra.mxu0 0.0
  %4138 = vmatpush.msra.mxu0 0.0
  %4139 = vmatpush.msra.mxu0 0.0
  %4140 = vmatpush.msra.mxu0 0.0
  %4141 = vmatpush.msra.mxu0 0.0
  %4142 = vmatpush.msra.mxu0 0.0
  %4143 = vmatpush.msra.mxu0 0.0
  %4144 = vmatpush.msra.mxu0 0.0
  %4145 = vmatpush.msra.mxu0 0.0
  %4146 = vmatpush.msra.mxu0 %v4126
  %4147 = vmatpush.msra.mxu0 %v4098
  %4148 = vmatpush.msra.mxu0 %v4094
  %4149 = vmatpush.msra.mxu0 %v4090
  %4150 = vmatpush.msra.mxu0 %v4086
  %4151 = vmatpush.msra.mxu0 %v4082
  %4152 = vmatpush.msra.mxu0 %v4078
  %4153 = vmatmul.f32.gmra.mxu0 %v4123
  %v4154 = vpop.f32.mrf.mxu0
  %v4155 = vadd.f32 %v4114, %v4154
  %4156 = vdwg.mxu0
  %4157 = vmatpush.msra.mxu0 0.0
  %4158 = vmatpush.msra.mxu0 0.0
  %4159 = vmatpush.msra.mxu0 0.0
  %4160 = vmatpush.msra.mxu0 0.0
  %4161 = vmatpush.msra.mxu0 0.0
  %4162 = vmatpush.msra.mxu0 0.0
  %4163 = vmatpush.msra.mxu0 0.0
  %4164 = vmatpush.msra.mxu0 0.0
  %4165 = vmatpush.msra.mxu0 0.0
  %4166 = vmatpush.msra.mxu0 %v4129
  %4167 = vmatpush.msra.mxu0 %v4099
  %4168 = vmatpush.msra.mxu0 %v4095
  %4169 = vmatpush.msra.mxu0 %v4091
  %4170 = vmatpush.msra.mxu0 %v4087
  %4171 = vmatpush.msra.mxu0 %v4083
  %4172 = vmatpush.msra.mxu0 %v4079
  %4173 = vmatmul.f32.gmra.mxu0 %v4123
  %v4174 = vpop.f32.mrf.mxu0
  %v4175 = vadd.f32 %v4115, %v4174
  %4176 = vdwg.mxu0
  %4177 = vmatpush.msra.mxu0 0.0
  %4178 = vmatpush.msra.mxu0 0.0
  %4179 = vmatpush.msra.mxu0 0.0
  %4180 = vmatpush.msra.mxu0 0.0
  %4181 = vmatpush.msra.mxu0 0.0
  %4182 = vmatpush.msra.mxu0 0.0
  %4183 = vmatpush.msra.mxu0 0.0
  %4184 = vmatpush.msra.mxu0 0.0
  %4185 = vmatpush.msra.mxu0 0.0
  %4186 = vmatpush.msra.mxu0 %v4132
  %4187 = vmatpush.msra.mxu0 %v4100
  %4188 = vmatpush.msra.mxu0 %v4096
  %4189 = vmatpush.msra.mxu0 %v4092
  %4190 = vmatpush.msra.mxu0 %v4088
  %4191 = vmatpush.msra.mxu0 %v4084
  %4192 = vmatpush.msra.mxu0 %v4080
  %4193 = vmatmul.f32.gmra.mxu0 %v4123
  %v4194 = vpop.f32.mrf.mxu0
  %v4195 = vadd.f32 %v4116, %v4194
  %4196 = vdwg.mxu0
  %4197 = vmatpush.msra.mxu0 0.0
  %4198 = vmatpush.msra.mxu0 0.0
  %4199 = vmatpush.msra.mxu0 0.0
  %4200 = vmatpush.msra.mxu0 0.0
  %4201 = vmatpush.msra.mxu0 0.0
  %4202 = vmatpush.msra.mxu0 0.0
  %4203 = vmatpush.msra.mxu0 0.0
  %4204 = vmatpush.msra.mxu0 0.0
  %4205 = vmatpush.msra.mxu0 0.0
  %4206 = vmatpush.msra.mxu0 %v4135
  %4207 = vmatpush.msra.mxu0 %v4101
  %4208 = vmatpush.msra.mxu0 %v4097
  %4209 = vmatpush.msra.mxu0 %v4093
  %4210 = vmatpush.msra.mxu0 %v4089
  %4211 = vmatpush.msra.mxu0 %v4085
  %4212 = vmatpush.msra.mxu0 %v4081
  %4213 = vmatmul.f32.gmra.mxu0 %v4123
  %v4214 = vpop.f32.mrf.mxu0
  %v4215 = vadd.f32 %v4117, %v4214
  %4216 = vdwg.mxu0
  %v4217 = vxor.u32 %v4155, 2147483648
  %v4218 = vmul.f32 %v4217, 1.442695
  %v4219 = vpow.pop %v4218
  %v4220 = vadd.f32 %v4219, 1.0
  %v4221 = vrcp.pop %v4220
  %v4222 = vmul.f32 %v4220, %v4221
  %v4223 = vsub.f32 1.0, %v4222
  %v4224 = vmul.f32 %v4221, %v4223
  %v4225 = vadd.f32 %v4221, %v4224
  %vm4226 = vweird.f32 %v4220
  %vm4227 = vweird.f32 %v4221
  %vm4228 = vmor %vm4226, %vm4227
  %v4229 = vsel %vm4228, %v4221, %v4225
  %v4230 = vand.u32 2147483647, %v4220
  %vm4231 = vcmp.eq.f32.partialorder %v4230, 8.507059e+37
  %v4232 = vand.u32 %v4220, 2147483648
  %v4233 = vor.u32 1.1754944e-38, %v4232
  %v4234 = vsel %vm4231, %v4233, %v4229
  %v4235 = vmul.f32 1.0, %v4234
  %v4236 = vxor.u32 %v4175, 2147483648
  %v4237 = vmul.f32 %v4236, 1.442695
  %v4238 = vpow.pop %v4237
  %v4239 = vadd.f32 %v4238, 1.0
  %v4240 = vrcp.pop %v4239
  %v4241 = vmul.f32 %v4239, %v4240
  %v4242 = vsub.f32 1.0, %v4241
  %v4243 = vmul.f32 %v4240, %v4242
  %v4244 = vadd.f32 %v4240, %v4243
  %vm4245 = vweird.f32 %v4239
  %vm4246 = vweird.f32 %v4240
  %vm4247 = vmor %vm4245, %vm4246
  %v4248 = vsel %vm4247, %v4240, %v4244
  %v4249 = vand.u32 2147483647, %v4239
  %vm4250 = vcmp.eq.f32.partialorder %v4249, 8.507059e+37
  %v4251 = vand.u32 %v4239, 2147483648
  %v4252 = vor.u32 1.1754944e-38, %v4251
  %v4253 = vsel %vm4250, %v4252, %v4248
  %v4254 = vmul.f32 1.0, %v4253
  %v4255 = vtanh.pop %v4195
  %v4256 = vxor.u32 %v4215, 2147483648
  %v4257 = vmul.f32 %v4256, 1.442695
  %v4258 = vpow.pop %v4257
  %v4259 = vadd.f32 %v4258, 1.0
  %v4260 = vrcp.pop %v4259
  %v4261 = vmul.f32 %v4259, %v4260
  %v4262 = vsub.f32 1.0, %v4261
  %v4263 = vmul.f32 %v4260, %v4262
  %v4264 = vadd.f32 %v4260, %v4263
  %vm4265 = vweird.f32 %v4259
  %vm4266 = vweird.f32 %v4260
  %vm4267 = vmor %vm4265, %vm4266
  %v4268 = vsel %vm4267, %v4260, %v4264
  %v4269 = vand.u32 2147483647, %v4259
  %vm4270 = vcmp.eq.f32.partialorder %v4269, 8.507059e+37
  %v4271 = vand.u32 %v4259, 2147483648
  %v4272 = vor.u32 1.1754944e-38, %v4271
  %v4273 = vsel %vm4270, %v4272, %v4268
  %v4274 = vmul.f32 1.0, %v4273
  %v4275 = vmul.f32 %v4254, %v4074
  %v4276 = vmul.f32 %v4235, %v4255
  %v4277 = vadd.f32 %v4275, %v4276
  %v4278 = vtanh.pop %v4277
  %v4279 = vmul.f32 %v4274, %v4278
  %4280 = vst.msk [vmem:[#allocation3 + $0x26] sm:$0x3] %vm470, %v4279
  %v4281 = vld [vmem:[%s3] sm:$0xff]
  %v4282 = vld [vmem:[%s3 + $0x8] sm:$0xff]
  %v4283 = vld [vmem:[%s3 + $0x10] sm:$0xff]
  %v4284 = vld [vmem:[%s3 + $0x18] sm:$0xff]
  %v4285 = vld [vmem:[%s3 + $0x20] sm:$0xff]
  %v4286 = vld [vmem:[%s3 + $0x28] sm:$0xff]
  %v4287 = vld [vmem:[%s3 + $0x30] sm:$0xff]
  %v4288 = vld [vmem:[%s3 + $0x38] sm:$0xff]
  %v4289 = vld [vmem:[%s3 + $0x40] sm:$0xff]
  %v4290 = vld [vmem:[%s3 + $0x48] sm:$0xff]
  %v4291 = vld [vmem:[%s3 + $0x50] sm:$0xff]
  %v4292 = vld [vmem:[%s3 + $0x58] sm:$0xff]
  %v4293 = vld [vmem:[%s3 + $0x60] sm:$0xff]
  %v4294 = vld [vmem:[%s3 + $0x68] sm:$0xff]
  %v4295 = vld [vmem:[%s3 + $0x70] sm:$0xff]
  %v4296 = vld [vmem:[%s3 + $0x78] sm:$0xff]
  %v4297 = vld [vmem:[%s3 + $0x80] sm:$0xff]
  %v4298 = vld [vmem:[%s3 + $0x88] sm:$0xff]
  %v4299 = vld [vmem:[%s3 + $0x90] sm:$0xff]
  %v4300 = vld [vmem:[%s3 + $0x98] sm:$0xff]
  %v4301 = vld [vmem:[%s3 + $0xa0] sm:$0xff]
  %v4302 = vld [vmem:[%s3 + $0xa8] sm:$0xff]
  %v4303 = vld [vmem:[%s3 + $0xb0] sm:$0xff]
  %v4304 = vld [vmem:[%s3 + $0xb8] sm:$0xff]
  %v4305 = vld [vmem:[%s3 + $0xc0] sm:$0x3]
  %v4306 = vld [vmem:[%s3 + $0xc8] sm:$0x3]
  %v4307 = vld [vmem:[%s3 + $0xd0] sm:$0x3]
  %v4308 = vld [vmem:[%s3 + $0xd8] sm:$0x3]
  %v4309 = vld [vmem:[#allocation2 + $0xa0] sm:$0x3]
  %v4310 = vld [vmem:[#allocation2 + $0xa8] sm:$0x3]
  %v4311 = vld [vmem:[#allocation2 + $0xb0] sm:$0x3]
  %v4312 = vld [vmem:[#allocation2 + $0xb8] sm:$0x3]
  %v4314 = vsel %vm310, %v4279, 0
  %v4317 = vsel %vm314, %v4305, 0
  %v4320 = vsel %vm314, %v4306, 0
  %v4323 = vsel %vm314, %v4307, 0
  %v4326 = vsel %vm314, %v4308, 0
  %4328 = vmatpush.msra.mxu0 0.0
  %4329 = vmatpush.msra.mxu0 0.0
  %4330 = vmatpush.msra.mxu0 0.0
  %4331 = vmatpush.msra.mxu0 0.0
  %4332 = vmatpush.msra.mxu0 0.0
  %4333 = vmatpush.msra.mxu0 0.0
  %4334 = vmatpush.msra.mxu0 0.0
  %4335 = vmatpush.msra.mxu0 0.0
  %4336 = vmatpush.msra.mxu0 0.0
  %4337 = vmatpush.msra.mxu0 %v4317
  %4338 = vmatpush.msra.mxu0 %v4301
  %4339 = vmatpush.msra.mxu0 %v4297
  %4340 = vmatpush.msra.mxu0 %v4293
  %4341 = vmatpush.msra.mxu0 %v4289
  %4342 = vmatpush.msra.mxu0 %v4285
  %4343 = vmatpush.msra.mxu0 %v4281
  %4344 = vmatmul.f32.gmra.mxu0 %v4314
  %v4345 = vpop.f32.mrf.mxu0
  %v4346 = vadd.f32 %v4309, %v4345
  %4347 = vdwg.mxu0
  %4348 = vmatpush.msra.mxu0 0.0
  %4349 = vmatpush.msra.mxu0 0.0
  %4350 = vmatpush.msra.mxu0 0.0
  %4351 = vmatpush.msra.mxu0 0.0
  %4352 = vmatpush.msra.mxu0 0.0
  %4353 = vmatpush.msra.mxu0 0.0
  %4354 = vmatpush.msra.mxu0 0.0
  %4355 = vmatpush.msra.mxu0 0.0
  %4356 = vmatpush.msra.mxu0 0.0
  %4357 = vmatpush.msra.mxu0 %v4320
  %4358 = vmatpush.msra.mxu0 %v4302
  %4359 = vmatpush.msra.mxu0 %v4298
  %4360 = vmatpush.msra.mxu0 %v4294
  %4361 = vmatpush.msra.mxu0 %v4290
  %4362 = vmatpush.msra.mxu0 %v4286
  %4363 = vmatpush.msra.mxu0 %v4282
  %4364 = vmatmul.f32.gmra.mxu0 %v4314
  %v4365 = vpop.f32.mrf.mxu0
  %v4366 = vadd.f32 %v4310, %v4365
  %4367 = vdwg.mxu0
  %4368 = vmatpush.msra.mxu0 0.0
  %4369 = vmatpush.msra.mxu0 0.0
  %4370 = vmatpush.msra.mxu0 0.0
  %4371 = vmatpush.msra.mxu0 0.0
  %4372 = vmatpush.msra.mxu0 0.0
  %4373 = vmatpush.msra.mxu0 0.0
  %4374 = vmatpush.msra.mxu0 0.0
  %4375 = vmatpush.msra.mxu0 0.0
  %4376 = vmatpush.msra.mxu0 0.0
  %4377 = vmatpush.msra.mxu0 %v4323
  %4378 = vmatpush.msra.mxu0 %v4303
  %4379 = vmatpush.msra.mxu0 %v4299
  %4380 = vmatpush.msra.mxu0 %v4295
  %4381 = vmatpush.msra.mxu0 %v4291
  %4382 = vmatpush.msra.mxu0 %v4287
  %4383 = vmatpush.msra.mxu0 %v4283
  %4384 = vmatmul.f32.gmra.mxu0 %v4314
  %v4385 = vpop.f32.mrf.mxu0
  %v4386 = vadd.f32 %v4311, %v4385
  %4387 = vdwg.mxu0
  %4388 = vmatpush.msra.mxu0 0.0
  %4389 = vmatpush.msra.mxu0 0.0
  %4390 = vmatpush.msra.mxu0 0.0
  %4391 = vmatpush.msra.mxu0 0.0
  %4392 = vmatpush.msra.mxu0 0.0
  %4393 = vmatpush.msra.mxu0 0.0
  %4394 = vmatpush.msra.mxu0 0.0
  %4395 = vmatpush.msra.mxu0 0.0
  %4396 = vmatpush.msra.mxu0 0.0
  %4397 = vmatpush.msra.mxu0 %v4326
  %4398 = vmatpush.msra.mxu0 %v4304
  %4399 = vmatpush.msra.mxu0 %v4300
  %4400 = vmatpush.msra.mxu0 %v4296
  %4401 = vmatpush.msra.mxu0 %v4292
  %4402 = vmatpush.msra.mxu0 %v4288
  %4403 = vmatpush.msra.mxu0 %v4284
  %4404 = vmatmul.f32.gmra.mxu0 %v4314
  %v4405 = vpop.f32.mrf.mxu0
  %v4406 = vadd.f32 %v4312, %v4405
  %4407 = vdwg.mxu0
  %v4408 = vxor.u32 %v4346, 2147483648
  %v4409 = vmul.f32 %v4408, 1.442695
  %v4410 = vpow.pop %v4409
  %v4411 = vadd.f32 %v4410, 1.0
  %v4412 = vrcp.pop %v4411
  %v4413 = vmul.f32 %v4411, %v4412
  %v4414 = vsub.f32 1.0, %v4413
  %v4415 = vmul.f32 %v4412, %v4414
  %v4416 = vadd.f32 %v4412, %v4415
  %vm4417 = vweird.f32 %v4411
  %vm4418 = vweird.f32 %v4412
  %vm4419 = vmor %vm4417, %vm4418
  %v4420 = vsel %vm4419, %v4412, %v4416
  %v4421 = vand.u32 2147483647, %v4411
  %vm4422 = vcmp.eq.f32.partialorder %v4421, 8.507059e+37
  %v4423 = vand.u32 %v4411, 2147483648
  %v4424 = vor.u32 1.1754944e-38, %v4423
  %v4425 = vsel %vm4422, %v4424, %v4420
  %v4426 = vmul.f32 1.0, %v4425
  %v4427 = vxor.u32 %v4366, 2147483648
  %v4428 = vmul.f32 %v4427, 1.442695
  %v4429 = vpow.pop %v4428
  %v4430 = vadd.f32 %v4429, 1.0
  %v4431 = vrcp.pop %v4430
  %v4432 = vmul.f32 %v4430, %v4431
  %v4433 = vsub.f32 1.0, %v4432
  %v4434 = vmul.f32 %v4431, %v4433
  %v4435 = vadd.f32 %v4431, %v4434
  %vm4436 = vweird.f32 %v4430
  %vm4437 = vweird.f32 %v4431
  %vm4438 = vmor %vm4436, %vm4437
  %v4439 = vsel %vm4438, %v4431, %v4435
  %v4440 = vand.u32 2147483647, %v4430
  %vm4441 = vcmp.eq.f32.partialorder %v4440, 8.507059e+37
  %v4442 = vand.u32 %v4430, 2147483648
  %v4443 = vor.u32 1.1754944e-38, %v4442
  %v4444 = vsel %vm4441, %v4443, %v4439
  %v4445 = vmul.f32 1.0, %v4444
  %v4446 = vtanh.pop %v4386
  %v4447 = vxor.u32 %v4406, 2147483648
  %v4448 = vmul.f32 %v4447, 1.442695
  %v4449 = vpow.pop %v4448
  %v4450 = vadd.f32 %v4449, 1.0
  %v4451 = vrcp.pop %v4450
  %v4452 = vmul.f32 %v4450, %v4451
  %v4453 = vsub.f32 1.0, %v4452
  %v4454 = vmul.f32 %v4451, %v4453
  %v4455 = vadd.f32 %v4451, %v4454
  %vm4456 = vweird.f32 %v4450
  %vm4457 = vweird.f32 %v4451
  %vm4458 = vmor %vm4456, %vm4457
  %v4459 = vsel %vm4458, %v4451, %v4455
  %v4460 = vand.u32 2147483647, %v4450
  %vm4461 = vcmp.eq.f32.partialorder %v4460, 8.507059e+37
  %v4462 = vand.u32 %v4450, 2147483648
  %v4463 = vor.u32 1.1754944e-38, %v4462
  %v4464 = vsel %vm4461, %v4463, %v4459
  %v4465 = vmul.f32 1.0, %v4464
  %v4466 = vmul.f32 %v4445, %v4277
  %v4467 = vmul.f32 %v4426, %v4446
  %v4468 = vadd.f32 %v4466, %v4467
  %v4469 = vtanh.pop %v4468
  %v4470 = vmul.f32 %v4465, %v4469
  %4471 = vst.msk [vmem:[#allocation3 + $0x28] sm:$0x3] %vm470, %v4470
  %v4472 = vld [vmem:[%s3] sm:$0xff]
  %v4473 = vld [vmem:[%s3 + $0x8] sm:$0xff]
  %v4474 = vld [vmem:[%s3 + $0x10] sm:$0xff]
  %v4475 = vld [vmem:[%s3 + $0x18] sm:$0xff]
  %v4476 = vld [vmem:[%s3 + $0x20] sm:$0xff]
  %v4477 = vld [vmem:[%s3 + $0x28] sm:$0xff]
  %v4478 = vld [vmem:[%s3 + $0x30] sm:$0xff]
  %v4479 = vld [vmem:[%s3 + $0x38] sm:$0xff]
  %v4480 = vld [vmem:[%s3 + $0x40] sm:$0xff]
  %v4481 = vld [vmem:[%s3 + $0x48] sm:$0xff]
  %v4482 = vld [vmem:[%s3 + $0x50] sm:$0xff]
  %v4483 = vld [vmem:[%s3 + $0x58] sm:$0xff]
  %v4484 = vld [vmem:[%s3 + $0x60] sm:$0xff]
  %v4485 = vld [vmem:[%s3 + $0x68] sm:$0xff]
  %v4486 = vld [vmem:[%s3 + $0x70] sm:$0xff]
  %v4487 = vld [vmem:[%s3 + $0x78] sm:$0xff]
  %v4488 = vld [vmem:[%s3 + $0x80] sm:$0xff]
  %v4489 = vld [vmem:[%s3 + $0x88] sm:$0xff]
  %v4490 = vld [vmem:[%s3 + $0x90] sm:$0xff]
  %v4491 = vld [vmem:[%s3 + $0x98] sm:$0xff]
  %v4492 = vld [vmem:[%s3 + $0xa0] sm:$0xff]
  %v4493 = vld [vmem:[%s3 + $0xa8] sm:$0xff]
  %v4494 = vld [vmem:[%s3 + $0xb0] sm:$0xff]
  %v4495 = vld [vmem:[%s3 + $0xb8] sm:$0xff]
  %v4496 = vld [vmem:[%s3 + $0xc0] sm:$0x3]
  %v4497 = vld [vmem:[%s3 + $0xc8] sm:$0x3]
  %v4498 = vld [vmem:[%s3 + $0xd0] sm:$0x3]
  %v4499 = vld [vmem:[%s3 + $0xd8] sm:$0x3]
  %v4500 = vld [vmem:[#allocation2 + $0xa0] sm:$0xc]
  %v4501 = vld [vmem:[#allocation2 + $0xa8] sm:$0xc]
  %v4502 = vld [vmem:[#allocation2 + $0xb0] sm:$0xc]
  %v4503 = vld [vmem:[#allocation2 + $0xb8] sm:$0xc]
  %v4508 = vrot.slane %v4500, 2
  %v4509 = vrot.slane %v4501, 2
  %v4510 = vrot.slane %v4502, 2
  %v4511 = vrot.slane %v4503, 2
  %v4517 = vsel %vm310, %v4470, 0
  %v4520 = vsel %vm314, %v4496, 0
  %v4523 = vsel %vm314, %v4497, 0
  %v4526 = vsel %vm314, %v4498, 0
  %v4529 = vsel %vm314, %v4499, 0
  %4531 = vmatpush.msra.mxu0 0.0
  %4532 = vmatpush.msra.mxu0 0.0
  %4533 = vmatpush.msra.mxu0 0.0
  %4534 = vmatpush.msra.mxu0 0.0
  %4535 = vmatpush.msra.mxu0 0.0
  %4536 = vmatpush.msra.mxu0 0.0
  %4537 = vmatpush.msra.mxu0 0.0
  %4538 = vmatpush.msra.mxu0 0.0
  %4539 = vmatpush.msra.mxu0 0.0
  %4540 = vmatpush.msra.mxu0 %v4520
  %4541 = vmatpush.msra.mxu0 %v4492
  %4542 = vmatpush.msra.mxu0 %v4488
  %4543 = vmatpush.msra.mxu0 %v4484
  %4544 = vmatpush.msra.mxu0 %v4480
  %4545 = vmatpush.msra.mxu0 %v4476
  %4546 = vmatpush.msra.mxu0 %v4472
  %4547 = vmatmul.f32.gmra.mxu0 %v4517
  %v4548 = vpop.f32.mrf.mxu0
  %v4549 = vadd.f32 %v4508, %v4548
  %4550 = vdwg.mxu0
  %4551 = vmatpush.msra.mxu0 0.0
  %4552 = vmatpush.msra.mxu0 0.0
  %4553 = vmatpush.msra.mxu0 0.0
  %4554 = vmatpush.msra.mxu0 0.0
  %4555 = vmatpush.msra.mxu0 0.0
  %4556 = vmatpush.msra.mxu0 0.0
  %4557 = vmatpush.msra.mxu0 0.0
  %4558 = vmatpush.msra.mxu0 0.0
  %4559 = vmatpush.msra.mxu0 0.0
  %4560 = vmatpush.msra.mxu0 %v4523
  %4561 = vmatpush.msra.mxu0 %v4493
  %4562 = vmatpush.msra.mxu0 %v4489
  %4563 = vmatpush.msra.mxu0 %v4485
  %4564 = vmatpush.msra.mxu0 %v4481
  %4565 = vmatpush.msra.mxu0 %v4477
  %4566 = vmatpush.msra.mxu0 %v4473
  %4567 = vmatmul.f32.gmra.mxu0 %v4517
  %v4568 = vpop.f32.mrf.mxu0
  %v4569 = vadd.f32 %v4509, %v4568
  %4570 = vdwg.mxu0
  %4571 = vmatpush.msra.mxu0 0.0
  %4572 = vmatpush.msra.mxu0 0.0
  %4573 = vmatpush.msra.mxu0 0.0
  %4574 = vmatpush.msra.mxu0 0.0
  %4575 = vmatpush.msra.mxu0 0.0
  %4576 = vmatpush.msra.mxu0 0.0
  %4577 = vmatpush.msra.mxu0 0.0
  %4578 = vmatpush.msra.mxu0 0.0
  %4579 = vmatpush.msra.mxu0 0.0
  %4580 = vmatpush.msra.mxu0 %v4526
  %4581 = vmatpush.msra.mxu0 %v4494
  %4582 = vmatpush.msra.mxu0 %v4490
  %4583 = vmatpush.msra.mxu0 %v4486
  %4584 = vmatpush.msra.mxu0 %v4482
  %4585 = vmatpush.msra.mxu0 %v4478
  %4586 = vmatpush.msra.mxu0 %v4474
  %4587 = vmatmul.f32.gmra.mxu0 %v4517
  %v4588 = vpop.f32.mrf.mxu0
  %v4589 = vadd.f32 %v4510, %v4588
  %4590 = vdwg.mxu0
  %4591 = vmatpush.msra.mxu0 0.0
  %4592 = vmatpush.msra.mxu0 0.0
  %4593 = vmatpush.msra.mxu0 0.0
  %4594 = vmatpush.msra.mxu0 0.0
  %4595 = vmatpush.msra.mxu0 0.0
  %4596 = vmatpush.msra.mxu0 0.0
  %4597 = vmatpush.msra.mxu0 0.0
  %4598 = vmatpush.msra.mxu0 0.0
  %4599 = vmatpush.msra.mxu0 0.0
  %4600 = vmatpush.msra.mxu0 %v4529
  %4601 = vmatpush.msra.mxu0 %v4495
  %4602 = vmatpush.msra.mxu0 %v4491
  %4603 = vmatpush.msra.mxu0 %v4487
  %4604 = vmatpush.msra.mxu0 %v4483
  %4605 = vmatpush.msra.mxu0 %v4479
  %4606 = vmatpush.msra.mxu0 %v4475
  %4607 = vmatmul.f32.gmra.mxu0 %v4517
  %v4608 = vpop.f32.mrf.mxu0
  %v4609 = vadd.f32 %v4511, %v4608
  %4610 = vdwg.mxu0
  %v4611 = vxor.u32 %v4549, 2147483648
  %v4612 = vmul.f32 %v4611, 1.442695
  %v4613 = vpow.pop %v4612
  %v4614 = vadd.f32 %v4613, 1.0
  %v4615 = vrcp.pop %v4614
  %v4616 = vmul.f32 %v4614, %v4615
  %v4617 = vsub.f32 1.0, %v4616
  %v4618 = vmul.f32 %v4615, %v4617
  %v4619 = vadd.f32 %v4615, %v4618
  %vm4620 = vweird.f32 %v4614
  %vm4621 = vweird.f32 %v4615
  %vm4622 = vmor %vm4620, %vm4621
  %v4623 = vsel %vm4622, %v4615, %v4619
  %v4624 = vand.u32 2147483647, %v4614
  %vm4625 = vcmp.eq.f32.partialorder %v4624, 8.507059e+37
  %v4626 = vand.u32 %v4614, 2147483648
  %v4627 = vor.u32 1.1754944e-38, %v4626
  %v4628 = vsel %vm4625, %v4627, %v4623
  %v4629 = vmul.f32 1.0, %v4628
  %v4630 = vxor.u32 %v4569, 2147483648
  %v4631 = vmul.f32 %v4630, 1.442695
  %v4632 = vpow.pop %v4631
  %v4633 = vadd.f32 %v4632, 1.0
  %v4634 = vrcp.pop %v4633
  %v4635 = vmul.f32 %v4633, %v4634
  %v4636 = vsub.f32 1.0, %v4635
  %v4637 = vmul.f32 %v4634, %v4636
  %v4638 = vadd.f32 %v4634, %v4637
  %vm4639 = vweird.f32 %v4633
  %vm4640 = vweird.f32 %v4634
  %vm4641 = vmor %vm4639, %vm4640
  %v4642 = vsel %vm4641, %v4634, %v4638
  %v4643 = vand.u32 2147483647, %v4633
  %vm4644 = vcmp.eq.f32.partialorder %v4643, 8.507059e+37
  %v4645 = vand.u32 %v4633, 2147483648
  %v4646 = vor.u32 1.1754944e-38, %v4645
  %v4647 = vsel %vm4644, %v4646, %v4642
  %v4648 = vmul.f32 1.0, %v4647
  %v4649 = vtanh.pop %v4589
  %v4650 = vxor.u32 %v4609, 2147483648
  %v4651 = vmul.f32 %v4650, 1.442695
  %v4652 = vpow.pop %v4651
  %v4653 = vadd.f32 %v4652, 1.0
  %v4654 = vrcp.pop %v4653
  %v4655 = vmul.f32 %v4653, %v4654
  %v4656 = vsub.f32 1.0, %v4655
  %v4657 = vmul.f32 %v4654, %v4656
  %v4658 = vadd.f32 %v4654, %v4657
  %vm4659 = vweird.f32 %v4653
  %vm4660 = vweird.f32 %v4654
  %vm4661 = vmor %vm4659, %vm4660
  %v4662 = vsel %vm4661, %v4654, %v4658
  %v4663 = vand.u32 2147483647, %v4653
  %vm4664 = vcmp.eq.f32.partialorder %v4663, 8.507059e+37
  %v4665 = vand.u32 %v4653, 2147483648
  %v4666 = vor.u32 1.1754944e-38, %v4665
  %v4667 = vsel %vm4664, %v4666, %v4662
  %v4668 = vmul.f32 1.0, %v4667
  %v4669 = vmul.f32 %v4648, %v4468
  %v4670 = vmul.f32 %v4629, %v4649
  %v4671 = vadd.f32 %v4669, %v4670
  %v4672 = vtanh.pop %v4671
  %v4673 = vmul.f32 %v4668, %v4672
  %4674 = vst.msk [vmem:[#allocation3 + $0x2a] sm:$0x3] %vm470, %v4673
  %v4675 = vld [vmem:[%s3] sm:$0xff]
  %v4676 = vld [vmem:[%s3 + $0x8] sm:$0xff]
  %v4677 = vld [vmem:[%s3 + $0x10] sm:$0xff]
  %v4678 = vld [vmem:[%s3 + $0x18] sm:$0xff]
  %v4679 = vld [vmem:[%s3 + $0x20] sm:$0xff]
  %v4680 = vld [vmem:[%s3 + $0x28] sm:$0xff]
  %v4681 = vld [vmem:[%s3 + $0x30] sm:$0xff]
  %v4682 = vld [vmem:[%s3 + $0x38] sm:$0xff]
  %v4683 = vld [vmem:[%s3 + $0x40] sm:$0xff]
  %v4684 = vld [vmem:[%s3 + $0x48] sm:$0xff]
  %v4685 = vld [vmem:[%s3 + $0x50] sm:$0xff]
  %v4686 = vld [vmem:[%s3 + $0x58] sm:$0xff]
  %v4687 = vld [vmem:[%s3 + $0x60] sm:$0xff]
  %v4688 = vld [vmem:[%s3 + $0x68] sm:$0xff]
  %v4689 = vld [vmem:[%s3 + $0x70] sm:$0xff]
  %v4690 = vld [vmem:[%s3 + $0x78] sm:$0xff]
  %v4691 = vld [vmem:[%s3 + $0x80] sm:$0xff]
  %v4692 = vld [vmem:[%s3 + $0x88] sm:$0xff]
  %v4693 = vld [vmem:[%s3 + $0x90] sm:$0xff]
  %v4694 = vld [vmem:[%s3 + $0x98] sm:$0xff]
  %v4695 = vld [vmem:[%s3 + $0xa0] sm:$0xff]
  %v4696 = vld [vmem:[%s3 + $0xa8] sm:$0xff]
  %v4697 = vld [vmem:[%s3 + $0xb0] sm:$0xff]
  %v4698 = vld [vmem:[%s3 + $0xb8] sm:$0xff]
  %v4699 = vld [vmem:[%s3 + $0xc0] sm:$0x3]
  %v4700 = vld [vmem:[%s3 + $0xc8] sm:$0x3]
  %v4701 = vld [vmem:[%s3 + $0xd0] sm:$0x3]
  %v4702 = vld [vmem:[%s3 + $0xd8] sm:$0x3]
  %v4703 = vld [vmem:[#allocation2 + $0xa0] sm:$0x30]
  %v4704 = vld [vmem:[#allocation2 + $0xa8] sm:$0x30]
  %v4705 = vld [vmem:[#allocation2 + $0xb0] sm:$0x30]
  %v4706 = vld [vmem:[#allocation2 + $0xb8] sm:$0x30]
  %v4711 = vrot.slane %v4703, 4
  %v4712 = vrot.slane %v4704, 4
  %v4713 = vrot.slane %v4705, 4
  %v4714 = vrot.slane %v4706, 4
  %v4720 = vsel %vm310, %v4673, 0
  %v4723 = vsel %vm314, %v4699, 0
  %v4726 = vsel %vm314, %v4700, 0
  %v4729 = vsel %vm314, %v4701, 0
  %v4732 = vsel %vm314, %v4702, 0
  %4734 = vmatpush.msra.mxu0 0.0
  %4735 = vmatpush.msra.mxu0 0.0
  %4736 = vmatpush.msra.mxu0 0.0
  %4737 = vmatpush.msra.mxu0 0.0
  %4738 = vmatpush.msra.mxu0 0.0
  %4739 = vmatpush.msra.mxu0 0.0
  %4740 = vmatpush.msra.mxu0 0.0
  %4741 = vmatpush.msra.mxu0 0.0
  %4742 = vmatpush.msra.mxu0 0.0
  %4743 = vmatpush.msra.mxu0 %v4723
  %4744 = vmatpush.msra.mxu0 %v4695
  %4745 = vmatpush.msra.mxu0 %v4691
  %4746 = vmatpush.msra.mxu0 %v4687
  %4747 = vmatpush.msra.mxu0 %v4683
  %4748 = vmatpush.msra.mxu0 %v4679
  %4749 = vmatpush.msra.mxu0 %v4675
  %4750 = vmatmul.f32.gmra.mxu0 %v4720
  %v4751 = vpop.f32.mrf.mxu0
  %v4752 = vadd.f32 %v4711, %v4751
  %4753 = vdwg.mxu0
  %4754 = vmatpush.msra.mxu0 0.0
  %4755 = vmatpush.msra.mxu0 0.0
  %4756 = vmatpush.msra.mxu0 0.0
  %4757 = vmatpush.msra.mxu0 0.0
  %4758 = vmatpush.msra.mxu0 0.0
  %4759 = vmatpush.msra.mxu0 0.0
  %4760 = vmatpush.msra.mxu0 0.0
  %4761 = vmatpush.msra.mxu0 0.0
  %4762 = vmatpush.msra.mxu0 0.0
  %4763 = vmatpush.msra.mxu0 %v4726
  %4764 = vmatpush.msra.mxu0 %v4696
  %4765 = vmatpush.msra.mxu0 %v4692
  %4766 = vmatpush.msra.mxu0 %v4688
  %4767 = vmatpush.msra.mxu0 %v4684
  %4768 = vmatpush.msra.mxu0 %v4680
  %4769 = vmatpush.msra.mxu0 %v4676
  %4770 = vmatmul.f32.gmra.mxu0 %v4720
  %v4771 = vpop.f32.mrf.mxu0
  %v4772 = vadd.f32 %v4712, %v4771
  %4773 = vdwg.mxu0
  %4774 = vmatpush.msra.mxu0 0.0
  %4775 = vmatpush.msra.mxu0 0.0
  %4776 = vmatpush.msra.mxu0 0.0
  %4777 = vmatpush.msra.mxu0 0.0
  %4778 = vmatpush.msra.mxu0 0.0
  %4779 = vmatpush.msra.mxu0 0.0
  %4780 = vmatpush.msra.mxu0 0.0
  %4781 = vmatpush.msra.mxu0 0.0
  %4782 = vmatpush.msra.mxu0 0.0
  %4783 = vmatpush.msra.mxu0 %v4729
  %4784 = vmatpush.msra.mxu0 %v4697
  %4785 = vmatpush.msra.mxu0 %v4693
  %4786 = vmatpush.msra.mxu0 %v4689
  %4787 = vmatpush.msra.mxu0 %v4685
  %4788 = vmatpush.msra.mxu0 %v4681
  %4789 = vmatpush.msra.mxu0 %v4677
  %4790 = vmatmul.f32.gmra.mxu0 %v4720
  %v4791 = vpop.f32.mrf.mxu0
  %v4792 = vadd.f32 %v4713, %v4791
  %4793 = vdwg.mxu0
  %4794 = vmatpush.msra.mxu0 0.0
  %4795 = vmatpush.msra.mxu0 0.0
  %4796 = vmatpush.msra.mxu0 0.0
  %4797 = vmatpush.msra.mxu0 0.0
  %4798 = vmatpush.msra.mxu0 0.0
  %4799 = vmatpush.msra.mxu0 0.0
  %4800 = vmatpush.msra.mxu0 0.0
  %4801 = vmatpush.msra.mxu0 0.0
  %4802 = vmatpush.msra.mxu0 0.0
  %4803 = vmatpush.msra.mxu0 %v4732
  %4804 = vmatpush.msra.mxu0 %v4698
  %4805 = vmatpush.msra.mxu0 %v4694
  %4806 = vmatpush.msra.mxu0 %v4690
  %4807 = vmatpush.msra.mxu0 %v4686
  %4808 = vmatpush.msra.mxu0 %v4682
  %4809 = vmatpush.msra.mxu0 %v4678
  %4810 = vmatmul.f32.gmra.mxu0 %v4720
  %v4811 = vpop.f32.mrf.mxu0
  %v4812 = vadd.f32 %v4714, %v4811
  %4813 = vdwg.mxu0
  %v4814 = vxor.u32 %v4752, 2147483648
  %v4815 = vmul.f32 %v4814, 1.442695
  %v4816 = vpow.pop %v4815
  %v4817 = vadd.f32 %v4816, 1.0
  %v4818 = vrcp.pop %v4817
  %v4819 = vmul.f32 %v4817, %v4818
  %v4820 = vsub.f32 1.0, %v4819
  %v4821 = vmul.f32 %v4818, %v4820
  %v4822 = vadd.f32 %v4818, %v4821
  %vm4823 = vweird.f32 %v4817
  %vm4824 = vweird.f32 %v4818
  %vm4825 = vmor %vm4823, %vm4824
  %v4826 = vsel %vm4825, %v4818, %v4822
  %v4827 = vand.u32 2147483647, %v4817
  %vm4828 = vcmp.eq.f32.partialorder %v4827, 8.507059e+37
  %v4829 = vand.u32 %v4817, 2147483648
  %v4830 = vor.u32 1.1754944e-38, %v4829
  %v4831 = vsel %vm4828, %v4830, %v4826
  %v4832 = vmul.f32 1.0, %v4831
  %v4833 = vxor.u32 %v4772, 2147483648
  %v4834 = vmul.f32 %v4833, 1.442695
  %v4835 = vpow.pop %v4834
  %v4836 = vadd.f32 %v4835, 1.0
  %v4837 = vrcp.pop %v4836
  %v4838 = vmul.f32 %v4836, %v4837
  %v4839 = vsub.f32 1.0, %v4838
  %v4840 = vmul.f32 %v4837, %v4839
  %v4841 = vadd.f32 %v4837, %v4840
  %vm4842 = vweird.f32 %v4836
  %vm4843 = vweird.f32 %v4837
  %vm4844 = vmor %vm4842, %vm4843
  %v4845 = vsel %vm4844, %v4837, %v4841
  %v4846 = vand.u32 2147483647, %v4836
  %vm4847 = vcmp.eq.f32.partialorder %v4846, 8.507059e+37
  %v4848 = vand.u32 %v4836, 2147483648
  %v4849 = vor.u32 1.1754944e-38, %v4848
  %v4850 = vsel %vm4847, %v4849, %v4845
  %v4851 = vmul.f32 1.0, %v4850
  %v4852 = vtanh.pop %v4792
  %v4853 = vxor.u32 %v4812, 2147483648
  %v4854 = vmul.f32 %v4853, 1.442695
  %v4855 = vpow.pop %v4854
  %v4856 = vadd.f32 %v4855, 1.0
  %v4857 = vrcp.pop %v4856
  %v4858 = vmul.f32 %v4856, %v4857
  %v4859 = vsub.f32 1.0, %v4858
  %v4860 = vmul.f32 %v4857, %v4859
  %v4861 = vadd.f32 %v4857, %v4860
  %vm4862 = vweird.f32 %v4856
  %vm4863 = vweird.f32 %v4857
  %vm4864 = vmor %vm4862, %vm4863
  %v4865 = vsel %vm4864, %v4857, %v4861
  %v4866 = vand.u32 2147483647, %v4856
  %vm4867 = vcmp.eq.f32.partialorder %v4866, 8.507059e+37
  %v4868 = vand.u32 %v4856, 2147483648
  %v4869 = vor.u32 1.1754944e-38, %v4868
  %v4870 = vsel %vm4867, %v4869, %v4865
  %v4871 = vmul.f32 1.0, %v4870
  %v4872 = vmul.f32 %v4851, %v4671
  %v4873 = vmul.f32 %v4832, %v4852
  %v4874 = vadd.f32 %v4872, %v4873
  %v4875 = vtanh.pop %v4874
  %v4876 = vmul.f32 %v4871, %v4875
  %4877 = vst.msk [vmem:[#allocation3 + $0x2c] sm:$0x3] %vm470, %v4876
  %v4878 = vld [vmem:[%s3] sm:$0xff]
  %v4879 = vld [vmem:[%s3 + $0x8] sm:$0xff]
  %v4880 = vld [vmem:[%s3 + $0x10] sm:$0xff]
  %v4881 = vld [vmem:[%s3 + $0x18] sm:$0xff]
  %v4882 = vld [vmem:[%s3 + $0x20] sm:$0xff]
  %v4883 = vld [vmem:[%s3 + $0x28] sm:$0xff]
  %v4884 = vld [vmem:[%s3 + $0x30] sm:$0xff]
  %v4885 = vld [vmem:[%s3 + $0x38] sm:$0xff]
  %v4886 = vld [vmem:[%s3 + $0x40] sm:$0xff]
  %v4887 = vld [vmem:[%s3 + $0x48] sm:$0xff]
  %v4888 = vld [vmem:[%s3 + $0x50] sm:$0xff]
  %v4889 = vld [vmem:[%s3 + $0x58] sm:$0xff]
  %v4890 = vld [vmem:[%s3 + $0x60] sm:$0xff]
  %v4891 = vld [vmem:[%s3 + $0x68] sm:$0xff]
  %v4892 = vld [vmem:[%s3 + $0x70] sm:$0xff]
  %v4893 = vld [vmem:[%s3 + $0x78] sm:$0xff]
  %v4894 = vld [vmem:[%s3 + $0x80] sm:$0xff]
  %v4895 = vld [vmem:[%s3 + $0x88] sm:$0xff]
  %v4896 = vld [vmem:[%s3 + $0x90] sm:$0xff]
  %v4897 = vld [vmem:[%s3 + $0x98] sm:$0xff]
  %v4898 = vld [vmem:[%s3 + $0xa0] sm:$0xff]
  %v4899 = vld [vmem:[%s3 + $0xa8] sm:$0xff]
  %v4900 = vld [vmem:[%s3 + $0xb0] sm:$0xff]
  %v4901 = vld [vmem:[%s3 + $0xb8] sm:$0xff]
  %v4902 = vld [vmem:[%s3 + $0xc0] sm:$0x3]
  %v4903 = vld [vmem:[%s3 + $0xc8] sm:$0x3]
  %v4904 = vld [vmem:[%s3 + $0xd0] sm:$0x3]
  %v4905 = vld [vmem:[%s3 + $0xd8] sm:$0x3]
  %v4906 = vld [vmem:[#allocation2 + $0xa0] sm:$0xc0]
  %v4907 = vld [vmem:[#allocation2 + $0xa8] sm:$0xc0]
  %v4908 = vld [vmem:[#allocation2 + $0xb0] sm:$0xc0]
  %v4909 = vld [vmem:[#allocation2 + $0xb8] sm:$0xc0]
  %v4914 = vrot.slane %v4906, 6
  %v4915 = vrot.slane %v4907, 6
  %v4916 = vrot.slane %v4908, 6
  %v4917 = vrot.slane %v4909, 6
  %v4923 = vsel %vm310, %v4876, 0
  %v4926 = vsel %vm314, %v4902, 0
  %v4929 = vsel %vm314, %v4903, 0
  %v4932 = vsel %vm314, %v4904, 0
  %v4935 = vsel %vm314, %v4905, 0
  %4937 = vmatpush.msra.mxu0 0.0
  %4938 = vmatpush.msra.mxu0 0.0
  %4939 = vmatpush.msra.mxu0 0.0
  %4940 = vmatpush.msra.mxu0 0.0
  %4941 = vmatpush.msra.mxu0 0.0
  %4942 = vmatpush.msra.mxu0 0.0
  %4943 = vmatpush.msra.mxu0 0.0
  %4944 = vmatpush.msra.mxu0 0.0
  %4945 = vmatpush.msra.mxu0 0.0
  %4946 = vmatpush.msra.mxu0 %v4926
  %4947 = vmatpush.msra.mxu0 %v4898
  %4948 = vmatpush.msra.mxu0 %v4894
  %4949 = vmatpush.msra.mxu0 %v4890
  %4950 = vmatpush.msra.mxu0 %v4886
  %4951 = vmatpush.msra.mxu0 %v4882
  %4952 = vmatpush.msra.mxu0 %v4878
  %4953 = vmatmul.f32.gmra.mxu0 %v4923
  %v4954 = vpop.f32.mrf.mxu0
  %v4955 = vadd.f32 %v4914, %v4954
  %4956 = vdwg.mxu0
  %4957 = vmatpush.msra.mxu0 0.0
  %4958 = vmatpush.msra.mxu0 0.0
  %4959 = vmatpush.msra.mxu0 0.0
  %4960 = vmatpush.msra.mxu0 0.0
  %4961 = vmatpush.msra.mxu0 0.0
  %4962 = vmatpush.msra.mxu0 0.0
  %4963 = vmatpush.msra.mxu0 0.0
  %4964 = vmatpush.msra.mxu0 0.0
  %4965 = vmatpush.msra.mxu0 0.0
  %4966 = vmatpush.msra.mxu0 %v4929
  %4967 = vmatpush.msra.mxu0 %v4899
  %4968 = vmatpush.msra.mxu0 %v4895
  %4969 = vmatpush.msra.mxu0 %v4891
  %4970 = vmatpush.msra.mxu0 %v4887
  %4971 = vmatpush.msra.mxu0 %v4883
  %4972 = vmatpush.msra.mxu0 %v4879
  %4973 = vmatmul.f32.gmra.mxu0 %v4923
  %v4974 = vpop.f32.mrf.mxu0
  %v4975 = vadd.f32 %v4915, %v4974
  %4976 = vdwg.mxu0
  %4977 = vmatpush.msra.mxu0 0.0
  %4978 = vmatpush.msra.mxu0 0.0
  %4979 = vmatpush.msra.mxu0 0.0
  %4980 = vmatpush.msra.mxu0 0.0
  %4981 = vmatpush.msra.mxu0 0.0
  %4982 = vmatpush.msra.mxu0 0.0
  %4983 = vmatpush.msra.mxu0 0.0
  %4984 = vmatpush.msra.mxu0 0.0
  %4985 = vmatpush.msra.mxu0 0.0
  %4986 = vmatpush.msra.mxu0 %v4932
  %4987 = vmatpush.msra.mxu0 %v4900
  %4988 = vmatpush.msra.mxu0 %v4896
  %4989 = vmatpush.msra.mxu0 %v4892
  %4990 = vmatpush.msra.mxu0 %v4888
  %4991 = vmatpush.msra.mxu0 %v4884
  %4992 = vmatpush.msra.mxu0 %v4880
  %4993 = vmatmul.f32.gmra.mxu0 %v4923
  %v4994 = vpop.f32.mrf.mxu0
  %v4995 = vadd.f32 %v4916, %v4994
  %4996 = vdwg.mxu0
  %4997 = vmatpush.msra.mxu0 0.0
  %4998 = vmatpush.msra.mxu0 0.0
  %4999 = vmatpush.msra.mxu0 0.0
  %5000 = vmatpush.msra.mxu0 0.0
  %5001 = vmatpush.msra.mxu0 0.0
  %5002 = vmatpush.msra.mxu0 0.0
  %5003 = vmatpush.msra.mxu0 0.0
  %5004 = vmatpush.msra.mxu0 0.0
  %5005 = vmatpush.msra.mxu0 0.0
  %5006 = vmatpush.msra.mxu0 %v4935
  %5007 = vmatpush.msra.mxu0 %v4901
  %5008 = vmatpush.msra.mxu0 %v4897
  %5009 = vmatpush.msra.mxu0 %v4893
  %5010 = vmatpush.msra.mxu0 %v4889
  %5011 = vmatpush.msra.mxu0 %v4885
  %5012 = vmatpush.msra.mxu0 %v4881
  %5013 = vmatmul.f32.gmra.mxu0 %v4923
  %v5014 = vpop.f32.mrf.mxu0
  %v5015 = vadd.f32 %v4917, %v5014
  %5016 = vdwg.mxu0
  %v5017 = vxor.u32 %v4955, 2147483648
  %v5018 = vmul.f32 %v5017, 1.442695
  %v5019 = vpow.pop %v5018
  %v5020 = vadd.f32 %v5019, 1.0
  %v5021 = vrcp.pop %v5020
  %v5022 = vmul.f32 %v5020, %v5021
  %v5023 = vsub.f32 1.0, %v5022
  %v5024 = vmul.f32 %v5021, %v5023
  %v5025 = vadd.f32 %v5021, %v5024
  %vm5026 = vweird.f32 %v5020
  %vm5027 = vweird.f32 %v5021
  %vm5028 = vmor %vm5026, %vm5027
  %v5029 = vsel %vm5028, %v5021, %v5025
  %v5030 = vand.u32 2147483647, %v5020
  %vm5031 = vcmp.eq.f32.partialorder %v5030, 8.507059e+37
  %v5032 = vand.u32 %v5020, 2147483648
  %v5033 = vor.u32 1.1754944e-38, %v5032
  %v5034 = vsel %vm5031, %v5033, %v5029
  %v5035 = vmul.f32 1.0, %v5034
  %v5036 = vxor.u32 %v4975, 2147483648
  %v5037 = vmul.f32 %v5036, 1.442695
  %v5038 = vpow.pop %v5037
  %v5039 = vadd.f32 %v5038, 1.0
  %v5040 = vrcp.pop %v5039
  %v5041 = vmul.f32 %v5039, %v5040
  %v5042 = vsub.f32 1.0, %v5041
  %v5043 = vmul.f32 %v5040, %v5042
  %v5044 = vadd.f32 %v5040, %v5043
  %vm5045 = vweird.f32 %v5039
  %vm5046 = vweird.f32 %v5040
  %vm5047 = vmor %vm5045, %vm5046
  %v5048 = vsel %vm5047, %v5040, %v5044
  %v5049 = vand.u32 2147483647, %v5039
  %vm5050 = vcmp.eq.f32.partialorder %v5049, 8.507059e+37
  %v5051 = vand.u32 %v5039, 2147483648
  %v5052 = vor.u32 1.1754944e-38, %v5051
  %v5053 = vsel %vm5050, %v5052, %v5048
  %v5054 = vmul.f32 1.0, %v5053
  %v5055 = vtanh.pop %v4995
  %v5056 = vxor.u32 %v5015, 2147483648
  %v5057 = vmul.f32 %v5056, 1.442695
  %v5058 = vpow.pop %v5057
  %v5059 = vadd.f32 %v5058, 1.0
  %v5060 = vrcp.pop %v5059
  %v5061 = vmul.f32 %v5059, %v5060
  %v5062 = vsub.f32 1.0, %v5061
  %v5063 = vmul.f32 %v5060, %v5062
  %v5064 = vadd.f32 %v5060, %v5063
  %vm5065 = vweird.f32 %v5059
  %vm5066 = vweird.f32 %v5060
  %vm5067 = vmor %vm5065, %vm5066
  %v5068 = vsel %vm5067, %v5060, %v5064
  %v5069 = vand.u32 2147483647, %v5059
  %vm5070 = vcmp.eq.f32.partialorder %v5069, 8.507059e+37
  %v5071 = vand.u32 %v5059, 2147483648
  %v5072 = vor.u32 1.1754944e-38, %v5071
  %v5073 = vsel %vm5070, %v5072, %v5068
  %v5074 = vmul.f32 1.0, %v5073
  %v5075 = vmul.f32 %v5054, %v4874
  %v5076 = vmul.f32 %v5035, %v5055
  %v5077 = vadd.f32 %v5075, %v5076
  %v5078 = vtanh.pop %v5077
  %v5079 = vmul.f32 %v5074, %v5078
  %5080 = vst.msk [vmem:[#allocation3 + $0x2e] sm:$0x3] %vm470, %v5079
  %v5081 = vld [vmem:[%s3] sm:$0xff]
  %v5082 = vld [vmem:[%s3 + $0x8] sm:$0xff]
  %v5083 = vld [vmem:[%s3 + $0x10] sm:$0xff]
  %v5084 = vld [vmem:[%s3 + $0x18] sm:$0xff]
  %v5085 = vld [vmem:[%s3 + $0x20] sm:$0xff]
  %v5086 = vld [vmem:[%s3 + $0x28] sm:$0xff]
  %v5087 = vld [vmem:[%s3 + $0x30] sm:$0xff]
  %v5088 = vld [vmem:[%s3 + $0x38] sm:$0xff]
  %v5089 = vld [vmem:[%s3 + $0x40] sm:$0xff]
  %v5090 = vld [vmem:[%s3 + $0x48] sm:$0xff]
  %v5091 = vld [vmem:[%s3 + $0x50] sm:$0xff]
  %v5092 = vld [vmem:[%s3 + $0x58] sm:$0xff]
  %v5093 = vld [vmem:[%s3 + $0x60] sm:$0xff]
  %v5094 = vld [vmem:[%s3 + $0x68] sm:$0xff]
  %v5095 = vld [vmem:[%s3 + $0x70] sm:$0xff]
  %v5096 = vld [vmem:[%s3 + $0x78] sm:$0xff]
  %v5097 = vld [vmem:[%s3 + $0x80] sm:$0xff]
  %v5098 = vld [vmem:[%s3 + $0x88] sm:$0xff]
  %v5099 = vld [vmem:[%s3 + $0x90] sm:$0xff]
  %v5100 = vld [vmem:[%s3 + $0x98] sm:$0xff]
  %v5101 = vld [vmem:[%s3 + $0xa0] sm:$0xff]
  %v5102 = vld [vmem:[%s3 + $0xa8] sm:$0xff]
  %v5103 = vld [vmem:[%s3 + $0xb0] sm:$0xff]
  %v5104 = vld [vmem:[%s3 + $0xb8] sm:$0xff]
  %v5105 = vld [vmem:[%s3 + $0xc0] sm:$0x3]
  %v5106 = vld [vmem:[%s3 + $0xc8] sm:$0x3]
  %v5107 = vld [vmem:[%s3 + $0xd0] sm:$0x3]
  %v5108 = vld [vmem:[%s3 + $0xd8] sm:$0x3]
  %v5109 = vld [vmem:[#allocation2 + $0xc0] sm:$0x3]
  %v5110 = vld [vmem:[#allocation2 + $0xc8] sm:$0x3]
  %v5111 = vld [vmem:[#allocation2 + $0xd0] sm:$0x3]
  %v5112 = vld [vmem:[#allocation2 + $0xd8] sm:$0x3]
  %v5114 = vsel %vm310, %v5079, 0
  %v5117 = vsel %vm314, %v5105, 0
  %v5120 = vsel %vm314, %v5106, 0
  %v5123 = vsel %vm314, %v5107, 0
  %v5126 = vsel %vm314, %v5108, 0
  %5128 = vmatpush.msra.mxu0 0.0
  %5129 = vmatpush.msra.mxu0 0.0
  %5130 = vmatpush.msra.mxu0 0.0
  %5131 = vmatpush.msra.mxu0 0.0
  %5132 = vmatpush.msra.mxu0 0.0
  %5133 = vmatpush.msra.mxu0 0.0
  %5134 = vmatpush.msra.mxu0 0.0
  %5135 = vmatpush.msra.mxu0 0.0
  %5136 = vmatpush.msra.mxu0 0.0
  %5137 = vmatpush.msra.mxu0 %v5117
  %5138 = vmatpush.msra.mxu0 %v5101
  %5139 = vmatpush.msra.mxu0 %v5097
  %5140 = vmatpush.msra.mxu0 %v5093
  %5141 = vmatpush.msra.mxu0 %v5089
  %5142 = vmatpush.msra.mxu0 %v5085
  %5143 = vmatpush.msra.mxu0 %v5081
  %5144 = vmatmul.f32.gmra.mxu0 %v5114
  %v5145 = vpop.f32.mrf.mxu0
  %v5146 = vadd.f32 %v5109, %v5145
  %5147 = vdwg.mxu0
  %5148 = vmatpush.msra.mxu0 0.0
  %5149 = vmatpush.msra.mxu0 0.0
  %5150 = vmatpush.msra.mxu0 0.0
  %5151 = vmatpush.msra.mxu0 0.0
  %5152 = vmatpush.msra.mxu0 0.0
  %5153 = vmatpush.msra.mxu0 0.0
  %5154 = vmatpush.msra.mxu0 0.0
  %5155 = vmatpush.msra.mxu0 0.0
  %5156 = vmatpush.msra.mxu0 0.0
  %5157 = vmatpush.msra.mxu0 %v5120
  %5158 = vmatpush.msra.mxu0 %v5102
  %5159 = vmatpush.msra.mxu0 %v5098
  %5160 = vmatpush.msra.mxu0 %v5094
  %5161 = vmatpush.msra.mxu0 %v5090
  %5162 = vmatpush.msra.mxu0 %v5086
  %5163 = vmatpush.msra.mxu0 %v5082
  %5164 = vmatmul.f32.gmra.mxu0 %v5114
  %v5165 = vpop.f32.mrf.mxu0
  %v5166 = vadd.f32 %v5110, %v5165
  %5167 = vdwg.mxu0
  %5168 = vmatpush.msra.mxu0 0.0
  %5169 = vmatpush.msra.mxu0 0.0
  %5170 = vmatpush.msra.mxu0 0.0
  %5171 = vmatpush.msra.mxu0 0.0
  %5172 = vmatpush.msra.mxu0 0.0
  %5173 = vmatpush.msra.mxu0 0.0
  %5174 = vmatpush.msra.mxu0 0.0
  %5175 = vmatpush.msra.mxu0 0.0
  %5176 = vmatpush.msra.mxu0 0.0
  %5177 = vmatpush.msra.mxu0 %v5123
  %5178 = vmatpush.msra.mxu0 %v5103
  %5179 = vmatpush.msra.mxu0 %v5099
  %5180 = vmatpush.msra.mxu0 %v5095
  %5181 = vmatpush.msra.mxu0 %v5091
  %5182 = vmatpush.msra.mxu0 %v5087
  %5183 = vmatpush.msra.mxu0 %v5083
  %5184 = vmatmul.f32.gmra.mxu0 %v5114
  %v5185 = vpop.f32.mrf.mxu0
  %v5186 = vadd.f32 %v5111, %v5185
  %5187 = vdwg.mxu0
  %5188 = vmatpush.msra.mxu0 0.0
  %5189 = vmatpush.msra.mxu0 0.0
  %5190 = vmatpush.msra.mxu0 0.0
  %5191 = vmatpush.msra.mxu0 0.0
  %5192 = vmatpush.msra.mxu0 0.0
  %5193 = vmatpush.msra.mxu0 0.0
  %5194 = vmatpush.msra.mxu0 0.0
  %5195 = vmatpush.msra.mxu0 0.0
  %5196 = vmatpush.msra.mxu0 0.0
  %5197 = vmatpush.msra.mxu0 %v5126
  %5198 = vmatpush.msra.mxu0 %v5104
  %5199 = vmatpush.msra.mxu0 %v5100
  %5200 = vmatpush.msra.mxu0 %v5096
  %5201 = vmatpush.msra.mxu0 %v5092
  %5202 = vmatpush.msra.mxu0 %v5088
  %5203 = vmatpush.msra.mxu0 %v5084
  %5204 = vmatmul.f32.gmra.mxu0 %v5114
  %v5205 = vpop.f32.mrf.mxu0
  %v5206 = vadd.f32 %v5112, %v5205
  %5207 = vdwg.mxu0
  %v5208 = vxor.u32 %v5146, 2147483648
  %v5209 = vmul.f32 %v5208, 1.442695
  %v5210 = vpow.pop %v5209
  %v5211 = vadd.f32 %v5210, 1.0
  %v5212 = vrcp.pop %v5211
  %v5213 = vmul.f32 %v5211, %v5212
  %v5214 = vsub.f32 1.0, %v5213
  %v5215 = vmul.f32 %v5212, %v5214
  %v5216 = vadd.f32 %v5212, %v5215
  %vm5217 = vweird.f32 %v5211
  %vm5218 = vweird.f32 %v5212
  %vm5219 = vmor %vm5217, %vm5218
  %v5220 = vsel %vm5219, %v5212, %v5216
  %v5221 = vand.u32 2147483647, %v5211
  %vm5222 = vcmp.eq.f32.partialorder %v5221, 8.507059e+37
  %v5223 = vand.u32 %v5211, 2147483648
  %v5224 = vor.u32 1.1754944e-38, %v5223
  %v5225 = vsel %vm5222, %v5224, %v5220
  %v5226 = vmul.f32 1.0, %v5225
  %v5227 = vxor.u32 %v5166, 2147483648
  %v5228 = vmul.f32 %v5227, 1.442695
  %v5229 = vpow.pop %v5228
  %v5230 = vadd.f32 %v5229, 1.0
  %v5231 = vrcp.pop %v5230
  %v5232 = vmul.f32 %v5230, %v5231
  %v5233 = vsub.f32 1.0, %v5232
  %v5234 = vmul.f32 %v5231, %v5233
  %v5235 = vadd.f32 %v5231, %v5234
  %vm5236 = vweird.f32 %v5230
  %vm5237 = vweird.f32 %v5231
  %vm5238 = vmor %vm5236, %vm5237
  %v5239 = vsel %vm5238, %v5231, %v5235
  %v5240 = vand.u32 2147483647, %v5230
  %vm5241 = vcmp.eq.f32.partialorder %v5240, 8.507059e+37
  %v5242 = vand.u32 %v5230, 2147483648
  %v5243 = vor.u32 1.1754944e-38, %v5242
  %v5244 = vsel %vm5241, %v5243, %v5239
  %v5245 = vmul.f32 1.0, %v5244
  %v5246 = vtanh.pop %v5186
  %v5247 = vxor.u32 %v5206, 2147483648
  %v5248 = vmul.f32 %v5247, 1.442695
  %v5249 = vpow.pop %v5248
  %v5250 = vadd.f32 %v5249, 1.0
  %v5251 = vrcp.pop %v5250
  %v5252 = vmul.f32 %v5250, %v5251
  %v5253 = vsub.f32 1.0, %v5252
  %v5254 = vmul.f32 %v5251, %v5253
  %v5255 = vadd.f32 %v5251, %v5254
  %vm5256 = vweird.f32 %v5250
  %vm5257 = vweird.f32 %v5251
  %vm5258 = vmor %vm5256, %vm5257
  %v5259 = vsel %vm5258, %v5251, %v5255
  %v5260 = vand.u32 2147483647, %v5250
  %vm5261 = vcmp.eq.f32.partialorder %v5260, 8.507059e+37
  %v5262 = vand.u32 %v5250, 2147483648
  %v5263 = vor.u32 1.1754944e-38, %v5262
  %v5264 = vsel %vm5261, %v5263, %v5259
  %v5265 = vmul.f32 1.0, %v5264
  %v5266 = vmul.f32 %v5245, %v5077
  %v5267 = vmul.f32 %v5226, %v5246
  %v5268 = vadd.f32 %v5266, %v5267
  %v5269 = vtanh.pop %v5268
  %v5270 = vmul.f32 %v5265, %v5269
  %5271 = vst.msk [vmem:[#allocation3 + $0x30] sm:$0x3] %vm470, %v5270
  %v5272 = vld [vmem:[%s3] sm:$0xff]
  %v5273 = vld [vmem:[%s3 + $0x8] sm:$0xff]
  %v5274 = vld [vmem:[%s3 + $0x10] sm:$0xff]
  %v5275 = vld [vmem:[%s3 + $0x18] sm:$0xff]
  %v5276 = vld [vmem:[%s3 + $0x20] sm:$0xff]
  %v5277 = vld [vmem:[%s3 + $0x28] sm:$0xff]
  %v5278 = vld [vmem:[%s3 + $0x30] sm:$0xff]
  %v5279 = vld [vmem:[%s3 + $0x38] sm:$0xff]
  %v5280 = vld [vmem:[%s3 + $0x40] sm:$0xff]
  %v5281 = vld [vmem:[%s3 + $0x48] sm:$0xff]
  %v5282 = vld [vmem:[%s3 + $0x50] sm:$0xff]
  %v5283 = vld [vmem:[%s3 + $0x58] sm:$0xff]
  %v5284 = vld [vmem:[%s3 + $0x60] sm:$0xff]
  %v5285 = vld [vmem:[%s3 + $0x68] sm:$0xff]
  %v5286 = vld [vmem:[%s3 + $0x70] sm:$0xff]
  %v5287 = vld [vmem:[%s3 + $0x78] sm:$0xff]
  %v5288 = vld [vmem:[%s3 + $0x80] sm:$0xff]
  %v5289 = vld [vmem:[%s3 + $0x88] sm:$0xff]
  %v5290 = vld [vmem:[%s3 + $0x90] sm:$0xff]
  %v5291 = vld [vmem:[%s3 + $0x98] sm:$0xff]
  %v5292 = vld [vmem:[%s3 + $0xa0] sm:$0xff]
  %v5293 = vld [vmem:[%s3 + $0xa8] sm:$0xff]
  %v5294 = vld [vmem:[%s3 + $0xb0] sm:$0xff]
  %v5295 = vld [vmem:[%s3 + $0xb8] sm:$0xff]
  %v5296 = vld [vmem:[%s3 + $0xc0] sm:$0x3]
  %v5297 = vld [vmem:[%s3 + $0xc8] sm:$0x3]
  %v5298 = vld [vmem:[%s3 + $0xd0] sm:$0x3]
  %v5299 = vld [vmem:[%s3 + $0xd8] sm:$0x3]
  %v5300 = vld [vmem:[#allocation2 + $0xc0] sm:$0xc]
  %v5301 = vld [vmem:[#allocation2 + $0xc8] sm:$0xc]
  %v5302 = vld [vmem:[#allocation2 + $0xd0] sm:$0xc]
  %v5303 = vld [vmem:[#allocation2 + $0xd8] sm:$0xc]
  %v5308 = vrot.slane %v5300, 2
  %v5309 = vrot.slane %v5301, 2
  %v5310 = vrot.slane %v5302, 2
  %v5311 = vrot.slane %v5303, 2
  %v5317 = vsel %vm310, %v5270, 0
  %v5320 = vsel %vm314, %v5296, 0
  %v5323 = vsel %vm314, %v5297, 0
  %v5326 = vsel %vm314, %v5298, 0
  %v5329 = vsel %vm314, %v5299, 0
  %5331 = vmatpush.msra.mxu0 0.0
  %5332 = vmatpush.msra.mxu0 0.0
  %5333 = vmatpush.msra.mxu0 0.0
  %5334 = vmatpush.msra.mxu0 0.0
  %5335 = vmatpush.msra.mxu0 0.0
  %5336 = vmatpush.msra.mxu0 0.0
  %5337 = vmatpush.msra.mxu0 0.0
  %5338 = vmatpush.msra.mxu0 0.0
  %5339 = vmatpush.msra.mxu0 0.0
  %5340 = vmatpush.msra.mxu0 %v5320
  %5341 = vmatpush.msra.mxu0 %v5292
  %5342 = vmatpush.msra.mxu0 %v5288
  %5343 = vmatpush.msra.mxu0 %v5284
  %5344 = vmatpush.msra.mxu0 %v5280
  %5345 = vmatpush.msra.mxu0 %v5276
  %5346 = vmatpush.msra.mxu0 %v5272
  %5347 = vmatmul.f32.gmra.mxu0 %v5317
  %v5348 = vpop.f32.mrf.mxu0
  %v5349 = vadd.f32 %v5308, %v5348
  %5350 = vdwg.mxu0
  %5351 = vmatpush.msra.mxu0 0.0
  %5352 = vmatpush.msra.mxu0 0.0
  %5353 = vmatpush.msra.mxu0 0.0
  %5354 = vmatpush.msra.mxu0 0.0
  %5355 = vmatpush.msra.mxu0 0.0
  %5356 = vmatpush.msra.mxu0 0.0
  %5357 = vmatpush.msra.mxu0 0.0
  %5358 = vmatpush.msra.mxu0 0.0
  %5359 = vmatpush.msra.mxu0 0.0
  %5360 = vmatpush.msra.mxu0 %v5323
  %5361 = vmatpush.msra.mxu0 %v5293
  %5362 = vmatpush.msra.mxu0 %v5289
  %5363 = vmatpush.msra.mxu0 %v5285
  %5364 = vmatpush.msra.mxu0 %v5281
  %5365 = vmatpush.msra.mxu0 %v5277
  %5366 = vmatpush.msra.mxu0 %v5273
  %5367 = vmatmul.f32.gmra.mxu0 %v5317
  %v5368 = vpop.f32.mrf.mxu0
  %v5369 = vadd.f32 %v5309, %v5368
  %5370 = vdwg.mxu0
  %5371 = vmatpush.msra.mxu0 0.0
  %5372 = vmatpush.msra.mxu0 0.0
  %5373 = vmatpush.msra.mxu0 0.0
  %5374 = vmatpush.msra.mxu0 0.0
  %5375 = vmatpush.msra.mxu0 0.0
  %5376 = vmatpush.msra.mxu0 0.0
  %5377 = vmatpush.msra.mxu0 0.0
  %5378 = vmatpush.msra.mxu0 0.0
  %5379 = vmatpush.msra.mxu0 0.0
  %5380 = vmatpush.msra.mxu0 %v5326
  %5381 = vmatpush.msra.mxu0 %v5294
  %5382 = vmatpush.msra.mxu0 %v5290
  %5383 = vmatpush.msra.mxu0 %v5286
  %5384 = vmatpush.msra.mxu0 %v5282
  %5385 = vmatpush.msra.mxu0 %v5278
  %5386 = vmatpush.msra.mxu0 %v5274
  %5387 = vmatmul.f32.gmra.mxu0 %v5317
  %v5388 = vpop.f32.mrf.mxu0
  %v5389 = vadd.f32 %v5310, %v5388
  %5390 = vdwg.mxu0
  %5391 = vmatpush.msra.mxu0 0.0
  %5392 = vmatpush.msra.mxu0 0.0
  %5393 = vmatpush.msra.mxu0 0.0
  %5394 = vmatpush.msra.mxu0 0.0
  %5395 = vmatpush.msra.mxu0 0.0
  %5396 = vmatpush.msra.mxu0 0.0
  %5397 = vmatpush.msra.mxu0 0.0
  %5398 = vmatpush.msra.mxu0 0.0
  %5399 = vmatpush.msra.mxu0 0.0
  %5400 = vmatpush.msra.mxu0 %v5329
  %5401 = vmatpush.msra.mxu0 %v5295
  %5402 = vmatpush.msra.mxu0 %v5291
  %5403 = vmatpush.msra.mxu0 %v5287
  %5404 = vmatpush.msra.mxu0 %v5283
  %5405 = vmatpush.msra.mxu0 %v5279
  %5406 = vmatpush.msra.mxu0 %v5275
  %5407 = vmatmul.f32.gmra.mxu0 %v5317
  %v5408 = vpop.f32.mrf.mxu0
  %v5409 = vadd.f32 %v5311, %v5408
  %5410 = vdwg.mxu0
  %v5411 = vxor.u32 %v5349, 2147483648
  %v5412 = vmul.f32 %v5411, 1.442695
  %v5413 = vpow.pop %v5412
  %v5414 = vadd.f32 %v5413, 1.0
  %v5415 = vrcp.pop %v5414
  %v5416 = vmul.f32 %v5414, %v5415
  %v5417 = vsub.f32 1.0, %v5416
  %v5418 = vmul.f32 %v5415, %v5417
  %v5419 = vadd.f32 %v5415, %v5418
  %vm5420 = vweird.f32 %v5414
  %vm5421 = vweird.f32 %v5415
  %vm5422 = vmor %vm5420, %vm5421
  %v5423 = vsel %vm5422, %v5415, %v5419
  %v5424 = vand.u32 2147483647, %v5414
  %vm5425 = vcmp.eq.f32.partialorder %v5424, 8.507059e+37
  %v5426 = vand.u32 %v5414, 2147483648
  %v5427 = vor.u32 1.1754944e-38, %v5426
  %v5428 = vsel %vm5425, %v5427, %v5423
  %v5429 = vmul.f32 1.0, %v5428
  %v5430 = vxor.u32 %v5369, 2147483648
  %v5431 = vmul.f32 %v5430, 1.442695
  %v5432 = vpow.pop %v5431
  %v5433 = vadd.f32 %v5432, 1.0
  %v5434 = vrcp.pop %v5433
  %v5435 = vmul.f32 %v5433, %v5434
  %v5436 = vsub.f32 1.0, %v5435
  %v5437 = vmul.f32 %v5434, %v5436
  %v5438 = vadd.f32 %v5434, %v5437
  %vm5439 = vweird.f32 %v5433
  %vm5440 = vweird.f32 %v5434
  %vm5441 = vmor %vm5439, %vm5440
  %v5442 = vsel %vm5441, %v5434, %v5438
  %v5443 = vand.u32 2147483647, %v5433
  %vm5444 = vcmp.eq.f32.partialorder %v5443, 8.507059e+37
  %v5445 = vand.u32 %v5433, 2147483648
  %v5446 = vor.u32 1.1754944e-38, %v5445
  %v5447 = vsel %vm5444, %v5446, %v5442
  %v5448 = vmul.f32 1.0, %v5447
  %v5449 = vtanh.pop %v5389
  %v5450 = vxor.u32 %v5409, 2147483648
  %v5451 = vmul.f32 %v5450, 1.442695
  %v5452 = vpow.pop %v5451
  %v5453 = vadd.f32 %v5452, 1.0
  %v5454 = vrcp.pop %v5453
  %v5455 = vmul.f32 %v5453, %v5454
  %v5456 = vsub.f32 1.0, %v5455
  %v5457 = vmul.f32 %v5454, %v5456
  %v5458 = vadd.f32 %v5454, %v5457
  %vm5459 = vweird.f32 %v5453
  %vm5460 = vweird.f32 %v5454
  %vm5461 = vmor %vm5459, %vm5460
  %v5462 = vsel %vm5461, %v5454, %v5458
  %v5463 = vand.u32 2147483647, %v5453
  %vm5464 = vcmp.eq.f32.partialorder %v5463, 8.507059e+37
  %v5465 = vand.u32 %v5453, 2147483648
  %v5466 = vor.u32 1.1754944e-38, %v5465
  %v5467 = vsel %vm5464, %v5466, %v5462
  %v5468 = vmul.f32 1.0, %v5467
  %v5469 = vmul.f32 %v5448, %v5268
  %v5470 = vmul.f32 %v5429, %v5449
  %v5471 = vadd.f32 %v5469, %v5470
  %v5472 = vtanh.pop %v5471
  %v5473 = vmul.f32 %v5468, %v5472
  %5474 = vst.msk [vmem:[#allocation3 + $0x32] sm:$0x3] %vm470, %v5473
  %v5475 = vld [vmem:[%s3] sm:$0xff]
  %v5476 = vld [vmem:[%s3 + $0x8] sm:$0xff]
  %v5477 = vld [vmem:[%s3 + $0x10] sm:$0xff]
  %v5478 = vld [vmem:[%s3 + $0x18] sm:$0xff]
  %v5479 = vld [vmem:[%s3 + $0x20] sm:$0xff]
  %v5480 = vld [vmem:[%s3 + $0x28] sm:$0xff]
  %v5481 = vld [vmem:[%s3 + $0x30] sm:$0xff]
  %v5482 = vld [vmem:[%s3 + $0x38] sm:$0xff]
  %v5483 = vld [vmem:[%s3 + $0x40] sm:$0xff]
  %v5484 = vld [vmem:[%s3 + $0x48] sm:$0xff]
  %v5485 = vld [vmem:[%s3 + $0x50] sm:$0xff]
  %v5486 = vld [vmem:[%s3 + $0x58] sm:$0xff]
  %v5487 = vld [vmem:[%s3 + $0x60] sm:$0xff]
  %v5488 = vld [vmem:[%s3 + $0x68] sm:$0xff]
  %v5489 = vld [vmem:[%s3 + $0x70] sm:$0xff]
  %v5490 = vld [vmem:[%s3 + $0x78] sm:$0xff]
  %v5491 = vld [vmem:[%s3 + $0x80] sm:$0xff]
  %v5492 = vld [vmem:[%s3 + $0x88] sm:$0xff]
  %v5493 = vld [vmem:[%s3 + $0x90] sm:$0xff]
  %v5494 = vld [vmem:[%s3 + $0x98] sm:$0xff]
  %v5495 = vld [vmem:[%s3 + $0xa0] sm:$0xff]
  %v5496 = vld [vmem:[%s3 + $0xa8] sm:$0xff]
  %v5497 = vld [vmem:[%s3 + $0xb0] sm:$0xff]
  %v5498 = vld [vmem:[%s3 + $0xb8] sm:$0xff]
  %v5499 = vld [vmem:[%s3 + $0xc0] sm:$0x3]
  %v5500 = vld [vmem:[%s3 + $0xc8] sm:$0x3]
  %v5501 = vld [vmem:[%s3 + $0xd0] sm:$0x3]
  %v5502 = vld [vmem:[%s3 + $0xd8] sm:$0x3]
  %v5503 = vld [vmem:[#allocation2 + $0xc0] sm:$0x30]
  %v5504 = vld [vmem:[#allocation2 + $0xc8] sm:$0x30]
  %v5505 = vld [vmem:[#allocation2 + $0xd0] sm:$0x30]
  %v5506 = vld [vmem:[#allocation2 + $0xd8] sm:$0x30]
  %v5511 = vrot.slane %v5503, 4
  %v5512 = vrot.slane %v5504, 4
  %v5513 = vrot.slane %v5505, 4
  %v5514 = vrot.slane %v5506, 4
  %v5520 = vsel %vm310, %v5473, 0
  %v5523 = vsel %vm314, %v5499, 0
  %v5526 = vsel %vm314, %v5500, 0
  %v5529 = vsel %vm314, %v5501, 0
  %v5532 = vsel %vm314, %v5502, 0
  %5534 = vmatpush.msra.mxu0 0.0
  %5535 = vmatpush.msra.mxu0 0.0
  %5536 = vmatpush.msra.mxu0 0.0
  %5537 = vmatpush.msra.mxu0 0.0
  %5538 = vmatpush.msra.mxu0 0.0
  %5539 = vmatpush.msra.mxu0 0.0
  %5540 = vmatpush.msra.mxu0 0.0
  %5541 = vmatpush.msra.mxu0 0.0
  %5542 = vmatpush.msra.mxu0 0.0
  %5543 = vmatpush.msra.mxu0 %v5523
  %5544 = vmatpush.msra.mxu0 %v5495
  %5545 = vmatpush.msra.mxu0 %v5491
  %5546 = vmatpush.msra.mxu0 %v5487
  %5547 = vmatpush.msra.mxu0 %v5483
  %5548 = vmatpush.msra.mxu0 %v5479
  %5549 = vmatpush.msra.mxu0 %v5475
  %5550 = vmatmul.f32.gmra.mxu0 %v5520
  %v5551 = vpop.f32.mrf.mxu0
  %v5552 = vadd.f32 %v5511, %v5551
  %5553 = vdwg.mxu0
  %5554 = vmatpush.msra.mxu0 0.0
  %5555 = vmatpush.msra.mxu0 0.0
  %5556 = vmatpush.msra.mxu0 0.0
  %5557 = vmatpush.msra.mxu0 0.0
  %5558 = vmatpush.msra.mxu0 0.0
  %5559 = vmatpush.msra.mxu0 0.0
  %5560 = vmatpush.msra.mxu0 0.0
  %5561 = vmatpush.msra.mxu0 0.0
  %5562 = vmatpush.msra.mxu0 0.0
  %5563 = vmatpush.msra.mxu0 %v5526
  %5564 = vmatpush.msra.mxu0 %v5496
  %5565 = vmatpush.msra.mxu0 %v5492
  %5566 = vmatpush.msra.mxu0 %v5488
  %5567 = vmatpush.msra.mxu0 %v5484
  %5568 = vmatpush.msra.mxu0 %v5480
  %5569 = vmatpush.msra.mxu0 %v5476
  %5570 = vmatmul.f32.gmra.mxu0 %v5520
  %v5571 = vpop.f32.mrf.mxu0
  %v5572 = vadd.f32 %v5512, %v5571
  %5573 = vdwg.mxu0
  %5574 = vmatpush.msra.mxu0 0.0
  %5575 = vmatpush.msra.mxu0 0.0
  %5576 = vmatpush.msra.mxu0 0.0
  %5577 = vmatpush.msra.mxu0 0.0
  %5578 = vmatpush.msra.mxu0 0.0
  %5579 = vmatpush.msra.mxu0 0.0
  %5580 = vmatpush.msra.mxu0 0.0
  %5581 = vmatpush.msra.mxu0 0.0
  %5582 = vmatpush.msra.mxu0 0.0
  %5583 = vmatpush.msra.mxu0 %v5529
  %5584 = vmatpush.msra.mxu0 %v5497
  %5585 = vmatpush.msra.mxu0 %v5493
  %5586 = vmatpush.msra.mxu0 %v5489
  %5587 = vmatpush.msra.mxu0 %v5485
  %5588 = vmatpush.msra.mxu0 %v5481
  %5589 = vmatpush.msra.mxu0 %v5477
  %5590 = vmatmul.f32.gmra.mxu0 %v5520
  %v5591 = vpop.f32.mrf.mxu0
  %v5592 = vadd.f32 %v5513, %v5591
  %5593 = vdwg.mxu0
  %5594 = vmatpush.msra.mxu0 0.0
  %5595 = vmatpush.msra.mxu0 0.0
  %5596 = vmatpush.msra.mxu0 0.0
  %5597 = vmatpush.msra.mxu0 0.0
  %5598 = vmatpush.msra.mxu0 0.0
  %5599 = vmatpush.msra.mxu0 0.0
  %5600 = vmatpush.msra.mxu0 0.0
  %5601 = vmatpush.msra.mxu0 0.0
  %5602 = vmatpush.msra.mxu0 0.0
  %5603 = vmatpush.msra.mxu0 %v5532
  %5604 = vmatpush.msra.mxu0 %v5498
  %5605 = vmatpush.msra.mxu0 %v5494
  %5606 = vmatpush.msra.mxu0 %v5490
  %5607 = vmatpush.msra.mxu0 %v5486
  %5608 = vmatpush.msra.mxu0 %v5482
  %5609 = vmatpush.msra.mxu0 %v5478
  %5610 = vmatmul.f32.gmra.mxu0 %v5520
  %v5611 = vpop.f32.mrf.mxu0
  %v5612 = vadd.f32 %v5514, %v5611
  %5613 = vdwg.mxu0
  %v5614 = vxor.u32 %v5552, 2147483648
  %v5615 = vmul.f32 %v5614, 1.442695
  %v5616 = vpow.pop %v5615
  %v5617 = vadd.f32 %v5616, 1.0
  %v5618 = vrcp.pop %v5617
  %v5619 = vmul.f32 %v5617, %v5618
  %v5620 = vsub.f32 1.0, %v5619
  %v5621 = vmul.f32 %v5618, %v5620
  %v5622 = vadd.f32 %v5618, %v5621
  %vm5623 = vweird.f32 %v5617
  %vm5624 = vweird.f32 %v5618
  %vm5625 = vmor %vm5623, %vm5624
  %v5626 = vsel %vm5625, %v5618, %v5622
  %v5627 = vand.u32 2147483647, %v5617
  %vm5628 = vcmp.eq.f32.partialorder %v5627, 8.507059e+37
  %v5629 = vand.u32 %v5617, 2147483648
  %v5630 = vor.u32 1.1754944e-38, %v5629
  %v5631 = vsel %vm5628, %v5630, %v5626
  %v5632 = vmul.f32 1.0, %v5631
  %v5633 = vxor.u32 %v5572, 2147483648
  %v5634 = vmul.f32 %v5633, 1.442695
  %v5635 = vpow.pop %v5634
  %v5636 = vadd.f32 %v5635, 1.0
  %v5637 = vrcp.pop %v5636
  %v5638 = vmul.f32 %v5636, %v5637
  %v5639 = vsub.f32 1.0, %v5638
  %v5640 = vmul.f32 %v5637, %v5639
  %v5641 = vadd.f32 %v5637, %v5640
  %vm5642 = vweird.f32 %v5636
  %vm5643 = vweird.f32 %v5637
  %vm5644 = vmor %vm5642, %vm5643
  %v5645 = vsel %vm5644, %v5637, %v5641
  %v5646 = vand.u32 2147483647, %v5636
  %vm5647 = vcmp.eq.f32.partialorder %v5646, 8.507059e+37
  %v5648 = vand.u32 %v5636, 2147483648
  %v5649 = vor.u32 1.1754944e-38, %v5648
  %v5650 = vsel %vm5647, %v5649, %v5645
  %v5651 = vmul.f32 1.0, %v5650
  %v5652 = vtanh.pop %v5592
  %v5653 = vxor.u32 %v5612, 2147483648
  %v5654 = vmul.f32 %v5653, 1.442695
  %v5655 = vpow.pop %v5654
  %v5656 = vadd.f32 %v5655, 1.0
  %v5657 = vrcp.pop %v5656
  %v5658 = vmul.f32 %v5656, %v5657
  %v5659 = vsub.f32 1.0, %v5658
  %v5660 = vmul.f32 %v5657, %v5659
  %v5661 = vadd.f32 %v5657, %v5660
  %vm5662 = vweird.f32 %v5656
  %vm5663 = vweird.f32 %v5657
  %vm5664 = vmor %vm5662, %vm5663
  %v5665 = vsel %vm5664, %v5657, %v5661
  %v5666 = vand.u32 2147483647, %v5656
  %vm5667 = vcmp.eq.f32.partialorder %v5666, 8.507059e+37
  %v5668 = vand.u32 %v5656, 2147483648
  %v5669 = vor.u32 1.1754944e-38, %v5668
  %v5670 = vsel %vm5667, %v5669, %v5665
  %v5671 = vmul.f32 1.0, %v5670
  %v5672 = vmul.f32 %v5651, %v5471
  %v5673 = vmul.f32 %v5632, %v5652
  %v5674 = vadd.f32 %v5672, %v5673
  %v5675 = vtanh.pop %v5674
  %v5676 = vmul.f32 %v5671, %v5675
  %5677 = vst.msk [vmem:[#allocation3 + $0x34] sm:$0x3] %vm470, %v5676
  %v5678 = vld [vmem:[%s3] sm:$0xff]
  %v5679 = vld [vmem:[%s3 + $0x8] sm:$0xff]
  %v5680 = vld [vmem:[%s3 + $0x10] sm:$0xff]
  %v5681 = vld [vmem:[%s3 + $0x18] sm:$0xff]
  %v5682 = vld [vmem:[%s3 + $0x20] sm:$0xff]
  %v5683 = vld [vmem:[%s3 + $0x28] sm:$0xff]
  %v5684 = vld [vmem:[%s3 + $0x30] sm:$0xff]
  %v5685 = vld [vmem:[%s3 + $0x38] sm:$0xff]
  %v5686 = vld [vmem:[%s3 + $0x40] sm:$0xff]
  %v5687 = vld [vmem:[%s3 + $0x48] sm:$0xff]
  %v5688 = vld [vmem:[%s3 + $0x50] sm:$0xff]
  %v5689 = vld [vmem:[%s3 + $0x58] sm:$0xff]
  %v5690 = vld [vmem:[%s3 + $0x60] sm:$0xff]
  %v5691 = vld [vmem:[%s3 + $0x68] sm:$0xff]
  %v5692 = vld [vmem:[%s3 + $0x70] sm:$0xff]
  %v5693 = vld [vmem:[%s3 + $0x78] sm:$0xff]
  %v5694 = vld [vmem:[%s3 + $0x80] sm:$0xff]
  %v5695 = vld [vmem:[%s3 + $0x88] sm:$0xff]
  %v5696 = vld [vmem:[%s3 + $0x90] sm:$0xff]
  %v5697 = vld [vmem:[%s3 + $0x98] sm:$0xff]
  %v5698 = vld [vmem:[%s3 + $0xa0] sm:$0xff]
  %v5699 = vld [vmem:[%s3 + $0xa8] sm:$0xff]
  %v5700 = vld [vmem:[%s3 + $0xb0] sm:$0xff]
  %v5701 = vld [vmem:[%s3 + $0xb8] sm:$0xff]
  %v5702 = vld [vmem:[%s3 + $0xc0] sm:$0x3]
  %v5703 = vld [vmem:[%s3 + $0xc8] sm:$0x3]
  %v5704 = vld [vmem:[%s3 + $0xd0] sm:$0x3]
  %v5705 = vld [vmem:[%s3 + $0xd8] sm:$0x3]
  %v5706 = vld [vmem:[#allocation2 + $0xc0] sm:$0xc0]
  %v5707 = vld [vmem:[#allocation2 + $0xc8] sm:$0xc0]
  %v5708 = vld [vmem:[#allocation2 + $0xd0] sm:$0xc0]
  %v5709 = vld [vmem:[#allocation2 + $0xd8] sm:$0xc0]
  %v5714 = vrot.slane %v5706, 6
  %v5715 = vrot.slane %v5707, 6
  %v5716 = vrot.slane %v5708, 6
  %v5717 = vrot.slane %v5709, 6
  %v5723 = vsel %vm310, %v5676, 0
  %v5726 = vsel %vm314, %v5702, 0
  %v5729 = vsel %vm314, %v5703, 0
  %v5732 = vsel %vm314, %v5704, 0
  %v5735 = vsel %vm314, %v5705, 0
  %5737 = vmatpush.msra.mxu0 0.0
  %5738 = vmatpush.msra.mxu0 0.0
  %5739 = vmatpush.msra.mxu0 0.0
  %5740 = vmatpush.msra.mxu0 0.0
  %5741 = vmatpush.msra.mxu0 0.0
  %5742 = vmatpush.msra.mxu0 0.0
  %5743 = vmatpush.msra.mxu0 0.0
  %5744 = vmatpush.msra.mxu0 0.0
  %5745 = vmatpush.msra.mxu0 0.0
  %5746 = vmatpush.msra.mxu0 %v5726
  %5747 = vmatpush.msra.mxu0 %v5698
  %5748 = vmatpush.msra.mxu0 %v5694
  %5749 = vmatpush.msra.mxu0 %v5690
  %5750 = vmatpush.msra.mxu0 %v5686
  %5751 = vmatpush.msra.mxu0 %v5682
  %5752 = vmatpush.msra.mxu0 %v5678
  %5753 = vmatmul.f32.gmra.mxu0 %v5723
  %v5754 = vpop.f32.mrf.mxu0
  %v5755 = vadd.f32 %v5714, %v5754
  %5756 = vdwg.mxu0
  %5757 = vmatpush.msra.mxu0 0.0
  %5758 = vmatpush.msra.mxu0 0.0
  %5759 = vmatpush.msra.mxu0 0.0
  %5760 = vmatpush.msra.mxu0 0.0
  %5761 = vmatpush.msra.mxu0 0.0
  %5762 = vmatpush.msra.mxu0 0.0
  %5763 = vmatpush.msra.mxu0 0.0
  %5764 = vmatpush.msra.mxu0 0.0
  %5765 = vmatpush.msra.mxu0 0.0
  %5766 = vmatpush.msra.mxu0 %v5729
  %5767 = vmatpush.msra.mxu0 %v5699
  %5768 = vmatpush.msra.mxu0 %v5695
  %5769 = vmatpush.msra.mxu0 %v5691
  %5770 = vmatpush.msra.mxu0 %v5687
  %5771 = vmatpush.msra.mxu0 %v5683
  %5772 = vmatpush.msra.mxu0 %v5679
  %5773 = vmatmul.f32.gmra.mxu0 %v5723
  %v5774 = vpop.f32.mrf.mxu0
  %v5775 = vadd.f32 %v5715, %v5774
  %5776 = vdwg.mxu0
  %5777 = vmatpush.msra.mxu0 0.0
  %5778 = vmatpush.msra.mxu0 0.0
  %5779 = vmatpush.msra.mxu0 0.0
  %5780 = vmatpush.msra.mxu0 0.0
  %5781 = vmatpush.msra.mxu0 0.0
  %5782 = vmatpush.msra.mxu0 0.0
  %5783 = vmatpush.msra.mxu0 0.0
  %5784 = vmatpush.msra.mxu0 0.0
  %5785 = vmatpush.msra.mxu0 0.0
  %5786 = vmatpush.msra.mxu0 %v5732
  %5787 = vmatpush.msra.mxu0 %v5700
  %5788 = vmatpush.msra.mxu0 %v5696
  %5789 = vmatpush.msra.mxu0 %v5692
  %5790 = vmatpush.msra.mxu0 %v5688
  %5791 = vmatpush.msra.mxu0 %v5684
  %5792 = vmatpush.msra.mxu0 %v5680
  %5793 = vmatmul.f32.gmra.mxu0 %v5723
  %v5794 = vpop.f32.mrf.mxu0
  %v5795 = vadd.f32 %v5716, %v5794
  %5796 = vdwg.mxu0
  %5797 = vmatpush.msra.mxu0 0.0
  %5798 = vmatpush.msra.mxu0 0.0
  %5799 = vmatpush.msra.mxu0 0.0
  %5800 = vmatpush.msra.mxu0 0.0
  %5801 = vmatpush.msra.mxu0 0.0
  %5802 = vmatpush.msra.mxu0 0.0
  %5803 = vmatpush.msra.mxu0 0.0
  %5804 = vmatpush.msra.mxu0 0.0
  %5805 = vmatpush.msra.mxu0 0.0
  %5806 = vmatpush.msra.mxu0 %v5735
  %5807 = vmatpush.msra.mxu0 %v5701
  %5808 = vmatpush.msra.mxu0 %v5697
  %5809 = vmatpush.msra.mxu0 %v5693
  %5810 = vmatpush.msra.mxu0 %v5689
  %5811 = vmatpush.msra.mxu0 %v5685
  %5812 = vmatpush.msra.mxu0 %v5681
  %5813 = vmatmul.f32.gmra.mxu0 %v5723
  %v5814 = vpop.f32.mrf.mxu0
  %v5815 = vadd.f32 %v5717, %v5814
  %5816 = vdwg.mxu0
  %v5817 = vxor.u32 %v5755, 2147483648
  %v5818 = vmul.f32 %v5817, 1.442695
  %v5819 = vpow.pop %v5818
  %v5820 = vadd.f32 %v5819, 1.0
  %v5821 = vrcp.pop %v5820
  %v5822 = vmul.f32 %v5820, %v5821
  %v5823 = vsub.f32 1.0, %v5822
  %v5824 = vmul.f32 %v5821, %v5823
  %v5825 = vadd.f32 %v5821, %v5824
  %vm5826 = vweird.f32 %v5820
  %vm5827 = vweird.f32 %v5821
  %vm5828 = vmor %vm5826, %vm5827
  %v5829 = vsel %vm5828, %v5821, %v5825
  %v5830 = vand.u32 2147483647, %v5820
  %vm5831 = vcmp.eq.f32.partialorder %v5830, 8.507059e+37
  %v5832 = vand.u32 %v5820, 2147483648
  %v5833 = vor.u32 1.1754944e-38, %v5832
  %v5834 = vsel %vm5831, %v5833, %v5829
  %v5835 = vmul.f32 1.0, %v5834
  %v5836 = vxor.u32 %v5775, 2147483648
  %v5837 = vmul.f32 %v5836, 1.442695
  %v5838 = vpow.pop %v5837
  %v5839 = vadd.f32 %v5838, 1.0
  %v5840 = vrcp.pop %v5839
  %v5841 = vmul.f32 %v5839, %v5840
  %v5842 = vsub.f32 1.0, %v5841
  %v5843 = vmul.f32 %v5840, %v5842
  %v5844 = vadd.f32 %v5840, %v5843
  %vm5845 = vweird.f32 %v5839
  %vm5846 = vweird.f32 %v5840
  %vm5847 = vmor %vm5845, %vm5846
  %v5848 = vsel %vm5847, %v5840, %v5844
  %v5849 = vand.u32 2147483647, %v5839
  %vm5850 = vcmp.eq.f32.partialorder %v5849, 8.507059e+37
  %v5851 = vand.u32 %v5839, 2147483648
  %v5852 = vor.u32 1.1754944e-38, %v5851
  %v5853 = vsel %vm5850, %v5852, %v5848
  %v5854 = vmul.f32 1.0, %v5853
  %v5855 = vtanh.pop %v5795
  %v5856 = vxor.u32 %v5815, 2147483648
  %v5857 = vmul.f32 %v5856, 1.442695
  %v5858 = vpow.pop %v5857
  %v5859 = vadd.f32 %v5858, 1.0
  %v5860 = vrcp.pop %v5859
  %v5861 = vmul.f32 %v5859, %v5860
  %v5862 = vsub.f32 1.0, %v5861
  %v5863 = vmul.f32 %v5860, %v5862
  %v5864 = vadd.f32 %v5860, %v5863
  %vm5865 = vweird.f32 %v5859
  %vm5866 = vweird.f32 %v5860
  %vm5867 = vmor %vm5865, %vm5866
  %v5868 = vsel %vm5867, %v5860, %v5864
  %v5869 = vand.u32 2147483647, %v5859
  %vm5870 = vcmp.eq.f32.partialorder %v5869, 8.507059e+37
  %v5871 = vand.u32 %v5859, 2147483648
  %v5872 = vor.u32 1.1754944e-38, %v5871
  %v5873 = vsel %vm5870, %v5872, %v5868
  %v5874 = vmul.f32 1.0, %v5873
  %v5875 = vmul.f32 %v5854, %v5674
  %v5876 = vmul.f32 %v5835, %v5855
  %v5877 = vadd.f32 %v5875, %v5876
  %v5878 = vtanh.pop %v5877
  %v5879 = vmul.f32 %v5874, %v5878
  %5880 = vst.msk [vmem:[#allocation3 + $0x36] sm:$0x3] %vm470, %v5879
  %v5881 = vld [vmem:[%s3] sm:$0xff]
  %v5882 = vld [vmem:[%s3 + $0x8] sm:$0xff]
  %v5883 = vld [vmem:[%s3 + $0x10] sm:$0xff]
  %v5884 = vld [vmem:[%s3 + $0x18] sm:$0xff]
  %v5885 = vld [vmem:[%s3 + $0x20] sm:$0xff]
  %v5886 = vld [vmem:[%s3 + $0x28] sm:$0xff]
  %v5887 = vld [vmem:[%s3 + $0x30] sm:$0xff]
  %v5888 = vld [vmem:[%s3 + $0x38] sm:$0xff]
  %v5889 = vld [vmem:[%s3 + $0x40] sm:$0xff]
  %v5890 = vld [vmem:[%s3 + $0x48] sm:$0xff]
  %v5891 = vld [vmem:[%s3 + $0x50] sm:$0xff]
  %v5892 = vld [vmem:[%s3 + $0x58] sm:$0xff]
  %v5893 = vld [vmem:[%s3 + $0x60] sm:$0xff]
  %v5894 = vld [vmem:[%s3 + $0x68] sm:$0xff]
  %v5895 = vld [vmem:[%s3 + $0x70] sm:$0xff]
  %v5896 = vld [vmem:[%s3 + $0x78] sm:$0xff]
  %v5897 = vld [vmem:[%s3 + $0x80] sm:$0xff]
  %v5898 = vld [vmem:[%s3 + $0x88] sm:$0xff]
  %v5899 = vld [vmem:[%s3 + $0x90] sm:$0xff]
  %v5900 = vld [vmem:[%s3 + $0x98] sm:$0xff]
  %v5901 = vld [vmem:[%s3 + $0xa0] sm:$0xff]
  %v5902 = vld [vmem:[%s3 + $0xa8] sm:$0xff]
  %v5903 = vld [vmem:[%s3 + $0xb0] sm:$0xff]
  %v5904 = vld [vmem:[%s3 + $0xb8] sm:$0xff]
  %v5905 = vld [vmem:[%s3 + $0xc0] sm:$0x3]
  %v5906 = vld [vmem:[%s3 + $0xc8] sm:$0x3]
  %v5907 = vld [vmem:[%s3 + $0xd0] sm:$0x3]
  %v5908 = vld [vmem:[%s3 + $0xd8] sm:$0x3]
  %v5909 = vld [vmem:[#allocation2 + $0xe0] sm:$0x3]
  %v5910 = vld [vmem:[#allocation2 + $0xe8] sm:$0x3]
  %v5911 = vld [vmem:[#allocation2 + $0xf0] sm:$0x3]
  %v5912 = vld [vmem:[#allocation2 + $0xf8] sm:$0x3]
  %v5914 = vsel %vm310, %v5879, 0
  %v5917 = vsel %vm314, %v5905, 0
  %v5920 = vsel %vm314, %v5906, 0
  %v5923 = vsel %vm314, %v5907, 0
  %v5926 = vsel %vm314, %v5908, 0
  %5928 = vmatpush.msra.mxu0 0.0
  %5929 = vmatpush.msra.mxu0 0.0
  %5930 = vmatpush.msra.mxu0 0.0
  %5931 = vmatpush.msra.mxu0 0.0
  %5932 = vmatpush.msra.mxu0 0.0
  %5933 = vmatpush.msra.mxu0 0.0
  %5934 = vmatpush.msra.mxu0 0.0
  %5935 = vmatpush.msra.mxu0 0.0
  %5936 = vmatpush.msra.mxu0 0.0
  %5937 = vmatpush.msra.mxu0 %v5917
  %5938 = vmatpush.msra.mxu0 %v5901
  %5939 = vmatpush.msra.mxu0 %v5897
  %5940 = vmatpush.msra.mxu0 %v5893
  %5941 = vmatpush.msra.mxu0 %v5889
  %5942 = vmatpush.msra.mxu0 %v5885
  %5943 = vmatpush.msra.mxu0 %v5881
  %5944 = vmatmul.f32.gmra.mxu0 %v5914
  %v5945 = vpop.f32.mrf.mxu0
  %v5946 = vadd.f32 %v5909, %v5945
  %5947 = vdwg.mxu0
  %5948 = vmatpush.msra.mxu0 0.0
  %5949 = vmatpush.msra.mxu0 0.0
  %5950 = vmatpush.msra.mxu0 0.0
  %5951 = vmatpush.msra.mxu0 0.0
  %5952 = vmatpush.msra.mxu0 0.0
  %5953 = vmatpush.msra.mxu0 0.0
  %5954 = vmatpush.msra.mxu0 0.0
  %5955 = vmatpush.msra.mxu0 0.0
  %5956 = vmatpush.msra.mxu0 0.0
  %5957 = vmatpush.msra.mxu0 %v5920
  %5958 = vmatpush.msra.mxu0 %v5902
  %5959 = vmatpush.msra.mxu0 %v5898
  %5960 = vmatpush.msra.mxu0 %v5894
  %5961 = vmatpush.msra.mxu0 %v5890
  %5962 = vmatpush.msra.mxu0 %v5886
  %5963 = vmatpush.msra.mxu0 %v5882
  %5964 = vmatmul.f32.gmra.mxu0 %v5914
  %v5965 = vpop.f32.mrf.mxu0
  %v5966 = vadd.f32 %v5910, %v5965
  %5967 = vdwg.mxu0
  %5968 = vmatpush.msra.mxu0 0.0
  %5969 = vmatpush.msra.mxu0 0.0
  %5970 = vmatpush.msra.mxu0 0.0
  %5971 = vmatpush.msra.mxu0 0.0
  %5972 = vmatpush.msra.mxu0 0.0
  %5973 = vmatpush.msra.mxu0 0.0
  %5974 = vmatpush.msra.mxu0 0.0
  %5975 = vmatpush.msra.mxu0 0.0
  %5976 = vmatpush.msra.mxu0 0.0
  %5977 = vmatpush.msra.mxu0 %v5923
  %5978 = vmatpush.msra.mxu0 %v5903
  %5979 = vmatpush.msra.mxu0 %v5899
  %5980 = vmatpush.msra.mxu0 %v5895
  %5981 = vmatpush.msra.mxu0 %v5891
  %5982 = vmatpush.msra.mxu0 %v5887
  %5983 = vmatpush.msra.mxu0 %v5883
  %5984 = vmatmul.f32.gmra.mxu0 %v5914
  %v5985 = vpop.f32.mrf.mxu0
  %v5986 = vadd.f32 %v5911, %v5985
  %5987 = vdwg.mxu0
  %5988 = vmatpush.msra.mxu0 0.0
  %5989 = vmatpush.msra.mxu0 0.0
  %5990 = vmatpush.msra.mxu0 0.0
  %5991 = vmatpush.msra.mxu0 0.0
  %5992 = vmatpush.msra.mxu0 0.0
  %5993 = vmatpush.msra.mxu0 0.0
  %5994 = vmatpush.msra.mxu0 0.0
  %5995 = vmatpush.msra.mxu0 0.0
  %5996 = vmatpush.msra.mxu0 0.0
  %5997 = vmatpush.msra.mxu0 %v5926
  %5998 = vmatpush.msra.mxu0 %v5904
  %5999 = vmatpush.msra.mxu0 %v5900
  %6000 = vmatpush.msra.mxu0 %v5896
  %6001 = vmatpush.msra.mxu0 %v5892
  %6002 = vmatpush.msra.mxu0 %v5888
  %6003 = vmatpush.msra.mxu0 %v5884
  %6004 = vmatmul.f32.gmra.mxu0 %v5914
  %v6005 = vpop.f32.mrf.mxu0
  %v6006 = vadd.f32 %v5912, %v6005
  %6007 = vdwg.mxu0
  %v6008 = vxor.u32 %v5946, 2147483648
  %v6009 = vmul.f32 %v6008, 1.442695
  %v6010 = vpow.pop %v6009
  %v6011 = vadd.f32 %v6010, 1.0
  %v6012 = vrcp.pop %v6011
  %v6013 = vmul.f32 %v6011, %v6012
  %v6014 = vsub.f32 1.0, %v6013
  %v6015 = vmul.f32 %v6012, %v6014
  %v6016 = vadd.f32 %v6012, %v6015
  %vm6017 = vweird.f32 %v6011
  %vm6018 = vweird.f32 %v6012
  %vm6019 = vmor %vm6017, %vm6018
  %v6020 = vsel %vm6019, %v6012, %v6016
  %v6021 = vand.u32 2147483647, %v6011
  %vm6022 = vcmp.eq.f32.partialorder %v6021, 8.507059e+37
  %v6023 = vand.u32 %v6011, 2147483648
  %v6024 = vor.u32 1.1754944e-38, %v6023
  %v6025 = vsel %vm6022, %v6024, %v6020
  %v6026 = vmul.f32 1.0, %v6025
  %v6027 = vxor.u32 %v5966, 2147483648
  %v6028 = vmul.f32 %v6027, 1.442695
  %v6029 = vpow.pop %v6028
  %v6030 = vadd.f32 %v6029, 1.0
  %v6031 = vrcp.pop %v6030
  %v6032 = vmul.f32 %v6030, %v6031
  %v6033 = vsub.f32 1.0, %v6032
  %v6034 = vmul.f32 %v6031, %v6033
  %v6035 = vadd.f32 %v6031, %v6034
  %vm6036 = vweird.f32 %v6030
  %vm6037 = vweird.f32 %v6031
  %vm6038 = vmor %vm6036, %vm6037
  %v6039 = vsel %vm6038, %v6031, %v6035
  %v6040 = vand.u32 2147483647, %v6030
  %vm6041 = vcmp.eq.f32.partialorder %v6040, 8.507059e+37
  %v6042 = vand.u32 %v6030, 2147483648
  %v6043 = vor.u32 1.1754944e-38, %v6042
  %v6044 = vsel %vm6041, %v6043, %v6039
  %v6045 = vmul.f32 1.0, %v6044
  %v6046 = vtanh.pop %v5986
  %v6047 = vxor.u32 %v6006, 2147483648
  %v6048 = vmul.f32 %v6047, 1.442695
  %v6049 = vpow.pop %v6048
  %v6050 = vadd.f32 %v6049, 1.0
  %v6051 = vrcp.pop %v6050
  %v6052 = vmul.f32 %v6050, %v6051
  %v6053 = vsub.f32 1.0, %v6052
  %v6054 = vmul.f32 %v6051, %v6053
  %v6055 = vadd.f32 %v6051, %v6054
  %vm6056 = vweird.f32 %v6050
  %vm6057 = vweird.f32 %v6051
  %vm6058 = vmor %vm6056, %vm6057
  %v6059 = vsel %vm6058, %v6051, %v6055
  %v6060 = vand.u32 2147483647, %v6050
  %vm6061 = vcmp.eq.f32.partialorder %v6060, 8.507059e+37
  %v6062 = vand.u32 %v6050, 2147483648
  %v6063 = vor.u32 1.1754944e-38, %v6062
  %v6064 = vsel %vm6061, %v6063, %v6059
  %v6065 = vmul.f32 1.0, %v6064
  %v6066 = vmul.f32 %v6045, %v5877
  %v6067 = vmul.f32 %v6026, %v6046
  %v6068 = vadd.f32 %v6066, %v6067
  %v6069 = vtanh.pop %v6068
  %v6070 = vmul.f32 %v6065, %v6069
  %6071 = vst.msk [vmem:[#allocation3 + $0x38] sm:$0x3] %vm470, %v6070
  %v6072 = vld [vmem:[%s3] sm:$0xff]
  %v6073 = vld [vmem:[%s3 + $0x8] sm:$0xff]
  %v6074 = vld [vmem:[%s3 + $0x10] sm:$0xff]
  %v6075 = vld [vmem:[%s3 + $0x18] sm:$0xff]
  %v6076 = vld [vmem:[%s3 + $0x20] sm:$0xff]
  %v6077 = vld [vmem:[%s3 + $0x28] sm:$0xff]
  %v6078 = vld [vmem:[%s3 + $0x30] sm:$0xff]
  %v6079 = vld [vmem:[%s3 + $0x38] sm:$0xff]
  %v6080 = vld [vmem:[%s3 + $0x40] sm:$0xff]
  %v6081 = vld [vmem:[%s3 + $0x48] sm:$0xff]
  %v6082 = vld [vmem:[%s3 + $0x50] sm:$0xff]
  %v6083 = vld [vmem:[%s3 + $0x58] sm:$0xff]
  %v6084 = vld [vmem:[%s3 + $0x60] sm:$0xff]
  %v6085 = vld [vmem:[%s3 + $0x68] sm:$0xff]
  %v6086 = vld [vmem:[%s3 + $0x70] sm:$0xff]
  %v6087 = vld [vmem:[%s3 + $0x78] sm:$0xff]
  %v6088 = vld [vmem:[%s3 + $0x80] sm:$0xff]
  %v6089 = vld [vmem:[%s3 + $0x88] sm:$0xff]
  %v6090 = vld [vmem:[%s3 + $0x90] sm:$0xff]
  %v6091 = vld [vmem:[%s3 + $0x98] sm:$0xff]
  %v6092 = vld [vmem:[%s3 + $0xa0] sm:$0xff]
  %v6093 = vld [vmem:[%s3 + $0xa8] sm:$0xff]
  %v6094 = vld [vmem:[%s3 + $0xb0] sm:$0xff]
  %v6095 = vld [vmem:[%s3 + $0xb8] sm:$0xff]
  %v6096 = vld [vmem:[%s3 + $0xc0] sm:$0x3]
  %v6097 = vld [vmem:[%s3 + $0xc8] sm:$0x3]
  %v6098 = vld [vmem:[%s3 + $0xd0] sm:$0x3]
  %v6099 = vld [vmem:[%s3 + $0xd8] sm:$0x3]
  %v6100 = vld [vmem:[#allocation2 + $0xe0] sm:$0xc]
  %v6101 = vld [vmem:[#allocation2 + $0xe8] sm:$0xc]
  %v6102 = vld [vmem:[#allocation2 + $0xf0] sm:$0xc]
  %v6103 = vld [vmem:[#allocation2 + $0xf8] sm:$0xc]
  %v6108 = vrot.slane %v6100, 2
  %v6109 = vrot.slane %v6101, 2
  %v6110 = vrot.slane %v6102, 2
  %v6111 = vrot.slane %v6103, 2
  %v6117 = vsel %vm310, %v6070, 0
  %v6120 = vsel %vm314, %v6096, 0
  %v6123 = vsel %vm314, %v6097, 0
  %v6126 = vsel %vm314, %v6098, 0
  %v6129 = vsel %vm314, %v6099, 0
  %6131 = vmatpush.msra.mxu0 0.0
  %6132 = vmatpush.msra.mxu0 0.0
  %6133 = vmatpush.msra.mxu0 0.0
  %6134 = vmatpush.msra.mxu0 0.0
  %6135 = vmatpush.msra.mxu0 0.0
  %6136 = vmatpush.msra.mxu0 0.0
  %6137 = vmatpush.msra.mxu0 0.0
  %6138 = vmatpush.msra.mxu0 0.0
  %6139 = vmatpush.msra.mxu0 0.0
  %6140 = vmatpush.msra.mxu0 %v6120
  %6141 = vmatpush.msra.mxu0 %v6092
  %6142 = vmatpush.msra.mxu0 %v6088
  %6143 = vmatpush.msra.mxu0 %v6084
  %6144 = vmatpush.msra.mxu0 %v6080
  %6145 = vmatpush.msra.mxu0 %v6076
  %6146 = vmatpush.msra.mxu0 %v6072
  %6147 = vmatmul.f32.gmra.mxu0 %v6117
  %v6148 = vpop.f32.mrf.mxu0
  %v6149 = vadd.f32 %v6108, %v6148
  %6150 = vdwg.mxu0
  %6151 = vmatpush.msra.mxu0 0.0
  %6152 = vmatpush.msra.mxu0 0.0
  %6153 = vmatpush.msra.mxu0 0.0
  %6154 = vmatpush.msra.mxu0 0.0
  %6155 = vmatpush.msra.mxu0 0.0
  %6156 = vmatpush.msra.mxu0 0.0
  %6157 = vmatpush.msra.mxu0 0.0
  %6158 = vmatpush.msra.mxu0 0.0
  %6159 = vmatpush.msra.mxu0 0.0
  %6160 = vmatpush.msra.mxu0 %v6123
  %6161 = vmatpush.msra.mxu0 %v6093
  %6162 = vmatpush.msra.mxu0 %v6089
  %6163 = vmatpush.msra.mxu0 %v6085
  %6164 = vmatpush.msra.mxu0 %v6081
  %6165 = vmatpush.msra.mxu0 %v6077
  %6166 = vmatpush.msra.mxu0 %v6073
  %6167 = vmatmul.f32.gmra.mxu0 %v6117
  %v6168 = vpop.f32.mrf.mxu0
  %v6169 = vadd.f32 %v6109, %v6168
  %6170 = vdwg.mxu0
  %6171 = vmatpush.msra.mxu0 0.0
  %6172 = vmatpush.msra.mxu0 0.0
  %6173 = vmatpush.msra.mxu0 0.0
  %6174 = vmatpush.msra.mxu0 0.0
  %6175 = vmatpush.msra.mxu0 0.0
  %6176 = vmatpush.msra.mxu0 0.0
  %6177 = vmatpush.msra.mxu0 0.0
  %6178 = vmatpush.msra.mxu0 0.0
  %6179 = vmatpush.msra.mxu0 0.0
  %6180 = vmatpush.msra.mxu0 %v6126
  %6181 = vmatpush.msra.mxu0 %v6094
  %6182 = vmatpush.msra.mxu0 %v6090
  %6183 = vmatpush.msra.mxu0 %v6086
  %6184 = vmatpush.msra.mxu0 %v6082
  %6185 = vmatpush.msra.mxu0 %v6078
  %6186 = vmatpush.msra.mxu0 %v6074
  %6187 = vmatmul.f32.gmra.mxu0 %v6117
  %v6188 = vpop.f32.mrf.mxu0
  %v6189 = vadd.f32 %v6110, %v6188
  %6190 = vdwg.mxu0
  %6191 = vmatpush.msra.mxu0 0.0
  %6192 = vmatpush.msra.mxu0 0.0
  %6193 = vmatpush.msra.mxu0 0.0
  %6194 = vmatpush.msra.mxu0 0.0
  %6195 = vmatpush.msra.mxu0 0.0
  %6196 = vmatpush.msra.mxu0 0.0
  %6197 = vmatpush.msra.mxu0 0.0
  %6198 = vmatpush.msra.mxu0 0.0
  %6199 = vmatpush.msra.mxu0 0.0
  %6200 = vmatpush.msra.mxu0 %v6129
  %6201 = vmatpush.msra.mxu0 %v6095
  %6202 = vmatpush.msra.mxu0 %v6091
  %6203 = vmatpush.msra.mxu0 %v6087
  %6204 = vmatpush.msra.mxu0 %v6083
  %6205 = vmatpush.msra.mxu0 %v6079
  %6206 = vmatpush.msra.mxu0 %v6075
  %6207 = vmatmul.f32.gmra.mxu0 %v6117
  %v6208 = vpop.f32.mrf.mxu0
  %v6209 = vadd.f32 %v6111, %v6208
  %6210 = vdwg.mxu0
  %v6211 = vxor.u32 %v6149, 2147483648
  %v6212 = vmul.f32 %v6211, 1.442695
  %v6213 = vpow.pop %v6212
  %v6214 = vadd.f32 %v6213, 1.0
  %v6215 = vrcp.pop %v6214
  %v6216 = vmul.f32 %v6214, %v6215
  %v6217 = vsub.f32 1.0, %v6216
  %v6218 = vmul.f32 %v6215, %v6217
  %v6219 = vadd.f32 %v6215, %v6218
  %vm6220 = vweird.f32 %v6214
  %vm6221 = vweird.f32 %v6215
  %vm6222 = vmor %vm6220, %vm6221
  %v6223 = vsel %vm6222, %v6215, %v6219
  %v6224 = vand.u32 2147483647, %v6214
  %vm6225 = vcmp.eq.f32.partialorder %v6224, 8.507059e+37
  %v6226 = vand.u32 %v6214, 2147483648
  %v6227 = vor.u32 1.1754944e-38, %v6226
  %v6228 = vsel %vm6225, %v6227, %v6223
  %v6229 = vmul.f32 1.0, %v6228
  %v6230 = vxor.u32 %v6169, 2147483648
  %v6231 = vmul.f32 %v6230, 1.442695
  %v6232 = vpow.pop %v6231
  %v6233 = vadd.f32 %v6232, 1.0
  %v6234 = vrcp.pop %v6233
  %v6235 = vmul.f32 %v6233, %v6234
  %v6236 = vsub.f32 1.0, %v6235
  %v6237 = vmul.f32 %v6234, %v6236
  %v6238 = vadd.f32 %v6234, %v6237
  %vm6239 = vweird.f32 %v6233
  %vm6240 = vweird.f32 %v6234
  %vm6241 = vmor %vm6239, %vm6240
  %v6242 = vsel %vm6241, %v6234, %v6238
  %v6243 = vand.u32 2147483647, %v6233
  %vm6244 = vcmp.eq.f32.partialorder %v6243, 8.507059e+37
  %v6245 = vand.u32 %v6233, 2147483648
  %v6246 = vor.u32 1.1754944e-38, %v6245
  %v6247 = vsel %vm6244, %v6246, %v6242
  %v6248 = vmul.f32 1.0, %v6247
  %v6249 = vtanh.pop %v6189
  %v6250 = vxor.u32 %v6209, 2147483648
  %v6251 = vmul.f32 %v6250, 1.442695
  %v6252 = vpow.pop %v6251
  %v6253 = vadd.f32 %v6252, 1.0
  %v6254 = vrcp.pop %v6253
  %v6255 = vmul.f32 %v6253, %v6254
  %v6256 = vsub.f32 1.0, %v6255
  %v6257 = vmul.f32 %v6254, %v6256
  %v6258 = vadd.f32 %v6254, %v6257
  %vm6259 = vweird.f32 %v6253
  %vm6260 = vweird.f32 %v6254
  %vm6261 = vmor %vm6259, %vm6260
  %v6262 = vsel %vm6261, %v6254, %v6258
  %v6263 = vand.u32 2147483647, %v6253
  %vm6264 = vcmp.eq.f32.partialorder %v6263, 8.507059e+37
  %v6265 = vand.u32 %v6253, 2147483648
  %v6266 = vor.u32 1.1754944e-38, %v6265
  %v6267 = vsel %vm6264, %v6266, %v6262
  %v6268 = vmul.f32 1.0, %v6267
  %v6269 = vmul.f32 %v6248, %v6068
  %v6270 = vmul.f32 %v6229, %v6249
  %v6271 = vadd.f32 %v6269, %v6270
  %v6272 = vtanh.pop %v6271
  %v6273 = vmul.f32 %v6268, %v6272
  %6274 = vst.msk [vmem:[#allocation3 + $0x3a] sm:$0x3] %vm470, %v6273
  %v6275 = vld [vmem:[%s4] sm:$0xff]
  %v6276 = vld [vmem:[%s4 + $0x8] sm:$0xff]
  %v6277 = vld [vmem:[%s4 + $0x10] sm:$0xff]
  %v6278 = vld [vmem:[%s4 + $0x18] sm:$0xff]
  %v6279 = vld [vmem:[%s4 + $0x20] sm:$0xff]
  %v6280 = vld [vmem:[%s4 + $0x28] sm:$0xff]
  %v6281 = vld [vmem:[%s4 + $0x30] sm:$0xff]
  %v6282 = vld [vmem:[%s4 + $0x38] sm:$0xff]
  %v6283 = vld [vmem:[%s4 + $0x40] sm:$0xff]
  %v6284 = vld [vmem:[%s4 + $0x48] sm:$0xff]
  %v6285 = vld [vmem:[%s4 + $0x50] sm:$0xff]
  %v6286 = vld [vmem:[%s4 + $0x58] sm:$0xff]
  %v6287 = vld [vmem:[%s4 + $0x60] sm:$0xff]
  %v6288 = vld [vmem:[%s4 + $0x68] sm:$0xff]
  %v6289 = vld [vmem:[%s4 + $0x70] sm:$0xf]
  %v6290 = vld [vmem:[%s4 + $0x78] sm:$0xf]
  %v6291 = vld [vmem:[#allocation3] sm:$0xff]
  %v6292 = vld [vmem:[#allocation3 + $0x8] sm:$0xff]
  %v6293 = vld [vmem:[#allocation3 + $0x10] sm:$0xff]
  %v6294 = vld [vmem:[#allocation3 + $0x18] sm:$0xff]
  %v6295 = vld [vmem:[#allocation3 + $0x20] sm:$0xff]
  %v6296 = vld [vmem:[#allocation3 + $0x28] sm:$0xff]
  %v6297 = vld [vmem:[#allocation3 + $0x30] sm:$0xff]
  %v6298 = vld [vmem:[#allocation3 + $0x38] sm:$0x1f]
  %vm6299 = vcmask 498688
  %v6301 = vsel %vm6299, %v6275, 0
  %v6304 = vsel %vm6299, %v6277, 0
  %v6307 = vsel %vm6299, %v6279, 0
  %v6310 = vsel %vm6299, %v6281, 0
  %v6313 = vsel %vm6299, %v6283, 0
  %v6316 = vsel %vm6299, %v6285, 0
  %v6319 = vsel %vm6299, %v6287, 0
  %v6322 = vsel %vm6299, %v6289, 0
  %vm6324 = vcmask 1044480
  %v6326 = vsel %vm6324, %v6298, 0
  %6328 = vmatpush.msra.mxu0 0.0
  %6329 = vmatpush.msra.mxu0 0.0
  %6330 = vmatpush.msra.mxu0 0.0
  %6331 = vmatpush.msra.mxu0 0.0
  %6332 = vmatpush.msra.mxu0 0.0
  %6333 = vmatpush.msra.mxu0 0.0
  %6334 = vmatpush.msra.mxu0 0.0
  %6335 = vmatpush.msra.mxu0 0.0
  %6336 = vmatpush.msra.mxu0 %v6326
  %6337 = vmatpush.msra.mxu0 %v6297
  %6338 = vmatpush.msra.mxu0 %v6296
  %6339 = vmatpush.msra.mxu0 %v6295
  %6340 = vmatpush.msra.mxu0 %v6294
  %6341 = vmatpush.msra.mxu0 %v6293
  %6342 = vmatpush.msra.mxu0 %v6292
  %6343 = vmatpush.msra.mxu0 %v6291
  %6344 = vmatmul.f32.gmra.mxu0 %v6301
  %v6345 = vpop.f32.mrf.mxu0
  %v6346 = vadd.f32 0.0, %v6345
  %6347 = vmatmul.f32.gmra.mxu0 %v6304
  %v6348 = vpop.f32.mrf.mxu0
  %v6349 = vadd.f32 0.0, %v6348
  %6350 = vmatmul.f32.gmra.mxu0 %v6307
  %v6351 = vpop.f32.mrf.mxu0
  %v6352 = vadd.f32 0.0, %v6351
  %6353 = vmatmul.f32.gmra.mxu0 %v6310
  %v6354 = vpop.f32.mrf.mxu0
  %v6355 = vadd.f32 0.0, %v6354
  %6356 = vmatmul.f32.gmra.mxu0 %v6313
  %v6357 = vpop.f32.mrf.mxu0
  %v6358 = vadd.f32 0.0, %v6357
  %6359 = vmatmul.f32.gmra.mxu0 %v6316
  %v6360 = vpop.f32.mrf.mxu0
  %v6361 = vadd.f32 0.0, %v6360
  %6362 = vmatmul.f32.gmra.mxu0 %v6319
  %v6363 = vpop.f32.mrf.mxu0
  %v6364 = vadd.f32 0.0, %v6363
  %6365 = vmatmul.f32.gmra.mxu0 %v6322
  %v6366 = vpop.f32.mrf.mxu0
  %v6367 = vadd.f32 0.0, %v6366
  %6368 = vdwg.mxu0
  %v6369 = vsel %vm310, %v6346, -inf
  %v6370 = vsel %vm310, %v6349, -inf
  %v6371 = vsel %vm310, %v6352, -inf
  %v6372 = vsel %vm310, %v6355, -inf
  %v6373 = vsel %vm310, %v6358, -inf
  %v6374 = vmax.f32 %v6369, %v6373
  %v6375 = vsel %vm310, %v6361, -inf
  %v6376 = vmax.f32 %v6370, %v6375
  %v6377 = vsel %vm310, %v6364, -inf
  %v6378 = vmax.f32 %v6371, %v6377
  %vm6379 = vcmask 404480
  %v6380 = vsel %vm6379, %v6367, -inf
  %v6381 = vmax.f32 %v6372, %v6380
  %v6382 = vmax.f32 %v6374, %v6376
  %v6383 = vmax.f32 %v6378, %v6381
  %v6384 = vmax.f32 %v6382, %v6383
  %v6385 = vrot.slane %v6384, 4
  %v6386 = vmax.f32 %v6384, %v6385
  %v6387 = vrot.slane %v6386, 2
  %v6388 = vmax.f32 %v6386, %v6387
  %v6389 = vrot.slane %v6388, 1
  %v6390 = vmax.f32 %v6388, %v6389
  %v6391 = vsub.f32 %v6346, %v6390
  %v6392 = vsub.f32 %v6349, %v6390
  %v6393 = vsub.f32 %v6352, %v6390
  %v6394 = vsub.f32 %v6355, %v6390
  %v6395 = vsub.f32 %v6358, %v6390
  %v6396 = vsub.f32 %v6361, %v6390
  %v6397 = vsub.f32 %v6364, %v6390
  %v6398 = vsub.f32 %v6367, %v6390
  %v6399 = vmul.f32 %v6391, 1.442695
  %v6400 = vpow.pop %v6399
  %v6401 = vmul.f32 %v6392, 1.442695
  %v6402 = vpow.pop %v6401
  %v6403 = vmul.f32 %v6393, 1.442695
  %v6404 = vpow.pop %v6403
  %v6405 = vmul.f32 %v6394, 1.442695
  %v6406 = vpow.pop %v6405
  %v6407 = vmul.f32 %v6395, 1.442695
  %v6408 = vpow.pop %v6407
  %v6409 = vmul.f32 %v6396, 1.442695
  %v6410 = vpow.pop %v6409
  %v6411 = vmul.f32 %v6397, 1.442695
  %v6412 = vpow.pop %v6411
  %v6413 = vmul.f32 %v6398, 1.442695
  %v6414 = vpow.pop %v6413
  %vm6415 = vcmask 490496
  %v6417 = vsel %vm6415, %v6276, 0
  %v6420 = vsel %vm6415, %v6278, 0
  %v6423 = vsel %vm6415, %v6280, 0
  %v6426 = vsel %vm6415, %v6282, 0
  %v6429 = vsel %vm6415, %v6284, 0
  %v6432 = vsel %vm6415, %v6286, 0
  %v6435 = vsel %vm6415, %v6288, 0
  %v6438 = vsel %vm6415, %v6290, 0
  %vm6440 = vcmask 1043456
  %v6442 = vsel %vm6440, %v6414, 0
  %6444 = vmatpush.msra.mxu0 0.0
  %6445 = vmatpush.msra.mxu0 0.0
  %6446 = vmatpush.msra.mxu0 0.0
  %6447 = vmatpush.msra.mxu0 0.0
  %6448 = vmatpush.msra.mxu0 0.0
  %6449 = vmatpush.msra.mxu0 0.0
  %6450 = vmatpush.msra.mxu0 0.0
  %6451 = vmatpush.msra.mxu0 0.0
  %6452 = vmatpush.msra.mxu0 %v6442
  %6453 = vmatpush.msra.mxu0 %v6412
  %6454 = vmatpush.msra.mxu0 %v6410
  %6455 = vmatpush.msra.mxu0 %v6408
  %6456 = vmatpush.msra.mxu0 %v6406
  %6457 = vmatpush.msra.mxu0 %v6404
  %6458 = vmatpush.msra.mxu0 %v6402
  %6459 = vmatpush.msra.mxu0 %v6400
  %6460 = vmatmul.f32.gmra.mxu0 %v6417
  %v6461 = vpop.f32.mrf.mxu0
  %v6462 = vadd.f32 0.0, %v6461
  %6463 = vmatmul.f32.gmra.mxu0 %v6420
  %v6464 = vpop.f32.mrf.mxu0
  %v6465 = vadd.f32 0.0, %v6464
  %6466 = vmatmul.f32.gmra.mxu0 %v6423
  %v6467 = vpop.f32.mrf.mxu0
  %v6468 = vadd.f32 0.0, %v6467
  %6469 = vmatmul.f32.gmra.mxu0 %v6426
  %v6470 = vpop.f32.mrf.mxu0
  %v6471 = vadd.f32 0.0, %v6470
  %6472 = vmatmul.f32.gmra.mxu0 %v6429
  %v6473 = vpop.f32.mrf.mxu0
  %v6474 = vadd.f32 0.0, %v6473
  %6475 = vmatmul.f32.gmra.mxu0 %v6432
  %v6476 = vpop.f32.mrf.mxu0
  %v6477 = vadd.f32 0.0, %v6476
  %6478 = vmatmul.f32.gmra.mxu0 %v6435
  %v6479 = vpop.f32.mrf.mxu0
  %v6480 = vadd.f32 0.0, %v6479
  %6481 = vmatmul.f32.gmra.mxu0 %v6438
  %v6482 = vpop.f32.mrf.mxu0
  %v6483 = vadd.f32 0.0, %v6482
  %6484 = vdwg.mxu0
  %v6485 = vrcp.pop %v6462
  %v6486 = vrcp.pop %v6465
  %v6487 = vrcp.pop %v6468
  %v6488 = vrcp.pop %v6471
  %v6489 = vrcp.pop %v6474
  %v6490 = vrcp.pop %v6477
  %v6491 = vrcp.pop %v6480
  %v6492 = vrcp.pop %v6483
  %v6493 = vmul.f32 %v6400, %v6485
  %v6494 = vmul.f32 %v6402, %v6486
  %v6495 = vmul.f32 %v6404, %v6487
  %v6496 = vmul.f32 %v6406, %v6488
  %v6497 = vmul.f32 %v6408, %v6489
  %v6498 = vmul.f32 %v6410, %v6490
  %v6499 = vmul.f32 %v6412, %v6491
  %v6500 = vmul.f32 %v6414, %v6492
  %v6501 = vmul.f32 %v6493, %v6291
  %v6502 = vmul.f32 %v6494, %v6292
  %v6503 = vmul.f32 %v6495, %v6293
  %v6504 = vmul.f32 %v6496, %v6294
  %v6505 = vmul.f32 %v6497, %v6295
  %v6506 = vmul.f32 %v6498, %v6296
  %v6507 = vmul.f32 %v6499, %v6297
  %v6508 = vmul.f32 %v6500, %v6298
  %6509 = vst.msk [vmem:[#allocation4] sm:$0xff] %vm310, %v6501
  %6510 = vst.msk [vmem:[#allocation4 + $0x8] sm:$0xff] %vm310, %v6502
  %6511 = vst.msk [vmem:[#allocation4 + $0x10] sm:$0xff] %vm310, %v6503
  %6512 = vst.msk [vmem:[#allocation4 + $0x18] sm:$0xff] %vm310, %v6504
  %6513 = vst.msk [vmem:[#allocation4 + $0x20] sm:$0xff] %vm310, %v6505
  %6514 = vst.msk [vmem:[#allocation4 + $0x28] sm:$0xff] %vm310, %v6506
  %6515 = vst.msk [vmem:[#allocation4 + $0x30] sm:$0xff] %vm310, %v6507
  %6516 = vst.msk [vmem:[#allocation4 + $0x38] sm:$0xf] %vm6379, %v6508
  %v6517 = vld [vmem:[%s6] sm:$0xff]
  %v6518 = vld [vmem:[%s6 + $0x8] sm:$0xff]
  %v6519 = vld [vmem:[%s6 + $0x10] sm:$0xff]
  %v6520 = vld [vmem:[%s6 + $0x18] sm:$0xff]
  %v6521 = vld [vmem:[%s6 + $0x20] sm:$0xff]
  %v6522 = vld [vmem:[%s6 + $0x28] sm:$0xff]
  %v6523 = vld [vmem:[%s6 + $0x30] sm:$0xff]
  %v6524 = vld [vmem:[%s6 + $0x38] sm:$0xff]
  %v6525 = vld [vmem:[%s6 + $0x40] sm:$0xff]
  %v6526 = vld [vmem:[%s6 + $0x48] sm:$0xff]
  %v6527 = vld [vmem:[%s6 + $0x50] sm:$0xff]
  %v6528 = vld [vmem:[%s6 + $0x58] sm:$0xff]
  %v6529 = vld [vmem:[%s6 + $0x60] sm:$0xff]
  %v6530 = vld [vmem:[%s6 + $0x68] sm:$0xff]
  %v6531 = vld [vmem:[%s6 + $0x70] sm:$0xff]
  %v6532 = vld [vmem:[#allocation4] sm:$0x3]
  %v6533 = vld [vmem:[%s5] sm:$0xff]
  %v6534 = vld [vmem:[%s5 + $0x8] sm:$0xff]
  %v6535 = vld [vmem:[%s5 + $0x10] sm:$0xff]
  %v6536 = vld [vmem:[%s5 + $0x18] sm:$0xff]
  %v6537 = vld [vmem:[%s5 + $0x20] sm:$0xff]
  %v6538 = vld [vmem:[%s5 + $0x28] sm:$0xff]
  %v6539 = vld [vmem:[%s5 + $0x30] sm:$0x3]
  %v6540 = vld [vmem:[#allocation4 + $0x2] sm:$0x3]
  %s6541 = scalar_lea.vmem %s5, 56
  %v6542 = vld [vmem:[%s6541] sm:$0xff]
  %v6543 = vld [vmem:[%s6541 + $0x8] sm:$0xff]
  %v6544 = vld [vmem:[%s6541 + $0x10] sm:$0xff]
  %v6545 = vld [vmem:[%s6541 + $0x18] sm:$0xff]
  %v6546 = vld [vmem:[%s6541 + $0x20] sm:$0xff]
  %v6547 = vld [vmem:[%s6541 + $0x28] sm:$0xff]
  %v6548 = vld [vmem:[%s6541 + $0x30] sm:$0x3]
  %v6549 = vld [vmem:[#allocation4 + $0x4] sm:$0x3]
  %s6550 = scalar_lea.vmem %s5, 112
  %v6551 = vld [vmem:[%s6550] sm:$0xff]
  %v6552 = vld [vmem:[%s6550 + $0x8] sm:$0xff]
  %v6553 = vld [vmem:[%s6550 + $0x10] sm:$0xff]
  %v6554 = vld [vmem:[%s6550 + $0x18] sm:$0xff]
  %v6555 = vld [vmem:[%s6550 + $0x20] sm:$0xff]
  %v6556 = vld [vmem:[%s6550 + $0x28] sm:$0xff]
  %v6557 = vld [vmem:[%s6550 + $0x30] sm:$0x3]
  %v6559 = vsel %vm310, %v6549, 0
  %v6562 = vsel %vm314, %v6557, 0
  %6564 = vmatpush.msra.mxu0 0.0
  %6565 = vmatpush.msra.mxu0 0.0
  %6566 = vmatpush.msra.mxu0 0.0
  %6567 = vmatpush.msra.mxu0 0.0
  %6568 = vmatpush.msra.mxu0 0.0
  %6569 = vmatpush.msra.mxu0 0.0
  %6570 = vmatpush.msra.mxu0 0.0
  %6571 = vmatpush.msra.mxu0 0.0
  %6572 = vmatpush.msra.mxu0 0.0
  %6573 = vmatpush.msra.mxu0 %v6562
  %6574 = vmatpush.msra.mxu0 %v6556
  %6575 = vmatpush.msra.mxu0 %v6555
  %6576 = vmatpush.msra.mxu0 %v6554
  %6577 = vmatpush.msra.mxu0 %v6553
  %6578 = vmatpush.msra.mxu0 %v6552
  %6579 = vmatpush.msra.mxu0 %v6551
  %6580 = vmatmul.f32.gmra.mxu0 %v6559
  %v6581 = vpop.f32.mrf.mxu0
  %v6582 = vadd.f32 0.0, %v6581
  %6583 = vdwg.mxu0
  %v6585 = vsel %vm310, %v6532, 0
  %v6588 = vsel %vm314, %v6539, 0
  %6590 = vmatpush.msra.mxu0 0.0
  %6591 = vmatpush.msra.mxu0 0.0
  %6592 = vmatpush.msra.mxu0 0.0
  %6593 = vmatpush.msra.mxu0 0.0
  %6594 = vmatpush.msra.mxu0 0.0
  %6595 = vmatpush.msra.mxu0 0.0
  %6596 = vmatpush.msra.mxu0 0.0
  %6597 = vmatpush.msra.mxu0 0.0
  %6598 = vmatpush.msra.mxu0 0.0
  %6599 = vmatpush.msra.mxu0 %v6588
  %6600 = vmatpush.msra.mxu0 %v6538
  %6601 = vmatpush.msra.mxu0 %v6537
  %6602 = vmatpush.msra.mxu0 %v6536
  %6603 = vmatpush.msra.mxu0 %v6535
  %6604 = vmatpush.msra.mxu0 %v6534
  %6605 = vmatpush.msra.mxu0 %v6533
  %6606 = vmatmul.f32.gmra.mxu0 %v6585
  %v6607 = vpop.f32.mrf.mxu0
  %v6608 = vadd.f32 %v6582, %v6607
  %6609 = vdwg.mxu0
  %v6610 = vld [vmem:[#allocation4 + $0x6] sm:$0x3]
  %s6611 = scalar_lea.vmem %s5, 168
  %v6612 = vld [vmem:[%s6611] sm:$0xff]
  %v6613 = vld [vmem:[%s6611 + $0x8] sm:$0xff]
  %v6614 = vld [vmem:[%s6611 + $0x10] sm:$0xff]
  %v6615 = vld [vmem:[%s6611 + $0x18] sm:$0xff]
  %v6616 = vld [vmem:[%s6611 + $0x20] sm:$0xff]
  %v6617 = vld [vmem:[%s6611 + $0x28] sm:$0xff]
  %v6618 = vld [vmem:[%s6611 + $0x30] sm:$0x3]
  %v6620 = vsel %vm310, %v6610, 0
  %v6623 = vsel %vm314, %v6618, 0
  %6625 = vmatpush.msra.mxu0 0.0
  %6626 = vmatpush.msra.mxu0 0.0
  %6627 = vmatpush.msra.mxu0 0.0
  %6628 = vmatpush.msra.mxu0 0.0
  %6629 = vmatpush.msra.mxu0 0.0
  %6630 = vmatpush.msra.mxu0 0.0
  %6631 = vmatpush.msra.mxu0 0.0
  %6632 = vmatpush.msra.mxu0 0.0
  %6633 = vmatpush.msra.mxu0 0.0
  %6634 = vmatpush.msra.mxu0 %v6623
  %6635 = vmatpush.msra.mxu0 %v6617
  %6636 = vmatpush.msra.mxu0 %v6616
  %6637 = vmatpush.msra.mxu0 %v6615
  %6638 = vmatpush.msra.mxu0 %v6614
  %6639 = vmatpush.msra.mxu0 %v6613
  %6640 = vmatpush.msra.mxu0 %v6612
  %6641 = vmatmul.f32.gmra.mxu0 %v6620
  %v6642 = vpop.f32.mrf.mxu0
  %v6643 = vadd.f32 0.0, %v6642
  %6644 = vdwg.mxu0
  %v6646 = vsel %vm310, %v6540, 0
  %v6649 = vsel %vm314, %v6548, 0
  %6651 = vmatpush.msra.mxu0 0.0
  %6652 = vmatpush.msra.mxu0 0.0
  %6653 = vmatpush.msra.mxu0 0.0
  %6654 = vmatpush.msra.mxu0 0.0
  %6655 = vmatpush.msra.mxu0 0.0
  %6656 = vmatpush.msra.mxu0 0.0
  %6657 = vmatpush.msra.mxu0 0.0
  %6658 = vmatpush.msra.mxu0 0.0
  %6659 = vmatpush.msra.mxu0 0.0
  %6660 = vmatpush.msra.mxu0 %v6649
  %6661 = vmatpush.msra.mxu0 %v6547
  %6662 = vmatpush.msra.mxu0 %v6546
  %6663 = vmatpush.msra.mxu0 %v6545
  %6664 = vmatpush.msra.mxu0 %v6544
  %6665 = vmatpush.msra.mxu0 %v6543
  %6666 = vmatpush.msra.mxu0 %v6542
  %6667 = vmatmul.f32.gmra.mxu0 %v6646
  %v6668 = vpop.f32.mrf.mxu0
  %v6669 = vadd.f32 %v6643, %v6668
  %6670 = vdwg.mxu0
  %v6671 = vld [vmem:[#allocation4 + $0x8] sm:$0x3]
  %s6672 = scalar_lea.vmem %s5, 224
  %v6673 = vld [vmem:[%s6672] sm:$0xff]
  %v6674 = vld [vmem:[%s6672 + $0x8] sm:$0xff]
  %v6675 = vld [vmem:[%s6672 + $0x10] sm:$0xff]
  %v6676 = vld [vmem:[%s6672 + $0x18] sm:$0xff]
  %v6677 = vld [vmem:[%s6672 + $0x20] sm:$0xff]
  %v6678 = vld [vmem:[%s6672 + $0x28] sm:$0xff]
  %v6679 = vld [vmem:[%s6672 + $0x30] sm:$0x3]
  %v6681 = vsel %vm310, %v6671, 0
  %v6684 = vsel %vm314, %v6679, 0
  %6686 = vmatpush.msra.mxu0 0.0
  %6687 = vmatpush.msra.mxu0 0.0
  %6688 = vmatpush.msra.mxu0 0.0
  %6689 = vmatpush.msra.mxu0 0.0
  %6690 = vmatpush.msra.mxu0 0.0
  %6691 = vmatpush.msra.mxu0 0.0
  %6692 = vmatpush.msra.mxu0 0.0
  %6693 = vmatpush.msra.mxu0 0.0
  %6694 = vmatpush.msra.mxu0 0.0
  %6695 = vmatpush.msra.mxu0 %v6684
  %6696 = vmatpush.msra.mxu0 %v6678
  %6697 = vmatpush.msra.mxu0 %v6677
  %6698 = vmatpush.msra.mxu0 %v6676
  %6699 = vmatpush.msra.mxu0 %v6675
  %6700 = vmatpush.msra.mxu0 %v6674
  %6701 = vmatpush.msra.mxu0 %v6673
  %6702 = vmatmul.f32.gmra.mxu0 %v6681
  %v6703 = vpop.f32.mrf.mxu0
  %v6704 = vadd.f32 0.0, %v6703
  %6705 = vdwg.mxu0
  %v6706 = vadd.f32 %v6608, %v6704
  %v6707 = vld [vmem:[#allocation4 + $0xa] sm:$0x3]
  %s6708 = scalar_lea.vmem %s5, 280
  %v6709 = vld [vmem:[%s6708] sm:$0xff]
  %v6710 = vld [vmem:[%s6708 + $0x8] sm:$0xff]
  %v6711 = vld [vmem:[%s6708 + $0x10] sm:$0xff]
  %v6712 = vld [vmem:[%s6708 + $0x18] sm:$0xff]
  %v6713 = vld [vmem:[%s6708 + $0x20] sm:$0xff]
  %v6714 = vld [vmem:[%s6708 + $0x28] sm:$0xff]
  %v6715 = vld [vmem:[%s6708 + $0x30] sm:$0x3]
  %v6717 = vsel %vm310, %v6707, 0
  %v6720 = vsel %vm314, %v6715, 0
  %6722 = vmatpush.msra.mxu0 0.0
  %6723 = vmatpush.msra.mxu0 0.0
  %6724 = vmatpush.msra.mxu0 0.0
  %6725 = vmatpush.msra.mxu0 0.0
  %6726 = vmatpush.msra.mxu0 0.0
  %6727 = vmatpush.msra.mxu0 0.0
  %6728 = vmatpush.msra.mxu0 0.0
  %6729 = vmatpush.msra.mxu0 0.0
  %6730 = vmatpush.msra.mxu0 0.0
  %6731 = vmatpush.msra.mxu0 %v6720
  %6732 = vmatpush.msra.mxu0 %v6714
  %6733 = vmatpush.msra.mxu0 %v6713
  %6734 = vmatpush.msra.mxu0 %v6712
  %6735 = vmatpush.msra.mxu0 %v6711
  %6736 = vmatpush.msra.mxu0 %v6710
  %6737 = vmatpush.msra.mxu0 %v6709
  %6738 = vmatmul.f32.gmra.mxu0 %v6717
  %v6739 = vpop.f32.mrf.mxu0
  %v6740 = vadd.f32 0.0, %v6739
  %6741 = vdwg.mxu0
  %v6742 = vadd.f32 %v6669, %v6740
  %v6743 = vld [vmem:[#allocation4 + $0xc] sm:$0x3]
  %s6744 = scalar_lea.vmem %s5, 336
  %v6745 = vld [vmem:[%s6744] sm:$0xff]
  %v6746 = vld [vmem:[%s6744 + $0x8] sm:$0xff]
  %v6747 = vld [vmem:[%s6744 + $0x10] sm:$0xff]
  %v6748 = vld [vmem:[%s6744 + $0x18] sm:$0xff]
  %v6749 = vld [vmem:[%s6744 + $0x20] sm:$0xff]
  %v6750 = vld [vmem:[%s6744 + $0x28] sm:$0xff]
  %v6751 = vld [vmem:[%s6744 + $0x30] sm:$0x3]
  %v6753 = vsel %vm310, %v6743, 0
  %v6756 = vsel %vm314, %v6751, 0
  %6758 = vmatpush.msra.mxu0 0.0
  %6759 = vmatpush.msra.mxu0 0.0
  %6760 = vmatpush.msra.mxu0 0.0
  %6761 = vmatpush.msra.mxu0 0.0
  %6762 = vmatpush.msra.mxu0 0.0
  %6763 = vmatpush.msra.mxu0 0.0
  %6764 = vmatpush.msra.mxu0 0.0
  %6765 = vmatpush.msra.mxu0 0.0
  %6766 = vmatpush.msra.mxu0 0.0
  %6767 = vmatpush.msra.mxu0 %v6756
  %6768 = vmatpush.msra.mxu0 %v6750
  %6769 = vmatpush.msra.mxu0 %v6749
  %6770 = vmatpush.msra.mxu0 %v6748
  %6771 = vmatpush.msra.mxu0 %v6747
  %6772 = vmatpush.msra.mxu0 %v6746
  %6773 = vmatpush.msra.mxu0 %v6745
  %6774 = vmatmul.f32.gmra.mxu0 %v6753
  %v6775 = vpop.f32.mrf.mxu0
  %v6776 = vadd.f32 0.0, %v6775
  %6777 = vdwg.mxu0
  %v6778 = vadd.f32 %v6706, %v6776
  %v6779 = vld [vmem:[#allocation4 + $0xe] sm:$0x3]
  %s6780 = scalar_lea.vmem %s5, 392
  %v6781 = vld [vmem:[%s6780] sm:$0xff]
  %v6782 = vld [vmem:[%s6780 + $0x8] sm:$0xff]
  %v6783 = vld [vmem:[%s6780 + $0x10] sm:$0xff]
  %v6784 = vld [vmem:[%s6780 + $0x18] sm:$0xff]
  %v6785 = vld [vmem:[%s6780 + $0x20] sm:$0xff]
  %v6786 = vld [vmem:[%s6780 + $0x28] sm:$0xff]
  %v6787 = vld [vmem:[%s6780 + $0x30] sm:$0x3]
  %v6789 = vsel %vm310, %v6779, 0
  %v6792 = vsel %vm314, %v6787, 0
  %6794 = vmatpush.msra.mxu0 0.0
  %6795 = vmatpush.msra.mxu0 0.0
  %6796 = vmatpush.msra.mxu0 0.0
  %6797 = vmatpush.msra.mxu0 0.0
  %6798 = vmatpush.msra.mxu0 0.0
  %6799 = vmatpush.msra.mxu0 0.0
  %6800 = vmatpush.msra.mxu0 0.0
  %6801 = vmatpush.msra.mxu0 0.0
  %6802 = vmatpush.msra.mxu0 0.0
  %6803 = vmatpush.msra.mxu0 %v6792
  %6804 = vmatpush.msra.mxu0 %v6786
  %6805 = vmatpush.msra.mxu0 %v6785
  %6806 = vmatpush.msra.mxu0 %v6784
  %6807 = vmatpush.msra.mxu0 %v6783
  %6808 = vmatpush.msra.mxu0 %v6782
  %6809 = vmatpush.msra.mxu0 %v6781
  %6810 = vmatmul.f32.gmra.mxu0 %v6789
  %v6811 = vpop.f32.mrf.mxu0
  %v6812 = vadd.f32 0.0, %v6811
  %6813 = vdwg.mxu0
  %v6814 = vadd.f32 %v6742, %v6812
  %v6815 = vld [vmem:[#allocation4 + $0x10] sm:$0x3]
  %s6816 = scalar_lea.vmem %s5, 448
  %v6817 = vld [vmem:[%s6816] sm:$0xff]
  %v6818 = vld [vmem:[%s6816 + $0x8] sm:$0xff]
  %v6819 = vld [vmem:[%s6816 + $0x10] sm:$0xff]
  %v6820 = vld [vmem:[%s6816 + $0x18] sm:$0xff]
  %v6821 = vld [vmem:[%s6816 + $0x20] sm:$0xff]
  %v6822 = vld [vmem:[%s6816 + $0x28] sm:$0xff]
  %v6823 = vld [vmem:[%s6816 + $0x30] sm:$0x3]
  %v6825 = vsel %vm310, %v6815, 0
  %v6828 = vsel %vm314, %v6823, 0
  %6830 = vmatpush.msra.mxu0 0.0
  %6831 = vmatpush.msra.mxu0 0.0
  %6832 = vmatpush.msra.mxu0 0.0
  %6833 = vmatpush.msra.mxu0 0.0
  %6834 = vmatpush.msra.mxu0 0.0
  %6835 = vmatpush.msra.mxu0 0.0
  %6836 = vmatpush.msra.mxu0 0.0
  %6837 = vmatpush.msra.mxu0 0.0
  %6838 = vmatpush.msra.mxu0 0.0
  %6839 = vmatpush.msra.mxu0 %v6828
  %6840 = vmatpush.msra.mxu0 %v6822
  %6841 = vmatpush.msra.mxu0 %v6821
  %6842 = vmatpush.msra.mxu0 %v6820
  %6843 = vmatpush.msra.mxu0 %v6819
  %6844 = vmatpush.msra.mxu0 %v6818
  %6845 = vmatpush.msra.mxu0 %v6817
  %6846 = vmatmul.f32.gmra.mxu0 %v6825
  %v6847 = vpop.f32.mrf.mxu0
  %v6848 = vadd.f32 0.0, %v6847
  %6849 = vdwg.mxu0
  %v6850 = vadd.f32 %v6778, %v6848
  %v6851 = vld [vmem:[#allocation4 + $0x12] sm:$0x3]
  %s6852 = scalar_lea.vmem %s5, 504
  %v6853 = vld [vmem:[%s6852] sm:$0xff]
  %v6854 = vld [vmem:[%s6852 + $0x8] sm:$0xff]
  %v6855 = vld [vmem:[%s6852 + $0x10] sm:$0xff]
  %v6856 = vld [vmem:[%s6852 + $0x18] sm:$0xff]
  %v6857 = vld [vmem:[%s6852 + $0x20] sm:$0xff]
  %v6858 = vld [vmem:[%s6852 + $0x28] sm:$0xff]
  %v6859 = vld [vmem:[%s6852 + $0x30] sm:$0x3]
  %v6861 = vsel %vm310, %v6851, 0
  %v6864 = vsel %vm314, %v6859, 0
  %6866 = vmatpush.msra.mxu0 0.0
  %6867 = vmatpush.msra.mxu0 0.0
  %6868 = vmatpush.msra.mxu0 0.0
  %6869 = vmatpush.msra.mxu0 0.0
  %6870 = vmatpush.msra.mxu0 0.0
  %6871 = vmatpush.msra.mxu0 0.0
  %6872 = vmatpush.msra.mxu0 0.0
  %6873 = vmatpush.msra.mxu0 0.0
  %6874 = vmatpush.msra.mxu0 0.0
  %6875 = vmatpush.msra.mxu0 %v6864
  %6876 = vmatpush.msra.mxu0 %v6858
  %6877 = vmatpush.msra.mxu0 %v6857
  %6878 = vmatpush.msra.mxu0 %v6856
  %6879 = vmatpush.msra.mxu0 %v6855
  %6880 = vmatpush.msra.mxu0 %v6854
  %6881 = vmatpush.msra.mxu0 %v6853
  %6882 = vmatmul.f32.gmra.mxu0 %v6861
  %v6883 = vpop.f32.mrf.mxu0
  %v6884 = vadd.f32 0.0, %v6883
  %6885 = vdwg.mxu0
  %v6886 = vadd.f32 %v6814, %v6884
  %v6887 = vld [vmem:[#allocation4 + $0x14] sm:$0x3]
  %s6888 = scalar_lea.vmem %s5, 560
  %v6889 = vld [vmem:[%s6888] sm:$0xff]
  %v6890 = vld [vmem:[%s6888 + $0x8] sm:$0xff]
  %v6891 = vld [vmem:[%s6888 + $0x10] sm:$0xff]
  %v6892 = vld [vmem:[%s6888 + $0x18] sm:$0xff]
  %v6893 = vld [vmem:[%s6888 + $0x20] sm:$0xff]
  %v6894 = vld [vmem:[%s6888 + $0x28] sm:$0xff]
  %v6895 = vld [vmem:[%s6888 + $0x30] sm:$0x3]
  %v6897 = vsel %vm310, %v6887, 0
  %v6900 = vsel %vm314, %v6895, 0
  %6902 = vmatpush.msra.mxu0 0.0
  %6903 = vmatpush.msra.mxu0 0.0
  %6904 = vmatpush.msra.mxu0 0.0
  %6905 = vmatpush.msra.mxu0 0.0
  %6906 = vmatpush.msra.mxu0 0.0
  %6907 = vmatpush.msra.mxu0 0.0
  %6908 = vmatpush.msra.mxu0 0.0
  %6909 = vmatpush.msra.mxu0 0.0
  %6910 = vmatpush.msra.mxu0 0.0
  %6911 = vmatpush.msra.mxu0 %v6900
  %6912 = vmatpush.msra.mxu0 %v6894
  %6913 = vmatpush.msra.mxu0 %v6893
  %6914 = vmatpush.msra.mxu0 %v6892
  %6915 = vmatpush.msra.mxu0 %v6891
  %6916 = vmatpush.msra.mxu0 %v6890
  %6917 = vmatpush.msra.mxu0 %v6889
  %6918 = vmatmul.f32.gmra.mxu0 %v6897
  %v6919 = vpop.f32.mrf.mxu0
  %v6920 = vadd.f32 0.0, %v6919
  %6921 = vdwg.mxu0
  %v6922 = vadd.f32 %v6850, %v6920
  %v6923 = vld [vmem:[#allocation4 + $0x16] sm:$0x3]
  %s6924 = scalar_lea.vmem %s5, 616
  %v6925 = vld [vmem:[%s6924] sm:$0xff]
  %v6926 = vld [vmem:[%s6924 + $0x8] sm:$0xff]
  %v6927 = vld [vmem:[%s6924 + $0x10] sm:$0xff]
  %v6928 = vld [vmem:[%s6924 + $0x18] sm:$0xff]
  %v6929 = vld [vmem:[%s6924 + $0x20] sm:$0xff]
  %v6930 = vld [vmem:[%s6924 + $0x28] sm:$0xff]
  %v6931 = vld [vmem:[%s6924 + $0x30] sm:$0x3]
  %v6933 = vsel %vm310, %v6923, 0
  %v6936 = vsel %vm314, %v6931, 0
  %6938 = vmatpush.msra.mxu0 0.0
  %6939 = vmatpush.msra.mxu0 0.0
  %6940 = vmatpush.msra.mxu0 0.0
  %6941 = vmatpush.msra.mxu0 0.0
  %6942 = vmatpush.msra.mxu0 0.0
  %6943 = vmatpush.msra.mxu0 0.0
  %6944 = vmatpush.msra.mxu0 0.0
  %6945 = vmatpush.msra.mxu0 0.0
  %6946 = vmatpush.msra.mxu0 0.0
  %6947 = vmatpush.msra.mxu0 %v6936
  %6948 = vmatpush.msra.mxu0 %v6930
  %6949 = vmatpush.msra.mxu0 %v6929
  %6950 = vmatpush.msra.mxu0 %v6928
  %6951 = vmatpush.msra.mxu0 %v6927
  %6952 = vmatpush.msra.mxu0 %v6926
  %6953 = vmatpush.msra.mxu0 %v6925
  %6954 = vmatmul.f32.gmra.mxu0 %v6933
  %v6955 = vpop.f32.mrf.mxu0
  %v6956 = vadd.f32 0.0, %v6955
  %6957 = vdwg.mxu0
  %v6958 = vadd.f32 %v6886, %v6956
  %v6959 = vld [vmem:[#allocation4 + $0x18] sm:$0x3]
  %s6960 = scalar_lea.vmem %s5, 672
  %v6961 = vld [vmem:[%s6960] sm:$0xff]
  %v6962 = vld [vmem:[%s6960 + $0x8] sm:$0xff]
  %v6963 = vld [vmem:[%s6960 + $0x10] sm:$0xff]
  %v6964 = vld [vmem:[%s6960 + $0x18] sm:$0xff]
  %v6965 = vld [vmem:[%s6960 + $0x20] sm:$0xff]
  %v6966 = vld [vmem:[%s6960 + $0x28] sm:$0xff]
  %v6967 = vld [vmem:[%s6960 + $0x30] sm:$0x3]
  %v6969 = vsel %vm310, %v6959, 0
  %v6972 = vsel %vm314, %v6967, 0
  %6974 = vmatpush.msra.mxu0 0.0
  %6975 = vmatpush.msra.mxu0 0.0
  %6976 = vmatpush.msra.mxu0 0.0
  %6977 = vmatpush.msra.mxu0 0.0
  %6978 = vmatpush.msra.mxu0 0.0
  %6979 = vmatpush.msra.mxu0 0.0
  %6980 = vmatpush.msra.mxu0 0.0
  %6981 = vmatpush.msra.mxu0 0.0
  %6982 = vmatpush.msra.mxu0 0.0
  %6983 = vmatpush.msra.mxu0 %v6972
  %6984 = vmatpush.msra.mxu0 %v6966
  %6985 = vmatpush.msra.mxu0 %v6965
  %6986 = vmatpush.msra.mxu0 %v6964
  %6987 = vmatpush.msra.mxu0 %v6963
  %6988 = vmatpush.msra.mxu0 %v6962
  %6989 = vmatpush.msra.mxu0 %v6961
  %6990 = vmatmul.f32.gmra.mxu0 %v6969
  %v6991 = vpop.f32.mrf.mxu0
  %v6992 = vadd.f32 0.0, %v6991
  %6993 = vdwg.mxu0
  %v6994 = vadd.f32 %v6922, %v6992
  %v6995 = vld [vmem:[#allocation4 + $0x1a] sm:$0x3]
  %s6996 = scalar_lea.vmem %s5, 728
  %v6997 = vld [vmem:[%s6996] sm:$0xff]
  %v6998 = vld [vmem:[%s6996 + $0x8] sm:$0xff]
  %v6999 = vld [vmem:[%s6996 + $0x10] sm:$0xff]
  %v7000 = vld [vmem:[%s6996 + $0x18] sm:$0xff]
  %v7001 = vld [vmem:[%s6996 + $0x20] sm:$0xff]
  %v7002 = vld [vmem:[%s6996 + $0x28] sm:$0xff]
  %v7003 = vld [vmem:[%s6996 + $0x30] sm:$0x3]
  %v7005 = vsel %vm310, %v6995, 0
  %v7008 = vsel %vm314, %v7003, 0
  %7010 = vmatpush.msra.mxu0 0.0
  %7011 = vmatpush.msra.mxu0 0.0
  %7012 = vmatpush.msra.mxu0 0.0
  %7013 = vmatpush.msra.mxu0 0.0
  %7014 = vmatpush.msra.mxu0 0.0
  %7015 = vmatpush.msra.mxu0 0.0
  %7016 = vmatpush.msra.mxu0 0.0
  %7017 = vmatpush.msra.mxu0 0.0
  %7018 = vmatpush.msra.mxu0 0.0
  %7019 = vmatpush.msra.mxu0 %v7008
  %7020 = vmatpush.msra.mxu0 %v7002
  %7021 = vmatpush.msra.mxu0 %v7001
  %7022 = vmatpush.msra.mxu0 %v7000
  %7023 = vmatpush.msra.mxu0 %v6999
  %7024 = vmatpush.msra.mxu0 %v6998
  %7025 = vmatpush.msra.mxu0 %v6997
  %7026 = vmatmul.f32.gmra.mxu0 %v7005
  %v7027 = vpop.f32.mrf.mxu0
  %v7028 = vadd.f32 0.0, %v7027
  %7029 = vdwg.mxu0
  %v7030 = vadd.f32 %v6958, %v7028
  %v7031 = vld [vmem:[#allocation4 + $0x1c] sm:$0x3]
  %s7032 = scalar_lea.vmem %s5, 784
  %v7033 = vld [vmem:[%s7032] sm:$0xff]
  %v7034 = vld [vmem:[%s7032 + $0x8] sm:$0xff]
  %v7035 = vld [vmem:[%s7032 + $0x10] sm:$0xff]
  %v7036 = vld [vmem:[%s7032 + $0x18] sm:$0xff]
  %v7037 = vld [vmem:[%s7032 + $0x20] sm:$0xff]
  %v7038 = vld [vmem:[%s7032 + $0x28] sm:$0xff]
  %v7039 = vld [vmem:[%s7032 + $0x30] sm:$0x3]
  %v7041 = vsel %vm310, %v7031, 0
  %v7044 = vsel %vm314, %v7039, 0
  %7046 = vmatpush.msra.mxu0 0.0
  %7047 = vmatpush.msra.mxu0 0.0
  %7048 = vmatpush.msra.mxu0 0.0
  %7049 = vmatpush.msra.mxu0 0.0
  %7050 = vmatpush.msra.mxu0 0.0
  %7051 = vmatpush.msra.mxu0 0.0
  %7052 = vmatpush.msra.mxu0 0.0
  %7053 = vmatpush.msra.mxu0 0.0
  %7054 = vmatpush.msra.mxu0 0.0
  %7055 = vmatpush.msra.mxu0 %v7044
  %7056 = vmatpush.msra.mxu0 %v7038
  %7057 = vmatpush.msra.mxu0 %v7037
  %7058 = vmatpush.msra.mxu0 %v7036
  %7059 = vmatpush.msra.mxu0 %v7035
  %7060 = vmatpush.msra.mxu0 %v7034
  %7061 = vmatpush.msra.mxu0 %v7033
  %7062 = vmatmul.f32.gmra.mxu0 %v7041
  %v7063 = vpop.f32.mrf.mxu0
  %v7064 = vadd.f32 0.0, %v7063
  %7065 = vdwg.mxu0
  %v7066 = vadd.f32 %v6994, %v7064
  %v7067 = vld [vmem:[#allocation4 + $0x1e] sm:$0x3]
  %s7068 = scalar_lea.vmem %s5, 840
  %v7069 = vld [vmem:[%s7068] sm:$0xff]
  %v7070 = vld [vmem:[%s7068 + $0x8] sm:$0xff]
  %v7071 = vld [vmem:[%s7068 + $0x10] sm:$0xff]
  %v7072 = vld [vmem:[%s7068 + $0x18] sm:$0xff]
  %v7073 = vld [vmem:[%s7068 + $0x20] sm:$0xff]
  %v7074 = vld [vmem:[%s7068 + $0x28] sm:$0xff]
  %v7075 = vld [vmem:[%s7068 + $0x30] sm:$0x3]
  %v7077 = vsel %vm310, %v7067, 0
  %v7080 = vsel %vm314, %v7075, 0
  %7082 = vmatpush.msra.mxu0 0.0
  %7083 = vmatpush.msra.mxu0 0.0
  %7084 = vmatpush.msra.mxu0 0.0
  %7085 = vmatpush.msra.mxu0 0.0
  %7086 = vmatpush.msra.mxu0 0.0
  %7087 = vmatpush.msra.mxu0 0.0
  %7088 = vmatpush.msra.mxu0 0.0
  %7089 = vmatpush.msra.mxu0 0.0
  %7090 = vmatpush.msra.mxu0 0.0
  %7091 = vmatpush.msra.mxu0 %v7080
  %7092 = vmatpush.msra.mxu0 %v7074
  %7093 = vmatpush.msra.mxu0 %v7073
  %7094 = vmatpush.msra.mxu0 %v7072
  %7095 = vmatpush.msra.mxu0 %v7071
  %7096 = vmatpush.msra.mxu0 %v7070
  %7097 = vmatpush.msra.mxu0 %v7069
  %7098 = vmatmul.f32.gmra.mxu0 %v7077
  %v7099 = vpop.f32.mrf.mxu0
  %v7100 = vadd.f32 0.0, %v7099
  %7101 = vdwg.mxu0
  %v7102 = vadd.f32 %v7030, %v7100
  %v7103 = vld [vmem:[#allocation4 + $0x20] sm:$0x3]
  %s7104 = scalar_lea.vmem %s5, 896
  %v7105 = vld [vmem:[%s7104] sm:$0xff]
  %v7106 = vld [vmem:[%s7104 + $0x8] sm:$0xff]
  %v7107 = vld [vmem:[%s7104 + $0x10] sm:$0xff]
  %v7108 = vld [vmem:[%s7104 + $0x18] sm:$0xff]
  %v7109 = vld [vmem:[%s7104 + $0x20] sm:$0xff]
  %v7110 = vld [vmem:[%s7104 + $0x28] sm:$0xff]
  %v7111 = vld [vmem:[%s7104 + $0x30] sm:$0x3]
  %v7113 = vsel %vm310, %v7103, 0
  %v7116 = vsel %vm314, %v7111, 0
  %7118 = vmatpush.msra.mxu0 0.0
  %7119 = vmatpush.msra.mxu0 0.0
  %7120 = vmatpush.msra.mxu0 0.0
  %7121 = vmatpush.msra.mxu0 0.0
  %7122 = vmatpush.msra.mxu0 0.0
  %7123 = vmatpush.msra.mxu0 0.0
  %7124 = vmatpush.msra.mxu0 0.0
  %7125 = vmatpush.msra.mxu0 0.0
  %7126 = vmatpush.msra.mxu0 0.0
  %7127 = vmatpush.msra.mxu0 %v7116
  %7128 = vmatpush.msra.mxu0 %v7110
  %7129 = vmatpush.msra.mxu0 %v7109
  %7130 = vmatpush.msra.mxu0 %v7108
  %7131 = vmatpush.msra.mxu0 %v7107
  %7132 = vmatpush.msra.mxu0 %v7106
  %7133 = vmatpush.msra.mxu0 %v7105
  %7134 = vmatmul.f32.gmra.mxu0 %v7113
  %v7135 = vpop.f32.mrf.mxu0
  %v7136 = vadd.f32 0.0, %v7135
  %7137 = vdwg.mxu0
  %v7138 = vadd.f32 %v7066, %v7136
  %v7139 = vld [vmem:[#allocation4 + $0x22] sm:$0x3]
  %s7140 = scalar_lea.vmem %s5, 952
  %v7141 = vld [vmem:[%s7140] sm:$0xff]
  %v7142 = vld [vmem:[%s7140 + $0x8] sm:$0xff]
  %v7143 = vld [vmem:[%s7140 + $0x10] sm:$0xff]
  %v7144 = vld [vmem:[%s7140 + $0x18] sm:$0xff]
  %v7145 = vld [vmem:[%s7140 + $0x20] sm:$0xff]
  %v7146 = vld [vmem:[%s7140 + $0x28] sm:$0xff]
  %v7147 = vld [vmem:[%s7140 + $0x30] sm:$0x3]
  %v7149 = vsel %vm310, %v7139, 0
  %v7152 = vsel %vm314, %v7147, 0
  %7154 = vmatpush.msra.mxu0 0.0
  %7155 = vmatpush.msra.mxu0 0.0
  %7156 = vmatpush.msra.mxu0 0.0
  %7157 = vmatpush.msra.mxu0 0.0
  %7158 = vmatpush.msra.mxu0 0.0
  %7159 = vmatpush.msra.mxu0 0.0
  %7160 = vmatpush.msra.mxu0 0.0
  %7161 = vmatpush.msra.mxu0 0.0
  %7162 = vmatpush.msra.mxu0 0.0
  %7163 = vmatpush.msra.mxu0 %v7152
  %7164 = vmatpush.msra.mxu0 %v7146
  %7165 = vmatpush.msra.mxu0 %v7145
  %7166 = vmatpush.msra.mxu0 %v7144
  %7167 = vmatpush.msra.mxu0 %v7143
  %7168 = vmatpush.msra.mxu0 %v7142
  %7169 = vmatpush.msra.mxu0 %v7141
  %7170 = vmatmul.f32.gmra.mxu0 %v7149
  %v7171 = vpop.f32.mrf.mxu0
  %v7172 = vadd.f32 0.0, %v7171
  %7173 = vdwg.mxu0
  %v7174 = vadd.f32 %v7102, %v7172
  %v7175 = vld [vmem:[#allocation4 + $0x24] sm:$0x3]
  %s7176 = scalar_lea.vmem %s5, 1008
  %v7177 = vld [vmem:[%s7176] sm:$0xff]
  %v7178 = vld [vmem:[%s7176 + $0x8] sm:$0xff]
  %v7179 = vld [vmem:[%s7176 + $0x10] sm:$0xff]
  %v7180 = vld [vmem:[%s7176 + $0x18] sm:$0xff]
  %v7181 = vld [vmem:[%s7176 + $0x20] sm:$0xff]
  %v7182 = vld [vmem:[%s7176 + $0x28] sm:$0xff]
  %v7183 = vld [vmem:[%s7176 + $0x30] sm:$0x3]
  %v7185 = vsel %vm310, %v7175, 0
  %v7188 = vsel %vm314, %v7183, 0
  %7190 = vmatpush.msra.mxu0 0.0
  %7191 = vmatpush.msra.mxu0 0.0
  %7192 = vmatpush.msra.mxu0 0.0
  %7193 = vmatpush.msra.mxu0 0.0
  %7194 = vmatpush.msra.mxu0 0.0
  %7195 = vmatpush.msra.mxu0 0.0
  %7196 = vmatpush.msra.mxu0 0.0
  %7197 = vmatpush.msra.mxu0 0.0
  %7198 = vmatpush.msra.mxu0 0.0
  %7199 = vmatpush.msra.mxu0 %v7188
  %7200 = vmatpush.msra.mxu0 %v7182
  %7201 = vmatpush.msra.mxu0 %v7181
  %7202 = vmatpush.msra.mxu0 %v7180
  %7203 = vmatpush.msra.mxu0 %v7179
  %7204 = vmatpush.msra.mxu0 %v7178
  %7205 = vmatpush.msra.mxu0 %v7177
  %7206 = vmatmul.f32.gmra.mxu0 %v7185
  %v7207 = vpop.f32.mrf.mxu0
  %v7208 = vadd.f32 0.0, %v7207
  %7209 = vdwg.mxu0
  %v7210 = vadd.f32 %v7138, %v7208
  %v7211 = vld [vmem:[#allocation4 + $0x26] sm:$0x3]
  %s7212 = scalar_lea.vmem %s5, 1064
  %v7213 = vld [vmem:[%s7212] sm:$0xff]
  %v7214 = vld [vmem:[%s7212 + $0x8] sm:$0xff]
  %v7215 = vld [vmem:[%s7212 + $0x10] sm:$0xff]
  %v7216 = vld [vmem:[%s7212 + $0x18] sm:$0xff]
  %v7217 = vld [vmem:[%s7212 + $0x20] sm:$0xff]
  %v7218 = vld [vmem:[%s7212 + $0x28] sm:$0xff]
  %v7219 = vld [vmem:[%s7212 + $0x30] sm:$0x3]
  %v7221 = vsel %vm310, %v7211, 0
  %v7224 = vsel %vm314, %v7219, 0
  %7226 = vmatpush.msra.mxu0 0.0
  %7227 = vmatpush.msra.mxu0 0.0
  %7228 = vmatpush.msra.mxu0 0.0
  %7229 = vmatpush.msra.mxu0 0.0
  %7230 = vmatpush.msra.mxu0 0.0
  %7231 = vmatpush.msra.mxu0 0.0
  %7232 = vmatpush.msra.mxu0 0.0
  %7233 = vmatpush.msra.mxu0 0.0
  %7234 = vmatpush.msra.mxu0 0.0
  %7235 = vmatpush.msra.mxu0 %v7224
  %7236 = vmatpush.msra.mxu0 %v7218
  %7237 = vmatpush.msra.mxu0 %v7217
  %7238 = vmatpush.msra.mxu0 %v7216
  %7239 = vmatpush.msra.mxu0 %v7215
  %7240 = vmatpush.msra.mxu0 %v7214
  %7241 = vmatpush.msra.mxu0 %v7213
  %7242 = vmatmul.f32.gmra.mxu0 %v7221
  %v7243 = vpop.f32.mrf.mxu0
  %v7244 = vadd.f32 0.0, %v7243
  %7245 = vdwg.mxu0
  %v7246 = vadd.f32 %v7174, %v7244
  %v7247 = vld [vmem:[#allocation4 + $0x28] sm:$0x3]
  %s7248 = scalar_lea.vmem %s5, 1120
  %v7249 = vld [vmem:[%s7248] sm:$0xff]
  %v7250 = vld [vmem:[%s7248 + $0x8] sm:$0xff]
  %v7251 = vld [vmem:[%s7248 + $0x10] sm:$0xff]
  %v7252 = vld [vmem:[%s7248 + $0x18] sm:$0xff]
  %v7253 = vld [vmem:[%s7248 + $0x20] sm:$0xff]
  %v7254 = vld [vmem:[%s7248 + $0x28] sm:$0xff]
  %v7255 = vld [vmem:[%s7248 + $0x30] sm:$0x3]
  %v7257 = vsel %vm310, %v7247, 0
  %v7260 = vsel %vm314, %v7255, 0
  %7262 = vmatpush.msra.mxu0 0.0
  %7263 = vmatpush.msra.mxu0 0.0
  %7264 = vmatpush.msra.mxu0 0.0
  %7265 = vmatpush.msra.mxu0 0.0
  %7266 = vmatpush.msra.mxu0 0.0
  %7267 = vmatpush.msra.mxu0 0.0
  %7268 = vmatpush.msra.mxu0 0.0
  %7269 = vmatpush.msra.mxu0 0.0
  %7270 = vmatpush.msra.mxu0 0.0
  %7271 = vmatpush.msra.mxu0 %v7260
  %7272 = vmatpush.msra.mxu0 %v7254
  %7273 = vmatpush.msra.mxu0 %v7253
  %7274 = vmatpush.msra.mxu0 %v7252
  %7275 = vmatpush.msra.mxu0 %v7251
  %7276 = vmatpush.msra.mxu0 %v7250
  %7277 = vmatpush.msra.mxu0 %v7249
  %7278 = vmatmul.f32.gmra.mxu0 %v7257
  %v7279 = vpop.f32.mrf.mxu0
  %v7280 = vadd.f32 0.0, %v7279
  %7281 = vdwg.mxu0
  %v7282 = vadd.f32 %v7210, %v7280
  %v7283 = vld [vmem:[#allocation4 + $0x2a] sm:$0x3]
  %s7284 = scalar_lea.vmem %s5, 1176
  %v7285 = vld [vmem:[%s7284] sm:$0xff]
  %v7286 = vld [vmem:[%s7284 + $0x8] sm:$0xff]
  %v7287 = vld [vmem:[%s7284 + $0x10] sm:$0xff]
  %v7288 = vld [vmem:[%s7284 + $0x18] sm:$0xff]
  %v7289 = vld [vmem:[%s7284 + $0x20] sm:$0xff]
  %v7290 = vld [vmem:[%s7284 + $0x28] sm:$0xff]
  %v7291 = vld [vmem:[%s7284 + $0x30] sm:$0x3]
  %v7293 = vsel %vm310, %v7283, 0
  %v7296 = vsel %vm314, %v7291, 0
  %7298 = vmatpush.msra.mxu0 0.0
  %7299 = vmatpush.msra.mxu0 0.0
  %7300 = vmatpush.msra.mxu0 0.0
  %7301 = vmatpush.msra.mxu0 0.0
  %7302 = vmatpush.msra.mxu0 0.0
  %7303 = vmatpush.msra.mxu0 0.0
  %7304 = vmatpush.msra.mxu0 0.0
  %7305 = vmatpush.msra.mxu0 0.0
  %7306 = vmatpush.msra.mxu0 0.0
  %7307 = vmatpush.msra.mxu0 %v7296
  %7308 = vmatpush.msra.mxu0 %v7290
  %7309 = vmatpush.msra.mxu0 %v7289
  %7310 = vmatpush.msra.mxu0 %v7288
  %7311 = vmatpush.msra.mxu0 %v7287
  %7312 = vmatpush.msra.mxu0 %v7286
  %7313 = vmatpush.msra.mxu0 %v7285
  %7314 = vmatmul.f32.gmra.mxu0 %v7293
  %v7315 = vpop.f32.mrf.mxu0
  %v7316 = vadd.f32 0.0, %v7315
  %7317 = vdwg.mxu0
  %v7318 = vadd.f32 %v7246, %v7316
  %v7319 = vld [vmem:[#allocation4 + $0x2c] sm:$0x3]
  %s7320 = scalar_lea.vmem %s5, 1232
  %v7321 = vld [vmem:[%s7320] sm:$0xff]
  %v7322 = vld [vmem:[%s7320 + $0x8] sm:$0xff]
  %v7323 = vld [vmem:[%s7320 + $0x10] sm:$0xff]
  %v7324 = vld [vmem:[%s7320 + $0x18] sm:$0xff]
  %v7325 = vld [vmem:[%s7320 + $0x20] sm:$0xff]
  %v7326 = vld [vmem:[%s7320 + $0x28] sm:$0xff]
  %v7327 = vld [vmem:[%s7320 + $0x30] sm:$0x3]
  %v7329 = vsel %vm310, %v7319, 0
  %v7332 = vsel %vm314, %v7327, 0
  %7334 = vmatpush.msra.mxu0 0.0
  %7335 = vmatpush.msra.mxu0 0.0
  %7336 = vmatpush.msra.mxu0 0.0
  %7337 = vmatpush.msra.mxu0 0.0
  %7338 = vmatpush.msra.mxu0 0.0
  %7339 = vmatpush.msra.mxu0 0.0
  %7340 = vmatpush.msra.mxu0 0.0
  %7341 = vmatpush.msra.mxu0 0.0
  %7342 = vmatpush.msra.mxu0 0.0
  %7343 = vmatpush.msra.mxu0 %v7332
  %7344 = vmatpush.msra.mxu0 %v7326
  %7345 = vmatpush.msra.mxu0 %v7325
  %7346 = vmatpush.msra.mxu0 %v7324
  %7347 = vmatpush.msra.mxu0 %v7323
  %7348 = vmatpush.msra.mxu0 %v7322
  %7349 = vmatpush.msra.mxu0 %v7321
  %7350 = vmatmul.f32.gmra.mxu0 %v7329
  %v7351 = vpop.f32.mrf.mxu0
  %v7352 = vadd.f32 0.0, %v7351
  %7353 = vdwg.mxu0
  %v7354 = vadd.f32 %v7282, %v7352
  %v7355 = vld [vmem:[#allocation4 + $0x2e] sm:$0x3]
  %s7356 = scalar_lea.vmem %s5, 1288
  %v7357 = vld [vmem:[%s7356] sm:$0xff]
  %v7358 = vld [vmem:[%s7356 + $0x8] sm:$0xff]
  %v7359 = vld [vmem:[%s7356 + $0x10] sm:$0xff]
  %v7360 = vld [vmem:[%s7356 + $0x18] sm:$0xff]
  %v7361 = vld [vmem:[%s7356 + $0x20] sm:$0xff]
  %v7362 = vld [vmem:[%s7356 + $0x28] sm:$0xff]
  %v7363 = vld [vmem:[%s7356 + $0x30] sm:$0x3]
  %v7365 = vsel %vm310, %v7355, 0
  %v7368 = vsel %vm314, %v7363, 0
  %7370 = vmatpush.msra.mxu0 0.0
  %7371 = vmatpush.msra.mxu0 0.0
  %7372 = vmatpush.msra.mxu0 0.0
  %7373 = vmatpush.msra.mxu0 0.0
  %7374 = vmatpush.msra.mxu0 0.0
  %7375 = vmatpush.msra.mxu0 0.0
  %7376 = vmatpush.msra.mxu0 0.0
  %7377 = vmatpush.msra.mxu0 0.0
  %7378 = vmatpush.msra.mxu0 0.0
  %7379 = vmatpush.msra.mxu0 %v7368
  %7380 = vmatpush.msra.mxu0 %v7362
  %7381 = vmatpush.msra.mxu0 %v7361
  %7382 = vmatpush.msra.mxu0 %v7360
  %7383 = vmatpush.msra.mxu0 %v7359
  %7384 = vmatpush.msra.mxu0 %v7358
  %7385 = vmatpush.msra.mxu0 %v7357
  %7386 = vmatmul.f32.gmra.mxu0 %v7365
  %v7387 = vpop.f32.mrf.mxu0
  %v7388 = vadd.f32 0.0, %v7387
  %7389 = vdwg.mxu0
  %v7390 = vadd.f32 %v7318, %v7388
  %v7391 = vld [vmem:[#allocation4 + $0x30] sm:$0x3]
  %s7392 = scalar_lea.vmem %s5, 1344
  %v7393 = vld [vmem:[%s7392] sm:$0xff]
  %v7394 = vld [vmem:[%s7392 + $0x8] sm:$0xff]
  %v7395 = vld [vmem:[%s7392 + $0x10] sm:$0xff]
  %v7396 = vld [vmem:[%s7392 + $0x18] sm:$0xff]
  %v7397 = vld [vmem:[%s7392 + $0x20] sm:$0xff]
  %v7398 = vld [vmem:[%s7392 + $0x28] sm:$0xff]
  %v7399 = vld [vmem:[%s7392 + $0x30] sm:$0x3]
  %v7401 = vsel %vm310, %v7391, 0
  %v7404 = vsel %vm314, %v7399, 0
  %7406 = vmatpush.msra.mxu0 0.0
  %7407 = vmatpush.msra.mxu0 0.0
  %7408 = vmatpush.msra.mxu0 0.0
  %7409 = vmatpush.msra.mxu0 0.0
  %7410 = vmatpush.msra.mxu0 0.0
  %7411 = vmatpush.msra.mxu0 0.0
  %7412 = vmatpush.msra.mxu0 0.0
  %7413 = vmatpush.msra.mxu0 0.0
  %7414 = vmatpush.msra.mxu0 0.0
  %7415 = vmatpush.msra.mxu0 %v7404
  %7416 = vmatpush.msra.mxu0 %v7398
  %7417 = vmatpush.msra.mxu0 %v7397
  %7418 = vmatpush.msra.mxu0 %v7396
  %7419 = vmatpush.msra.mxu0 %v7395
  %7420 = vmatpush.msra.mxu0 %v7394
  %7421 = vmatpush.msra.mxu0 %v7393
  %7422 = vmatmul.f32.gmra.mxu0 %v7401
  %v7423 = vpop.f32.mrf.mxu0
  %v7424 = vadd.f32 0.0, %v7423
  %7425 = vdwg.mxu0
  %v7426 = vadd.f32 %v7354, %v7424
  %v7427 = vld [vmem:[#allocation4 + $0x32] sm:$0x3]
  %s7428 = scalar_lea.vmem %s5, 1400
  %v7429 = vld [vmem:[%s7428] sm:$0xff]
  %v7430 = vld [vmem:[%s7428 + $0x8] sm:$0xff]
  %v7431 = vld [vmem:[%s7428 + $0x10] sm:$0xff]
  %v7432 = vld [vmem:[%s7428 + $0x18] sm:$0xff]
  %v7433 = vld [vmem:[%s7428 + $0x20] sm:$0xff]
  %v7434 = vld [vmem:[%s7428 + $0x28] sm:$0xff]
  %v7435 = vld [vmem:[%s7428 + $0x30] sm:$0x3]
  %v7437 = vsel %vm310, %v7427, 0
  %v7440 = vsel %vm314, %v7435, 0
  %7442 = vmatpush.msra.mxu0 0.0
  %7443 = vmatpush.msra.mxu0 0.0
  %7444 = vmatpush.msra.mxu0 0.0
  %7445 = vmatpush.msra.mxu0 0.0
  %7446 = vmatpush.msra.mxu0 0.0
  %7447 = vmatpush.msra.mxu0 0.0
  %7448 = vmatpush.msra.mxu0 0.0
  %7449 = vmatpush.msra.mxu0 0.0
  %7450 = vmatpush.msra.mxu0 0.0
  %7451 = vmatpush.msra.mxu0 %v7440
  %7452 = vmatpush.msra.mxu0 %v7434
  %7453 = vmatpush.msra.mxu0 %v7433
  %7454 = vmatpush.msra.mxu0 %v7432
  %7455 = vmatpush.msra.mxu0 %v7431
  %7456 = vmatpush.msra.mxu0 %v7430
  %7457 = vmatpush.msra.mxu0 %v7429
  %7458 = vmatmul.f32.gmra.mxu0 %v7437
  %v7459 = vpop.f32.mrf.mxu0
  %v7460 = vadd.f32 0.0, %v7459
  %7461 = vdwg.mxu0
  %v7462 = vadd.f32 %v7390, %v7460
  %v7463 = vld [vmem:[#allocation4 + $0x34] sm:$0x3]
  %s7464 = scalar_lea.vmem %s5, 1456
  %v7465 = vld [vmem:[%s7464] sm:$0xff]
  %v7466 = vld [vmem:[%s7464 + $0x8] sm:$0xff]
  %v7467 = vld [vmem:[%s7464 + $0x10] sm:$0xff]
  %v7468 = vld [vmem:[%s7464 + $0x18] sm:$0xff]
  %v7469 = vld [vmem:[%s7464 + $0x20] sm:$0xff]
  %v7470 = vld [vmem:[%s7464 + $0x28] sm:$0xff]
  %v7471 = vld [vmem:[%s7464 + $0x30] sm:$0x3]
  %v7473 = vsel %vm310, %v7463, 0
  %v7476 = vsel %vm314, %v7471, 0
  %7478 = vmatpush.msra.mxu0 0.0
  %7479 = vmatpush.msra.mxu0 0.0
  %7480 = vmatpush.msra.mxu0 0.0
  %7481 = vmatpush.msra.mxu0 0.0
  %7482 = vmatpush.msra.mxu0 0.0
  %7483 = vmatpush.msra.mxu0 0.0
  %7484 = vmatpush.msra.mxu0 0.0
  %7485 = vmatpush.msra.mxu0 0.0
  %7486 = vmatpush.msra.mxu0 0.0
  %7487 = vmatpush.msra.mxu0 %v7476
  %7488 = vmatpush.msra.mxu0 %v7470
  %7489 = vmatpush.msra.mxu0 %v7469
  %7490 = vmatpush.msra.mxu0 %v7468
  %7491 = vmatpush.msra.mxu0 %v7467
  %7492 = vmatpush.msra.mxu0 %v7466
  %7493 = vmatpush.msra.mxu0 %v7465
  %7494 = vmatmul.f32.gmra.mxu0 %v7473
  %v7495 = vpop.f32.mrf.mxu0
  %v7496 = vadd.f32 0.0, %v7495
  %7497 = vdwg.mxu0
  %v7498 = vadd.f32 %v7426, %v7496
  %v7499 = vld [vmem:[#allocation4 + $0x36] sm:$0x3]
  %s7500 = scalar_lea.vmem %s5, 1512
  %v7501 = vld [vmem:[%s7500] sm:$0xff]
  %v7502 = vld [vmem:[%s7500 + $0x8] sm:$0xff]
  %v7503 = vld [vmem:[%s7500 + $0x10] sm:$0xff]
  %v7504 = vld [vmem:[%s7500 + $0x18] sm:$0xff]
  %v7505 = vld [vmem:[%s7500 + $0x20] sm:$0xff]
  %v7506 = vld [vmem:[%s7500 + $0x28] sm:$0xff]
  %v7507 = vld [vmem:[%s7500 + $0x30] sm:$0x3]
  %v7509 = vsel %vm310, %v7499, 0
  %v7512 = vsel %vm314, %v7507, 0
  %7514 = vmatpush.msra.mxu0 0.0
  %7515 = vmatpush.msra.mxu0 0.0
  %7516 = vmatpush.msra.mxu0 0.0
  %7517 = vmatpush.msra.mxu0 0.0
  %7518 = vmatpush.msra.mxu0 0.0
  %7519 = vmatpush.msra.mxu0 0.0
  %7520 = vmatpush.msra.mxu0 0.0
  %7521 = vmatpush.msra.mxu0 0.0
  %7522 = vmatpush.msra.mxu0 0.0
  %7523 = vmatpush.msra.mxu0 %v7512
  %7524 = vmatpush.msra.mxu0 %v7506
  %7525 = vmatpush.msra.mxu0 %v7505
  %7526 = vmatpush.msra.mxu0 %v7504
  %7527 = vmatpush.msra.mxu0 %v7503
  %7528 = vmatpush.msra.mxu0 %v7502
  %7529 = vmatpush.msra.mxu0 %v7501
  %7530 = vmatmul.f32.gmra.mxu0 %v7509
  %v7531 = vpop.f32.mrf.mxu0
  %v7532 = vadd.f32 0.0, %v7531
  %7533 = vdwg.mxu0
  %v7534 = vadd.f32 %v7462, %v7532
  %v7535 = vld [vmem:[#allocation4 + $0x38] sm:$0x3]
  %s7536 = scalar_lea.vmem %s5, 1568
  %v7537 = vld [vmem:[%s7536] sm:$0xff]
  %v7538 = vld [vmem:[%s7536 + $0x8] sm:$0xff]
  %v7539 = vld [vmem:[%s7536 + $0x10] sm:$0xff]
  %v7540 = vld [vmem:[%s7536 + $0x18] sm:$0xff]
  %v7541 = vld [vmem:[%s7536 + $0x20] sm:$0xff]
  %v7542 = vld [vmem:[%s7536 + $0x28] sm:$0xff]
  %v7543 = vld [vmem:[%s7536 + $0x30] sm:$0x3]
  %v7545 = vsel %vm310, %v7535, 0
  %v7548 = vsel %vm314, %v7543, 0
  %7550 = vmatpush.msra.mxu0 0.0
  %7551 = vmatpush.msra.mxu0 0.0
  %7552 = vmatpush.msra.mxu0 0.0
  %7553 = vmatpush.msra.mxu0 0.0
  %7554 = vmatpush.msra.mxu0 0.0
  %7555 = vmatpush.msra.mxu0 0.0
  %7556 = vmatpush.msra.mxu0 0.0
  %7557 = vmatpush.msra.mxu0 0.0
  %7558 = vmatpush.msra.mxu0 0.0
  %7559 = vmatpush.msra.mxu0 %v7548
  %7560 = vmatpush.msra.mxu0 %v7542
  %7561 = vmatpush.msra.mxu0 %v7541
  %7562 = vmatpush.msra.mxu0 %v7540
  %7563 = vmatpush.msra.mxu0 %v7539
  %7564 = vmatpush.msra.mxu0 %v7538
  %7565 = vmatpush.msra.mxu0 %v7537
  %7566 = vmatmul.f32.gmra.mxu0 %v7545
  %v7567 = vpop.f32.mrf.mxu0
  %v7568 = vadd.f32 0.0, %v7567
  %7569 = vdwg.mxu0
  %v7570 = vadd.f32 %v7498, %v7568
  %v7571 = vld [vmem:[#allocation4 + $0x3a] sm:$0x3]
  %s7572 = scalar_lea.vmem %s5, 1624
  %v7573 = vld [vmem:[%s7572] sm:$0xff]
  %v7574 = vld [vmem:[%s7572 + $0x8] sm:$0xff]
  %v7575 = vld [vmem:[%s7572 + $0x10] sm:$0xff]
  %v7576 = vld [vmem:[%s7572 + $0x18] sm:$0xff]
  %v7577 = vld [vmem:[%s7572 + $0x20] sm:$0xff]
  %v7578 = vld [vmem:[%s7572 + $0x28] sm:$0xff]
  %v7579 = vld [vmem:[%s7572 + $0x30] sm:$0x3]
  %v7581 = vsel %vm310, %v7571, 0
  %v7584 = vsel %vm314, %v7579, 0
  %7586 = vmatpush.msra.mxu0 0.0
  %7587 = vmatpush.msra.mxu0 0.0
  %7588 = vmatpush.msra.mxu0 0.0
  %7589 = vmatpush.msra.mxu0 0.0
  %7590 = vmatpush.msra.mxu0 0.0
  %7591 = vmatpush.msra.mxu0 0.0
  %7592 = vmatpush.msra.mxu0 0.0
  %7593 = vmatpush.msra.mxu0 0.0
  %7594 = vmatpush.msra.mxu0 0.0
  %7595 = vmatpush.msra.mxu0 %v7584
  %7596 = vmatpush.msra.mxu0 %v7578
  %7597 = vmatpush.msra.mxu0 %v7577
  %7598 = vmatpush.msra.mxu0 %v7576
  %7599 = vmatpush.msra.mxu0 %v7575
  %7600 = vmatpush.msra.mxu0 %v7574
  %7601 = vmatpush.msra.mxu0 %v7573
  %7602 = vmatmul.f32.gmra.mxu0 %v7581
  %v7603 = vpop.f32.mrf.mxu0
  %v7604 = vadd.f32 0.0, %v7603
  %7605 = vdwg.mxu0
  %v7606 = vadd.f32 %v7534, %v7604
  %v7607 = vadd.f32 %v7570, %v7606
  %v7608 = vperm.slane %v6531, 0
  %v7609 = vadd.f32 %v7607, %v7608
  %v7610 = vmax.f32 %v7609, 0.0
  %v7611 = vperm.slane %v6531, 1
  %v7613 = vsel %vm310, %v7610, 0
  %v7616 = vsel %vm314, %v6523, 0
  %7618 = vmatpush.msra.mxu0 0.0
  %7619 = vmatpush.msra.mxu0 0.0
  %7620 = vmatpush.msra.mxu0 0.0
  %7621 = vmatpush.msra.mxu0 0.0
  %7622 = vmatpush.msra.mxu0 0.0
  %7623 = vmatpush.msra.mxu0 0.0
  %7624 = vmatpush.msra.mxu0 0.0
  %7625 = vmatpush.msra.mxu0 0.0
  %7626 = vmatpush.msra.mxu0 0.0
  %7627 = vmatpush.msra.mxu0 %v7616
  %7628 = vmatpush.msra.mxu0 %v6522
  %7629 = vmatpush.msra.mxu0 %v6521
  %7630 = vmatpush.msra.mxu0 %v6520
  %7631 = vmatpush.msra.mxu0 %v6519
  %7632 = vmatpush.msra.mxu0 %v6518
  %7633 = vmatpush.msra.mxu0 %v6517
  %7634 = vmatmul.f32.gmra.mxu0 %v7613
  %v7635 = vpop.f32.mrf.mxu0
  %v7636 = vadd.f32 %v7611, %v7635
  %7637 = vdwg.mxu0
  %v7638 = vmax.f32 %v7636, 0.0
  %v7639 = vld [vmem:[%s1] sm:$0x3]
  %vm7640 = vcmask 138240
  %v7642 = vsel %vm7640, %v7639, 0
  %v7645 = vsel %vm69, %v6526, 0
  %7647 = vmatpush.msra.mxu0 0.0
  %7648 = vmatpush.msra.mxu0 0.0
  %7649 = vmatpush.msra.mxu0 0.0
  %7650 = vmatpush.msra.mxu0 0.0
  %7651 = vmatpush.msra.mxu0 0.0
  %7652 = vmatpush.msra.mxu0 0.0
  %7653 = vmatpush.msra.mxu0 0.0
  %7654 = vmatpush.msra.mxu0 0.0
  %7655 = vmatpush.msra.mxu0 0.0
  %7656 = vmatpush.msra.mxu0 0.0
  %7657 = vmatpush.msra.mxu0 0.0
  %7658 = vmatpush.msra.mxu0 0.0
  %7659 = vmatpush.msra.mxu0 0.0
  %7660 = vmatpush.msra.mxu0 %v7645
  %7661 = vmatpush.msra.mxu0 %v6525
  %7662 = vmatpush.msra.mxu0 %v6524
  %7663 = vmatmul.f32.gmra.mxu0 %v7642
  %v7664 = vpop.f32.mrf.mxu0
  %v7665 = vadd.f32 0.0, %v7664
  %7666 = vdwg.mxu0
  %v7667 = vmax.f32 %v7665, 0.0
  %vm7668 = vcmask 80896
  %v7670 = vsel %vm7668, %v7667, 0
  %v7673 = vsel %vm314, %v6530, 0
  %7675 = vmatpush.msra.mxu0 0.0
  %7676 = vmatpush.msra.mxu0 0.0
  %7677 = vmatpush.msra.mxu0 0.0
  %7678 = vmatpush.msra.mxu0 0.0
  %7679 = vmatpush.msra.mxu0 0.0
  %7680 = vmatpush.msra.mxu0 0.0
  %7681 = vmatpush.msra.mxu0 0.0
  %7682 = vmatpush.msra.mxu0 0.0
  %7683 = vmatpush.msra.mxu0 0.0
  %7684 = vmatpush.msra.mxu0 0.0
  %7685 = vmatpush.msra.mxu0 0.0
  %7686 = vmatpush.msra.mxu0 0.0
  %7687 = vmatpush.msra.mxu0 0.0
  %7688 = vmatpush.msra.mxu0 0.0
  %7689 = vmatpush.msra.mxu0 %v7673
  %7690 = vmatpush.msra.mxu0 %v6529
  %7691 = vmatmul.f32.gmra.mxu0 %v7670
  %v7692 = vpop.f32.mrf.mxu0
  %v7693 = vadd.f32 0.0, %v7692
  %7694 = vdwg.mxu0
  %v7696 = vsel %vm7668, %v7638, 0
  %v7699 = vsel %vm314, %v6528, 0
  %7701 = vmatpush.msra.mxu0 0.0
  %7702 = vmatpush.msra.mxu0 0.0
  %7703 = vmatpush.msra.mxu0 0.0
  %7704 = vmatpush.msra.mxu0 0.0
  %7705 = vmatpush.msra.mxu0 0.0
  %7706 = vmatpush.msra.mxu0 0.0
  %7707 = vmatpush.msra.mxu0 0.0
  %7708 = vmatpush.msra.mxu0 0.0
  %7709 = vmatpush.msra.mxu0 0.0
  %7710 = vmatpush.msra.mxu0 0.0
  %7711 = vmatpush.msra.mxu0 0.0
  %7712 = vmatpush.msra.mxu0 0.0
  %7713 = vmatpush.msra.mxu0 0.0
  %7714 = vmatpush.msra.mxu0 0.0
  %7715 = vmatpush.msra.mxu0 %v7699
  %7716 = vmatpush.msra.mxu0 %v6527
  %7717 = vmatmul.f32.gmra.mxu0 %v7696
  %v7718 = vpop.f32.mrf.mxu0
  %v7719 = vadd.f32 %v7693, %v7718
  %7720 = vdwg.mxu0
  %v7721 = vperm.slane %v6531, 2
  %v7722 = vadd.f32 %v7719, %v7721
  %vm7723 = vcmask 1024
  %7724 = vst.msk [vmem:[%s7] sm:$0x3] %vm7723, %v7722
  // Predicated region
  $region30: #{model_forward.1} parent=0 // pred_check
    _
  $region31: #{model_forward.1} parent=0 // pred_check_branch
    %7726 = sbr.rel (0) target = $region33
  $region32: #{model_forward.1} parent=0 // pred_region
    _
  $region33: #{model_forward.1} parent=0 // pred_fallthru
    _
  // Predicated region
  $region34: #{model_forward.1} parent=0 // pred_check
    _
  $region35: #{model_forward.1} parent=0 // pred_check_branch
    %7728 = sbr.rel (0) target = $region37
  $region36: #{model_forward.1} parent=0 // pred_region
    _
  $region37: #{model_forward.1} parent=0 // pred_fallthru
    _

</llo_original>
